<compile_context>
chip_gen: v7x
topology: tpu7x:2x2x1
jax: 0.10.0
libtpu: 0.0.40
codegen_flags: <defaults>
</compile_context>

<pallas_src>
import jax
import jax.numpy as jnp
from jax.experimental import pallas as pl
from jax.experimental.pallas import tpu as pltpu


# ---------------------------------------------------------------------------
# Fused forward kernel: processes ONE image per grid step.  Per image, only the
# (256,1) input and the (16,16) phase-layout result touch HBM.
# ---------------------------------------------------------------------------
def _fused_kernel(x_ref, m1_ref, m2_ref, m3_ref,
                  w1_ref, b1_ref, w2_ref, b2_ref,
                  w3_ref, b3_ref, w4_ref, b4_ref,
                  p1_ref, p2_ref,
                  wt1_ref, bt1_ref, wt2_ref, bt2_ref,
                  o_ref,
                  pad1, pad2, pad3, pad4):
    f32, bf16 = jnp.float32, jnp.bfloat16

    def conv3x3(pad_ref, x_dense, w_ref, b_ref, mask_ref, H, W, cin, cout, use_vpu):
        """3x3 / pad=1 conv + bias + ReLU on a (H*W, cin) flat (pixels x channels) tile.

        The input is written into a zero-padded flat VMEM scratch; each of the 9 taps is
        a shifted static slice, masked against row wrap-around, and accumulated either as
        a (cin,cout) MXU matmul (bf16 in / f32 acc) or, for cin==1, as a VPU broadcast FMA.
        """
        HW = H * W
        pad_ref[...] = jnp.zeros_like(pad_ref)
        pad_ref[W + 1:W + 1 + HW, :] = x_dense
        mask_l = mask_ref[:, 0:1]          # zero where w == 0     (left-wrap taps)
        mask_r = mask_ref[:, 1:2]          # zero where w == W - 1 (right-wrap taps)
        acc = jnp.zeros((HW, cout), f32)
        for di in range(3):
            for dj in range(3):
                t = di * 3 + dj
                start = di * W + dj
                xt = pad_ref[start:start + HW, :]
                if dj == 0:
                    xt = xt * mask_l
                elif dj == 2:
                    xt = xt * mask_r
                if use_vpu:                # cin == 1: outer product on the VPU
                    acc = acc + xt * w_ref[t:t + 1, :]
                else:                      # MXU: bf16 operands, f32 accumulate
                    acc = acc + jnp.dot(
                        xt.astype(bf16),
                        w_ref[t * cin:(t + 1) * cin, :],
                        preferred_element_type=f32)
        return jnp.maximum(acc + b_ref[...], 0.0)

    def maxpool2x2(y, p_ref, W):
        """2x2/stride-2 max pool of a (H*W, C) tile: 4-corner elementwise max followed by
        a 0/1 selection matmul (host-precomputed) that also reorders the pooled pixels
        into the dense row-major layout expected by the next layer."""
        HW = y.shape[0]
        m = jnp.maximum(jnp.maximum(y[0:HW - W - 1, :], y[1:HW - W, :]),
                        jnp.maximum(y[W:HW - 1, :], y[W + 1:HW, :]))
        return jnp.dot(p_ref[...], m.astype(bf16), preferred_element_type=f32)

    # TODO(synk): Attention(32,32)/Attention(128,128) (and EdgeAttention) classes are not
    # defined in the provided source file; they are applied as identity pass-throughs.

    # ------------------------------- encoder --------------------------------
    x0 = x_ref[...]                                                     # (256, 1)
    y1 = conv3x3(pad1, x0, w1_ref, b1_ref, m1_ref, 16, 16, 1, 32, True)
    h1 = maxpool2x2(y1, p1_ref, 16)                                     # (64, 32)
    y2 = conv3x3(pad2, h1, w2_ref, b2_ref, m2_ref, 8, 8, 32, 64, False)
    h2 = maxpool2x2(y2, p2_ref, 8)                                      # (16, 64)

    # ------------------------------ bottleneck ------------------------------
    y3 = conv3x3(pad3, h2, w3_ref, b3_ref, m3_ref, 4, 4, 64, 128, False)
    y4 = conv3x3(pad4, y3, w4_ref, b4_ref, m3_ref, 4, 4, 128, 64, False)

    # ------------------------------- decoder --------------------------------
    # ConvTranspose2d(k=2, s=2) layers are per-pixel matmuls; results stay in a "phase"
    # layout: rows p4 = 4x4 bottleneck pixel (h,w), cols j = (a1,b1,a2,b2) sub-position.
    z1 = jnp.dot(y4.astype(bf16), wt1_ref[...], preferred_element_type=f32)
    z1 = jnp.maximum(z1 + bt1_ref[...], 0.0)                            # (16, 128)
    z2 = jnp.dot(z1.astype(bf16), wt2_ref[...], preferred_element_type=f32)
    z2 = z2 + bt2_ref[...]                                              # (16, 16)
    o_ref[...] = pl.reciprocal(1.0 + jnp.exp(-z2), approx=False)        # sigmoid


# ---------------------------------------------------------------------------
# Host-side constant preparation (weight layouts, wrap masks, pool selectors)
# ---------------------------------------------------------------------------
def _conv_wmat(w, dtype):
    """PyTorch Conv2d weight (Cout, Cin, 3, 3) -> (9*Cin, Cout), rows ordered (di, dj, ci)."""
    cout, cin = w.shape[0], w.shape[1]
    return jnp.transpose(w, (2, 3, 1, 0)).reshape(9 * cin, cout).astype(dtype)


def _convT_wmat(w, dtype):
    """PyTorch ConvTranspose2d weight (Cin, Cout, 2, 2) -> (Cin, 4*Cout), cols (a, b, co)."""
    cin, cout = w.shape[0], w.shape[1]
    return jnp.transpose(w, (0, 2, 3, 1)).reshape(cin, 4 * cout).astype(dtype)


def _col_masks(H, W):
    """(H*W, 2) f32: col 0 zero where w==0 (left-wrap), col 1 zero where w==W-1 (right-wrap)."""
    col = jnp.arange(H * W, dtype=jnp.int32) % W
    return jnp.stack([(col != 0), (col != W - 1)], axis=1).astype(jnp.float32)


def _pool_select(H, W, dtype):
    """0/1 matrix (H*W/4, H*W - W - 1) picking the top-left corner of each 2x2 window."""
    HW = H * W
    q = jnp.arange(HW // 4, dtype=jnp.int32)
    src = 2 * (q // (W // 2)) * W + 2 * (q % (W // 2))
    cols = jnp.arange(HW - W - 1, dtype=jnp.int32)
    return (cols[None, :] == src[:, None]).astype(dtype)


# ---------------------------------------------------------------------------
# Forward pass
# ---------------------------------------------------------------------------
def edge_segmentation_cnn_forward(params, x_nchw):
    """EdgeSegmentationCNN forward (default flags).  x: (B, 1, 16, 16) f32 -> (B, 1, 16, 16)."""
    B, C, H, W = x_nchw.shape
    assert (C, H, W) == (1, 16, 16), "fused kernel is specialized for 1x16x16 inputs"
    # `intensity_image = 255*x`, get_edges and the ACM branches are dead code for the
    # default constructor flags and are skipped.

    bf16, f32 = jnp.bfloat16, jnp.float32
    w1 = _conv_wmat(params["e1_w"], f32)                  # (9, 32)    VPU path (Cin==1)
    w2 = _conv_wmat(params["e2_w"], bf16)                 # (288, 64)
    w3 = _conv_wmat(params["b1_w"], bf16)                 # (576, 128)
    w4 = _conv_wmat(params["b2_w"], bf16)                 # (1152, 64)
    wt1 = _convT_wmat(params["d1_w"], bf16)               # (64, 128)  cols (a1, b1, c)
    wt2 = jnp.kron(jnp.eye(4, dtype=f32),
                   _convT_wmat(params["d2_w"], f32)).astype(bf16)   # (128, 16) block-diag
    b1c = params["e1_b"].reshape(1, -1)
    b2c = params["e2_b"].reshape(1, -1)
    b3c = params["b1_b"].reshape(1, -1)
    b4c = params["b2_b"].reshape(1, -1)
    bt1 = jnp.tile(params["d1_b"], 4).reshape(1, -1)      # (1, 128)  (a1,b1,c) order
    bt2 = jnp.tile(params["d2_b"], 16).reshape(1, -1)     # (1, 16)   (Cout == 1)
    m1, m2, m3 = _col_masks(16, 16), _col_masks(8, 8), _col_masks(4, 4)
    p1, p2 = _pool_select(16, 16, bf16), _pool_select(8, 8, bf16)

    def full(shape):
        return pl.BlockSpec(shape, lambda b: (0,) * len(shape))

    out_k = pl.pallas_call(
        _fused_kernel,
        grid=(B,),
        in_specs=[
            pl.BlockSpec((None, H * W, 1), lambda b: (b, 0, 0)),   # x (one image / step)
            full((256, 2)), full((64, 2)), full((16, 2)),          # wrap masks
            full((9, 32)), full((1, 32)),                          # conv1
            full((288, 64)), full((1, 64)),                        # conv2
            full((576, 128)), full((1, 128)),                      # conv3
            full((1152, 64)), full((1, 64)),                       # conv4
            full((64, 239)), full((16, 55)),                       # pool selectors
            full((64, 128)), full((1, 128)),                       # convT1
            full((128, 16)), full((1, 16)),                        # convT2 (block-diag)
        ],
        out_specs=pl.BlockSpec((None, 16, 16), lambda b: (b, 0, 0)),
        out_shape=jax.ShapeDtypeStruct((B, 16, 16), jnp.float32),
        scratch_shapes=[
            pltpu.VMEM((16 * 16 + 2 * 16 + 2, 1), jnp.float32),    # conv1 padded input
            pltpu.VMEM((8 * 8 + 2 * 8 + 2, 32), jnp.float32),      # conv2 padded input
            pltpu.VMEM((4 * 4 + 2 * 4 + 2, 64), jnp.float32),      # conv3 padded input
            pltpu.VMEM((4 * 4 + 2 * 4 + 2, 128), jnp.float32),     # conv4 padded input
        ],
        compiler_params=pltpu.CompilerParams(dimension_semantics=("parallel",)),
    )(x_nchw.reshape(B, H * W, 1),
      m1, m2, m3,
      w1, b1c, w2, b2c, w3, b3c, w4, b4c,
      p1, p2, wt1, bt1, wt2, bt2)

    # Un-shuffle the phase-layout result (p4=(h,w), j=(a1,b1,a2,b2)) -> NCHW (2 KiB total).
    r = out_k.reshape(B, 4, 4, 2, 2, 2, 2)            # (b, h, w, a1, b1, a2, b2)
    r = jnp.transpose(r, (0, 1, 3, 5, 2, 4, 6))       # (b, h, a1, a2, w, b1, b2)
    return r.reshape(B, 1, 16, 16)


# ---------------------------------------------------------------------------
# Plain-JAX/XLA reference (no Pallas) used to validate the fused kernel
# ---------------------------------------------------------------------------
def reference_forward(params, x_nchw):
    x = jnp.transpose(x_nchw, (0, 2, 3, 1))

    def conv(h, w, b):
        whwio = jnp.transpose(w, (2, 3, 1, 0))
        y = jax.lax.conv_general_dilated(
            h, whwio, window_strides=(1, 1), padding="SAME",
            dimension_numbers=("NHWC", "HWIO", "NHWC"))
        return jax.nn.relu(y + b)

    def pool(h):
        B, H, W, C = h.shape
        return jnp.max(h.reshape(B, H // 2, 2, W // 2, 2, C), axis=(2, 4))

    def convT(h, w, b):
        B, H, W, cin = h.shape
        cout = w.shape[1]
        wm = jnp.transpose(w, (0, 2, 3, 1)).reshape(cin, 4 * cout)
        y = h.reshape(B * H * W, cin) @ wm
        y = y.reshape(B, H, W, 2, 2, cout).transpose(0, 1, 3, 2, 4, 5)
        return y.reshape(B, 2 * H, 2 * W, cout) + b

    h = pool(conv(x, params["e1_w"], params["e1_b"]))
    h = pool(conv(h, params["e2_w"], params["e2_b"]))
    h = conv(h, params["b1_w"], params["b1_b"])
    h = conv(h, params["b2_w"], params["b2_b"])
    h = jax.nn.relu(convT(h, params["d1_w"], params["d1_b"]))
    h = jax.nn.sigmoid(convT(h, params["d2_w"], params["d2_b"]))
    return jnp.transpose(h, (0, 3, 1, 2))


# ---------------------------------------------------------------------------
# Parameters (PyTorch weight layouts: Conv2d (Cout,Cin,3,3), ConvTranspose2d (Cin,Cout,2,2))
# ---------------------------------------------------------------------------
def init_params(key):
    ks = jax.random.split(key, 12)

    def w(k, shape, fan_in):
        return (jnp.sqrt(2.0 / fan_in) * jax.random.normal(k, shape)).astype(jnp.float32)

    def b(k, n):
        return (0.1 * jax.random.normal(k, (n,))).astype(jnp.float32)

    return {
        "e1_w": w(ks[0], (32, 1, 3, 3), 9),       "e1_b": b(ks[1], 32),
        "e2_w": w(ks[2], (64, 32, 3, 3), 288),    "e2_b": b(ks[3], 64),
        "b1_w": w(ks[4], (128, 64, 3, 3), 576),   "b1_b": b(ks[5], 128),
        "b2_w": w(ks[6], (64, 128, 3, 3), 1152),  "b2_b": b(ks[7], 64),
        "d1_w": w(ks[8], (64, 32, 2, 2), 64),     "d1_b": b(ks[9], 32),
        "d2_w": w(ks[10], (32, 1, 2, 2), 32),     "d2_b": b(ks[11], 1),
    }


# ---------------------------------------------------------------------------
if __name__ == "__main__":
    key = jax.random.PRNGKey(0)
    k_params, k_x = jax.random.split(key)

    params = init_params(k_params)
    x = jax.random.uniform(k_x, (2, 1, 16, 16), dtype=jnp.float32)   # NCHW, 1 channel

    fwd = jax.jit(edge_segmentation_cnn_forward)
    out = jax.block_until_ready(fwd(params, x))

    assert out.shape == (2, 1, 16, 16), out.shape
    assert out.dtype == jnp.float32
    assert bool(jnp.all(jnp.isfinite(out)))
    assert bool(jnp.all((out >= 0.0) & (out <= 1.0)))     # final sigmoid

    ref = jax.block_until_ready(jax.jit(reference_forward)(params, x))
    max_err = float(jnp.max(jnp.abs(out - ref)))
    assert max_err < 3e-2, f"kernel vs reference max abs error = {max_err}"

    print("KERNEL_OK")
</pallas_src>

<mosaic_0001>
module attributes {stable_mosaic.version = 11 : i64} {
  func.func @_fused_kernel(%arg0: i32, %arg1: memref<1x256x1xf32, #tpu.memory_space<vmem>>, %arg2: memref<256x2xf32, #tpu.memory_space<vmem>>, %arg3: memref<64x2xf32, #tpu.memory_space<vmem>>, %arg4: memref<16x2xf32, #tpu.memory_space<vmem>>, %arg5: memref<9x32xf32, #tpu.memory_space<vmem>>, %arg6: memref<1x32xf32, #tpu.memory_space<vmem>>, %arg7: memref<288x64xbf16, #tpu.memory_space<vmem>>, %arg8: memref<1x64xf32, #tpu.memory_space<vmem>>, %arg9: memref<576x128xbf16, #tpu.memory_space<vmem>>, %arg10: memref<1x128xf32, #tpu.memory_space<vmem>>, %arg11: memref<1152x64xbf16, #tpu.memory_space<vmem>>, %arg12: memref<1x64xf32, #tpu.memory_space<vmem>>, %arg13: memref<64x239xbf16, #tpu.memory_space<vmem>>, %arg14: memref<16x55xbf16, #tpu.memory_space<vmem>>, %arg15: memref<64x128xbf16, #tpu.memory_space<vmem>>, %arg16: memref<1x128xf32, #tpu.memory_space<vmem>>, %arg17: memref<128x16xbf16, #tpu.memory_space<vmem>>, %arg18: memref<1x16xf32, #tpu.memory_space<vmem>>, %arg19: memref<1x16x16xf32, #tpu.memory_space<vmem>>, %arg20: memref<290x1xf32, #tpu.memory_space<vmem>>, %arg21: memref<82x32xf32, #tpu.memory_space<vmem>>, %arg22: memref<26x64xf32, #tpu.memory_space<vmem>>, %arg23: memref<26x128xf32, #tpu.memory_space<vmem>>) attributes {dimension_semantics = [#tpu.dimension_semantics<parallel>], iteration_bounds = array<i64: 2>, scalar_prefetch = 0 : i64, scratch_operands = 4 : i64, tpu.core_type = #tpu.core_type<tc>, window_params = [{transform_indices = @transform_0, window_bounds = array<i64: 1, 256, 1>}, {pipeline_mode = #tpu.pipeline_mode<synchronous>, transform_indices = @transform_1, window_bounds = array<i64: 256, 2>}, {pipeline_mode = #tpu.pipeline_mode<synchronous>, transform_indices = @transform_2, window_bounds = array<i64: 64, 2>}, {pipeline_mode = #tpu.pipeline_mode<synchronous>, transform_indices = @transform_3, window_bounds = array<i64: 16, 2>}, {pipeline_mode = #tpu.pipeline_mode<synchronous>, transform_indices = @transform_4, window_bounds = array<i64: 9, 32>}, {pipeline_mode = #tpu.pipeline_mode<synchronous>, transform_indices = @transform_5, window_bounds = array<i64: 1, 32>}, {pipeline_mode = #tpu.pipeline_mode<synchronous>, transform_indices = @transform_6, window_bounds = array<i64: 288, 64>}, {pipeline_mode = #tpu.pipeline_mode<synchronous>, transform_indices = @transform_7, window_bounds = array<i64: 1, 64>}, {pipeline_mode = #tpu.pipeline_mode<synchronous>, transform_indices = @transform_8, window_bounds = array<i64: 576, 128>}, {pipeline_mode = #tpu.pipeline_mode<synchronous>, transform_indices = @transform_9, window_bounds = array<i64: 1, 128>}, {pipeline_mode = #tpu.pipeline_mode<synchronous>, transform_indices = @transform_10, window_bounds = array<i64: 1152, 64>}, {pipeline_mode = #tpu.pipeline_mode<synchronous>, transform_indices = @transform_11, window_bounds = array<i64: 1, 64>}, {pipeline_mode = #tpu.pipeline_mode<synchronous>, transform_indices = @transform_12, window_bounds = array<i64: 64, 239>}, {pipeline_mode = #tpu.pipeline_mode<synchronous>, transform_indices = @transform_13, window_bounds = array<i64: 16, 55>}, {pipeline_mode = #tpu.pipeline_mode<synchronous>, transform_indices = @transform_14, window_bounds = array<i64: 64, 128>}, {pipeline_mode = #tpu.pipeline_mode<synchronous>, transform_indices = @transform_15, window_bounds = array<i64: 1, 128>}, {pipeline_mode = #tpu.pipeline_mode<synchronous>, transform_indices = @transform_16, window_bounds = array<i64: 128, 16>}, {pipeline_mode = #tpu.pipeline_mode<synchronous>, transform_indices = @transform_17, window_bounds = array<i64: 1, 16>}, {transform_indices = @transform_18, window_bounds = array<i64: 1, 16, 16>}]} {
    %c0 = arith.constant 0 : index
    %c0_0 = arith.constant 0 : index
    %c0_1 = arith.constant 0 : index
    %0 = vector.load %arg1[%c0, %c0_0, %c0_1] : memref<1x256x1xf32, #tpu.memory_space<vmem>>, vector<1x256x1xf32>
    %1 = vector.shape_cast %0 : vector<1x256x1xf32> to vector<256x1xf32>
    %cst = arith.constant 0.000000e+00 : f32
    %2 = vector.broadcast %cst : f32 to vector<290x1xf32>
    %c0_2 = arith.constant 0 : index
    %c0_3 = arith.constant 0 : index
    %3 = vector.load %arg20[%c0_2, %c0_3] : memref<290x1xf32, #tpu.memory_space<vmem>>, vector<290x1xf32>
    tpu.vector_store %arg20[%c0_2, %c0_3], %2 {strides = array<i32>} : memref<290x1xf32, #tpu.memory_space<vmem>>, vector<290x1xf32>,
    %c17 = arith.constant 17 : index
    %c0_4 = arith.constant 0 : index
    %4 = vector.load %arg20[%c17, %c0_4] : memref<290x1xf32, #tpu.memory_space<vmem>>, vector<256x1xf32>
    tpu.vector_store %arg20[%c17, %c0_4], %1 {strides = array<i32>} : memref<290x1xf32, #tpu.memory_space<vmem>>, vector<256x1xf32>,
    %c0_5 = arith.constant 0 : index
    %c0_6 = arith.constant 0 : index
    %5 = vector.load %arg2[%c0_5, %c0_6] : memref<256x2xf32, #tpu.memory_space<vmem>>, vector<256x1xf32>
    %c0_7 = arith.constant 0 : index
    %c1 = arith.constant 1 : index
    %6 = vector.load %arg2[%c0_7, %c1] : memref<256x2xf32, #tpu.memory_space<vmem>>, vector<256x1xf32>
    %cst_8 = arith.constant 0.000000e+00 : f32
    %7 = vector.broadcast %cst_8 : f32 to vector<256x32xf32>
    %c0_9 = arith.constant 0 : index
    %c0_10 = arith.constant 0 : index
    %8 = vector.load %arg20[%c0_9, %c0_10] : memref<290x1xf32, #tpu.memory_space<vmem>>, vector<256x1xf32>
    %9 = arith.mulf %8, %5 : vector<256x1xf32>
    %c0_11 = arith.constant 0 : index
    %c0_12 = arith.constant 0 : index
    %10 = vector.load %arg5[%c0_11, %c0_12] : memref<9x32xf32, #tpu.memory_space<vmem>>, vector<1x32xf32>
    %11 = vector.broadcast %9 : vector<256x1xf32> to vector<256x32xf32>
    %12 = vector.broadcast %10 : vector<1x32xf32> to vector<256x32xf32>
    %13 = arith.mulf %11, %12 : vector<256x32xf32>
    %14 = arith.addf %7, %13 : vector<256x32xf32>
    %c1_13 = arith.constant 1 : index
    %c0_14 = arith.constant 0 : index
    %15 = vector.load %arg20[%c1_13, %c0_14] : memref<290x1xf32, #tpu.memory_space<vmem>>, vector<256x1xf32>
    %c1_15 = arith.constant 1 : index
    %c0_16 = arith.constant 0 : index
    %16 = vector.load %arg5[%c1_15, %c0_16] : memref<9x32xf32, #tpu.memory_space<vmem>>, vector<1x32xf32>
    %17 = vector.broadcast %15 : vector<256x1xf32> to vector<256x32xf32>
    %18 = vector.broadcast %16 : vector<1x32xf32> to vector<256x32xf32>
    %19 = arith.mulf %17, %18 : vector<256x32xf32>
    %20 = arith.addf %14, %19 : vector<256x32xf32>
    %c2 = arith.constant 2 : index
    %c0_17 = arith.constant 0 : index
    %21 = vector.load %arg20[%c2, %c0_17] : memref<290x1xf32, #tpu.memory_space<vmem>>, vector<256x1xf32>
    %22 = arith.mulf %21, %6 : vector<256x1xf32>
    %c2_18 = arith.constant 2 : index
    %c0_19 = arith.constant 0 : index
    %23 = vector.load %arg5[%c2_18, %c0_19] : memref<9x32xf32, #tpu.memory_space<vmem>>, vector<1x32xf32>
    %24 = vector.broadcast %22 : vector<256x1xf32> to vector<256x32xf32>
    %25 = vector.broadcast %23 : vector<1x32xf32> to vector<256x32xf32>
    %26 = arith.mulf %24, %25 : vector<256x32xf32>
    %27 = arith.addf %20, %26 : vector<256x32xf32>
    %c16 = arith.constant 16 : index
    %c0_20 = arith.constant 0 : index
    %28 = vector.load %arg20[%c16, %c0_20] : memref<290x1xf32, #tpu.memory_space<vmem>>, vector<256x1xf32>
    %29 = arith.mulf %28, %5 : vector<256x1xf32>
    %c3 = arith.constant 3 : index
    %c0_21 = arith.constant 0 : index
    %30 = vector.load %arg5[%c3, %c0_21] : memref<9x32xf32, #tpu.memory_space<vmem>>, vector<1x32xf32>
    %31 = vector.broadcast %29 : vector<256x1xf32> to vector<256x32xf32>
    %32 = vector.broadcast %30 : vector<1x32xf32> to vector<256x32xf32>
    %33 = arith.mulf %31, %32 : vector<256x32xf32>
    %34 = arith.addf %27, %33 : vector<256x32xf32>
    %c17_22 = arith.constant 17 : index
    %c0_23 = arith.constant 0 : index
    %35 = vector.load %arg20[%c17_22, %c0_23] : memref<290x1xf32, #tpu.memory_space<vmem>>, vector<256x1xf32>
    %c4 = arith.constant 4 : index
    %c0_24 = arith.constant 0 : index
    %36 = vector.load %arg5[%c4, %c0_24] : memref<9x32xf32, #tpu.memory_space<vmem>>, vector<1x32xf32>
    %37 = vector.broadcast %35 : vector<256x1xf32> to vector<256x32xf32>
    %38 = vector.broadcast %36 : vector<1x32xf32> to vector<256x32xf32>
    %39 = arith.mulf %37, %38 : vector<256x32xf32>
    %40 = arith.addf %34, %39 : vector<256x32xf32>
    %c18 = arith.constant 18 : index
    %c0_25 = arith.constant 0 : index
    %41 = vector.load %arg20[%c18, %c0_25] : memref<290x1xf32, #tpu.memory_space<vmem>>, vector<256x1xf32>
    %42 = arith.mulf %41, %6 : vector<256x1xf32>
    %c5 = arith.constant 5 : index
    %c0_26 = arith.constant 0 : index
    %43 = vector.load %arg5[%c5, %c0_26] : memref<9x32xf32, #tpu.memory_space<vmem>>, vector<1x32xf32>
    %44 = vector.broadcast %42 : vector<256x1xf32> to vector<256x32xf32>
    %45 = vector.broadcast %43 : vector<1x32xf32> to vector<256x32xf32>
    %46 = arith.mulf %44, %45 : vector<256x32xf32>
    %47 = arith.addf %40, %46 : vector<256x32xf32>
    %c32 = arith.constant 32 : index
    %c0_27 = arith.constant 0 : index
    %48 = vector.load %arg20[%c32, %c0_27] : memref<290x1xf32, #tpu.memory_space<vmem>>, vector<256x1xf32>
    %49 = arith.mulf %48, %5 : vector<256x1xf32>
    %c6 = arith.constant 6 : index
    %c0_28 = arith.constant 0 : index
    %50 = vector.load %arg5[%c6, %c0_28] : memref<9x32xf32, #tpu.memory_space<vmem>>, vector<1x32xf32>
    %51 = vector.broadcast %49 : vector<256x1xf32> to vector<256x32xf32>
    %52 = vector.broadcast %50 : vector<1x32xf32> to vector<256x32xf32>
    %53 = arith.mulf %51, %52 : vector<256x32xf32>
    %54 = arith.addf %47, %53 : vector<256x32xf32>
    %c33 = arith.constant 33 : index
    %c0_29 = arith.constant 0 : index
    %55 = vector.load %arg20[%c33, %c0_29] : memref<290x1xf32, #tpu.memory_space<vmem>>, vector<256x1xf32>
    %c7 = arith.constant 7 : index
    %c0_30 = arith.constant 0 : index
    %56 = vector.load %arg5[%c7, %c0_30] : memref<9x32xf32, #tpu.memory_space<vmem>>, vector<1x32xf32>
    %57 = vector.broadcast %55 : vector<256x1xf32> to vector<256x32xf32>
    %58 = vector.broadcast %56 : vector<1x32xf32> to vector<256x32xf32>
    %59 = arith.mulf %57, %58 : vector<256x32xf32>
    %60 = arith.addf %54, %59 : vector<256x32xf32>
    %c34 = arith.constant 34 : index
    %c0_31 = arith.constant 0 : index
    %61 = vector.load %arg20[%c34, %c0_31] : memref<290x1xf32, #tpu.memory_space<vmem>>, vector<256x1xf32>
    %62 = arith.mulf %61, %6 : vector<256x1xf32>
    %c8 = arith.constant 8 : index
    %c0_32 = arith.constant 0 : index
    %63 = vector.load %arg5[%c8, %c0_32] : memref<9x32xf32, #tpu.memory_space<vmem>>, vector<1x32xf32>
    %64 = vector.broadcast %62 : vector<256x1xf32> to vector<256x32xf32>
    %65 = vector.broadcast %63 : vector<1x32xf32> to vector<256x32xf32>
    %66 = arith.mulf %64, %65 : vector<256x32xf32>
    %67 = arith.addf %60, %66 : vector<256x32xf32>
    %c0_33 = arith.constant 0 : index
    %c0_34 = arith.constant 0 : index
    %68 = vector.load %arg6[%c0_33, %c0_34] : memref<1x32xf32, #tpu.memory_space<vmem>>, vector<1x32xf32>
    %69 = vector.broadcast %68 : vector<1x32xf32> to vector<256x32xf32>
    %70 = arith.addf %67, %69 : vector<256x32xf32>
    %cst_35 = arith.constant 0.000000e+00 : f32
    %71 = vector.broadcast %cst_35 : f32 to vector<256x32xf32>
    %72 = arith.maximumf %70, %71 : vector<256x32xf32>
    %73 = vector.extract_strided_slice %72 {offsets = [0, 0], sizes = [239, 32], strides = [1, 1]} : vector<256x32xf32> to vector<239x32xf32>
    %74 = vector.extract_strided_slice %72 {offsets = [1, 0], sizes = [239, 32], strides = [1, 1]} : vector<256x32xf32> to vector<239x32xf32>
    %75 = arith.maximumf %73, %74 : vector<239x32xf32>
    %76 = vector.extract_strided_slice %72 {offsets = [16, 0], sizes = [239, 32], strides = [1, 1]} : vector<256x32xf32> to vector<239x32xf32>
    %77 = vector.extract_strided_slice %72 {offsets = [17, 0], sizes = [239, 32], strides = [1, 1]} : vector<256x32xf32> to vector<239x32xf32>
    %78 = arith.maximumf %76, %77 : vector<239x32xf32>
    %79 = arith.maximumf %75, %78 : vector<239x32xf32>
    %c0_36 = arith.constant 0 : index
    %c0_37 = arith.constant 0 : index
    %80 = vector.load %arg13[%c0_36, %c0_37] : memref<64x239xbf16, #tpu.memory_space<vmem>>, vector<64x239xbf16>
    %81 = arith.truncf %79 : vector<239x32xf32> to vector<239x32xbf16>
    %cst_38 = arith.constant dense<0.000000e+00> : vector<64x32xf32>
    %82 = tpu.matmul %80, %81, %cst_38 {dimension_numbers = #tpu.dot_dimension_numbers<[1], [0], [0], [1], [0, 0, 1, 1], [], []>} : vector<64x239xbf16>, vector<239x32xbf16>, vector<64x32xf32> -> vector<64x32xf32>
    %cst_39 = arith.constant 0.000000e+00 : f32
    %83 = vector.broadcast %cst_39 : f32 to vector<82x32xf32>
    %c0_40 = arith.constant 0 : index
    %c0_41 = arith.constant 0 : index
    %84 = vector.load %arg21[%c0_40, %c0_41] : memref<82x32xf32, #tpu.memory_space<vmem>>, vector<82x32xf32>
    tpu.vector_store %arg21[%c0_40, %c0_41], %83 {strides = array<i32>} : memref<82x32xf32, #tpu.memory_space<vmem>>, vector<82x32xf32>,
    %c9 = arith.constant 9 : index
    %c0_42 = arith.constant 0 : index
    %85 = vector.load %arg21[%c9, %c0_42] : memref<82x32xf32, #tpu.memory_space<vmem>>, vector<64x32xf32>
    tpu.vector_store %arg21[%c9, %c0_42], %82 {strides = array<i32>} : memref<82x32xf32, #tpu.memory_space<vmem>>, vector<64x32xf32>,
    %c0_43 = arith.constant 0 : index
    %c0_44 = arith.constant 0 : index
    %86 = vector.load %arg3[%c0_43, %c0_44] : memref<64x2xf32, #tpu.memory_space<vmem>>, vector<64x1xf32>
    %c0_45 = arith.constant 0 : index
    %c1_46 = arith.constant 1 : index
    %87 = vector.load %arg3[%c0_45, %c1_46] : memref<64x2xf32, #tpu.memory_space<vmem>>, vector<64x1xf32>
    %cst_47 = arith.constant 0.000000e+00 : f32
    %88 = vector.broadcast %cst_47 : f32 to vector<64x64xf32>
    %c0_48 = arith.constant 0 : index
    %c0_49 = arith.constant 0 : index
    %89 = vector.load %arg21[%c0_48, %c0_49] : memref<82x32xf32, #tpu.memory_space<vmem>>, vector<64x32xf32>
    %90 = vector.broadcast %86 : vector<64x1xf32> to vector<64x32xf32>
    %91 = arith.mulf %89, %90 : vector<64x32xf32>
    %92 = arith.truncf %91 : vector<64x32xf32> to vector<64x32xbf16>
    %c0_50 = arith.constant 0 : index
    %c0_51 = arith.constant 0 : index
    %93 = vector.load %arg7[%c0_50, %c0_51] : memref<288x64xbf16, #tpu.memory_space<vmem>>, vector<32x64xbf16>
    %cst_52 = arith.constant dense<0.000000e+00> : vector<64x64xf32>
    %94 = tpu.matmul %92, %93, %cst_52 {dimension_numbers = #tpu.dot_dimension_numbers<[1], [0], [0], [1], [0, 0, 1, 1], [], []>} : vector<64x32xbf16>, vector<32x64xbf16>, vector<64x64xf32> -> vector<64x64xf32>
    %95 = arith.addf %88, %94 : vector<64x64xf32>
    %c1_53 = arith.constant 1 : index
    %c0_54 = arith.constant 0 : index
    %96 = vector.load %arg21[%c1_53, %c0_54] : memref<82x32xf32, #tpu.memory_space<vmem>>, vector<64x32xf32>
    %97 = arith.truncf %96 : vector<64x32xf32> to vector<64x32xbf16>
    %c32_55 = arith.constant 32 : index
    %c0_56 = arith.constant 0 : index
    %98 = vector.load %arg7[%c32_55, %c0_56] : memref<288x64xbf16, #tpu.memory_space<vmem>>, vector<32x64xbf16>
    %cst_57 = arith.constant dense<0.000000e+00> : vector<64x64xf32>
    %99 = tpu.matmul %97, %98, %cst_57 {dimension_numbers = #tpu.dot_dimension_numbers<[1], [0], [0], [1], [0, 0, 1, 1], [], []>} : vector<64x32xbf16>, vector<32x64xbf16>, vector<64x64xf32> -> vector<64x64xf32>
    %100 = arith.addf %95, %99 : vector<64x64xf32>
    %c2_58 = arith.constant 2 : index
    %c0_59 = arith.constant 0 : index
    %101 = vector.load %arg21[%c2_58, %c0_59] : memref<82x32xf32, #tpu.memory_space<vmem>>, vector<64x32xf32>
    %102 = vector.broadcast %87 : vector<64x1xf32> to vector<64x32xf32>
    %103 = arith.mulf %101, %102 : vector<64x32xf32>
    %104 = arith.truncf %103 : vector<64x32xf32> to vector<64x32xbf16>
    %c64 = arith.constant 64 : index
    %c0_60 = arith.constant 0 : index
    %105 = vector.load %arg7[%c64, %c0_60] : memref<288x64xbf16, #tpu.memory_space<vmem>>, vector<32x64xbf16>
    %cst_61 = arith.constant dense<0.000000e+00> : vector<64x64xf32>
    %106 = tpu.matmul %104, %105, %cst_61 {dimension_numbers = #tpu.dot_dimension_numbers<[1], [0], [0], [1], [0, 0, 1, 1], [], []>} : vector<64x32xbf16>, vector<32x64xbf16>, vector<64x64xf32> -> vector<64x64xf32>
    %107 = arith.addf %100, %106 : vector<64x64xf32>
    %c8_62 = arith.constant 8 : index
    %c0_63 = arith.constant 0 : index
    %108 = vector.load %arg21[%c8_62, %c0_63] : memref<82x32xf32, #tpu.memory_space<vmem>>, vector<64x32xf32>
    %109 = vector.broadcast %86 : vector<64x1xf32> to vector<64x32xf32>
    %110 = arith.mulf %108, %109 : vector<64x32xf32>
    %111 = arith.truncf %110 : vector<64x32xf32> to vector<64x32xbf16>
    %c96 = arith.constant 96 : index
    %c0_64 = arith.constant 0 : index
    %112 = vector.load %arg7[%c96, %c0_64] : memref<288x64xbf16, #tpu.memory_space<vmem>>, vector<32x64xbf16>
    %cst_65 = arith.constant dense<0.000000e+00> : vector<64x64xf32>
    %113 = tpu.matmul %111, %112, %cst_65 {dimension_numbers = #tpu.dot_dimension_numbers<[1], [0], [0], [1], [0, 0, 1, 1], [], []>} : vector<64x32xbf16>, vector<32x64xbf16>, vector<64x64xf32> -> vector<64x64xf32>
    %114 = arith.addf %107, %113 : vector<64x64xf32>
    %c9_66 = arith.constant 9 : index
    %c0_67 = arith.constant 0 : index
    %115 = vector.load %arg21[%c9_66, %c0_67] : memref<82x32xf32, #tpu.memory_space<vmem>>, vector<64x32xf32>
    %116 = arith.truncf %115 : vector<64x32xf32> to vector<64x32xbf16>
    %c128 = arith.constant 128 : index
    %c0_68 = arith.constant 0 : index
    %117 = vector.load %arg7[%c128, %c0_68] : memref<288x64xbf16, #tpu.memory_space<vmem>>, vector<32x64xbf16>
    %cst_69 = arith.constant dense<0.000000e+00> : vector<64x64xf32>
    %118 = tpu.matmul %116, %117, %cst_69 {dimension_numbers = #tpu.dot_dimension_numbers<[1], [0], [0], [1], [0, 0, 1, 1], [], []>} : vector<64x32xbf16>, vector<32x64xbf16>, vector<64x64xf32> -> vector<64x64xf32>
    %119 = arith.addf %114, %118 : vector<64x64xf32>
    %c10 = arith.constant 10 : index
    %c0_70 = arith.constant 0 : index
    %120 = vector.load %arg21[%c10, %c0_70] : memref<82x32xf32, #tpu.memory_space<vmem>>, vector<64x32xf32>
    %121 = vector.broadcast %87 : vector<64x1xf32> to vector<64x32xf32>
    %122 = arith.mulf %120, %121 : vector<64x32xf32>
    %123 = arith.truncf %122 : vector<64x32xf32> to vector<64x32xbf16>
    %c160 = arith.constant 160 : index
    %c0_71 = arith.constant 0 : index
    %124 = vector.load %arg7[%c160, %c0_71] : memref<288x64xbf16, #tpu.memory_space<vmem>>, vector<32x64xbf16>
    %cst_72 = arith.constant dense<0.000000e+00> : vector<64x64xf32>
    %125 = tpu.matmul %123, %124, %cst_72 {dimension_numbers = #tpu.dot_dimension_numbers<[1], [0], [0], [1], [0, 0, 1, 1], [], []>} : vector<64x32xbf16>, vector<32x64xbf16>, vector<64x64xf32> -> vector<64x64xf32>
    %126 = arith.addf %119, %125 : vector<64x64xf32>
    %c16_73 = arith.constant 16 : index
    %c0_74 = arith.constant 0 : index
    %127 = vector.load %arg21[%c16_73, %c0_74] : memref<82x32xf32, #tpu.memory_space<vmem>>, vector<64x32xf32>
    %128 = vector.broadcast %86 : vector<64x1xf32> to vector<64x32xf32>
    %129 = arith.mulf %127, %128 : vector<64x32xf32>
    %130 = arith.truncf %129 : vector<64x32xf32> to vector<64x32xbf16>
    %c192 = arith.constant 192 : index
    %c0_75 = arith.constant 0 : index
    %131 = vector.load %arg7[%c192, %c0_75] : memref<288x64xbf16, #tpu.memory_space<vmem>>, vector<32x64xbf16>
    %cst_76 = arith.constant dense<0.000000e+00> : vector<64x64xf32>
    %132 = tpu.matmul %130, %131, %cst_76 {dimension_numbers = #tpu.dot_dimension_numbers<[1], [0], [0], [1], [0, 0, 1, 1], [], []>} : vector<64x32xbf16>, vector<32x64xbf16>, vector<64x64xf32> -> vector<64x64xf32>
    %133 = arith.addf %126, %132 : vector<64x64xf32>
    %c17_77 = arith.constant 17 : index
    %c0_78 = arith.constant 0 : index
    %134 = vector.load %arg21[%c17_77, %c0_78] : memref<82x32xf32, #tpu.memory_space<vmem>>, vector<64x32xf32>
    %135 = arith.truncf %134 : vector<64x32xf32> to vector<64x32xbf16>
    %c224 = arith.constant 224 : index
    %c0_79 = arith.constant 0 : index
    %136 = vector.load %arg7[%c224, %c0_79] : memref<288x64xbf16, #tpu.memory_space<vmem>>, vector<32x64xbf16>
    %cst_80 = arith.constant dense<0.000000e+00> : vector<64x64xf32>
    %137 = tpu.matmul %135, %136, %cst_80 {dimension_numbers = #tpu.dot_dimension_numbers<[1], [0], [0], [1], [0, 0, 1, 1], [], []>} : vector<64x32xbf16>, vector<32x64xbf16>, vector<64x64xf32> -> vector<64x64xf32>
    %138 = arith.addf %133, %137 : vector<64x64xf32>
    %c18_81 = arith.constant 18 : index
    %c0_82 = arith.constant 0 : index
    %139 = vector.load %arg21[%c18_81, %c0_82] : memref<82x32xf32, #tpu.memory_space<vmem>>, vector<64x32xf32>
    %140 = vector.broadcast %87 : vector<64x1xf32> to vector<64x32xf32>
    %141 = arith.mulf %139, %140 : vector<64x32xf32>
    %142 = arith.truncf %141 : vector<64x32xf32> to vector<64x32xbf16>
    %c256 = arith.constant 256 : index
    %c0_83 = arith.constant 0 : index
    %143 = vector.load %arg7[%c256, %c0_83] : memref<288x64xbf16, #tpu.memory_space<vmem>>, vector<32x64xbf16>
    %cst_84 = arith.constant dense<0.000000e+00> : vector<64x64xf32>
    %144 = tpu.matmul %142, %143, %cst_84 {dimension_numbers = #tpu.dot_dimension_numbers<[1], [0], [0], [1], [0, 0, 1, 1], [], []>} : vector<64x32xbf16>, vector<32x64xbf16>, vector<64x64xf32> -> vector<64x64xf32>
    %145 = arith.addf %138, %144 : vector<64x64xf32>
    %c0_85 = arith.constant 0 : index
    %c0_86 = arith.constant 0 : index
    %146 = vector.load %arg8[%c0_85, %c0_86] : memref<1x64xf32, #tpu.memory_space<vmem>>, vector<1x64xf32>
    %147 = vector.broadcast %146 : vector<1x64xf32> to vector<64x64xf32>
    %148 = arith.addf %145, %147 : vector<64x64xf32>
    %cst_87 = arith.constant 0.000000e+00 : f32
    %149 = vector.broadcast %cst_87 : f32 to vector<64x64xf32>
    %150 = arith.maximumf %148, %149 : vector<64x64xf32>
    %151 = vector.extract_strided_slice %150 {offsets = [0, 0], sizes = [55, 64], strides = [1, 1]} : vector<64x64xf32> to vector<55x64xf32>
    %152 = vector.extract_strided_slice %150 {offsets = [1, 0], sizes = [55, 64], strides = [1, 1]} : vector<64x64xf32> to vector<55x64xf32>
    %153 = arith.maximumf %151, %152 : vector<55x64xf32>
    %154 = vector.extract_strided_slice %150 {offsets = [8, 0], sizes = [55, 64], strides = [1, 1]} : vector<64x64xf32> to vector<55x64xf32>
    %155 = vector.extract_strided_slice %150 {offsets = [9, 0], sizes = [55, 64], strides = [1, 1]} : vector<64x64xf32> to vector<55x64xf32>
    %156 = arith.maximumf %154, %155 : vector<55x64xf32>
    %157 = arith.maximumf %153, %156 : vector<55x64xf32>
    %c0_88 = arith.constant 0 : index
    %c0_89 = arith.constant 0 : index
    %158 = vector.load %arg14[%c0_88, %c0_89] : memref<16x55xbf16, #tpu.memory_space<vmem>>, vector<16x55xbf16>
    %159 = arith.truncf %157 : vector<55x64xf32> to vector<55x64xbf16>
    %cst_90 = arith.constant dense<0.000000e+00> : vector<16x64xf32>
    %160 = tpu.matmul %158, %159, %cst_90 {dimension_numbers = #tpu.dot_dimension_numbers<[1], [0], [0], [1], [0, 0, 1, 1], [], []>} : vector<16x55xbf16>, vector<55x64xbf16>, vector<16x64xf32> -> vector<16x64xf32>
    %cst_91 = arith.constant 0.000000e+00 : f32
    %161 = vector.broadcast %cst_91 : f32 to vector<26x64xf32>
    %c0_92 = arith.constant 0 : index
    %c0_93 = arith.constant 0 : index
    %162 = vector.load %arg22[%c0_92, %c0_93] : memref<26x64xf32, #tpu.memory_space<vmem>>, vector<26x64xf32>
    tpu.vector_store %arg22[%c0_92, %c0_93], %161 {strides = array<i32>} : memref<26x64xf32, #tpu.memory_space<vmem>>, vector<26x64xf32>,
    %c5_94 = arith.constant 5 : index
    %c0_95 = arith.constant 0 : index
    %163 = vector.load %arg22[%c5_94, %c0_95] : memref<26x64xf32, #tpu.memory_space<vmem>>, vector<16x64xf32>
    tpu.vector_store %arg22[%c5_94, %c0_95], %160 {strides = array<i32>} : memref<26x64xf32, #tpu.memory_space<vmem>>, vector<16x64xf32>,
    %c0_96 = arith.constant 0 : index
    %c0_97 = arith.constant 0 : index
    %164 = vector.load %arg4[%c0_96, %c0_97] : memref<16x2xf32, #tpu.memory_space<vmem>>, vector<16x1xf32>
    %c0_98 = arith.constant 0 : index
    %c1_99 = arith.constant 1 : index
    %165 = vector.load %arg4[%c0_98, %c1_99] : memref<16x2xf32, #tpu.memory_space<vmem>>, vector<16x1xf32>
    %cst_100 = arith.constant 0.000000e+00 : f32
    %166 = vector.broadcast %cst_100 : f32 to vector<16x128xf32>
    %c0_101 = arith.constant 0 : index
    %c0_102 = arith.constant 0 : index
    %167 = vector.load %arg22[%c0_101, %c0_102] : memref<26x64xf32, #tpu.memory_space<vmem>>, vector<16x64xf32>
    %168 = vector.broadcast %164 : vector<16x1xf32> to vector<16x64xf32>
    %169 = arith.mulf %167, %168 : vector<16x64xf32>
    %170 = arith.truncf %169 : vector<16x64xf32> to vector<16x64xbf16>
    %c0_103 = arith.constant 0 : index
    %c0_104 = arith.constant 0 : index
    %171 = vector.load %arg9[%c0_103, %c0_104] : memref<576x128xbf16, #tpu.memory_space<vmem>>, vector<64x128xbf16>
    %cst_105 = arith.constant dense<0.000000e+00> : vector<16x128xf32>
    %172 = tpu.matmul %170, %171, %cst_105 {dimension_numbers = #tpu.dot_dimension_numbers<[1], [0], [0], [1], [0, 0, 1, 1], [], []>} : vector<16x64xbf16>, vector<64x128xbf16>, vector<16x128xf32> -> vector<16x128xf32>
    %173 = arith.addf %166, %172 : vector<16x128xf32>
    %c1_106 = arith.constant 1 : index
    %c0_107 = arith.constant 0 : index
    %174 = vector.load %arg22[%c1_106, %c0_107] : memref<26x64xf32, #tpu.memory_space<vmem>>, vector<16x64xf32>
    %175 = arith.truncf %174 : vector<16x64xf32> to vector<16x64xbf16>
    %c64_108 = arith.constant 64 : index
    %c0_109 = arith.constant 0 : index
    %176 = vector.load %arg9[%c64_108, %c0_109] : memref<576x128xbf16, #tpu.memory_space<vmem>>, vector<64x128xbf16>
    %cst_110 = arith.constant dense<0.000000e+00> : vector<16x128xf32>
    %177 = tpu.matmul %175, %176, %cst_110 {dimension_numbers = #tpu.dot_dimension_numbers<[1], [0], [0], [1], [0, 0, 1, 1], [], []>} : vector<16x64xbf16>, vector<64x128xbf16>, vector<16x128xf32> -> vector<16x128xf32>
    %178 = arith.addf %173, %177 : vector<16x128xf32>
    %c2_111 = arith.constant 2 : index
    %c0_112 = arith.constant 0 : index
    %179 = vector.load %arg22[%c2_111, %c0_112] : memref<26x64xf32, #tpu.memory_space<vmem>>, vector<16x64xf32>
    %180 = vector.broadcast %165 : vector<16x1xf32> to vector<16x64xf32>
    %181 = arith.mulf %179, %180 : vector<16x64xf32>
    %182 = arith.truncf %181 : vector<16x64xf32> to vector<16x64xbf16>
    %c128_113 = arith.constant 128 : index
    %c0_114 = arith.constant 0 : index
    %183 = vector.load %arg9[%c128_113, %c0_114] : memref<576x128xbf16, #tpu.memory_space<vmem>>, vector<64x128xbf16>
    %cst_115 = arith.constant dense<0.000000e+00> : vector<16x128xf32>
    %184 = tpu.matmul %182, %183, %cst_115 {dimension_numbers = #tpu.dot_dimension_numbers<[1], [0], [0], [1], [0, 0, 1, 1], [], []>} : vector<16x64xbf16>, vector<64x128xbf16>, vector<16x128xf32> -> vector<16x128xf32>
    %185 = arith.addf %178, %184 : vector<16x128xf32>
    %c4_116 = arith.constant 4 : index
    %c0_117 = arith.constant 0 : index
    %186 = vector.load %arg22[%c4_116, %c0_117] : memref<26x64xf32, #tpu.memory_space<vmem>>, vector<16x64xf32>
    %187 = vector.broadcast %164 : vector<16x1xf32> to vector<16x64xf32>
    %188 = arith.mulf %186, %187 : vector<16x64xf32>
    %189 = arith.truncf %188 : vector<16x64xf32> to vector<16x64xbf16>
    %c192_118 = arith.constant 192 : index
    %c0_119 = arith.constant 0 : index
    %190 = vector.load %arg9[%c192_118, %c0_119] : memref<576x128xbf16, #tpu.memory_space<vmem>>, vector<64x128xbf16>
    %cst_120 = arith.constant dense<0.000000e+00> : vector<16x128xf32>
    %191 = tpu.matmul %189, %190, %cst_120 {dimension_numbers = #tpu.dot_dimension_numbers<[1], [0], [0], [1], [0, 0, 1, 1], [], []>} : vector<16x64xbf16>, vector<64x128xbf16>, vector<16x128xf32> -> vector<16x128xf32>
    %192 = arith.addf %185, %191 : vector<16x128xf32>
    %c5_121 = arith.constant 5 : index
    %c0_122 = arith.constant 0 : index
    %193 = vector.load %arg22[%c5_121, %c0_122] : memref<26x64xf32, #tpu.memory_space<vmem>>, vector<16x64xf32>
    %194 = arith.truncf %193 : vector<16x64xf32> to vector<16x64xbf16>
    %c256_123 = arith.constant 256 : index
    %c0_124 = arith.constant 0 : index
    %195 = vector.load %arg9[%c256_123, %c0_124] : memref<576x128xbf16, #tpu.memory_space<vmem>>, vector<64x128xbf16>
    %cst_125 = arith.constant dense<0.000000e+00> : vector<16x128xf32>
    %196 = tpu.matmul %194, %195, %cst_125 {dimension_numbers = #tpu.dot_dimension_numbers<[1], [0], [0], [1], [0, 0, 1, 1], [], []>} : vector<16x64xbf16>, vector<64x128xbf16>, vector<16x128xf32> -> vector<16x128xf32>
    %197 = arith.addf %192, %196 : vector<16x128xf32>
    %c6_126 = arith.constant 6 : index
    %c0_127 = arith.constant 0 : index
    %198 = vector.load %arg22[%c6_126, %c0_127] : memref<26x64xf32, #tpu.memory_space<vmem>>, vector<16x64xf32>
    %199 = vector.broadcast %165 : vector<16x1xf32> to vector<16x64xf32>
    %200 = arith.mulf %198, %199 : vector<16x64xf32>
    %201 = arith.truncf %200 : vector<16x64xf32> to vector<16x64xbf16>
    %c320 = arith.constant 320 : index
    %c0_128 = arith.constant 0 : index
    %202 = vector.load %arg9[%c320, %c0_128] : memref<576x128xbf16, #tpu.memory_space<vmem>>, vector<64x128xbf16>
    %cst_129 = arith.constant dense<0.000000e+00> : vector<16x128xf32>
    %203 = tpu.matmul %201, %202, %cst_129 {dimension_numbers = #tpu.dot_dimension_numbers<[1], [0], [0], [1], [0, 0, 1, 1], [], []>} : vector<16x64xbf16>, vector<64x128xbf16>, vector<16x128xf32> -> vector<16x128xf32>
    %204 = arith.addf %197, %203 : vector<16x128xf32>
    %c8_130 = arith.constant 8 : index
    %c0_131 = arith.constant 0 : index
    %205 = vector.load %arg22[%c8_130, %c0_131] : memref<26x64xf32, #tpu.memory_space<vmem>>, vector<16x64xf32>
    %206 = vector.broadcast %164 : vector<16x1xf32> to vector<16x64xf32>
    %207 = arith.mulf %205, %206 : vector<16x64xf32>
    %208 = arith.truncf %207 : vector<16x64xf32> to vector<16x64xbf16>
    %c384 = arith.constant 384 : index
    %c0_132 = arith.constant 0 : index
    %209 = vector.load %arg9[%c384, %c0_132] : memref<576x128xbf16, #tpu.memory_space<vmem>>, vector<64x128xbf16>
    %cst_133 = arith.constant dense<0.000000e+00> : vector<16x128xf32>
    %210 = tpu.matmul %208, %209, %cst_133 {dimension_numbers = #tpu.dot_dimension_numbers<[1], [0], [0], [1], [0, 0, 1, 1], [], []>} : vector<16x64xbf16>, vector<64x128xbf16>, vector<16x128xf32> -> vector<16x128xf32>
    %211 = arith.addf %204, %210 : vector<16x128xf32>
    %c9_134 = arith.constant 9 : index
    %c0_135 = arith.constant 0 : index
    %212 = vector.load %arg22[%c9_134, %c0_135] : memref<26x64xf32, #tpu.memory_space<vmem>>, vector<16x64xf32>
    %213 = arith.truncf %212 : vector<16x64xf32> to vector<16x64xbf16>
    %c448 = arith.constant 448 : index
    %c0_136 = arith.constant 0 : index
    %214 = vector.load %arg9[%c448, %c0_136] : memref<576x128xbf16, #tpu.memory_space<vmem>>, vector<64x128xbf16>
    %cst_137 = arith.constant dense<0.000000e+00> : vector<16x128xf32>
    %215 = tpu.matmul %213, %214, %cst_137 {dimension_numbers = #tpu.dot_dimension_numbers<[1], [0], [0], [1], [0, 0, 1, 1], [], []>} : vector<16x64xbf16>, vector<64x128xbf16>, vector<16x128xf32> -> vector<16x128xf32>
    %216 = arith.addf %211, %215 : vector<16x128xf32>
    %c10_138 = arith.constant 10 : index
    %c0_139 = arith.constant 0 : index
    %217 = vector.load %arg22[%c10_138, %c0_139] : memref<26x64xf32, #tpu.memory_space<vmem>>, vector<16x64xf32>
    %218 = vector.broadcast %165 : vector<16x1xf32> to vector<16x64xf32>
    %219 = arith.mulf %217, %218 : vector<16x64xf32>
    %220 = arith.truncf %219 : vector<16x64xf32> to vector<16x64xbf16>
    %c512 = arith.constant 512 : index
    %c0_140 = arith.constant 0 : index
    %221 = vector.load %arg9[%c512, %c0_140] : memref<576x128xbf16, #tpu.memory_space<vmem>>, vector<64x128xbf16>
    %cst_141 = arith.constant dense<0.000000e+00> : vector<16x128xf32>
    %222 = tpu.matmul %220, %221, %cst_141 {dimension_numbers = #tpu.dot_dimension_numbers<[1], [0], [0], [1], [0, 0, 1, 1], [], []>} : vector<16x64xbf16>, vector<64x128xbf16>, vector<16x128xf32> -> vector<16x128xf32>
    %223 = arith.addf %216, %222 : vector<16x128xf32>
    %c0_142 = arith.constant 0 : index
    %c0_143 = arith.constant 0 : index
    %224 = vector.load %arg10[%c0_142, %c0_143] : memref<1x128xf32, #tpu.memory_space<vmem>>, vector<1x128xf32>
    %225 = vector.broadcast %224 : vector<1x128xf32> to vector<16x128xf32>
    %226 = arith.addf %223, %225 : vector<16x128xf32>
    %cst_144 = arith.constant 0.000000e+00 : f32
    %227 = vector.broadcast %cst_144 : f32 to vector<16x128xf32>
    %228 = arith.maximumf %226, %227 : vector<16x128xf32>
    %cst_145 = arith.constant 0.000000e+00 : f32
    %229 = vector.broadcast %cst_145 : f32 to vector<26x128xf32>
    %c0_146 = arith.constant 0 : index
    %c0_147 = arith.constant 0 : index
    %230 = vector.load %arg23[%c0_146, %c0_147] : memref<26x128xf32, #tpu.memory_space<vmem>>, vector<26x128xf32>
    tpu.vector_store %arg23[%c0_146, %c0_147], %229 {strides = array<i32>} : memref<26x128xf32, #tpu.memory_space<vmem>>, vector<26x128xf32>,
    %c5_148 = arith.constant 5 : index
    %c0_149 = arith.constant 0 : index
    %231 = vector.load %arg23[%c5_148, %c0_149] : memref<26x128xf32, #tpu.memory_space<vmem>>, vector<16x128xf32>
    tpu.vector_store %arg23[%c5_148, %c0_149], %228 {strides = array<i32>} : memref<26x128xf32, #tpu.memory_space<vmem>>, vector<16x128xf32>,
    %c0_150 = arith.constant 0 : index
    %c0_151 = arith.constant 0 : index
    %232 = vector.load %arg4[%c0_150, %c0_151] : memref<16x2xf32, #tpu.memory_space<vmem>>, vector<16x1xf32>
    %c0_152 = arith.constant 0 : index
    %c1_153 = arith.constant 1 : index
    %233 = vector.load %arg4[%c0_152, %c1_153] : memref<16x2xf32, #tpu.memory_space<vmem>>, vector<16x1xf32>
    %cst_154 = arith.constant 0.000000e+00 : f32
    %234 = vector.broadcast %cst_154 : f32 to vector<16x64xf32>
    %c0_155 = arith.constant 0 : index
    %c0_156 = arith.constant 0 : index
    %235 = vector.load %arg23[%c0_155, %c0_156] : memref<26x128xf32, #tpu.memory_space<vmem>>, vector<16x128xf32>
    %236 = vector.broadcast %232 : vector<16x1xf32> to vector<16x128xf32>
    %237 = arith.mulf %235, %236 : vector<16x128xf32>
    %238 = arith.truncf %237 : vector<16x128xf32> to vector<16x128xbf16>
    %c0_157 = arith.constant 0 : index
    %c0_158 = arith.constant 0 : index
    %239 = vector.load %arg11[%c0_157, %c0_158] : memref<1152x64xbf16, #tpu.memory_space<vmem>>, vector<128x64xbf16>
    %cst_159 = arith.constant dense<0.000000e+00> : vector<16x64xf32>
    %240 = tpu.matmul %238, %239, %cst_159 {dimension_numbers = #tpu.dot_dimension_numbers<[1], [0], [0], [1], [0, 0, 1, 1], [], []>} : vector<16x128xbf16>, vector<128x64xbf16>, vector<16x64xf32> -> vector<16x64xf32>
    %241 = arith.addf %234, %240 : vector<16x64xf32>
    %c1_160 = arith.constant 1 : index
    %c0_161 = arith.constant 0 : index
    %242 = vector.load %arg23[%c1_160, %c0_161] : memref<26x128xf32, #tpu.memory_space<vmem>>, vector<16x128xf32>
    %243 = arith.truncf %242 : vector<16x128xf32> to vector<16x128xbf16>
    %c128_162 = arith.constant 128 : index
    %c0_163 = arith.constant 0 : index
    %244 = vector.load %arg11[%c128_162, %c0_163] : memref<1152x64xbf16, #tpu.memory_space<vmem>>, vector<128x64xbf16>
    %cst_164 = arith.constant dense<0.000000e+00> : vector<16x64xf32>
    %245 = tpu.matmul %243, %244, %cst_164 {dimension_numbers = #tpu.dot_dimension_numbers<[1], [0], [0], [1], [0, 0, 1, 1], [], []>} : vector<16x128xbf16>, vector<128x64xbf16>, vector<16x64xf32> -> vector<16x64xf32>
    %246 = arith.addf %241, %245 : vector<16x64xf32>
    %c2_165 = arith.constant 2 : index
    %c0_166 = arith.constant 0 : index
    %247 = vector.load %arg23[%c2_165, %c0_166] : memref<26x128xf32, #tpu.memory_space<vmem>>, vector<16x128xf32>
    %248 = vector.broadcast %233 : vector<16x1xf32> to vector<16x128xf32>
    %249 = arith.mulf %247, %248 : vector<16x128xf32>
    %250 = arith.truncf %249 : vector<16x128xf32> to vector<16x128xbf16>
    %c256_167 = arith.constant 256 : index
    %c0_168 = arith.constant 0 : index
    %251 = vector.load %arg11[%c256_167, %c0_168] : memref<1152x64xbf16, #tpu.memory_space<vmem>>, vector<128x64xbf16>
    %cst_169 = arith.constant dense<0.000000e+00> : vector<16x64xf32>
    %252 = tpu.matmul %250, %251, %cst_169 {dimension_numbers = #tpu.dot_dimension_numbers<[1], [0], [0], [1], [0, 0, 1, 1], [], []>} : vector<16x128xbf16>, vector<128x64xbf16>, vector<16x64xf32> -> vector<16x64xf32>
    %253 = arith.addf %246, %252 : vector<16x64xf32>
    %c4_170 = arith.constant 4 : index
    %c0_171 = arith.constant 0 : index
    %254 = vector.load %arg23[%c4_170, %c0_171] : memref<26x128xf32, #tpu.memory_space<vmem>>, vector<16x128xf32>
    %255 = vector.broadcast %232 : vector<16x1xf32> to vector<16x128xf32>
    %256 = arith.mulf %254, %255 : vector<16x128xf32>
    %257 = arith.truncf %256 : vector<16x128xf32> to vector<16x128xbf16>
    %c384_172 = arith.constant 384 : index
    %c0_173 = arith.constant 0 : index
    %258 = vector.load %arg11[%c384_172, %c0_173] : memref<1152x64xbf16, #tpu.memory_space<vmem>>, vector<128x64xbf16>
    %cst_174 = arith.constant dense<0.000000e+00> : vector<16x64xf32>
    %259 = tpu.matmul %257, %258, %cst_174 {dimension_numbers = #tpu.dot_dimension_numbers<[1], [0], [0], [1], [0, 0, 1, 1], [], []>} : vector<16x128xbf16>, vector<128x64xbf16>, vector<16x64xf32> -> vector<16x64xf32>
    %260 = arith.addf %253, %259 : vector<16x64xf32>
    %c5_175 = arith.constant 5 : index
    %c0_176 = arith.constant 0 : index
    %261 = vector.load %arg23[%c5_175, %c0_176] : memref<26x128xf32, #tpu.memory_space<vmem>>, vector<16x128xf32>
    %262 = arith.truncf %261 : vector<16x128xf32> to vector<16x128xbf16>
    %c512_177 = arith.constant 512 : index
    %c0_178 = arith.constant 0 : index
    %263 = vector.load %arg11[%c512_177, %c0_178] : memref<1152x64xbf16, #tpu.memory_space<vmem>>, vector<128x64xbf16>
    %cst_179 = arith.constant dense<0.000000e+00> : vector<16x64xf32>
    %264 = tpu.matmul %262, %263, %cst_179 {dimension_numbers = #tpu.dot_dimension_numbers<[1], [0], [0], [1], [0, 0, 1, 1], [], []>} : vector<16x128xbf16>, vector<128x64xbf16>, vector<16x64xf32> -> vector<16x64xf32>
    %265 = arith.addf %260, %264 : vector<16x64xf32>
    %c6_180 = arith.constant 6 : index
    %c0_181 = arith.constant 0 : index
    %266 = vector.load %arg23[%c6_180, %c0_181] : memref<26x128xf32, #tpu.memory_space<vmem>>, vector<16x128xf32>
    %267 = vector.broadcast %233 : vector<16x1xf32> to vector<16x128xf32>
    %268 = arith.mulf %266, %267 : vector<16x128xf32>
    %269 = arith.truncf %268 : vector<16x128xf32> to vector<16x128xbf16>
    %c640 = arith.constant 640 : index
    %c0_182 = arith.constant 0 : index
    %270 = vector.load %arg11[%c640, %c0_182] : memref<1152x64xbf16, #tpu.memory_space<vmem>>, vector<128x64xbf16>
    %cst_183 = arith.constant dense<0.000000e+00> : vector<16x64xf32>
    %271 = tpu.matmul %269, %270, %cst_183 {dimension_numbers = #tpu.dot_dimension_numbers<[1], [0], [0], [1], [0, 0, 1, 1], [], []>} : vector<16x128xbf16>, vector<128x64xbf16>, vector<16x64xf32> -> vector<16x64xf32>
    %272 = arith.addf %265, %271 : vector<16x64xf32>
    %c8_184 = arith.constant 8 : index
    %c0_185 = arith.constant 0 : index
    %273 = vector.load %arg23[%c8_184, %c0_185] : memref<26x128xf32, #tpu.memory_space<vmem>>, vector<16x128xf32>
    %274 = vector.broadcast %232 : vector<16x1xf32> to vector<16x128xf32>
    %275 = arith.mulf %273, %274 : vector<16x128xf32>
    %276 = arith.truncf %275 : vector<16x128xf32> to vector<16x128xbf16>
    %c768 = arith.constant 768 : index
    %c0_186 = arith.constant 0 : index
    %277 = vector.load %arg11[%c768, %c0_186] : memref<1152x64xbf16, #tpu.memory_space<vmem>>, vector<128x64xbf16>
    %cst_187 = arith.constant dense<0.000000e+00> : vector<16x64xf32>
    %278 = tpu.matmul %276, %277, %cst_187 {dimension_numbers = #tpu.dot_dimension_numbers<[1], [0], [0], [1], [0, 0, 1, 1], [], []>} : vector<16x128xbf16>, vector<128x64xbf16>, vector<16x64xf32> -> vector<16x64xf32>
    %279 = arith.addf %272, %278 : vector<16x64xf32>
    %c9_188 = arith.constant 9 : index
    %c0_189 = arith.constant 0 : index
    %280 = vector.load %arg23[%c9_188, %c0_189] : memref<26x128xf32, #tpu.memory_space<vmem>>, vector<16x128xf32>
    %281 = arith.truncf %280 : vector<16x128xf32> to vector<16x128xbf16>
    %c896 = arith.constant 896 : index
    %c0_190 = arith.constant 0 : index
    %282 = vector.load %arg11[%c896, %c0_190] : memref<1152x64xbf16, #tpu.memory_space<vmem>>, vector<128x64xbf16>
    %cst_191 = arith.constant dense<0.000000e+00> : vector<16x64xf32>
    %283 = tpu.matmul %281, %282, %cst_191 {dimension_numbers = #tpu.dot_dimension_numbers<[1], [0], [0], [1], [0, 0, 1, 1], [], []>} : vector<16x128xbf16>, vector<128x64xbf16>, vector<16x64xf32> -> vector<16x64xf32>
    %284 = arith.addf %279, %283 : vector<16x64xf32>
    %c10_192 = arith.constant 10 : index
    %c0_193 = arith.constant 0 : index
    %285 = vector.load %arg23[%c10_192, %c0_193] : memref<26x128xf32, #tpu.memory_space<vmem>>, vector<16x128xf32>
    %286 = vector.broadcast %233 : vector<16x1xf32> to vector<16x128xf32>
    %287 = arith.mulf %285, %286 : vector<16x128xf32>
    %288 = arith.truncf %287 : vector<16x128xf32> to vector<16x128xbf16>
    %c1024 = arith.constant 1024 : index
    %c0_194 = arith.constant 0 : index
    %289 = vector.load %arg11[%c1024, %c0_194] : memref<1152x64xbf16, #tpu.memory_space<vmem>>, vector<128x64xbf16>
    %cst_195 = arith.constant dense<0.000000e+00> : vector<16x64xf32>
    %290 = tpu.matmul %288, %289, %cst_195 {dimension_numbers = #tpu.dot_dimension_numbers<[1], [0], [0], [1], [0, 0, 1, 1], [], []>} : vector<16x128xbf16>, vector<128x64xbf16>, vector<16x64xf32> -> vector<16x64xf32>
    %291 = arith.addf %284, %290 : vector<16x64xf32>
    %c0_196 = arith.constant 0 : index
    %c0_197 = arith.constant 0 : index
    %292 = vector.load %arg12[%c0_196, %c0_197] : memref<1x64xf32, #tpu.memory_space<vmem>>, vector<1x64xf32>
    %293 = vector.broadcast %292 : vector<1x64xf32> to vector<16x64xf32>
    %294 = arith.addf %291, %293 : vector<16x64xf32>
    %cst_198 = arith.constant 0.000000e+00 : f32
    %295 = vector.broadcast %cst_198 : f32 to vector<16x64xf32>
    %296 = arith.maximumf %294, %295 : vector<16x64xf32>
    %297 = arith.truncf %296 : vector<16x64xf32> to vector<16x64xbf16>
    %c0_199 = arith.constant 0 : index
    %c0_200 = arith.constant 0 : index
    %298 = vector.load %arg15[%c0_199, %c0_200] : memref<64x128xbf16, #tpu.memory_space<vmem>>, vector<64x128xbf16>
    %cst_201 = arith.constant dense<0.000000e+00> : vector<16x128xf32>
    %299 = tpu.matmul %297, %298, %cst_201 {dimension_numbers = #tpu.dot_dimension_numbers<[1], [0], [0], [1], [0, 0, 1, 1], [], []>} : vector<16x64xbf16>, vector<64x128xbf16>, vector<16x128xf32> -> vector<16x128xf32>
    %c0_202 = arith.constant 0 : index
    %c0_203 = arith.constant 0 : index
    %300 = vector.load %arg16[%c0_202, %c0_203] : memref<1x128xf32, #tpu.memory_space<vmem>>, vector<1x128xf32>
    %301 = vector.broadcast %300 : vector<1x128xf32> to vector<16x128xf32>
    %302 = arith.addf %299, %301 : vector<16x128xf32>
    %cst_204 = arith.constant 0.000000e+00 : f32
    %303 = vector.broadcast %cst_204 : f32 to vector<16x128xf32>
    %304 = arith.maximumf %302, %303 : vector<16x128xf32>
    %305 = arith.truncf %304 : vector<16x128xf32> to vector<16x128xbf16>
    %c0_205 = arith.constant 0 : index
    %c0_206 = arith.constant 0 : index
    %306 = vector.load %arg17[%c0_205, %c0_206] : memref<128x16xbf16, #tpu.memory_space<vmem>>, vector<128x16xbf16>
    %cst_207 = arith.constant dense<0.000000e+00> : vector<16x16xf32>
    %307 = tpu.matmul %305, %306, %cst_207 {dimension_numbers = #tpu.dot_dimension_numbers<[1], [0], [0], [1], [0, 0, 1, 1], [], []>} : vector<16x128xbf16>, vector<128x16xbf16>, vector<16x16xf32> -> vector<16x16xf32>
    %c0_208 = arith.constant 0 : index
    %c0_209 = arith.constant 0 : index
    %308 = vector.load %arg18[%c0_208, %c0_209] : memref<1x16xf32, #tpu.memory_space<vmem>>, vector<1x16xf32>
    %309 = vector.broadcast %308 : vector<1x16xf32> to vector<16x16xf32>
    %310 = arith.addf %307, %309 : vector<16x16xf32>
    %cst_210 = arith.constant 0.000000e+00 : f32
    %311 = vector.broadcast %cst_210 : f32 to vector<16x16xf32>
    %312 = arith.subf %311, %310 : vector<16x16xf32>
    %313 = math.exp %312 : vector<16x16xf32>
    %cst_211 = arith.constant 1.000000e+00 : f32
    %314 = vector.broadcast %cst_211 : f32 to vector<16x16xf32>
    %315 = arith.addf %314, %313 : vector<16x16xf32>
    %316 = tpu.reciprocal %315 : vector<16x16xf32> -> vector<16x16xf32>
    %c0_212 = arith.constant 0 : index
    %c0_213 = arith.constant 0 : index
    %c0_214 = arith.constant 0 : index
    %317 = vector.load %arg19[%c0_212, %c0_213, %c0_214] : memref<1x16x16xf32, #tpu.memory_space<vmem>>, vector<1x16x16xf32>
    %318 = vector.shape_cast %317 : vector<1x16x16xf32> to vector<16x16xf32>
    %319 = vector.shape_cast %316 : vector<16x16xf32> to vector<1x16x16xf32>
    tpu.vector_store %arg19[%c0_212, %c0_213, %c0_214], %319 {strides = array<i32>} : memref<1x16x16xf32, #tpu.memory_space<vmem>>, vector<1x16x16xf32>,
    return
  }
  func.func @transform_0(%arg0: i32) -> (i32, i32, i32) {
    %c0_i32 = arith.constant 0 : i32
    %c0_i32_0 = arith.constant 0 : i32
    %c0_i32_1 = arith.constant 0 : i32
    return %arg0, %c0_i32, %c0_i32_0 : i32, i32, i32
  }
  func.func @transform_1(%arg0: i32) -> (i32, i32) {
    %c0_i32 = arith.constant 0 : i32
    %c0_i32_0 = arith.constant 0 : i32
    %c0_i32_1 = arith.constant 0 : i32
    return %c0_i32, %c0_i32_0 : i32, i32
  }
  func.func @transform_2(%arg0: i32) -> (i32, i32) {
    %c0_i32 = arith.constant 0 : i32
    %c0_i32_0 = arith.constant 0 : i32
    %c0_i32_1 = arith.constant 0 : i32
    return %c0_i32, %c0_i32_0 : i32, i32
  }
  func.func @transform_3(%arg0: i32) -> (i32, i32) {
    %c0_i32 = arith.constant 0 : i32
    %c0_i32_0 = arith.constant 0 : i32
    %c0_i32_1 = arith.constant 0 : i32
    return %c0_i32, %c0_i32_0 : i32, i32
  }
  func.func @transform_4(%arg0: i32) -> (i32, i32) {
    %c0_i32 = arith.constant 0 : i32
    %c0_i32_0 = arith.constant 0 : i32
    %c0_i32_1 = arith.constant 0 : i32
    return %c0_i32, %c0_i32_0 : i32, i32
  }
  func.func @transform_5(%arg0: i32) -> (i32, i32) {
    %c0_i32 = arith.constant 0 : i32
    %c0_i32_0 = arith.constant 0 : i32
    %c0_i32_1 = arith.constant 0 : i32
    return %c0_i32, %c0_i32_0 : i32, i32
  }
  func.func @transform_6(%arg0: i32) -> (i32, i32) {
    %c0_i32 = arith.constant 0 : i32
    %c0_i32_0 = arith.constant 0 : i32
    %c0_i32_1 = arith.constant 0 : i32
    return %c0_i32, %c0_i32_0 : i32, i32
  }
  func.func @transform_7(%arg0: i32) -> (i32, i32) {
    %c0_i32 = arith.constant 0 : i32
    %c0_i32_0 = arith.constant 0 : i32
    %c0_i32_1 = arith.constant 0 : i32
    return %c0_i32, %c0_i32_0 : i32, i32
  }
  func.func @transform_8(%arg0: i32) -> (i32, i32) {
    %c0_i32 = arith.constant 0 : i32
    %c0_i32_0 = arith.constant 0 : i32
    %c0_i32_1 = arith.constant 0 : i32
    return %c0_i32, %c0_i32_0 : i32, i32
  }
  func.func @transform_9(%arg0: i32) -> (i32, i32) {
    %c0_i32 = arith.constant 0 : i32
    %c0_i32_0 = arith.constant 0 : i32
    %c0_i32_1 = arith.constant 0 : i32
    return %c0_i32, %c0_i32_0 : i32, i32
  }
  func.func @transform_10(%arg0: i32) -> (i32, i32) {
    %c0_i32 = arith.constant 0 : i32
    %c0_i32_0 = arith.constant 0 : i32
    %c0_i32_1 = arith.constant 0 : i32
    return %c0_i32, %c0_i32_0 : i32, i32
  }
  func.func @transform_11(%arg0: i32) -> (i32, i32) {
    %c0_i32 = arith.constant 0 : i32
    %c0_i32_0 = arith.constant 0 : i32
    %c0_i32_1 = arith.constant 0 : i32
    return %c0_i32, %c0_i32_0 : i32, i32
  }
  func.func @transform_12(%arg0: i32) -> (i32, i32) {
    %c0_i32 = arith.constant 0 : i32
    %c0_i32_0 = arith.constant 0 : i32
    %c0_i32_1 = arith.constant 0 : i32
    return %c0_i32, %c0_i32_0 : i32, i32
  }
  func.func @transform_13(%arg0: i32) -> (i32, i32) {
    %c0_i32 = arith.constant 0 : i32
    %c0_i32_0 = arith.constant 0 : i32
    %c0_i32_1 = arith.constant 0 : i32
    return %c0_i32, %c0_i32_0 : i32, i32
  }
  func.func @transform_14(%arg0: i32) -> (i32, i32) {
    %c0_i32 = arith.constant 0 : i32
    %c0_i32_0 = arith.constant 0 : i32
    %c0_i32_1 = arith.constant 0 : i32
    return %c0_i32, %c0_i32_0 : i32, i32
  }
  func.func @transform_15(%arg0: i32) -> (i32, i32) {
    %c0_i32 = arith.constant 0 : i32
    %c0_i32_0 = arith.constant 0 : i32
    %c0_i32_1 = arith.constant 0 : i32
    return %c0_i32, %c0_i32_0 : i32, i32
  }
  func.func @transform_16(%arg0: i32) -> (i32, i32) {
    %c0_i32 = arith.constant 0 : i32
    %c0_i32_0 = arith.constant 0 : i32
    %c0_i32_1 = arith.constant 0 : i32
    return %c0_i32, %c0_i32_0 : i32, i32
  }
  func.func @transform_17(%arg0: i32) -> (i32, i32) {
    %c0_i32 = arith.constant 0 : i32
    %c0_i32_0 = arith.constant 0 : i32
    %c0_i32_1 = arith.constant 0 : i32
    return %c0_i32, %c0_i32_0 : i32, i32
  }
  func.func @transform_18(%arg0: i32) -> (i32, i32, i32) {
    %c0_i32 = arith.constant 0 : i32
    %c0_i32_0 = arith.constant 0 : i32
    %c0_i32_1 = arith.constant 0 : i32
    return %arg0, %c0_i32, %c0_i32_0 : i32, i32, i32
  }
}

</mosaic_0001>

<llo_original>
// kernel: tile.13
$region0: #{tile.13}
  #allocation0 [shape = 's32[1]{0}', space=sflag, size = 0x4, scoped, tag = 'scoped memory for tile.13']
  %s0 = inlined_call_operand.vmem [shape: f32[32], index: 0, kind: input, shape index: {}]
  %s1 = inlined_call_operand.vmem [shape: f32[4,32], index: 1, kind: output, shape index: {}]
  // Predicated region
  $region2: #{tile.13} parent=0 // pred_check
    _
  $region3: #{tile.13} parent=0 // pred_check_branch
    %3 = sbr.rel (0) target = $region5
  $region4: #{tile.13} parent=0 // pred_region
    _
  $region5: #{tile.13} parent=0 // pred_fallthru
    _
  %v4 = vld [vmem:[%s0] ss:$0 sm:$0xff]
  %5 = vst [vmem:[%s1] sm:$0xf] %v4

// kernel: tile.14
$region0: #{tile.14}
  %s0 = inlined_call_operand.vmem [shape: f32[4,32], index: 0, kind: input, shape index: {}]
  %s1 = inlined_call_operand.vmem [shape: f32[1,128], index: 1, kind: output, shape index: {}]
  $region1: #{tile.14} parent=0
    #allocation0 [shape = 'u8[4096]{0}', space=vmem, size = 0x1000, scoped, tag = 'scoped mem for output reshape']
    #allocation1 [shape = 'u8[4096]{0}', space=vmem, size = 0x1000, scoped, tag = 'scoped mem for input reshape']
    %s3 = sshllo.u32 0, 4
    %v4 = vld [vmem:[%s0] sm:%s3]
    %5 = vst [vmem:[#allocation1] sm:%s3] %v4
    %v6 = vld [vmem:[#allocation1] sm:$0x1]
    %vm7 = vcmask 261120
    %8 = vst.msk [vmem:[#allocation0] sm:$0x1] %vm7, %v6
    %s9 = scalar_lea.vmem [#allocation1], 3
    %v10 = vld [vmem:[%s9] sm:$0x1]
    %11 = vrot.lane.b32.xlu0 %v10, 96
    %v12 = vpop.permute.xlu0 %11
    %vm13 = vcmask 1048320
    %14 = vst.msk [vmem:[#allocation0] sm:$0x1] %vm13, %v12
    %s15 = scalar_lea.vmem [#allocation1], 2
    %v16 = vld [vmem:[%s15] sm:$0x1]
    %17 = vrot.lane.b32.xlu0 %v16, 64
    %v18 = vpop.permute.xlu0 %17
    %vm19 = vcmask 785920
    %20 = vst.msk [vmem:[#allocation0] sm:$0x1] %vm19, %v18
    %s21 = scalar_lea.vmem [#allocation1], 1
    %v22 = vld [vmem:[%s21] sm:$0x1]
    %23 = vrot.lane.b32.xlu0 %v22, 32
    %v24 = vpop.permute.xlu0 %23
    %vm25 = vcmask 523520
    %26 = vst.msk [vmem:[#allocation0] sm:$0x1] %vm25, %v24
    %s28 = sshllo.u32 0, 1
    %v30 = vld [vmem:[#allocation0] sm:%s28]
    %s31 = sshllo.u32 0, 1
    %32 = vst [vmem:[%s1] sm:%s31] %v30

// kernel: edge_segmentation_cnn_forward.1
$region0: #{edge_segmentation_cnn_forward.1}
  #allocation0 [shape = 'u32[]', space=smem, size = 0x4, offset = 0x4, fixed_abs, tag = 'smem constant byte address 0x4 - core index']
  #allocation1 [shape = 'u32[144,128]{1,0:T(1,128)}', space=vmem, size = 0x12000, scoped, tag = 'internal scratch']
  #allocation2 [shape = 'f32[290,1]{1,0:T(8,128)}', space=vmem, size = 0x25000, scoped, tag = 'scratch operand']
  #allocation3 [shape = 'f32[82,32]{1,0:T(8,128)}', space=vmem, size = 0xb000, scoped, tag = 'scratch operand']
  #allocation4 [shape = 'f32[26,64]{1,0:T(8,128)}', space=vmem, size = 0x4000, scoped, tag = 'scratch operand']
  #allocation5 [shape = 'f32[26,128]{1,0:T(8,128)}', space=vmem, size = 0x4000, scoped, tag = 'scratch operand']
  %s0 = inlined_call_operand.vmem [shape: f32[2,256,1], index: 0, kind: input, shape index: {}]
  %s1 = inlined_call_operand.vmem [shape: f32[256,2], index: 1, kind: input, shape index: {}]
  %s2 = inlined_call_operand.vmem [shape: f32[64,2], index: 2, kind: input, shape index: {}]
  %s3 = inlined_call_operand.vmem [shape: f32[16,2], index: 3, kind: input, shape index: {}]
  %s4 = inlined_call_operand.vmem [shape: f32[9,32], index: 4, kind: input, shape index: {}]
  %s5 = inlined_call_operand.vmem [shape: f32[1,32], index: 5, kind: input, shape index: {}]
  %s6 = inlined_call_operand.vmem [shape: bf16[288,64], index: 6, kind: input, shape index: {}]
  %s7 = inlined_call_operand.vmem [shape: f32[1,64], index: 7, kind: input, shape index: {}]
  %s8 = inlined_call_operand.vmem [shape: bf16[576,128], index: 8, kind: input, shape index: {}]
  %s9 = inlined_call_operand.vmem [shape: f32[1,128], index: 9, kind: input, shape index: {}]
  %s10 = inlined_call_operand.vmem [shape: bf16[1152,64], index: 10, kind: input, shape index: {}]
  %s11 = inlined_call_operand.vmem [shape: f32[1,64], index: 11, kind: input, shape index: {}]
  %s12 = inlined_call_operand.vmem [shape: bf16[64,239], index: 12, kind: input, shape index: {}]
  %s13 = inlined_call_operand.vmem [shape: bf16[16,55], index: 13, kind: input, shape index: {}]
  %s14 = inlined_call_operand.vmem [shape: bf16[64,128], index: 14, kind: input, shape index: {}]
  %s15 = inlined_call_operand.vmem [shape: f32[1,128], index: 15, kind: input, shape index: {}]
  %s16 = inlined_call_operand.vmem [shape: bf16[128,16], index: 16, kind: input, shape index: {}]
  %s17 = inlined_call_operand.vmem [shape: f32[1,16], index: 17, kind: input, shape index: {}]
  %s18 = inlined_call_operand.vmem [shape: f32[2,16,16], index: 18, kind: output, shape index: {}]
  %s19 = sld [smem:[#allocation0]]
  $region105: #{edge_segmentation_cnn_forward.1} parent=0
    _
  %s21 = ssub.s32 1, %s19
  %s22 = scalar_select 0, %s21, %s19
  loop: start=0, step=1, limit=4
  $region2: #{edge_segmentation_cnn_forward.1} parent=0 // loop_pre_header
    _
  $region3: #{edge_segmentation_cnn_forward.1} parent=0 // loop_header
    %s24 = sphi 0, %s28
    %p25 = scmp.ge.s32.totalorder %s24, 4
    %s34 = sphi 0, %s36
    %s37 = sphi 0, %s34
    %s38 = sphi 0, %s37
    %s54 = sphi 0, %s38
    %s58 = sphi 0, %s58
    %s60 = sphi 0, %s58
    %s61 = sphi 0, %s60
    %s75 = sphi 0, %s61
    %s79 = sphi 0, %s79
    %s81 = sphi 0, %s79
    %s82 = sphi 0, %s81
    %s96 = sphi 0, %s82
    %s100 = sphi 0, %s100
    %s102 = sphi 0, %s100
    %s103 = sphi 0, %s102
    %s117 = sphi 0, %s103
    %s121 = sphi 0, %s121
    %s123 = sphi 0, %s121
    %s124 = sphi 0, %s123
    %s138 = sphi 0, %s124
    %s142 = sphi 0, %s142
    %s144 = sphi 0, %s142
    %s145 = sphi 0, %s144
    %s159 = sphi 0, %s145
    %s163 = sphi 0, %s163
    %s165 = sphi 0, %s163
    %s166 = sphi 0, %s165
    %s180 = sphi 0, %s166
    %s184 = sphi 0, %s184
    %s186 = sphi 0, %s184
    %s187 = sphi 0, %s186
    %s201 = sphi 0, %s187
    %s205 = sphi 0, %s205
    %s207 = sphi 0, %s205
    %s208 = sphi 0, %s207
    %s222 = sphi 0, %s208
    %s226 = sphi 0, %s226
    %s228 = sphi 0, %s226
    %s229 = sphi 0, %s228
    %s243 = sphi 0, %s229
    %s247 = sphi 0, %s247
    %s249 = sphi 0, %s247
    %s250 = sphi 0, %s249
    %s264 = sphi 0, %s250
    %s268 = sphi 0, %s268
    %s270 = sphi 0, %s268
    %s271 = sphi 0, %s270
    %s285 = sphi 0, %s271
    %s289 = sphi 0, %s289
    %s291 = sphi 0, %s289
    %s292 = sphi 0, %s291
    %s306 = sphi 0, %s292
    %s310 = sphi 0, %s310
    %s312 = sphi 0, %s310
    %s313 = sphi 0, %s312
    %s327 = sphi 0, %s313
    %s331 = sphi 0, %s331
    %s333 = sphi 0, %s331
    %s334 = sphi 0, %s333
    %s348 = sphi 0, %s334
    %s352 = sphi 0, %s352
    %s354 = sphi 0, %s352
    %s355 = sphi 0, %s354
    %s369 = sphi 0, %s355
    %s373 = sphi 0, %s373
    %s375 = sphi 0, %s373
    %s376 = sphi 0, %s375
    %s390 = sphi 0, %s376
    %s394 = sphi 0, %s394
    %s396 = sphi 0, %s394
    %s397 = sphi 0, %s396
    %s411 = sphi 0, %s397
    %s417 = sphi 0, %s419
    %s420 = sphi 0, %s417
    %s421 = sphi 0, %s420
    %s437 = sphi 0, %s421
  $region4: #{edge_segmentation_cnn_forward.1} parent=0 // loop_header_branch
    %27 = sbr.rel (%p25) target = $region8
  $region5: #{edge_segmentation_cnn_forward.1} parent=0 // loop_body
    %s29 = ssub.s32 %s24, 1
    %s30 = ssub.s32 %s24, 2
    %s31 = sadd.s32 %s24, 1
    %s32 = ssub.s32 %s24, %s31
    %p33 = scmp.eq.s32.totalorder %s32, 0
    %s35 = sadd.s32 %s34, 1
    %s36 = scalar_select %p33, %s34, %s35
    %p39 = pneg %p33
    %p40 = scmp.eq.s32.totalorder %s24, 1
    %p41 = por %p39, %p40
    %p42 = scmp.ne.s32.totalorder %s34, %s37
    %p43 = scmp.eq.s32.totalorder %s24, 0
    %p44 = por %p42, %p43
    %p45 = scmp.ne.s32.totalorder %s34, %s37
    %p46 = scmp.eq.s32.totalorder %s29, 1
    %p47 = por %p45, %p46
    %p48 = scmp.ne.s32.totalorder %s37, %s38
    %p49 = scmp.eq.s32.totalorder %s29, 0
    %p50 = por %p48, %p49
    %p51 = scmp.ne.s32.totalorder %s37, %s38
    %p52 = scmp.eq.s32.totalorder %s30, 1
    %p53 = por %p51, %p52
    %p55 = scmp.ne.s32.totalorder %s38, %s54
    %p56 = scmp.eq.s32.totalorder %s30, 0
    %p57 = por %p55, %p56
    %s59 = sadd.s32 %s58, 1
    %p62 = scmp.eq.s32.totalorder %s24, 1
    %p63 = scmp.ne.s32.totalorder %s58, %s60
    %p64 = scmp.eq.s32.totalorder %s24, 0
    %p65 = por %p63, %p64
    %p66 = scmp.ne.s32.totalorder %s58, %s60
    %p67 = scmp.eq.s32.totalorder %s29, 1
    %p68 = por %p66, %p67
    %p69 = scmp.ne.s32.totalorder %s60, %s61
    %p70 = scmp.eq.s32.totalorder %s29, 0
    %p71 = por %p69, %p70
    %p72 = scmp.ne.s32.totalorder %s60, %s61
    %p73 = scmp.eq.s32.totalorder %s30, 1
    %p74 = por %p72, %p73
    %p76 = scmp.ne.s32.totalorder %s61, %s75
    %p77 = scmp.eq.s32.totalorder %s30, 0
    %p78 = por %p76, %p77
    %s80 = sadd.s32 %s79, 1
    %p83 = scmp.eq.s32.totalorder %s24, 1
    %p84 = scmp.ne.s32.totalorder %s79, %s81
    %p85 = scmp.eq.s32.totalorder %s24, 0
    %p86 = por %p84, %p85
    %p87 = scmp.ne.s32.totalorder %s79, %s81
    %p88 = scmp.eq.s32.totalorder %s29, 1
    %p89 = por %p87, %p88
    %p90 = scmp.ne.s32.totalorder %s81, %s82
    %p91 = scmp.eq.s32.totalorder %s29, 0
    %p92 = por %p90, %p91
    %p93 = scmp.ne.s32.totalorder %s81, %s82
    %p94 = scmp.eq.s32.totalorder %s30, 1
    %p95 = por %p93, %p94
    %p97 = scmp.ne.s32.totalorder %s82, %s96
    %p98 = scmp.eq.s32.totalorder %s30, 0
    %p99 = por %p97, %p98
    %s101 = sadd.s32 %s100, 1
    %p104 = scmp.eq.s32.totalorder %s24, 1
    %p105 = scmp.ne.s32.totalorder %s100, %s102
    %p106 = scmp.eq.s32.totalorder %s24, 0
    %p107 = por %p105, %p106
    %p108 = scmp.ne.s32.totalorder %s100, %s102
    %p109 = scmp.eq.s32.totalorder %s29, 1
    %p110 = por %p108, %p109
    %p111 = scmp.ne.s32.totalorder %s102, %s103
    %p112 = scmp.eq.s32.totalorder %s29, 0
    %p113 = por %p111, %p112
    %p114 = scmp.ne.s32.totalorder %s102, %s103
    %p115 = scmp.eq.s32.totalorder %s30, 1
    %p116 = por %p114, %p115
    %p118 = scmp.ne.s32.totalorder %s103, %s117
    %p119 = scmp.eq.s32.totalorder %s30, 0
    %p120 = por %p118, %p119
    %s122 = sadd.s32 %s121, 1
    %p125 = scmp.eq.s32.totalorder %s24, 1
    %p126 = scmp.ne.s32.totalorder %s121, %s123
    %p127 = scmp.eq.s32.totalorder %s24, 0
    %p128 = por %p126, %p127
    %p129 = scmp.ne.s32.totalorder %s121, %s123
    %p130 = scmp.eq.s32.totalorder %s29, 1
    %p131 = por %p129, %p130
    %p132 = scmp.ne.s32.totalorder %s123, %s124
    %p133 = scmp.eq.s32.totalorder %s29, 0
    %p134 = por %p132, %p133
    %p135 = scmp.ne.s32.totalorder %s123, %s124
    %p136 = scmp.eq.s32.totalorder %s30, 1
    %p137 = por %p135, %p136
    %p139 = scmp.ne.s32.totalorder %s124, %s138
    %p140 = scmp.eq.s32.totalorder %s30, 0
    %p141 = por %p139, %p140
    %s143 = sadd.s32 %s142, 1
    %p146 = scmp.eq.s32.totalorder %s24, 1
    %p147 = scmp.ne.s32.totalorder %s142, %s144
    %p148 = scmp.eq.s32.totalorder %s24, 0
    %p149 = por %p147, %p148
    %p150 = scmp.ne.s32.totalorder %s142, %s144
    %p151 = scmp.eq.s32.totalorder %s29, 1
    %p152 = por %p150, %p151
    %p153 = scmp.ne.s32.totalorder %s144, %s145
    %p154 = scmp.eq.s32.totalorder %s29, 0
    %p155 = por %p153, %p154
    %p156 = scmp.ne.s32.totalorder %s144, %s145
    %p157 = scmp.eq.s32.totalorder %s30, 1
    %p158 = por %p156, %p157
    %p160 = scmp.ne.s32.totalorder %s145, %s159
    %p161 = scmp.eq.s32.totalorder %s30, 0
    %p162 = por %p160, %p161
    %s164 = sadd.s32 %s163, 1
    %p167 = scmp.eq.s32.totalorder %s24, 1
    %p168 = scmp.ne.s32.totalorder %s163, %s165
    %p169 = scmp.eq.s32.totalorder %s24, 0
    %p170 = por %p168, %p169
    %p171 = scmp.ne.s32.totalorder %s163, %s165
    %p172 = scmp.eq.s32.totalorder %s29, 1
    %p173 = por %p171, %p172
    %p174 = scmp.ne.s32.totalorder %s165, %s166
    %p175 = scmp.eq.s32.totalorder %s29, 0
    %p176 = por %p174, %p175
    %p177 = scmp.ne.s32.totalorder %s165, %s166
    %p178 = scmp.eq.s32.totalorder %s30, 1
    %p179 = por %p177, %p178
    %p181 = scmp.ne.s32.totalorder %s166, %s180
    %p182 = scmp.eq.s32.totalorder %s30, 0
    %p183 = por %p181, %p182
    %s185 = sadd.s32 %s184, 1
    %p188 = scmp.eq.s32.totalorder %s24, 1
    %p189 = scmp.ne.s32.totalorder %s184, %s186
    %p190 = scmp.eq.s32.totalorder %s24, 0
    %p191 = por %p189, %p190
    %p192 = scmp.ne.s32.totalorder %s184, %s186
    %p193 = scmp.eq.s32.totalorder %s29, 1
    %p194 = por %p192, %p193
    %p195 = scmp.ne.s32.totalorder %s186, %s187
    %p196 = scmp.eq.s32.totalorder %s29, 0
    %p197 = por %p195, %p196
    %p198 = scmp.ne.s32.totalorder %s186, %s187
    %p199 = scmp.eq.s32.totalorder %s30, 1
    %p200 = por %p198, %p199
    %p202 = scmp.ne.s32.totalorder %s187, %s201
    %p203 = scmp.eq.s32.totalorder %s30, 0
    %p204 = por %p202, %p203
    %s206 = sadd.s32 %s205, 1
    %p209 = scmp.eq.s32.totalorder %s24, 1
    %p210 = scmp.ne.s32.totalorder %s205, %s207
    %p211 = scmp.eq.s32.totalorder %s24, 0
    %p212 = por %p210, %p211
    %p213 = scmp.ne.s32.totalorder %s205, %s207
    %p214 = scmp.eq.s32.totalorder %s29, 1
    %p215 = por %p213, %p214
    %p216 = scmp.ne.s32.totalorder %s207, %s208
    %p217 = scmp.eq.s32.totalorder %s29, 0
    %p218 = por %p216, %p217
    %p219 = scmp.ne.s32.totalorder %s207, %s208
    %p220 = scmp.eq.s32.totalorder %s30, 1
    %p221 = por %p219, %p220
    %p223 = scmp.ne.s32.totalorder %s208, %s222
    %p224 = scmp.eq.s32.totalorder %s30, 0
    %p225 = por %p223, %p224
    %s227 = sadd.s32 %s226, 1
    %p230 = scmp.eq.s32.totalorder %s24, 1
    %p231 = scmp.ne.s32.totalorder %s226, %s228
    %p232 = scmp.eq.s32.totalorder %s24, 0
    %p233 = por %p231, %p232
    %p234 = scmp.ne.s32.totalorder %s226, %s228
    %p235 = scmp.eq.s32.totalorder %s29, 1
    %p236 = por %p234, %p235
    %p237 = scmp.ne.s32.totalorder %s228, %s229
    %p238 = scmp.eq.s32.totalorder %s29, 0
    %p239 = por %p237, %p238
    %p240 = scmp.ne.s32.totalorder %s228, %s229
    %p241 = scmp.eq.s32.totalorder %s30, 1
    %p242 = por %p240, %p241
    %p244 = scmp.ne.s32.totalorder %s229, %s243
    %p245 = scmp.eq.s32.totalorder %s30, 0
    %p246 = por %p244, %p245
    %s248 = sadd.s32 %s247, 1
    %p251 = scmp.eq.s32.totalorder %s24, 1
    %p252 = scmp.ne.s32.totalorder %s247, %s249
    %p253 = scmp.eq.s32.totalorder %s24, 0
    %p254 = por %p252, %p253
    %p255 = scmp.ne.s32.totalorder %s247, %s249
    %p256 = scmp.eq.s32.totalorder %s29, 1
    %p257 = por %p255, %p256
    %p258 = scmp.ne.s32.totalorder %s249, %s250
    %p259 = scmp.eq.s32.totalorder %s29, 0
    %p260 = por %p258, %p259
    %p261 = scmp.ne.s32.totalorder %s249, %s250
    %p262 = scmp.eq.s32.totalorder %s30, 1
    %p263 = por %p261, %p262
    %p265 = scmp.ne.s32.totalorder %s250, %s264
    %p266 = scmp.eq.s32.totalorder %s30, 0
    %p267 = por %p265, %p266
    %s269 = sadd.s32 %s268, 1
    %p272 = scmp.eq.s32.totalorder %s24, 1
    %p273 = scmp.ne.s32.totalorder %s268, %s270
    %p274 = scmp.eq.s32.totalorder %s24, 0
    %p275 = por %p273, %p274
    %p276 = scmp.ne.s32.totalorder %s268, %s270
    %p277 = scmp.eq.s32.totalorder %s29, 1
    %p278 = por %p276, %p277
    %p279 = scmp.ne.s32.totalorder %s270, %s271
    %p280 = scmp.eq.s32.totalorder %s29, 0
    %p281 = por %p279, %p280
    %p282 = scmp.ne.s32.totalorder %s270, %s271
    %p283 = scmp.eq.s32.totalorder %s30, 1
    %p284 = por %p282, %p283
    %p286 = scmp.ne.s32.totalorder %s271, %s285
    %p287 = scmp.eq.s32.totalorder %s30, 0
    %p288 = por %p286, %p287
    %s290 = sadd.s32 %s289, 1
    %p293 = scmp.eq.s32.totalorder %s24, 1
    %p294 = scmp.ne.s32.totalorder %s289, %s291
    %p295 = scmp.eq.s32.totalorder %s24, 0
    %p296 = por %p294, %p295
    %p297 = scmp.ne.s32.totalorder %s289, %s291
    %p298 = scmp.eq.s32.totalorder %s29, 1
    %p299 = por %p297, %p298
    %p300 = scmp.ne.s32.totalorder %s291, %s292
    %p301 = scmp.eq.s32.totalorder %s29, 0
    %p302 = por %p300, %p301
    %p303 = scmp.ne.s32.totalorder %s291, %s292
    %p304 = scmp.eq.s32.totalorder %s30, 1
    %p305 = por %p303, %p304
    %p307 = scmp.ne.s32.totalorder %s292, %s306
    %p308 = scmp.eq.s32.totalorder %s30, 0
    %p309 = por %p307, %p308
    %s311 = sadd.s32 %s310, 1
    %p314 = scmp.eq.s32.totalorder %s24, 1
    %p315 = scmp.ne.s32.totalorder %s310, %s312
    %p316 = scmp.eq.s32.totalorder %s24, 0
    %p317 = por %p315, %p316
    %p318 = scmp.ne.s32.totalorder %s310, %s312
    %p319 = scmp.eq.s32.totalorder %s29, 1
    %p320 = por %p318, %p319
    %p321 = scmp.ne.s32.totalorder %s312, %s313
    %p322 = scmp.eq.s32.totalorder %s29, 0
    %p323 = por %p321, %p322
    %p324 = scmp.ne.s32.totalorder %s312, %s313
    %p325 = scmp.eq.s32.totalorder %s30, 1
    %p326 = por %p324, %p325
    %p328 = scmp.ne.s32.totalorder %s313, %s327
    %p329 = scmp.eq.s32.totalorder %s30, 0
    %p330 = por %p328, %p329
    %s332 = sadd.s32 %s331, 1
    %p335 = scmp.eq.s32.totalorder %s24, 1
    %p336 = scmp.ne.s32.totalorder %s331, %s333
    %p337 = scmp.eq.s32.totalorder %s24, 0
    %p338 = por %p336, %p337
    %p339 = scmp.ne.s32.totalorder %s331, %s333
    %p340 = scmp.eq.s32.totalorder %s29, 1
    %p341 = por %p339, %p340
    %p342 = scmp.ne.s32.totalorder %s333, %s334
    %p343 = scmp.eq.s32.totalorder %s29, 0
    %p344 = por %p342, %p343
    %p345 = scmp.ne.s32.totalorder %s333, %s334
    %p346 = scmp.eq.s32.totalorder %s30, 1
    %p347 = por %p345, %p346
    %p349 = scmp.ne.s32.totalorder %s334, %s348
    %p350 = scmp.eq.s32.totalorder %s30, 0
    %p351 = por %p349, %p350
    %s353 = sadd.s32 %s352, 1
    %p356 = scmp.eq.s32.totalorder %s24, 1
    %p357 = scmp.ne.s32.totalorder %s352, %s354
    %p358 = scmp.eq.s32.totalorder %s24, 0
    %p359 = por %p357, %p358
    %p360 = scmp.ne.s32.totalorder %s352, %s354
    %p361 = scmp.eq.s32.totalorder %s29, 1
    %p362 = por %p360, %p361
    %p363 = scmp.ne.s32.totalorder %s354, %s355
    %p364 = scmp.eq.s32.totalorder %s29, 0
    %p365 = por %p363, %p364
    %p366 = scmp.ne.s32.totalorder %s354, %s355
    %p367 = scmp.eq.s32.totalorder %s30, 1
    %p368 = por %p366, %p367
    %p370 = scmp.ne.s32.totalorder %s355, %s369
    %p371 = scmp.eq.s32.totalorder %s30, 0
    %p372 = por %p370, %p371
    %s374 = sadd.s32 %s373, 1
    %p377 = scmp.eq.s32.totalorder %s24, 1
    %p378 = scmp.ne.s32.totalorder %s373, %s375
    %p379 = scmp.eq.s32.totalorder %s24, 0
    %p380 = por %p378, %p379
    %p381 = scmp.ne.s32.totalorder %s373, %s375
    %p382 = scmp.eq.s32.totalorder %s29, 1
    %p383 = por %p381, %p382
    %p384 = scmp.ne.s32.totalorder %s375, %s376
    %p385 = scmp.eq.s32.totalorder %s29, 0
    %p386 = por %p384, %p385
    %p387 = scmp.ne.s32.totalorder %s375, %s376
    %p388 = scmp.eq.s32.totalorder %s30, 1
    %p389 = por %p387, %p388
    %p391 = scmp.ne.s32.totalorder %s376, %s390
    %p392 = scmp.eq.s32.totalorder %s30, 0
    %p393 = por %p391, %p392
    %s395 = sadd.s32 %s394, 1
    %p398 = scmp.eq.s32.totalorder %s24, 1
    %p399 = scmp.ne.s32.totalorder %s394, %s396
    %p400 = scmp.eq.s32.totalorder %s24, 0
    %p401 = por %p399, %p400
    %p402 = scmp.ne.s32.totalorder %s394, %s396
    %p403 = scmp.eq.s32.totalorder %s29, 1
    %p404 = por %p402, %p403
    %p405 = scmp.ne.s32.totalorder %s396, %s397
    %p406 = scmp.eq.s32.totalorder %s29, 0
    %p407 = por %p405, %p406
    %p408 = scmp.ne.s32.totalorder %s396, %s397
    %p409 = scmp.eq.s32.totalorder %s30, 1
    %p410 = por %p408, %p409
    %p412 = scmp.ne.s32.totalorder %s397, %s411
    %p413 = scmp.eq.s32.totalorder %s30, 0
    %p414 = por %p412, %p413
    %s415 = ssub.s32 %s24, %s31
    %p416 = scmp.eq.s32.totalorder %s415, 0
    %s418 = sadd.s32 %s417, 1
    %s419 = scalar_select %p416, %s417, %s418
    %p422 = pneg %p416
    %p423 = scmp.eq.s32.totalorder %s24, 1
    %p424 = por %p422, %p423
    %p425 = scmp.ne.s32.totalorder %s417, %s420
    %p426 = scmp.eq.s32.totalorder %s24, 0
    %p427 = por %p425, %p426
    %p428 = scmp.ne.s32.totalorder %s417, %s420
    %p429 = scmp.eq.s32.totalorder %s29, 1
    %p430 = por %p428, %p429
    %p431 = scmp.ne.s32.totalorder %s420, %s421
    %p432 = scmp.eq.s32.totalorder %s29, 0
    %p433 = por %p431, %p432
    %p434 = scmp.ne.s32.totalorder %s420, %s421
    %p435 = scmp.eq.s32.totalorder %s30, 1
    %p436 = por %p434, %p435
    %p438 = scmp.ne.s32.totalorder %s421, %s437
    %p439 = scmp.eq.s32.totalorder %s30, 0
    %p440 = por %p438, %p439
    %p441 = scmp.le.s32.totalorder 1, %s24
    %p442 = scmp.lt.s32.totalorder %s24, 3
    %p443 = pnand %p441, %p442
    %p444 = pneg %p443
    // Predicated region
    $region9: #{edge_segmentation_cnn_forward.1} parent=5 // pred_check
      _
    $region10: #{edge_segmentation_cnn_forward.1} parent=5 // pred_check_branch
      %446 = sbr.rel (%p443) target = $region12
    $region11: #{edge_segmentation_cnn_forward.1} parent=5 // pred_region
      %s447 = ssub.s32 %s24, 1
      // Predicated region
      $region13: #{edge_segmentation_cnn_forward.1} parent=11 // pred_check
        %p448 = pneg %p71
      $region14: #{edge_segmentation_cnn_forward.1} parent=11 // pred_check_branch
        %450 = sbr.rel (%p448) target = $region16
      $region15: #{edge_segmentation_cnn_forward.1} parent=11 // pred_region
        _
      $region16: #{edge_segmentation_cnn_forward.1} parent=11 // pred_fallthru
        _
      // Predicated region
      $region17: #{edge_segmentation_cnn_forward.1} parent=11 // pred_check
        %p451 = pneg %p92
      $region18: #{edge_segmentation_cnn_forward.1} parent=11 // pred_check_branch
        %453 = sbr.rel (%p451) target = $region20
      $region19: #{edge_segmentation_cnn_forward.1} parent=11 // pred_region
        _
      $region20: #{edge_segmentation_cnn_forward.1} parent=11 // pred_fallthru
        _
      // Predicated region
      $region21: #{edge_segmentation_cnn_forward.1} parent=11 // pred_check
        %p454 = pneg %p113
      $region22: #{edge_segmentation_cnn_forward.1} parent=11 // pred_check_branch
        %456 = sbr.rel (%p454) target = $region24
      $region23: #{edge_segmentation_cnn_forward.1} parent=11 // pred_region
        _
      $region24: #{edge_segmentation_cnn_forward.1} parent=11 // pred_fallthru
        _
      // Predicated region
      $region25: #{edge_segmentation_cnn_forward.1} parent=11 // pred_check
        %p457 = pneg %p134
      $region26: #{edge_segmentation_cnn_forward.1} parent=11 // pred_check_branch
        %459 = sbr.rel (%p457) target = $region28
      $region27: #{edge_segmentation_cnn_forward.1} parent=11 // pred_region
        _
      $region28: #{edge_segmentation_cnn_forward.1} parent=11 // pred_fallthru
        _
      // Predicated region
      $region29: #{edge_segmentation_cnn_forward.1} parent=11 // pred_check
        %p460 = pneg %p155
      $region30: #{edge_segmentation_cnn_forward.1} parent=11 // pred_check_branch
        %462 = sbr.rel (%p460) target = $region32
      $region31: #{edge_segmentation_cnn_forward.1} parent=11 // pred_region
        _
      $region32: #{edge_segmentation_cnn_forward.1} parent=11 // pred_fallthru
        _
      // Predicated region
      $region33: #{edge_segmentation_cnn_forward.1} parent=11 // pred_check
        %p463 = pneg %p176
      $region34: #{edge_segmentation_cnn_forward.1} parent=11 // pred_check_branch
        %465 = sbr.rel (%p463) target = $region36
      $region35: #{edge_segmentation_cnn_forward.1} parent=11 // pred_region
        _
      $region36: #{edge_segmentation_cnn_forward.1} parent=11 // pred_fallthru
        _
      // Predicated region
      $region37: #{edge_segmentation_cnn_forward.1} parent=11 // pred_check
        %p466 = pneg %p197
      $region38: #{edge_segmentation_cnn_forward.1} parent=11 // pred_check_branch
        %468 = sbr.rel (%p466) target = $region40
      $region39: #{edge_segmentation_cnn_forward.1} parent=11 // pred_region
        _
      $region40: #{edge_segmentation_cnn_forward.1} parent=11 // pred_fallthru
        _
      // Predicated region
      $region41: #{edge_segmentation_cnn_forward.1} parent=11 // pred_check
        %p469 = pneg %p218
      $region42: #{edge_segmentation_cnn_forward.1} parent=11 // pred_check_branch
        %471 = sbr.rel (%p469) target = $region44
      $region43: #{edge_segmentation_cnn_forward.1} parent=11 // pred_region
        _
      $region44: #{edge_segmentation_cnn_forward.1} parent=11 // pred_fallthru
        _
      // Predicated region
      $region45: #{edge_segmentation_cnn_forward.1} parent=11 // pred_check
        %p472 = pneg %p239
      $region46: #{edge_segmentation_cnn_forward.1} parent=11 // pred_check_branch
        %474 = sbr.rel (%p472) target = $region48
      $region47: #{edge_segmentation_cnn_forward.1} parent=11 // pred_region
        _
      $region48: #{edge_segmentation_cnn_forward.1} parent=11 // pred_fallthru
        _
      // Predicated region
      $region49: #{edge_segmentation_cnn_forward.1} parent=11 // pred_check
        %p475 = pneg %p260
      $region50: #{edge_segmentation_cnn_forward.1} parent=11 // pred_check_branch
        %477 = sbr.rel (%p475) target = $region52
      $region51: #{edge_segmentation_cnn_forward.1} parent=11 // pred_region
        _
      $region52: #{edge_segmentation_cnn_forward.1} parent=11 // pred_fallthru
        _
      // Predicated region
      $region53: #{edge_segmentation_cnn_forward.1} parent=11 // pred_check
        %p478 = pneg %p281
      $region54: #{edge_segmentation_cnn_forward.1} parent=11 // pred_check_branch
        %480 = sbr.rel (%p478) target = $region56
      $region55: #{edge_segmentation_cnn_forward.1} parent=11 // pred_region
        _
      $region56: #{edge_segmentation_cnn_forward.1} parent=11 // pred_fallthru
        _
      // Predicated region
      $region57: #{edge_segmentation_cnn_forward.1} parent=11 // pred_check
        %p481 = pneg %p302
      $region58: #{edge_segmentation_cnn_forward.1} parent=11 // pred_check_branch
        %483 = sbr.rel (%p481) target = $region60
      $region59: #{edge_segmentation_cnn_forward.1} parent=11 // pred_region
        _
      $region60: #{edge_segmentation_cnn_forward.1} parent=11 // pred_fallthru
        _
      // Predicated region
      $region61: #{edge_segmentation_cnn_forward.1} parent=11 // pred_check
        %p484 = pneg %p323
      $region62: #{edge_segmentation_cnn_forward.1} parent=11 // pred_check_branch
        %486 = sbr.rel (%p484) target = $region64
      $region63: #{edge_segmentation_cnn_forward.1} parent=11 // pred_region
        _
      $region64: #{edge_segmentation_cnn_forward.1} parent=11 // pred_fallthru
        _
      // Predicated region
      $region65: #{edge_segmentation_cnn_forward.1} parent=11 // pred_check
        %p487 = pneg %p344
      $region66: #{edge_segmentation_cnn_forward.1} parent=11 // pred_check_branch
        %489 = sbr.rel (%p487) target = $region68
      $region67: #{edge_segmentation_cnn_forward.1} parent=11 // pred_region
        _
      $region68: #{edge_segmentation_cnn_forward.1} parent=11 // pred_fallthru
        _
      // Predicated region
      $region69: #{edge_segmentation_cnn_forward.1} parent=11 // pred_check
        %p490 = pneg %p365
      $region70: #{edge_segmentation_cnn_forward.1} parent=11 // pred_check_branch
        %492 = sbr.rel (%p490) target = $region72
      $region71: #{edge_segmentation_cnn_forward.1} parent=11 // pred_region
        _
      $region72: #{edge_segmentation_cnn_forward.1} parent=11 // pred_fallthru
        _
      // Predicated region
      $region73: #{edge_segmentation_cnn_forward.1} parent=11 // pred_check
        %p493 = pneg %p386
      $region74: #{edge_segmentation_cnn_forward.1} parent=11 // pred_check_branch
        %495 = sbr.rel (%p493) target = $region76
      $region75: #{edge_segmentation_cnn_forward.1} parent=11 // pred_region
        _
      $region76: #{edge_segmentation_cnn_forward.1} parent=11 // pred_fallthru
        _
      // Predicated region
      $region77: #{edge_segmentation_cnn_forward.1} parent=11 // pred_check
        %p496 = pneg %p407
      $region78: #{edge_segmentation_cnn_forward.1} parent=11 // pred_check_branch
        %498 = sbr.rel (%p496) target = $region80
      $region79: #{edge_segmentation_cnn_forward.1} parent=11 // pred_region
        _
      $region80: #{edge_segmentation_cnn_forward.1} parent=11 // pred_fallthru
        _
    $region12: #{edge_segmentation_cnn_forward.1} parent=5 // pred_fallthru
      _
    %p499 = scmp.lt.s32.totalorder %s24, 2
    // Predicated region
    $region81: #{edge_segmentation_cnn_forward.1} parent=5 // pred_check
      %p500 = pneg %p499
    $region82: #{edge_segmentation_cnn_forward.1} parent=5 // pred_check_branch
      %502 = sbr.rel (%p500) target = $region84
    $region83: #{edge_segmentation_cnn_forward.1} parent=5 // pred_region
      // Predicated region
      $region85: #{edge_segmentation_cnn_forward.1} parent=83 // pred_check
        %p503 = pneg %p44
      $region86: #{edge_segmentation_cnn_forward.1} parent=83 // pred_check_branch
        %505 = sbr.rel (%p503) target = $region88
      $region87: #{edge_segmentation_cnn_forward.1} parent=83 // pred_region
        %p506 = scmp.lt.s32.totalorder %s24, 1
        %s507 = scalar_select %p506, %s24, 1
        %s508 = smul.addr %s507, 32
        %s509 = smul.addr %s508, 8
        %s510 = scalar_lea.vmem %s0, %s509
      $region88: #{edge_segmentation_cnn_forward.1} parent=83 // pred_fallthru
        _
    $region84: #{edge_segmentation_cnn_forward.1} parent=5 // pred_fallthru
      _
    %p511 = scmp.le.s32.totalorder 1, %s24
    %p512 = scmp.lt.s32.totalorder %s24, 3
    %p513 = pnand %p511, %p512
    %p514 = pneg %p513
    // Predicated region
    $region89: #{edge_segmentation_cnn_forward.1} parent=5 // pred_check
      _
    $region90: #{edge_segmentation_cnn_forward.1} parent=5 // pred_check_branch
      %516 = sbr.rel (%p513) target = $region92
    $region91: #{edge_segmentation_cnn_forward.1} parent=5 // pred_region
      %s517 = ssub.s32 %s24, 1
      %p518 = scmp.lt.s32.totalorder %s29, 1
      %s519 = scalar_select %p518, %s29, 1
      %s520 = smul.addr %s519, 32
      %s521 = smul.addr %s520, 8
      %s522 = scalar_lea.vmem %s0, %s521
      %p523 = pneg %p50
      %p524 = pneg %p47
      %p525 = pneg %p71
      %p526 = pneg %p68
      %p527 = pneg %p92
      %p528 = pneg %p89
      %p529 = pneg %p113
      %p530 = pneg %p110
      %p531 = pneg %p134
      %p532 = pneg %p131
      %p533 = pneg %p155
      %p534 = pneg %p152
      %p535 = pneg %p176
      %p536 = pneg %p173
      %p537 = pneg %p197
      %p538 = pneg %p194
      %p539 = pneg %p218
      %p540 = pneg %p215
      %p541 = pneg %p239
      %p542 = pneg %p236
      %p543 = pneg %p260
      %p544 = pneg %p257
      %p545 = pneg %p281
      %p546 = pneg %p278
      %p547 = pneg %p302
      %p548 = pneg %p299
      %p549 = pneg %p323
      %p550 = pneg %p320
      %p551 = pneg %p344
      %p552 = pneg %p341
      %p553 = pneg %p365
      %p554 = pneg %p362
      %p555 = pneg %p386
      %p556 = pneg %p383
      %p557 = pneg %p407
      %p558 = pneg %p404
      %p559 = pneg %p433
      %p560 = pneg %p430
      %p561 = scmp.lt.s32.totalorder %s29, 1
      %s562 = scalar_select %p561, %s29, 1
      %s563 = smul.addr %s562, 2
      %s564 = smul.addr %s563, 8
      %s565 = scalar_lea.vmem %s18, %s564
      %p566 = scmp.lt.s32.totalorder %s29, 1
      %s567 = scalar_select %p566, %s29, 1
      %s568 = smul.addr %s567, 32
      %s569 = smul.addr %s568, 8
      %s570 = scalar_lea.vmem %s0, %s569
      %p571 = scmp.lt.s32.totalorder %s29, 1
      %s572 = scalar_select %p571, %s29, 1
      %s573 = smul.addr %s572, 2
      %s574 = smul.addr %s573, 8
      %s575 = scalar_lea.vmem %s18, %s574
      %v577 = vld [vmem:[%s570] sm:$0xff]
      %v578 = vld [vmem:[%s570 + $0x8] sm:$0xff]
      %v579 = vld [vmem:[%s570 + $0x10] sm:$0xff]
      %v580 = vld [vmem:[%s570 + $0x18] sm:$0xff]
      %v581 = vld [vmem:[%s570 + $0x20] sm:$0xff]
      %v582 = vld [vmem:[%s570 + $0x28] sm:$0xff]
      %v583 = vld [vmem:[%s570 + $0x30] sm:$0xff]
      %v584 = vld [vmem:[%s570 + $0x38] sm:$0xff]
      %v585 = vld [vmem:[%s570 + $0x40] sm:$0xff]
      %v586 = vld [vmem:[%s570 + $0x48] sm:$0xff]
      %v587 = vld [vmem:[%s570 + $0x50] sm:$0xff]
      %v588 = vld [vmem:[%s570 + $0x58] sm:$0xff]
      %v589 = vld [vmem:[%s570 + $0x60] sm:$0xff]
      %v590 = vld [vmem:[%s570 + $0x68] sm:$0xff]
      %v591 = vld [vmem:[%s570 + $0x70] sm:$0xff]
      %v592 = vld [vmem:[%s570 + $0x78] sm:$0xff]
      %v593 = vld [vmem:[%s570 + $0x80] sm:$0xff]
      %v594 = vld [vmem:[%s570 + $0x88] sm:$0xff]
      %v595 = vld [vmem:[%s570 + $0x90] sm:$0xff]
      %v596 = vld [vmem:[%s570 + $0x98] sm:$0xff]
      %v597 = vld [vmem:[%s570 + $0xa0] sm:$0xff]
      %v598 = vld [vmem:[%s570 + $0xa8] sm:$0xff]
      %v599 = vld [vmem:[%s570 + $0xb0] sm:$0xff]
      %v600 = vld [vmem:[%s570 + $0xb8] sm:$0xff]
      %v601 = vld [vmem:[%s570 + $0xc0] sm:$0xff]
      %v602 = vld [vmem:[%s570 + $0xc8] sm:$0xff]
      %v603 = vld [vmem:[%s570 + $0xd0] sm:$0xff]
      %v604 = vld [vmem:[%s570 + $0xd8] sm:$0xff]
      %v605 = vld [vmem:[%s570 + $0xe0] sm:$0xff]
      %v606 = vld [vmem:[%s570 + $0xe8] sm:$0xff]
      %v607 = vld [vmem:[%s570 + $0xf0] sm:$0xff]
      %v608 = vld [vmem:[%s570 + $0xf8] sm:$0xff]
      %vm609 = vcmask 7168
      %610 = vst.msk [vmem:[#allocation2] sm:$0xff] %vm609, 0.0
      %611 = vst.msk [vmem:[#allocation2 + $0x8] sm:$0xff] %vm609, 0.0
      %612 = vst.msk [vmem:[#allocation2 + $0x10] sm:$0xff] %vm609, 0.0
      %613 = vst.msk [vmem:[#allocation2 + $0x18] sm:$0xff] %vm609, 0.0
      %614 = vst.msk [vmem:[#allocation2 + $0x20] sm:$0xff] %vm609, 0.0
      %615 = vst.msk [vmem:[#allocation2 + $0x28] sm:$0xff] %vm609, 0.0
      %616 = vst.msk [vmem:[#allocation2 + $0x30] sm:$0xff] %vm609, 0.0
      %617 = vst.msk [vmem:[#allocation2 + $0x38] sm:$0xff] %vm609, 0.0
      %618 = vst.msk [vmem:[#allocation2 + $0x40] sm:$0xff] %vm609, 0.0
      %619 = vst.msk [vmem:[#allocation2 + $0x48] sm:$0xff] %vm609, 0.0
      %620 = vst.msk [vmem:[#allocation2 + $0x50] sm:$0xff] %vm609, 0.0
      %621 = vst.msk [vmem:[#allocation2 + $0x58] sm:$0xff] %vm609, 0.0
      %622 = vst.msk [vmem:[#allocation2 + $0x60] sm:$0xff] %vm609, 0.0
      %623 = vst.msk [vmem:[#allocation2 + $0x68] sm:$0xff] %vm609, 0.0
      %624 = vst.msk [vmem:[#allocation2 + $0x70] sm:$0xff] %vm609, 0.0
      %625 = vst.msk [vmem:[#allocation2 + $0x78] sm:$0xff] %vm609, 0.0
      %626 = vst.msk [vmem:[#allocation2 + $0x80] sm:$0xff] %vm609, 0.0
      %627 = vst.msk [vmem:[#allocation2 + $0x88] sm:$0xff] %vm609, 0.0
      %628 = vst.msk [vmem:[#allocation2 + $0x90] sm:$0xff] %vm609, 0.0
      %629 = vst.msk [vmem:[#allocation2 + $0x98] sm:$0xff] %vm609, 0.0
      %630 = vst.msk [vmem:[#allocation2 + $0xa0] sm:$0xff] %vm609, 0.0
      %631 = vst.msk [vmem:[#allocation2 + $0xa8] sm:$0xff] %vm609, 0.0
      %632 = vst.msk [vmem:[#allocation2 + $0xb0] sm:$0xff] %vm609, 0.0
      %633 = vst.msk [vmem:[#allocation2 + $0xb8] sm:$0xff] %vm609, 0.0
      %634 = vst.msk [vmem:[#allocation2 + $0xc0] sm:$0xff] %vm609, 0.0
      %635 = vst.msk [vmem:[#allocation2 + $0xc8] sm:$0xff] %vm609, 0.0
      %636 = vst.msk [vmem:[#allocation2 + $0xd0] sm:$0xff] %vm609, 0.0
      %637 = vst.msk [vmem:[#allocation2 + $0xd8] sm:$0xff] %vm609, 0.0
      %638 = vst.msk [vmem:[#allocation2 + $0xe0] sm:$0xff] %vm609, 0.0
      %639 = vst.msk [vmem:[#allocation2 + $0xe8] sm:$0xff] %vm609, 0.0
      %640 = vst.msk [vmem:[#allocation2 + $0xf0] sm:$0xff] %vm609, 0.0
      %641 = vst.msk [vmem:[#allocation2 + $0xf8] sm:$0xff] %vm609, 0.0
      %642 = vst.msk [vmem:[#allocation2 + $0x100] sm:$0xff] %vm609, 0.0
      %643 = vst.msk [vmem:[#allocation2 + $0x108] sm:$0xff] %vm609, 0.0
      %644 = vst.msk [vmem:[#allocation2 + $0x110] sm:$0xff] %vm609, 0.0
      %645 = vst.msk [vmem:[#allocation2 + $0x118] sm:$0xff] %vm609, 0.0
      %vm646 = vcmask 1024
      %647 = vst.msk [vmem:[#allocation2 + $0x120] sm:$0x3] %vm646, 0.0
      %648 = vst.msk [vmem:[#allocation2 + $0x11] sm:$0xff] %vm609, %v577
      %649 = vst.msk [vmem:[#allocation2 + $0x19] sm:$0xff] %vm609, %v578
      %650 = vst.msk [vmem:[#allocation2 + $0x21] sm:$0xff] %vm609, %v579
      %651 = vst.msk [vmem:[#allocation2 + $0x29] sm:$0xff] %vm609, %v580
      %652 = vst.msk [vmem:[#allocation2 + $0x31] sm:$0xff] %vm609, %v581
      %653 = vst.msk [vmem:[#allocation2 + $0x39] sm:$0xff] %vm609, %v582
      %654 = vst.msk [vmem:[#allocation2 + $0x41] sm:$0xff] %vm609, %v583
      %655 = vst.msk [vmem:[#allocation2 + $0x49] sm:$0xff] %vm609, %v584
      %656 = vst.msk [vmem:[#allocation2 + $0x51] sm:$0xff] %vm609, %v585
      %657 = vst.msk [vmem:[#allocation2 + $0x59] sm:$0xff] %vm609, %v586
      %658 = vst.msk [vmem:[#allocation2 + $0x61] sm:$0xff] %vm609, %v587
      %659 = vst.msk [vmem:[#allocation2 + $0x69] sm:$0xff] %vm609, %v588
      %660 = vst.msk [vmem:[#allocation2 + $0x71] sm:$0xff] %vm609, %v589
      %661 = vst.msk [vmem:[#allocation2 + $0x79] sm:$0xff] %vm609, %v590
      %662 = vst.msk [vmem:[#allocation2 + $0x81] sm:$0xff] %vm609, %v591
      %663 = vst.msk [vmem:[#allocation2 + $0x89] sm:$0xff] %vm609, %v592
      %664 = vst.msk [vmem:[#allocation2 + $0x91] sm:$0xff] %vm609, %v593
      %665 = vst.msk [vmem:[#allocation2 + $0x99] sm:$0xff] %vm609, %v594
      %666 = vst.msk [vmem:[#allocation2 + $0xa1] sm:$0xff] %vm609, %v595
      %667 = vst.msk [vmem:[#allocation2 + $0xa9] sm:$0xff] %vm609, %v596
      %668 = vst.msk [vmem:[#allocation2 + $0xb1] sm:$0xff] %vm609, %v597
      %669 = vst.msk [vmem:[#allocation2 + $0xb9] sm:$0xff] %vm609, %v598
      %670 = vst.msk [vmem:[#allocation2 + $0xc1] sm:$0xff] %vm609, %v599
      %671 = vst.msk [vmem:[#allocation2 + $0xc9] sm:$0xff] %vm609, %v600
      %672 = vst.msk [vmem:[#allocation2 + $0xd1] sm:$0xff] %vm609, %v601
      %673 = vst.msk [vmem:[#allocation2 + $0xd9] sm:$0xff] %vm609, %v602
      %674 = vst.msk [vmem:[#allocation2 + $0xe1] sm:$0xff] %vm609, %v603
      %675 = vst.msk [vmem:[#allocation2 + $0xe9] sm:$0xff] %vm609, %v604
      %676 = vst.msk [vmem:[#allocation2 + $0xf1] sm:$0xff] %vm609, %v605
      %677 = vst.msk [vmem:[#allocation2 + $0xf9] sm:$0xff] %vm609, %v606
      %678 = vst.msk [vmem:[#allocation2 + $0x101] sm:$0xff] %vm609, %v607
      %679 = vst.msk [vmem:[#allocation2 + $0x109] sm:$0xff] %vm609, %v608
      %v680 = vld [vmem:[%s1] sm:$0xff]
      %v681 = vld [vmem:[%s1 + $0x8] sm:$0xff]
      %v682 = vld [vmem:[%s1 + $0x10] sm:$0xff]
      %v683 = vld [vmem:[%s1 + $0x18] sm:$0xff]
      %v684 = vld [vmem:[%s1 + $0x20] sm:$0xff]
      %v685 = vld [vmem:[%s1 + $0x28] sm:$0xff]
      %v686 = vld [vmem:[%s1 + $0x30] sm:$0xff]
      %v687 = vld [vmem:[%s1 + $0x38] sm:$0xff]
      %v688 = vld [vmem:[%s1 + $0x40] sm:$0xff]
      %v689 = vld [vmem:[%s1 + $0x48] sm:$0xff]
      %v690 = vld [vmem:[%s1 + $0x50] sm:$0xff]
      %v691 = vld [vmem:[%s1 + $0x58] sm:$0xff]
      %v692 = vld [vmem:[%s1 + $0x60] sm:$0xff]
      %v693 = vld [vmem:[%s1 + $0x68] sm:$0xff]
      %v694 = vld [vmem:[%s1 + $0x70] sm:$0xff]
      %v695 = vld [vmem:[%s1 + $0x78] sm:$0xff]
      %v696 = vld [vmem:[%s1 + $0x80] sm:$0xff]
      %v697 = vld [vmem:[%s1 + $0x88] sm:$0xff]
      %v698 = vld [vmem:[%s1 + $0x90] sm:$0xff]
      %v699 = vld [vmem:[%s1 + $0x98] sm:$0xff]
      %v700 = vld [vmem:[%s1 + $0xa0] sm:$0xff]
      %v701 = vld [vmem:[%s1 + $0xa8] sm:$0xff]
      %v702 = vld [vmem:[%s1 + $0xb0] sm:$0xff]
      %v703 = vld [vmem:[%s1 + $0xb8] sm:$0xff]
      %v704 = vld [vmem:[%s1 + $0xc0] sm:$0xff]
      %v705 = vld [vmem:[%s1 + $0xc8] sm:$0xff]
      %v706 = vld [vmem:[%s1 + $0xd0] sm:$0xff]
      %v707 = vld [vmem:[%s1 + $0xd8] sm:$0xff]
      %v708 = vld [vmem:[%s1 + $0xe0] sm:$0xff]
      %v709 = vld [vmem:[%s1 + $0xe8] sm:$0xff]
      %v710 = vld [vmem:[%s1 + $0xf0] sm:$0xff]
      %v711 = vld [vmem:[%s1 + $0xf8] sm:$0xff]
      %v712 = vld [vmem:[#allocation2] sm:$0xff]
      %v713 = vld [vmem:[#allocation2 + $0x8] sm:$0xff]
      %v714 = vld [vmem:[#allocation2 + $0x10] sm:$0xff]
      %v715 = vld [vmem:[#allocation2 + $0x18] sm:$0xff]
      %v716 = vld [vmem:[#allocation2 + $0x20] sm:$0xff]
      %v717 = vld [vmem:[#allocation2 + $0x28] sm:$0xff]
      %v718 = vld [vmem:[#allocation2 + $0x30] sm:$0xff]
      %v719 = vld [vmem:[#allocation2 + $0x38] sm:$0xff]
      %v720 = vld [vmem:[#allocation2 + $0x40] sm:$0xff]
      %v721 = vld [vmem:[#allocation2 + $0x48] sm:$0xff]
      %v722 = vld [vmem:[#allocation2 + $0x50] sm:$0xff]
      %v723 = vld [vmem:[#allocation2 + $0x58] sm:$0xff]
      %v724 = vld [vmem:[#allocation2 + $0x60] sm:$0xff]
      %v725 = vld [vmem:[#allocation2 + $0x68] sm:$0xff]
      %v726 = vld [vmem:[#allocation2 + $0x70] sm:$0xff]
      %v727 = vld [vmem:[#allocation2 + $0x78] sm:$0xff]
      %v728 = vld [vmem:[#allocation2 + $0x80] sm:$0xff]
      %v729 = vld [vmem:[#allocation2 + $0x88] sm:$0xff]
      %v730 = vld [vmem:[#allocation2 + $0x90] sm:$0xff]
      %v731 = vld [vmem:[#allocation2 + $0x98] sm:$0xff]
      %v732 = vld [vmem:[#allocation2 + $0xa0] sm:$0xff]
      %v733 = vld [vmem:[#allocation2 + $0xa8] sm:$0xff]
      %v734 = vld [vmem:[#allocation2 + $0xb0] sm:$0xff]
      %v735 = vld [vmem:[#allocation2 + $0xb8] sm:$0xff]
      %v736 = vld [vmem:[#allocation2 + $0xc0] sm:$0xff]
      %v737 = vld [vmem:[#allocation2 + $0xc8] sm:$0xff]
      %v738 = vld [vmem:[#allocation2 + $0xd0] sm:$0xff]
      %v739 = vld [vmem:[#allocation2 + $0xd8] sm:$0xff]
      %v740 = vld [vmem:[#allocation2 + $0xe0] sm:$0xff]
      %v741 = vld [vmem:[#allocation2 + $0xe8] sm:$0xff]
      %v742 = vld [vmem:[#allocation2 + $0xf0] sm:$0xff]
      %v743 = vld [vmem:[#allocation2 + $0xf8] sm:$0xff]
      %v744 = vmul.f32 %v712, %v680
      %v745 = vmul.f32 %v713, %v681
      %v746 = vmul.f32 %v714, %v682
      %v747 = vmul.f32 %v715, %v683
      %v748 = vmul.f32 %v716, %v684
      %v749 = vmul.f32 %v717, %v685
      %v750 = vmul.f32 %v718, %v686
      %v751 = vmul.f32 %v719, %v687
      %v752 = vmul.f32 %v720, %v688
      %v753 = vmul.f32 %v721, %v689
      %v754 = vmul.f32 %v722, %v690
      %v755 = vmul.f32 %v723, %v691
      %v756 = vmul.f32 %v724, %v692
      %v757 = vmul.f32 %v725, %v693
      %v758 = vmul.f32 %v726, %v694
      %v759 = vmul.f32 %v727, %v695
      %v760 = vmul.f32 %v728, %v696
      %v761 = vmul.f32 %v729, %v697
      %v762 = vmul.f32 %v730, %v698
      %v763 = vmul.f32 %v731, %v699
      %v764 = vmul.f32 %v732, %v700
      %v765 = vmul.f32 %v733, %v701
      %v766 = vmul.f32 %v734, %v702
      %v767 = vmul.f32 %v735, %v703
      %v768 = vmul.f32 %v736, %v704
      %v769 = vmul.f32 %v737, %v705
      %v770 = vmul.f32 %v738, %v706
      %v771 = vmul.f32 %v739, %v707
      %v772 = vmul.f32 %v740, %v708
      %v773 = vmul.f32 %v741, %v709
      %v774 = vmul.f32 %v742, %v710
      %v775 = vmul.f32 %v743, %v711
      %v776 = vld [vmem:[%s4] sm:$0x1]
      %778 = vset.pattern.permute.xlu0 0
      %779 = vperm.xlu0 %778, %v744
      %v780 = vpop.permute.xlu0 %779
      %783 = vset.pattern.permute.xlu0 0
      %784 = vperm.xlu0 %783, %v745
      %v785 = vpop.permute.xlu0 %784
      %788 = vset.pattern.permute.xlu0 0
      %789 = vperm.xlu0 %788, %v746
      %v790 = vpop.permute.xlu0 %789
      %793 = vset.pattern.permute.xlu0 0
      %794 = vperm.xlu0 %793, %v747
      %v795 = vpop.permute.xlu0 %794
      %798 = vset.pattern.permute.xlu0 0
      %799 = vperm.xlu0 %798, %v748
      %v800 = vpop.permute.xlu0 %799
      %803 = vset.pattern.permute.xlu0 0
      %804 = vperm.xlu0 %803, %v749
      %v805 = vpop.permute.xlu0 %804
      %808 = vset.pattern.permute.xlu0 0
      %809 = vperm.xlu0 %808, %v750
      %v810 = vpop.permute.xlu0 %809
      %813 = vset.pattern.permute.xlu0 0
      %814 = vperm.xlu0 %813, %v751
      %v815 = vpop.permute.xlu0 %814
      %818 = vset.pattern.permute.xlu0 0
      %819 = vperm.xlu0 %818, %v752
      %v820 = vpop.permute.xlu0 %819
      %823 = vset.pattern.permute.xlu0 0
      %824 = vperm.xlu0 %823, %v753
      %v825 = vpop.permute.xlu0 %824
      %828 = vset.pattern.permute.xlu0 0
      %829 = vperm.xlu0 %828, %v754
      %v830 = vpop.permute.xlu0 %829
      %833 = vset.pattern.permute.xlu0 0
      %834 = vperm.xlu0 %833, %v755
      %v835 = vpop.permute.xlu0 %834
      %838 = vset.pattern.permute.xlu0 0
      %839 = vperm.xlu0 %838, %v756
      %v840 = vpop.permute.xlu0 %839
      %843 = vset.pattern.permute.xlu0 0
      %844 = vperm.xlu0 %843, %v757
      %v845 = vpop.permute.xlu0 %844
      %848 = vset.pattern.permute.xlu0 0
      %849 = vperm.xlu0 %848, %v758
      %v850 = vpop.permute.xlu0 %849
      %853 = vset.pattern.permute.xlu0 0
      %854 = vperm.xlu0 %853, %v759
      %v855 = vpop.permute.xlu0 %854
      %858 = vset.pattern.permute.xlu0 0
      %859 = vperm.xlu0 %858, %v760
      %v860 = vpop.permute.xlu0 %859
      %863 = vset.pattern.permute.xlu0 0
      %864 = vperm.xlu0 %863, %v761
      %v865 = vpop.permute.xlu0 %864
      %868 = vset.pattern.permute.xlu0 0
      %869 = vperm.xlu0 %868, %v762
      %v870 = vpop.permute.xlu0 %869
      %873 = vset.pattern.permute.xlu0 0
      %874 = vperm.xlu0 %873, %v763
      %v875 = vpop.permute.xlu0 %874
      %878 = vset.pattern.permute.xlu0 0
      %879 = vperm.xlu0 %878, %v764
      %v880 = vpop.permute.xlu0 %879
      %883 = vset.pattern.permute.xlu0 0
      %884 = vperm.xlu0 %883, %v765
      %v885 = vpop.permute.xlu0 %884
      %888 = vset.pattern.permute.xlu0 0
      %889 = vperm.xlu0 %888, %v766
      %v890 = vpop.permute.xlu0 %889
      %893 = vset.pattern.permute.xlu0 0
      %894 = vperm.xlu0 %893, %v767
      %v895 = vpop.permute.xlu0 %894
      %898 = vset.pattern.permute.xlu0 0
      %899 = vperm.xlu0 %898, %v768
      %v900 = vpop.permute.xlu0 %899
      %903 = vset.pattern.permute.xlu0 0
      %904 = vperm.xlu0 %903, %v769
      %v905 = vpop.permute.xlu0 %904
      %908 = vset.pattern.permute.xlu0 0
      %909 = vperm.xlu0 %908, %v770
      %v910 = vpop.permute.xlu0 %909
      %913 = vset.pattern.permute.xlu0 0
      %914 = vperm.xlu0 %913, %v771
      %v915 = vpop.permute.xlu0 %914
      %918 = vset.pattern.permute.xlu0 0
      %919 = vperm.xlu0 %918, %v772
      %v920 = vpop.permute.xlu0 %919
      %923 = vset.pattern.permute.xlu0 0
      %924 = vperm.xlu0 %923, %v773
      %v925 = vpop.permute.xlu0 %924
      %928 = vset.pattern.permute.xlu0 0
      %929 = vperm.xlu0 %928, %v774
      %v930 = vpop.permute.xlu0 %929
      %933 = vset.pattern.permute.xlu0 0
      %934 = vperm.xlu0 %933, %v775
      %v935 = vpop.permute.xlu0 %934
      %v937 = vlaneseq
      %v938 = vshrl.u32 %v937, 7
      %v939 = vsub.s32 0, %v938
      %v940 = vrot.slane %v776, %v939
      %v941 = vmul.f32 %v780, %v940
      %v942 = vmul.f32 %v785, %v940
      %v943 = vmul.f32 %v790, %v940
      %v944 = vmul.f32 %v795, %v940
      %v945 = vmul.f32 %v800, %v940
      %v946 = vmul.f32 %v805, %v940
      %v947 = vmul.f32 %v810, %v940
      %v948 = vmul.f32 %v815, %v940
      %v949 = vmul.f32 %v820, %v940
      %v950 = vmul.f32 %v825, %v940
      %v951 = vmul.f32 %v830, %v940
      %v952 = vmul.f32 %v835, %v940
      %v953 = vmul.f32 %v840, %v940
      %v954 = vmul.f32 %v845, %v940
      %v955 = vmul.f32 %v850, %v940
      %v956 = vmul.f32 %v855, %v940
      %v957 = vmul.f32 %v860, %v940
      %v958 = vmul.f32 %v865, %v940
      %v959 = vmul.f32 %v870, %v940
      %v960 = vmul.f32 %v875, %v940
      %v961 = vmul.f32 %v880, %v940
      %v962 = vmul.f32 %v885, %v940
      %v963 = vmul.f32 %v890, %v940
      %v964 = vmul.f32 %v895, %v940
      %v965 = vmul.f32 %v900, %v940
      %v966 = vmul.f32 %v905, %v940
      %v967 = vmul.f32 %v910, %v940
      %v968 = vmul.f32 %v915, %v940
      %v969 = vmul.f32 %v920, %v940
      %v970 = vmul.f32 %v925, %v940
      %v971 = vmul.f32 %v930, %v940
      %v972 = vmul.f32 %v935, %v940
      %v973 = vadd.f32 %v941, 0.0
      %v974 = vadd.f32 %v942, 0.0
      %v975 = vadd.f32 %v943, 0.0
      %v976 = vadd.f32 %v944, 0.0
      %v977 = vadd.f32 %v945, 0.0
      %v978 = vadd.f32 %v946, 0.0
      %v979 = vadd.f32 %v947, 0.0
      %v980 = vadd.f32 %v948, 0.0
      %v981 = vadd.f32 %v949, 0.0
      %v982 = vadd.f32 %v950, 0.0
      %v983 = vadd.f32 %v951, 0.0
      %v984 = vadd.f32 %v952, 0.0
      %v985 = vadd.f32 %v953, 0.0
      %v986 = vadd.f32 %v954, 0.0
      %v987 = vadd.f32 %v955, 0.0
      %v988 = vadd.f32 %v956, 0.0
      %v989 = vadd.f32 %v957, 0.0
      %v990 = vadd.f32 %v958, 0.0
      %v991 = vadd.f32 %v959, 0.0
      %v992 = vadd.f32 %v960, 0.0
      %v993 = vadd.f32 %v961, 0.0
      %v994 = vadd.f32 %v962, 0.0
      %v995 = vadd.f32 %v963, 0.0
      %v996 = vadd.f32 %v964, 0.0
      %v997 = vadd.f32 %v965, 0.0
      %v998 = vadd.f32 %v966, 0.0
      %v999 = vadd.f32 %v967, 0.0
      %v1000 = vadd.f32 %v968, 0.0
      %v1001 = vadd.f32 %v969, 0.0
      %v1002 = vadd.f32 %v970, 0.0
      %v1003 = vadd.f32 %v971, 0.0
      %v1004 = vadd.f32 %v972, 0.0
      %v1005 = vld [vmem:[#allocation2 + $0x1] sm:$0xff]
      %v1006 = vld [vmem:[#allocation2 + $0x9] sm:$0xff]
      %v1007 = vld [vmem:[#allocation2 + $0x11] sm:$0xff]
      %v1008 = vld [vmem:[#allocation2 + $0x19] sm:$0xff]
      %v1009 = vld [vmem:[#allocation2 + $0x21] sm:$0xff]
      %v1010 = vld [vmem:[#allocation2 + $0x29] sm:$0xff]
      %v1011 = vld [vmem:[#allocation2 + $0x31] sm:$0xff]
      %v1012 = vld [vmem:[#allocation2 + $0x39] sm:$0xff]
      %v1013 = vld [vmem:[#allocation2 + $0x41] sm:$0xff]
      %v1014 = vld [vmem:[#allocation2 + $0x49] sm:$0xff]
      %v1015 = vld [vmem:[#allocation2 + $0x51] sm:$0xff]
      %v1016 = vld [vmem:[#allocation2 + $0x59] sm:$0xff]
      %v1017 = vld [vmem:[#allocation2 + $0x61] sm:$0xff]
      %v1018 = vld [vmem:[#allocation2 + $0x69] sm:$0xff]
      %v1019 = vld [vmem:[#allocation2 + $0x71] sm:$0xff]
      %v1020 = vld [vmem:[#allocation2 + $0x79] sm:$0xff]
      %v1021 = vld [vmem:[#allocation2 + $0x81] sm:$0xff]
      %v1022 = vld [vmem:[#allocation2 + $0x89] sm:$0xff]
      %v1023 = vld [vmem:[#allocation2 + $0x91] sm:$0xff]
      %v1024 = vld [vmem:[#allocation2 + $0x99] sm:$0xff]
      %v1025 = vld [vmem:[#allocation2 + $0xa1] sm:$0xff]
      %v1026 = vld [vmem:[#allocation2 + $0xa9] sm:$0xff]
      %v1027 = vld [vmem:[#allocation2 + $0xb1] sm:$0xff]
      %v1028 = vld [vmem:[#allocation2 + $0xb9] sm:$0xff]
      %v1029 = vld [vmem:[#allocation2 + $0xc1] sm:$0xff]
      %v1030 = vld [vmem:[#allocation2 + $0xc9] sm:$0xff]
      %v1031 = vld [vmem:[#allocation2 + $0xd1] sm:$0xff]
      %v1032 = vld [vmem:[#allocation2 + $0xd9] sm:$0xff]
      %v1033 = vld [vmem:[#allocation2 + $0xe1] sm:$0xff]
      %v1034 = vld [vmem:[#allocation2 + $0xe9] sm:$0xff]
      %v1035 = vld [vmem:[#allocation2 + $0xf1] sm:$0xff]
      %v1036 = vld [vmem:[#allocation2 + $0xf9] sm:$0xff]
      %v1037 = vld [vmem:[%s4 + $0x1] sm:$0x1]
      %1039 = vset.pattern.permute.xlu0 0
      %1040 = vperm.xlu0 %1039, %v1005
      %v1041 = vpop.permute.xlu0 %1040
      %1044 = vset.pattern.permute.xlu0 0
      %1045 = vperm.xlu0 %1044, %v1006
      %v1046 = vpop.permute.xlu0 %1045
      %1049 = vset.pattern.permute.xlu0 0
      %1050 = vperm.xlu0 %1049, %v1007
      %v1051 = vpop.permute.xlu0 %1050
      %1054 = vset.pattern.permute.xlu0 0
      %1055 = vperm.xlu0 %1054, %v1008
      %v1056 = vpop.permute.xlu0 %1055
      %1059 = vset.pattern.permute.xlu0 0
      %1060 = vperm.xlu0 %1059, %v1009
      %v1061 = vpop.permute.xlu0 %1060
      %1064 = vset.pattern.permute.xlu0 0
      %1065 = vperm.xlu0 %1064, %v1010
      %v1066 = vpop.permute.xlu0 %1065
      %1069 = vset.pattern.permute.xlu0 0
      %1070 = vperm.xlu0 %1069, %v1011
      %v1071 = vpop.permute.xlu0 %1070
      %1074 = vset.pattern.permute.xlu0 0
      %1075 = vperm.xlu0 %1074, %v1012
      %v1076 = vpop.permute.xlu0 %1075
      %1079 = vset.pattern.permute.xlu0 0
      %1080 = vperm.xlu0 %1079, %v1013
      %v1081 = vpop.permute.xlu0 %1080
      %1084 = vset.pattern.permute.xlu0 0
      %1085 = vperm.xlu0 %1084, %v1014
      %v1086 = vpop.permute.xlu0 %1085
      %1089 = vset.pattern.permute.xlu0 0
      %1090 = vperm.xlu0 %1089, %v1015
      %v1091 = vpop.permute.xlu0 %1090
      %1094 = vset.pattern.permute.xlu0 0
      %1095 = vperm.xlu0 %1094, %v1016
      %v1096 = vpop.permute.xlu0 %1095
      %1099 = vset.pattern.permute.xlu0 0
      %1100 = vperm.xlu0 %1099, %v1017
      %v1101 = vpop.permute.xlu0 %1100
      %1104 = vset.pattern.permute.xlu0 0
      %1105 = vperm.xlu0 %1104, %v1018
      %v1106 = vpop.permute.xlu0 %1105
      %1109 = vset.pattern.permute.xlu0 0
      %1110 = vperm.xlu0 %1109, %v1019
      %v1111 = vpop.permute.xlu0 %1110
      %1114 = vset.pattern.permute.xlu0 0
      %1115 = vperm.xlu0 %1114, %v1020
      %v1116 = vpop.permute.xlu0 %1115
      %1119 = vset.pattern.permute.xlu0 0
      %1120 = vperm.xlu0 %1119, %v1021
      %v1121 = vpop.permute.xlu0 %1120
      %1124 = vset.pattern.permute.xlu0 0
      %1125 = vperm.xlu0 %1124, %v1022
      %v1126 = vpop.permute.xlu0 %1125
      %1129 = vset.pattern.permute.xlu0 0
      %1130 = vperm.xlu0 %1129, %v1023
      %v1131 = vpop.permute.xlu0 %1130
      %1134 = vset.pattern.permute.xlu0 0
      %1135 = vperm.xlu0 %1134, %v1024
      %v1136 = vpop.permute.xlu0 %1135
      %1139 = vset.pattern.permute.xlu0 0
      %1140 = vperm.xlu0 %1139, %v1025
      %v1141 = vpop.permute.xlu0 %1140
      %1144 = vset.pattern.permute.xlu0 0
      %1145 = vperm.xlu0 %1144, %v1026
      %v1146 = vpop.permute.xlu0 %1145
      %1149 = vset.pattern.permute.xlu0 0
      %1150 = vperm.xlu0 %1149, %v1027
      %v1151 = vpop.permute.xlu0 %1150
      %1154 = vset.pattern.permute.xlu0 0
      %1155 = vperm.xlu0 %1154, %v1028
      %v1156 = vpop.permute.xlu0 %1155
      %1159 = vset.pattern.permute.xlu0 0
      %1160 = vperm.xlu0 %1159, %v1029
      %v1161 = vpop.permute.xlu0 %1160
      %1164 = vset.pattern.permute.xlu0 0
      %1165 = vperm.xlu0 %1164, %v1030
      %v1166 = vpop.permute.xlu0 %1165
      %1169 = vset.pattern.permute.xlu0 0
      %1170 = vperm.xlu0 %1169, %v1031
      %v1171 = vpop.permute.xlu0 %1170
      %1174 = vset.pattern.permute.xlu0 0
      %1175 = vperm.xlu0 %1174, %v1032
      %v1176 = vpop.permute.xlu0 %1175
      %1179 = vset.pattern.permute.xlu0 0
      %1180 = vperm.xlu0 %1179, %v1033
      %v1181 = vpop.permute.xlu0 %1180
      %1184 = vset.pattern.permute.xlu0 0
      %1185 = vperm.xlu0 %1184, %v1034
      %v1186 = vpop.permute.xlu0 %1185
      %1189 = vset.pattern.permute.xlu0 0
      %1190 = vperm.xlu0 %1189, %v1035
      %v1191 = vpop.permute.xlu0 %1190
      %1194 = vset.pattern.permute.xlu0 0
      %1195 = vperm.xlu0 %1194, %v1036
      %v1196 = vpop.permute.xlu0 %1195
      %v1198 = vlaneseq
      %v1199 = vshrl.u32 %v1198, 7
      %v1200 = vsub.s32 0, %v1199
      %v1201 = vrot.slane %v1037, %v1200
      %v1202 = vmul.f32 %v1041, %v1201
      %v1203 = vmul.f32 %v1046, %v1201
      %v1204 = vmul.f32 %v1051, %v1201
      %v1205 = vmul.f32 %v1056, %v1201
      %v1206 = vmul.f32 %v1061, %v1201
      %v1207 = vmul.f32 %v1066, %v1201
      %v1208 = vmul.f32 %v1071, %v1201
      %v1209 = vmul.f32 %v1076, %v1201
      %v1210 = vmul.f32 %v1081, %v1201
      %v1211 = vmul.f32 %v1086, %v1201
      %v1212 = vmul.f32 %v1091, %v1201
      %v1213 = vmul.f32 %v1096, %v1201
      %v1214 = vmul.f32 %v1101, %v1201
      %v1215 = vmul.f32 %v1106, %v1201
      %v1216 = vmul.f32 %v1111, %v1201
      %v1217 = vmul.f32 %v1116, %v1201
      %v1218 = vmul.f32 %v1121, %v1201
      %v1219 = vmul.f32 %v1126, %v1201
      %v1220 = vmul.f32 %v1131, %v1201
      %v1221 = vmul.f32 %v1136, %v1201
      %v1222 = vmul.f32 %v1141, %v1201
      %v1223 = vmul.f32 %v1146, %v1201
      %v1224 = vmul.f32 %v1151, %v1201
      %v1225 = vmul.f32 %v1156, %v1201
      %v1226 = vmul.f32 %v1161, %v1201
      %v1227 = vmul.f32 %v1166, %v1201
      %v1228 = vmul.f32 %v1171, %v1201
      %v1229 = vmul.f32 %v1176, %v1201
      %v1230 = vmul.f32 %v1181, %v1201
      %v1231 = vmul.f32 %v1186, %v1201
      %v1232 = vmul.f32 %v1191, %v1201
      %v1233 = vmul.f32 %v1196, %v1201
      %v1234 = vadd.f32 %v973, %v1202
      %v1235 = vadd.f32 %v974, %v1203
      %v1236 = vadd.f32 %v975, %v1204
      %v1237 = vadd.f32 %v976, %v1205
      %v1238 = vadd.f32 %v977, %v1206
      %v1239 = vadd.f32 %v978, %v1207
      %v1240 = vadd.f32 %v979, %v1208
      %v1241 = vadd.f32 %v980, %v1209
      %v1242 = vadd.f32 %v981, %v1210
      %v1243 = vadd.f32 %v982, %v1211
      %v1244 = vadd.f32 %v983, %v1212
      %v1245 = vadd.f32 %v984, %v1213
      %v1246 = vadd.f32 %v985, %v1214
      %v1247 = vadd.f32 %v986, %v1215
      %v1248 = vadd.f32 %v987, %v1216
      %v1249 = vadd.f32 %v988, %v1217
      %v1250 = vadd.f32 %v989, %v1218
      %v1251 = vadd.f32 %v990, %v1219
      %v1252 = vadd.f32 %v991, %v1220
      %v1253 = vadd.f32 %v992, %v1221
      %v1254 = vadd.f32 %v993, %v1222
      %v1255 = vadd.f32 %v994, %v1223
      %v1256 = vadd.f32 %v995, %v1224
      %v1257 = vadd.f32 %v996, %v1225
      %v1258 = vadd.f32 %v997, %v1226
      %v1259 = vadd.f32 %v998, %v1227
      %v1260 = vadd.f32 %v999, %v1228
      %v1261 = vadd.f32 %v1000, %v1229
      %v1262 = vadd.f32 %v1001, %v1230
      %v1263 = vadd.f32 %v1002, %v1231
      %v1264 = vadd.f32 %v1003, %v1232
      %v1265 = vadd.f32 %v1004, %v1233
      %v1266 = vld [vmem:[#allocation2 + $0x2] sm:$0xff]
      %v1267 = vld [vmem:[#allocation2 + $0xa] sm:$0xff]
      %v1268 = vld [vmem:[#allocation2 + $0x12] sm:$0xff]
      %v1269 = vld [vmem:[#allocation2 + $0x1a] sm:$0xff]
      %v1270 = vld [vmem:[#allocation2 + $0x22] sm:$0xff]
      %v1271 = vld [vmem:[#allocation2 + $0x2a] sm:$0xff]
      %v1272 = vld [vmem:[#allocation2 + $0x32] sm:$0xff]
      %v1273 = vld [vmem:[#allocation2 + $0x3a] sm:$0xff]
      %v1274 = vld [vmem:[#allocation2 + $0x42] sm:$0xff]
      %v1275 = vld [vmem:[#allocation2 + $0x4a] sm:$0xff]
      %v1276 = vld [vmem:[#allocation2 + $0x52] sm:$0xff]
      %v1277 = vld [vmem:[#allocation2 + $0x5a] sm:$0xff]
      %v1278 = vld [vmem:[#allocation2 + $0x62] sm:$0xff]
      %v1279 = vld [vmem:[#allocation2 + $0x6a] sm:$0xff]
      %v1280 = vld [vmem:[#allocation2 + $0x72] sm:$0xff]
      %v1281 = vld [vmem:[#allocation2 + $0x7a] sm:$0xff]
      %v1282 = vld [vmem:[#allocation2 + $0x82] sm:$0xff]
      %v1283 = vld [vmem:[#allocation2 + $0x8a] sm:$0xff]
      %v1284 = vld [vmem:[#allocation2 + $0x92] sm:$0xff]
      %v1285 = vld [vmem:[#allocation2 + $0x9a] sm:$0xff]
      %v1286 = vld [vmem:[#allocation2 + $0xa2] sm:$0xff]
      %v1287 = vld [vmem:[#allocation2 + $0xaa] sm:$0xff]
      %v1288 = vld [vmem:[#allocation2 + $0xb2] sm:$0xff]
      %v1289 = vld [vmem:[#allocation2 + $0xba] sm:$0xff]
      %v1290 = vld [vmem:[#allocation2 + $0xc2] sm:$0xff]
      %v1291 = vld [vmem:[#allocation2 + $0xca] sm:$0xff]
      %v1292 = vld [vmem:[#allocation2 + $0xd2] sm:$0xff]
      %v1293 = vld [vmem:[#allocation2 + $0xda] sm:$0xff]
      %v1294 = vld [vmem:[#allocation2 + $0xe2] sm:$0xff]
      %v1295 = vld [vmem:[#allocation2 + $0xea] sm:$0xff]
      %v1296 = vld [vmem:[#allocation2 + $0xf2] sm:$0xff]
      %v1297 = vld [vmem:[#allocation2 + $0xfa] sm:$0xff]
      %1330 = vrot.lane.b32.xlu0 %v680, 127
      %v1331 = vpop.permute.xlu0 %1330
      %1332 = vrot.lane.b32.xlu0 %v681, 127
      %v1333 = vpop.permute.xlu0 %1332
      %1334 = vrot.lane.b32.xlu0 %v682, 127
      %v1335 = vpop.permute.xlu0 %1334
      %1336 = vrot.lane.b32.xlu0 %v683, 127
      %v1337 = vpop.permute.xlu0 %1336
      %1338 = vrot.lane.b32.xlu0 %v684, 127
      %v1339 = vpop.permute.xlu0 %1338
      %1340 = vrot.lane.b32.xlu0 %v685, 127
      %v1341 = vpop.permute.xlu0 %1340
      %1342 = vrot.lane.b32.xlu0 %v686, 127
      %v1343 = vpop.permute.xlu0 %1342
      %1344 = vrot.lane.b32.xlu0 %v687, 127
      %v1345 = vpop.permute.xlu0 %1344
      %1346 = vrot.lane.b32.xlu0 %v688, 127
      %v1347 = vpop.permute.xlu0 %1346
      %1348 = vrot.lane.b32.xlu0 %v689, 127
      %v1349 = vpop.permute.xlu0 %1348
      %1350 = vrot.lane.b32.xlu0 %v690, 127
      %v1351 = vpop.permute.xlu0 %1350
      %1352 = vrot.lane.b32.xlu0 %v691, 127
      %v1353 = vpop.permute.xlu0 %1352
      %1354 = vrot.lane.b32.xlu0 %v692, 127
      %v1355 = vpop.permute.xlu0 %1354
      %1356 = vrot.lane.b32.xlu0 %v693, 127
      %v1357 = vpop.permute.xlu0 %1356
      %1358 = vrot.lane.b32.xlu0 %v694, 127
      %v1359 = vpop.permute.xlu0 %1358
      %1360 = vrot.lane.b32.xlu0 %v695, 127
      %v1361 = vpop.permute.xlu0 %1360
      %1362 = vrot.lane.b32.xlu0 %v696, 127
      %v1363 = vpop.permute.xlu0 %1362
      %1364 = vrot.lane.b32.xlu0 %v697, 127
      %v1365 = vpop.permute.xlu0 %1364
      %1366 = vrot.lane.b32.xlu0 %v698, 127
      %v1367 = vpop.permute.xlu0 %1366
      %1368 = vrot.lane.b32.xlu0 %v699, 127
      %v1369 = vpop.permute.xlu0 %1368
      %1370 = vrot.lane.b32.xlu0 %v700, 127
      %v1371 = vpop.permute.xlu0 %1370
      %1372 = vrot.lane.b32.xlu0 %v701, 127
      %v1373 = vpop.permute.xlu0 %1372
      %1374 = vrot.lane.b32.xlu0 %v702, 127
      %v1375 = vpop.permute.xlu0 %1374
      %1376 = vrot.lane.b32.xlu0 %v703, 127
      %v1377 = vpop.permute.xlu0 %1376
      %1378 = vrot.lane.b32.xlu0 %v704, 127
      %v1379 = vpop.permute.xlu0 %1378
      %1380 = vrot.lane.b32.xlu0 %v705, 127
      %v1381 = vpop.permute.xlu0 %1380
      %1382 = vrot.lane.b32.xlu0 %v706, 127
      %v1383 = vpop.permute.xlu0 %1382
      %1384 = vrot.lane.b32.xlu0 %v707, 127
      %v1385 = vpop.permute.xlu0 %1384
      %1386 = vrot.lane.b32.xlu0 %v708, 127
      %v1387 = vpop.permute.xlu0 %1386
      %1388 = vrot.lane.b32.xlu0 %v709, 127
      %v1389 = vpop.permute.xlu0 %1388
      %1390 = vrot.lane.b32.xlu0 %v710, 127
      %v1391 = vpop.permute.xlu0 %1390
      %1392 = vrot.lane.b32.xlu0 %v711, 127
      %v1393 = vpop.permute.xlu0 %1392
      %v1426 = vmul.f32 %v1266, %v1331
      %v1427 = vmul.f32 %v1267, %v1333
      %v1428 = vmul.f32 %v1268, %v1335
      %v1429 = vmul.f32 %v1269, %v1337
      %v1430 = vmul.f32 %v1270, %v1339
      %v1431 = vmul.f32 %v1271, %v1341
      %v1432 = vmul.f32 %v1272, %v1343
      %v1433 = vmul.f32 %v1273, %v1345
      %v1434 = vmul.f32 %v1274, %v1347
      %v1435 = vmul.f32 %v1275, %v1349
      %v1436 = vmul.f32 %v1276, %v1351
      %v1437 = vmul.f32 %v1277, %v1353
      %v1438 = vmul.f32 %v1278, %v1355
      %v1439 = vmul.f32 %v1279, %v1357
      %v1440 = vmul.f32 %v1280, %v1359
      %v1441 = vmul.f32 %v1281, %v1361
      %v1442 = vmul.f32 %v1282, %v1363
      %v1443 = vmul.f32 %v1283, %v1365
      %v1444 = vmul.f32 %v1284, %v1367
      %v1445 = vmul.f32 %v1285, %v1369
      %v1446 = vmul.f32 %v1286, %v1371
      %v1447 = vmul.f32 %v1287, %v1373
      %v1448 = vmul.f32 %v1288, %v1375
      %v1449 = vmul.f32 %v1289, %v1377
      %v1450 = vmul.f32 %v1290, %v1379
      %v1451 = vmul.f32 %v1291, %v1381
      %v1452 = vmul.f32 %v1292, %v1383
      %v1453 = vmul.f32 %v1293, %v1385
      %v1454 = vmul.f32 %v1294, %v1387
      %v1455 = vmul.f32 %v1295, %v1389
      %v1456 = vmul.f32 %v1296, %v1391
      %v1457 = vmul.f32 %v1297, %v1393
      %v1458 = vld [vmem:[%s4 + $0x2] sm:$0x1]
      %1460 = vset.pattern.permute.xlu0 0
      %1461 = vperm.xlu0 %1460, %v1426
      %v1462 = vpop.permute.xlu0 %1461
      %1465 = vset.pattern.permute.xlu0 0
      %1466 = vperm.xlu0 %1465, %v1427
      %v1467 = vpop.permute.xlu0 %1466
      %1470 = vset.pattern.permute.xlu0 0
      %1471 = vperm.xlu0 %1470, %v1428
      %v1472 = vpop.permute.xlu0 %1471
      %1475 = vset.pattern.permute.xlu0 0
      %1476 = vperm.xlu0 %1475, %v1429
      %v1477 = vpop.permute.xlu0 %1476
      %1480 = vset.pattern.permute.xlu0 0
      %1481 = vperm.xlu0 %1480, %v1430
      %v1482 = vpop.permute.xlu0 %1481
      %1485 = vset.pattern.permute.xlu0 0
      %1486 = vperm.xlu0 %1485, %v1431
      %v1487 = vpop.permute.xlu0 %1486
      %1490 = vset.pattern.permute.xlu0 0
      %1491 = vperm.xlu0 %1490, %v1432
      %v1492 = vpop.permute.xlu0 %1491
      %1495 = vset.pattern.permute.xlu0 0
      %1496 = vperm.xlu0 %1495, %v1433
      %v1497 = vpop.permute.xlu0 %1496
      %1500 = vset.pattern.permute.xlu0 0
      %1501 = vperm.xlu0 %1500, %v1434
      %v1502 = vpop.permute.xlu0 %1501
      %1505 = vset.pattern.permute.xlu0 0
      %1506 = vperm.xlu0 %1505, %v1435
      %v1507 = vpop.permute.xlu0 %1506
      %1510 = vset.pattern.permute.xlu0 0
      %1511 = vperm.xlu0 %1510, %v1436
      %v1512 = vpop.permute.xlu0 %1511
      %1515 = vset.pattern.permute.xlu0 0
      %1516 = vperm.xlu0 %1515, %v1437
      %v1517 = vpop.permute.xlu0 %1516
      %1520 = vset.pattern.permute.xlu0 0
      %1521 = vperm.xlu0 %1520, %v1438
      %v1522 = vpop.permute.xlu0 %1521
      %1525 = vset.pattern.permute.xlu0 0
      %1526 = vperm.xlu0 %1525, %v1439
      %v1527 = vpop.permute.xlu0 %1526
      %1530 = vset.pattern.permute.xlu0 0
      %1531 = vperm.xlu0 %1530, %v1440
      %v1532 = vpop.permute.xlu0 %1531
      %1535 = vset.pattern.permute.xlu0 0
      %1536 = vperm.xlu0 %1535, %v1441
      %v1537 = vpop.permute.xlu0 %1536
      %1540 = vset.pattern.permute.xlu0 0
      %1541 = vperm.xlu0 %1540, %v1442
      %v1542 = vpop.permute.xlu0 %1541
      %1545 = vset.pattern.permute.xlu0 0
      %1546 = vperm.xlu0 %1545, %v1443
      %v1547 = vpop.permute.xlu0 %1546
      %1550 = vset.pattern.permute.xlu0 0
      %1551 = vperm.xlu0 %1550, %v1444
      %v1552 = vpop.permute.xlu0 %1551
      %1555 = vset.pattern.permute.xlu0 0
      %1556 = vperm.xlu0 %1555, %v1445
      %v1557 = vpop.permute.xlu0 %1556
      %1560 = vset.pattern.permute.xlu0 0
      %1561 = vperm.xlu0 %1560, %v1446
      %v1562 = vpop.permute.xlu0 %1561
      %1565 = vset.pattern.permute.xlu0 0
      %1566 = vperm.xlu0 %1565, %v1447
      %v1567 = vpop.permute.xlu0 %1566
      %1570 = vset.pattern.permute.xlu0 0
      %1571 = vperm.xlu0 %1570, %v1448
      %v1572 = vpop.permute.xlu0 %1571
      %1575 = vset.pattern.permute.xlu0 0
      %1576 = vperm.xlu0 %1575, %v1449
      %v1577 = vpop.permute.xlu0 %1576
      %1580 = vset.pattern.permute.xlu0 0
      %1581 = vperm.xlu0 %1580, %v1450
      %v1582 = vpop.permute.xlu0 %1581
      %1585 = vset.pattern.permute.xlu0 0
      %1586 = vperm.xlu0 %1585, %v1451
      %v1587 = vpop.permute.xlu0 %1586
      %1590 = vset.pattern.permute.xlu0 0
      %1591 = vperm.xlu0 %1590, %v1452
      %v1592 = vpop.permute.xlu0 %1591
      %1595 = vset.pattern.permute.xlu0 0
      %1596 = vperm.xlu0 %1595, %v1453
      %v1597 = vpop.permute.xlu0 %1596
      %1600 = vset.pattern.permute.xlu0 0
      %1601 = vperm.xlu0 %1600, %v1454
      %v1602 = vpop.permute.xlu0 %1601
      %1605 = vset.pattern.permute.xlu0 0
      %1606 = vperm.xlu0 %1605, %v1455
      %v1607 = vpop.permute.xlu0 %1606
      %1610 = vset.pattern.permute.xlu0 0
      %1611 = vperm.xlu0 %1610, %v1456
      %v1612 = vpop.permute.xlu0 %1611
      %1615 = vset.pattern.permute.xlu0 0
      %1616 = vperm.xlu0 %1615, %v1457
      %v1617 = vpop.permute.xlu0 %1616
      %v1619 = vlaneseq
      %v1620 = vshrl.u32 %v1619, 7
      %v1621 = vsub.s32 0, %v1620
      %v1622 = vrot.slane %v1458, %v1621
      %v1623 = vmul.f32 %v1462, %v1622
      %v1624 = vmul.f32 %v1467, %v1622
      %v1625 = vmul.f32 %v1472, %v1622
      %v1626 = vmul.f32 %v1477, %v1622
      %v1627 = vmul.f32 %v1482, %v1622
      %v1628 = vmul.f32 %v1487, %v1622
      %v1629 = vmul.f32 %v1492, %v1622
      %v1630 = vmul.f32 %v1497, %v1622
      %v1631 = vmul.f32 %v1502, %v1622
      %v1632 = vmul.f32 %v1507, %v1622
      %v1633 = vmul.f32 %v1512, %v1622
      %v1634 = vmul.f32 %v1517, %v1622
      %v1635 = vmul.f32 %v1522, %v1622
      %v1636 = vmul.f32 %v1527, %v1622
      %v1637 = vmul.f32 %v1532, %v1622
      %v1638 = vmul.f32 %v1537, %v1622
      %v1639 = vmul.f32 %v1542, %v1622
      %v1640 = vmul.f32 %v1547, %v1622
      %v1641 = vmul.f32 %v1552, %v1622
      %v1642 = vmul.f32 %v1557, %v1622
      %v1643 = vmul.f32 %v1562, %v1622
      %v1644 = vmul.f32 %v1567, %v1622
      %v1645 = vmul.f32 %v1572, %v1622
      %v1646 = vmul.f32 %v1577, %v1622
      %v1647 = vmul.f32 %v1582, %v1622
      %v1648 = vmul.f32 %v1587, %v1622
      %v1649 = vmul.f32 %v1592, %v1622
      %v1650 = vmul.f32 %v1597, %v1622
      %v1651 = vmul.f32 %v1602, %v1622
      %v1652 = vmul.f32 %v1607, %v1622
      %v1653 = vmul.f32 %v1612, %v1622
      %v1654 = vmul.f32 %v1617, %v1622
      %v1655 = vadd.f32 %v1234, %v1623
      %v1656 = vadd.f32 %v1235, %v1624
      %v1657 = vadd.f32 %v1236, %v1625
      %v1658 = vadd.f32 %v1237, %v1626
      %v1659 = vadd.f32 %v1238, %v1627
      %v1660 = vadd.f32 %v1239, %v1628
      %v1661 = vadd.f32 %v1240, %v1629
      %v1662 = vadd.f32 %v1241, %v1630
      %v1663 = vadd.f32 %v1242, %v1631
      %v1664 = vadd.f32 %v1243, %v1632
      %v1665 = vadd.f32 %v1244, %v1633
      %v1666 = vadd.f32 %v1245, %v1634
      %v1667 = vadd.f32 %v1246, %v1635
      %v1668 = vadd.f32 %v1247, %v1636
      %v1669 = vadd.f32 %v1248, %v1637
      %v1670 = vadd.f32 %v1249, %v1638
      %v1671 = vadd.f32 %v1250, %v1639
      %v1672 = vadd.f32 %v1251, %v1640
      %v1673 = vadd.f32 %v1252, %v1641
      %v1674 = vadd.f32 %v1253, %v1642
      %v1675 = vadd.f32 %v1254, %v1643
      %v1676 = vadd.f32 %v1255, %v1644
      %v1677 = vadd.f32 %v1256, %v1645
      %v1678 = vadd.f32 %v1257, %v1646
      %v1679 = vadd.f32 %v1258, %v1647
      %v1680 = vadd.f32 %v1259, %v1648
      %v1681 = vadd.f32 %v1260, %v1649
      %v1682 = vadd.f32 %v1261, %v1650
      %v1683 = vadd.f32 %v1262, %v1651
      %v1684 = vadd.f32 %v1263, %v1652
      %v1685 = vadd.f32 %v1264, %v1653
      %v1686 = vadd.f32 %v1265, %v1654
      %v1687 = vld [vmem:[#allocation2 + $0x10] sm:$0xff]
      %v1688 = vld [vmem:[#allocation2 + $0x18] sm:$0xff]
      %v1689 = vld [vmem:[#allocation2 + $0x20] sm:$0xff]
      %v1690 = vld [vmem:[#allocation2 + $0x28] sm:$0xff]
      %v1691 = vld [vmem:[#allocation2 + $0x30] sm:$0xff]
      %v1692 = vld [vmem:[#allocation2 + $0x38] sm:$0xff]
      %v1693 = vld [vmem:[#allocation2 + $0x40] sm:$0xff]
      %v1694 = vld [vmem:[#allocation2 + $0x48] sm:$0xff]
      %v1695 = vld [vmem:[#allocation2 + $0x50] sm:$0xff]
      %v1696 = vld [vmem:[#allocation2 + $0x58] sm:$0xff]
      %v1697 = vld [vmem:[#allocation2 + $0x60] sm:$0xff]
      %v1698 = vld [vmem:[#allocation2 + $0x68] sm:$0xff]
      %v1699 = vld [vmem:[#allocation2 + $0x70] sm:$0xff]
      %v1700 = vld [vmem:[#allocation2 + $0x78] sm:$0xff]
      %v1701 = vld [vmem:[#allocation2 + $0x80] sm:$0xff]
      %v1702 = vld [vmem:[#allocation2 + $0x88] sm:$0xff]
      %v1703 = vld [vmem:[#allocation2 + $0x90] sm:$0xff]
      %v1704 = vld [vmem:[#allocation2 + $0x98] sm:$0xff]
      %v1705 = vld [vmem:[#allocation2 + $0xa0] sm:$0xff]
      %v1706 = vld [vmem:[#allocation2 + $0xa8] sm:$0xff]
      %v1707 = vld [vmem:[#allocation2 + $0xb0] sm:$0xff]
      %v1708 = vld [vmem:[#allocation2 + $0xb8] sm:$0xff]
      %v1709 = vld [vmem:[#allocation2 + $0xc0] sm:$0xff]
      %v1710 = vld [vmem:[#allocation2 + $0xc8] sm:$0xff]
      %v1711 = vld [vmem:[#allocation2 + $0xd0] sm:$0xff]
      %v1712 = vld [vmem:[#allocation2 + $0xd8] sm:$0xff]
      %v1713 = vld [vmem:[#allocation2 + $0xe0] sm:$0xff]
      %v1714 = vld [vmem:[#allocation2 + $0xe8] sm:$0xff]
      %v1715 = vld [vmem:[#allocation2 + $0xf0] sm:$0xff]
      %v1716 = vld [vmem:[#allocation2 + $0xf8] sm:$0xff]
      %v1717 = vld [vmem:[#allocation2 + $0x100] sm:$0xff]
      %v1718 = vld [vmem:[#allocation2 + $0x108] sm:$0xff]
      %v1719 = vmul.f32 %v1687, %v680
      %v1720 = vmul.f32 %v1688, %v681
      %v1721 = vmul.f32 %v1689, %v682
      %v1722 = vmul.f32 %v1690, %v683
      %v1723 = vmul.f32 %v1691, %v684
      %v1724 = vmul.f32 %v1692, %v685
      %v1725 = vmul.f32 %v1693, %v686
      %v1726 = vmul.f32 %v1694, %v687
      %v1727 = vmul.f32 %v1695, %v688
      %v1728 = vmul.f32 %v1696, %v689
      %v1729 = vmul.f32 %v1697, %v690
      %v1730 = vmul.f32 %v1698, %v691
      %v1731 = vmul.f32 %v1699, %v692
      %v1732 = vmul.f32 %v1700, %v693
      %v1733 = vmul.f32 %v1701, %v694
      %v1734 = vmul.f32 %v1702, %v695
      %v1735 = vmul.f32 %v1703, %v696
      %v1736 = vmul.f32 %v1704, %v697
      %v1737 = vmul.f32 %v1705, %v698
      %v1738 = vmul.f32 %v1706, %v699
      %v1739 = vmul.f32 %v1707, %v700
      %v1740 = vmul.f32 %v1708, %v701
      %v1741 = vmul.f32 %v1709, %v702
      %v1742 = vmul.f32 %v1710, %v703
      %v1743 = vmul.f32 %v1711, %v704
      %v1744 = vmul.f32 %v1712, %v705
      %v1745 = vmul.f32 %v1713, %v706
      %v1746 = vmul.f32 %v1714, %v707
      %v1747 = vmul.f32 %v1715, %v708
      %v1748 = vmul.f32 %v1716, %v709
      %v1749 = vmul.f32 %v1717, %v710
      %v1750 = vmul.f32 %v1718, %v711
      %v1751 = vld [vmem:[%s4 + $0x3] sm:$0x1]
      %1753 = vset.pattern.permute.xlu0 0
      %1754 = vperm.xlu0 %1753, %v1719
      %v1755 = vpop.permute.xlu0 %1754
      %1758 = vset.pattern.permute.xlu0 0
      %1759 = vperm.xlu0 %1758, %v1720
      %v1760 = vpop.permute.xlu0 %1759
      %1763 = vset.pattern.permute.xlu0 0
      %1764 = vperm.xlu0 %1763, %v1721
      %v1765 = vpop.permute.xlu0 %1764
      %1768 = vset.pattern.permute.xlu0 0
      %1769 = vperm.xlu0 %1768, %v1722
      %v1770 = vpop.permute.xlu0 %1769
      %1773 = vset.pattern.permute.xlu0 0
      %1774 = vperm.xlu0 %1773, %v1723
      %v1775 = vpop.permute.xlu0 %1774
      %1778 = vset.pattern.permute.xlu0 0
      %1779 = vperm.xlu0 %1778, %v1724
      %v1780 = vpop.permute.xlu0 %1779
      %1783 = vset.pattern.permute.xlu0 0
      %1784 = vperm.xlu0 %1783, %v1725
      %v1785 = vpop.permute.xlu0 %1784
      %1788 = vset.pattern.permute.xlu0 0
      %1789 = vperm.xlu0 %1788, %v1726
      %v1790 = vpop.permute.xlu0 %1789
      %1793 = vset.pattern.permute.xlu0 0
      %1794 = vperm.xlu0 %1793, %v1727
      %v1795 = vpop.permute.xlu0 %1794
      %1798 = vset.pattern.permute.xlu0 0
      %1799 = vperm.xlu0 %1798, %v1728
      %v1800 = vpop.permute.xlu0 %1799
      %1803 = vset.pattern.permute.xlu0 0
      %1804 = vperm.xlu0 %1803, %v1729
      %v1805 = vpop.permute.xlu0 %1804
      %1808 = vset.pattern.permute.xlu0 0
      %1809 = vperm.xlu0 %1808, %v1730
      %v1810 = vpop.permute.xlu0 %1809
      %1813 = vset.pattern.permute.xlu0 0
      %1814 = vperm.xlu0 %1813, %v1731
      %v1815 = vpop.permute.xlu0 %1814
      %1818 = vset.pattern.permute.xlu0 0
      %1819 = vperm.xlu0 %1818, %v1732
      %v1820 = vpop.permute.xlu0 %1819
      %1823 = vset.pattern.permute.xlu0 0
      %1824 = vperm.xlu0 %1823, %v1733
      %v1825 = vpop.permute.xlu0 %1824
      %1828 = vset.pattern.permute.xlu0 0
      %1829 = vperm.xlu0 %1828, %v1734
      %v1830 = vpop.permute.xlu0 %1829
      %1833 = vset.pattern.permute.xlu0 0
      %1834 = vperm.xlu0 %1833, %v1735
      %v1835 = vpop.permute.xlu0 %1834
      %1838 = vset.pattern.permute.xlu0 0
      %1839 = vperm.xlu0 %1838, %v1736
      %v1840 = vpop.permute.xlu0 %1839
      %1843 = vset.pattern.permute.xlu0 0
      %1844 = vperm.xlu0 %1843, %v1737
      %v1845 = vpop.permute.xlu0 %1844
      %1848 = vset.pattern.permute.xlu0 0
      %1849 = vperm.xlu0 %1848, %v1738
      %v1850 = vpop.permute.xlu0 %1849
      %1853 = vset.pattern.permute.xlu0 0
      %1854 = vperm.xlu0 %1853, %v1739
      %v1855 = vpop.permute.xlu0 %1854
      %1858 = vset.pattern.permute.xlu0 0
      %1859 = vperm.xlu0 %1858, %v1740
      %v1860 = vpop.permute.xlu0 %1859
      %1863 = vset.pattern.permute.xlu0 0
      %1864 = vperm.xlu0 %1863, %v1741
      %v1865 = vpop.permute.xlu0 %1864
      %1868 = vset.pattern.permute.xlu0 0
      %1869 = vperm.xlu0 %1868, %v1742
      %v1870 = vpop.permute.xlu0 %1869
      %1873 = vset.pattern.permute.xlu0 0
      %1874 = vperm.xlu0 %1873, %v1743
      %v1875 = vpop.permute.xlu0 %1874
      %1878 = vset.pattern.permute.xlu0 0
      %1879 = vperm.xlu0 %1878, %v1744
      %v1880 = vpop.permute.xlu0 %1879
      %1883 = vset.pattern.permute.xlu0 0
      %1884 = vperm.xlu0 %1883, %v1745
      %v1885 = vpop.permute.xlu0 %1884
      %1888 = vset.pattern.permute.xlu0 0
      %1889 = vperm.xlu0 %1888, %v1746
      %v1890 = vpop.permute.xlu0 %1889
      %1893 = vset.pattern.permute.xlu0 0
      %1894 = vperm.xlu0 %1893, %v1747
      %v1895 = vpop.permute.xlu0 %1894
      %1898 = vset.pattern.permute.xlu0 0
      %1899 = vperm.xlu0 %1898, %v1748
      %v1900 = vpop.permute.xlu0 %1899
      %1903 = vset.pattern.permute.xlu0 0
      %1904 = vperm.xlu0 %1903, %v1749
      %v1905 = vpop.permute.xlu0 %1904
      %1908 = vset.pattern.permute.xlu0 0
      %1909 = vperm.xlu0 %1908, %v1750
      %v1910 = vpop.permute.xlu0 %1909
      %v1912 = vlaneseq
      %v1913 = vshrl.u32 %v1912, 7
      %v1914 = vsub.s32 0, %v1913
      %v1915 = vrot.slane %v1751, %v1914
      %v1916 = vmul.f32 %v1755, %v1915
      %v1917 = vmul.f32 %v1760, %v1915
      %v1918 = vmul.f32 %v1765, %v1915
      %v1919 = vmul.f32 %v1770, %v1915
      %v1920 = vmul.f32 %v1775, %v1915
      %v1921 = vmul.f32 %v1780, %v1915
      %v1922 = vmul.f32 %v1785, %v1915
      %v1923 = vmul.f32 %v1790, %v1915
      %v1924 = vmul.f32 %v1795, %v1915
      %v1925 = vmul.f32 %v1800, %v1915
      %v1926 = vmul.f32 %v1805, %v1915
      %v1927 = vmul.f32 %v1810, %v1915
      %v1928 = vmul.f32 %v1815, %v1915
      %v1929 = vmul.f32 %v1820, %v1915
      %v1930 = vmul.f32 %v1825, %v1915
      %v1931 = vmul.f32 %v1830, %v1915
      %v1932 = vmul.f32 %v1835, %v1915
      %v1933 = vmul.f32 %v1840, %v1915
      %v1934 = vmul.f32 %v1845, %v1915
      %v1935 = vmul.f32 %v1850, %v1915
      %v1936 = vmul.f32 %v1855, %v1915
      %v1937 = vmul.f32 %v1860, %v1915
      %v1938 = vmul.f32 %v1865, %v1915
      %v1939 = vmul.f32 %v1870, %v1915
      %v1940 = vmul.f32 %v1875, %v1915
      %v1941 = vmul.f32 %v1880, %v1915
      %v1942 = vmul.f32 %v1885, %v1915
      %v1943 = vmul.f32 %v1890, %v1915
      %v1944 = vmul.f32 %v1895, %v1915
      %v1945 = vmul.f32 %v1900, %v1915
      %v1946 = vmul.f32 %v1905, %v1915
      %v1947 = vmul.f32 %v1910, %v1915
      %v1948 = vadd.f32 %v1655, %v1916
      %v1949 = vadd.f32 %v1656, %v1917
      %v1950 = vadd.f32 %v1657, %v1918
      %v1951 = vadd.f32 %v1658, %v1919
      %v1952 = vadd.f32 %v1659, %v1920
      %v1953 = vadd.f32 %v1660, %v1921
      %v1954 = vadd.f32 %v1661, %v1922
      %v1955 = vadd.f32 %v1662, %v1923
      %v1956 = vadd.f32 %v1663, %v1924
      %v1957 = vadd.f32 %v1664, %v1925
      %v1958 = vadd.f32 %v1665, %v1926
      %v1959 = vadd.f32 %v1666, %v1927
      %v1960 = vadd.f32 %v1667, %v1928
      %v1961 = vadd.f32 %v1668, %v1929
      %v1962 = vadd.f32 %v1669, %v1930
      %v1963 = vadd.f32 %v1670, %v1931
      %v1964 = vadd.f32 %v1671, %v1932
      %v1965 = vadd.f32 %v1672, %v1933
      %v1966 = vadd.f32 %v1673, %v1934
      %v1967 = vadd.f32 %v1674, %v1935
      %v1968 = vadd.f32 %v1675, %v1936
      %v1969 = vadd.f32 %v1676, %v1937
      %v1970 = vadd.f32 %v1677, %v1938
      %v1971 = vadd.f32 %v1678, %v1939
      %v1972 = vadd.f32 %v1679, %v1940
      %v1973 = vadd.f32 %v1680, %v1941
      %v1974 = vadd.f32 %v1681, %v1942
      %v1975 = vadd.f32 %v1682, %v1943
      %v1976 = vadd.f32 %v1683, %v1944
      %v1977 = vadd.f32 %v1684, %v1945
      %v1978 = vadd.f32 %v1685, %v1946
      %v1979 = vadd.f32 %v1686, %v1947
      %v1980 = vld [vmem:[#allocation2 + $0x11] sm:$0xff]
      %v1981 = vld [vmem:[#allocation2 + $0x19] sm:$0xff]
      %v1982 = vld [vmem:[#allocation2 + $0x21] sm:$0xff]
      %v1983 = vld [vmem:[#allocation2 + $0x29] sm:$0xff]
      %v1984 = vld [vmem:[#allocation2 + $0x31] sm:$0xff]
      %v1985 = vld [vmem:[#allocation2 + $0x39] sm:$0xff]
      %v1986 = vld [vmem:[#allocation2 + $0x41] sm:$0xff]
      %v1987 = vld [vmem:[#allocation2 + $0x49] sm:$0xff]
      %v1988 = vld [vmem:[#allocation2 + $0x51] sm:$0xff]
      %v1989 = vld [vmem:[#allocation2 + $0x59] sm:$0xff]
      %v1990 = vld [vmem:[#allocation2 + $0x61] sm:$0xff]
      %v1991 = vld [vmem:[#allocation2 + $0x69] sm:$0xff]
      %v1992 = vld [vmem:[#allocation2 + $0x71] sm:$0xff]
      %v1993 = vld [vmem:[#allocation2 + $0x79] sm:$0xff]
      %v1994 = vld [vmem:[#allocation2 + $0x81] sm:$0xff]
      %v1995 = vld [vmem:[#allocation2 + $0x89] sm:$0xff]
      %v1996 = vld [vmem:[#allocation2 + $0x91] sm:$0xff]
      %v1997 = vld [vmem:[#allocation2 + $0x99] sm:$0xff]
      %v1998 = vld [vmem:[#allocation2 + $0xa1] sm:$0xff]
      %v1999 = vld [vmem:[#allocation2 + $0xa9] sm:$0xff]
      %v2000 = vld [vmem:[#allocation2 + $0xb1] sm:$0xff]
      %v2001 = vld [vmem:[#allocation2 + $0xb9] sm:$0xff]
      %v2002 = vld [vmem:[#allocation2 + $0xc1] sm:$0xff]
      %v2003 = vld [vmem:[#allocation2 + $0xc9] sm:$0xff]
      %v2004 = vld [vmem:[#allocation2 + $0xd1] sm:$0xff]
      %v2005 = vld [vmem:[#allocation2 + $0xd9] sm:$0xff]
      %v2006 = vld [vmem:[#allocation2 + $0xe1] sm:$0xff]
      %v2007 = vld [vmem:[#allocation2 + $0xe9] sm:$0xff]
      %v2008 = vld [vmem:[#allocation2 + $0xf1] sm:$0xff]
      %v2009 = vld [vmem:[#allocation2 + $0xf9] sm:$0xff]
      %v2010 = vld [vmem:[#allocation2 + $0x101] sm:$0xff]
      %v2011 = vld [vmem:[#allocation2 + $0x109] sm:$0xff]
      %v2012 = vld [vmem:[%s4 + $0x4] sm:$0x1]
      %2014 = vset.pattern.permute.xlu0 0
      %2015 = vperm.xlu0 %2014, %v1980
      %v2016 = vpop.permute.xlu0 %2015
      %2019 = vset.pattern.permute.xlu0 0
      %2020 = vperm.xlu0 %2019, %v1981
      %v2021 = vpop.permute.xlu0 %2020
      %2024 = vset.pattern.permute.xlu0 0
      %2025 = vperm.xlu0 %2024, %v1982
      %v2026 = vpop.permute.xlu0 %2025
      %2029 = vset.pattern.permute.xlu0 0
      %2030 = vperm.xlu0 %2029, %v1983
      %v2031 = vpop.permute.xlu0 %2030
      %2034 = vset.pattern.permute.xlu0 0
      %2035 = vperm.xlu0 %2034, %v1984
      %v2036 = vpop.permute.xlu0 %2035
      %2039 = vset.pattern.permute.xlu0 0
      %2040 = vperm.xlu0 %2039, %v1985
      %v2041 = vpop.permute.xlu0 %2040
      %2044 = vset.pattern.permute.xlu0 0
      %2045 = vperm.xlu0 %2044, %v1986
      %v2046 = vpop.permute.xlu0 %2045
      %2049 = vset.pattern.permute.xlu0 0
      %2050 = vperm.xlu0 %2049, %v1987
      %v2051 = vpop.permute.xlu0 %2050
      %2054 = vset.pattern.permute.xlu0 0
      %2055 = vperm.xlu0 %2054, %v1988
      %v2056 = vpop.permute.xlu0 %2055
      %2059 = vset.pattern.permute.xlu0 0
      %2060 = vperm.xlu0 %2059, %v1989
      %v2061 = vpop.permute.xlu0 %2060
      %2064 = vset.pattern.permute.xlu0 0
      %2065 = vperm.xlu0 %2064, %v1990
      %v2066 = vpop.permute.xlu0 %2065
      %2069 = vset.pattern.permute.xlu0 0
      %2070 = vperm.xlu0 %2069, %v1991
      %v2071 = vpop.permute.xlu0 %2070
      %2074 = vset.pattern.permute.xlu0 0
      %2075 = vperm.xlu0 %2074, %v1992
      %v2076 = vpop.permute.xlu0 %2075
      %2079 = vset.pattern.permute.xlu0 0
      %2080 = vperm.xlu0 %2079, %v1993
      %v2081 = vpop.permute.xlu0 %2080
      %2084 = vset.pattern.permute.xlu0 0
      %2085 = vperm.xlu0 %2084, %v1994
      %v2086 = vpop.permute.xlu0 %2085
      %2089 = vset.pattern.permute.xlu0 0
      %2090 = vperm.xlu0 %2089, %v1995
      %v2091 = vpop.permute.xlu0 %2090
      %2094 = vset.pattern.permute.xlu0 0
      %2095 = vperm.xlu0 %2094, %v1996
      %v2096 = vpop.permute.xlu0 %2095
      %2099 = vset.pattern.permute.xlu0 0
      %2100 = vperm.xlu0 %2099, %v1997
      %v2101 = vpop.permute.xlu0 %2100
      %2104 = vset.pattern.permute.xlu0 0
      %2105 = vperm.xlu0 %2104, %v1998
      %v2106 = vpop.permute.xlu0 %2105
      %2109 = vset.pattern.permute.xlu0 0
      %2110 = vperm.xlu0 %2109, %v1999
      %v2111 = vpop.permute.xlu0 %2110
      %2114 = vset.pattern.permute.xlu0 0
      %2115 = vperm.xlu0 %2114, %v2000
      %v2116 = vpop.permute.xlu0 %2115
      %2119 = vset.pattern.permute.xlu0 0
      %2120 = vperm.xlu0 %2119, %v2001
      %v2121 = vpop.permute.xlu0 %2120
      %2124 = vset.pattern.permute.xlu0 0
      %2125 = vperm.xlu0 %2124, %v2002
      %v2126 = vpop.permute.xlu0 %2125
      %2129 = vset.pattern.permute.xlu0 0
      %2130 = vperm.xlu0 %2129, %v2003
      %v2131 = vpop.permute.xlu0 %2130
      %2134 = vset.pattern.permute.xlu0 0
      %2135 = vperm.xlu0 %2134, %v2004
      %v2136 = vpop.permute.xlu0 %2135
      %2139 = vset.pattern.permute.xlu0 0
      %2140 = vperm.xlu0 %2139, %v2005
      %v2141 = vpop.permute.xlu0 %2140
      %2144 = vset.pattern.permute.xlu0 0
      %2145 = vperm.xlu0 %2144, %v2006
      %v2146 = vpop.permute.xlu0 %2145
      %2149 = vset.pattern.permute.xlu0 0
      %2150 = vperm.xlu0 %2149, %v2007
      %v2151 = vpop.permute.xlu0 %2150
      %2154 = vset.pattern.permute.xlu0 0
      %2155 = vperm.xlu0 %2154, %v2008
      %v2156 = vpop.permute.xlu0 %2155
      %2159 = vset.pattern.permute.xlu0 0
      %2160 = vperm.xlu0 %2159, %v2009
      %v2161 = vpop.permute.xlu0 %2160
      %2164 = vset.pattern.permute.xlu0 0
      %2165 = vperm.xlu0 %2164, %v2010
      %v2166 = vpop.permute.xlu0 %2165
      %2169 = vset.pattern.permute.xlu0 0
      %2170 = vperm.xlu0 %2169, %v2011
      %v2171 = vpop.permute.xlu0 %2170
      %v2173 = vlaneseq
      %v2174 = vshrl.u32 %v2173, 7
      %v2175 = vsub.s32 0, %v2174
      %v2176 = vrot.slane %v2012, %v2175
      %v2177 = vmul.f32 %v2016, %v2176
      %v2178 = vmul.f32 %v2021, %v2176
      %v2179 = vmul.f32 %v2026, %v2176
      %v2180 = vmul.f32 %v2031, %v2176
      %v2181 = vmul.f32 %v2036, %v2176
      %v2182 = vmul.f32 %v2041, %v2176
      %v2183 = vmul.f32 %v2046, %v2176
      %v2184 = vmul.f32 %v2051, %v2176
      %v2185 = vmul.f32 %v2056, %v2176
      %v2186 = vmul.f32 %v2061, %v2176
      %v2187 = vmul.f32 %v2066, %v2176
      %v2188 = vmul.f32 %v2071, %v2176
      %v2189 = vmul.f32 %v2076, %v2176
      %v2190 = vmul.f32 %v2081, %v2176
      %v2191 = vmul.f32 %v2086, %v2176
      %v2192 = vmul.f32 %v2091, %v2176
      %v2193 = vmul.f32 %v2096, %v2176
      %v2194 = vmul.f32 %v2101, %v2176
      %v2195 = vmul.f32 %v2106, %v2176
      %v2196 = vmul.f32 %v2111, %v2176
      %v2197 = vmul.f32 %v2116, %v2176
      %v2198 = vmul.f32 %v2121, %v2176
      %v2199 = vmul.f32 %v2126, %v2176
      %v2200 = vmul.f32 %v2131, %v2176
      %v2201 = vmul.f32 %v2136, %v2176
      %v2202 = vmul.f32 %v2141, %v2176
      %v2203 = vmul.f32 %v2146, %v2176
      %v2204 = vmul.f32 %v2151, %v2176
      %v2205 = vmul.f32 %v2156, %v2176
      %v2206 = vmul.f32 %v2161, %v2176
      %v2207 = vmul.f32 %v2166, %v2176
      %v2208 = vmul.f32 %v2171, %v2176
      %v2209 = vadd.f32 %v1948, %v2177
      %v2210 = vadd.f32 %v1949, %v2178
      %v2211 = vadd.f32 %v1950, %v2179
      %v2212 = vadd.f32 %v1951, %v2180
      %v2213 = vadd.f32 %v1952, %v2181
      %v2214 = vadd.f32 %v1953, %v2182
      %v2215 = vadd.f32 %v1954, %v2183
      %v2216 = vadd.f32 %v1955, %v2184
      %v2217 = vadd.f32 %v1956, %v2185
      %v2218 = vadd.f32 %v1957, %v2186
      %v2219 = vadd.f32 %v1958, %v2187
      %v2220 = vadd.f32 %v1959, %v2188
      %v2221 = vadd.f32 %v1960, %v2189
      %v2222 = vadd.f32 %v1961, %v2190
      %v2223 = vadd.f32 %v1962, %v2191
      %v2224 = vadd.f32 %v1963, %v2192
      %v2225 = vadd.f32 %v1964, %v2193
      %v2226 = vadd.f32 %v1965, %v2194
      %v2227 = vadd.f32 %v1966, %v2195
      %v2228 = vadd.f32 %v1967, %v2196
      %v2229 = vadd.f32 %v1968, %v2197
      %v2230 = vadd.f32 %v1969, %v2198
      %v2231 = vadd.f32 %v1970, %v2199
      %v2232 = vadd.f32 %v1971, %v2200
      %v2233 = vadd.f32 %v1972, %v2201
      %v2234 = vadd.f32 %v1973, %v2202
      %v2235 = vadd.f32 %v1974, %v2203
      %v2236 = vadd.f32 %v1975, %v2204
      %v2237 = vadd.f32 %v1976, %v2205
      %v2238 = vadd.f32 %v1977, %v2206
      %v2239 = vadd.f32 %v1978, %v2207
      %v2240 = vadd.f32 %v1979, %v2208
      %v2241 = vld [vmem:[#allocation2 + $0x12] sm:$0xff]
      %v2242 = vld [vmem:[#allocation2 + $0x1a] sm:$0xff]
      %v2243 = vld [vmem:[#allocation2 + $0x22] sm:$0xff]
      %v2244 = vld [vmem:[#allocation2 + $0x2a] sm:$0xff]
      %v2245 = vld [vmem:[#allocation2 + $0x32] sm:$0xff]
      %v2246 = vld [vmem:[#allocation2 + $0x3a] sm:$0xff]
      %v2247 = vld [vmem:[#allocation2 + $0x42] sm:$0xff]
      %v2248 = vld [vmem:[#allocation2 + $0x4a] sm:$0xff]
      %v2249 = vld [vmem:[#allocation2 + $0x52] sm:$0xff]
      %v2250 = vld [vmem:[#allocation2 + $0x5a] sm:$0xff]
      %v2251 = vld [vmem:[#allocation2 + $0x62] sm:$0xff]
      %v2252 = vld [vmem:[#allocation2 + $0x6a] sm:$0xff]
      %v2253 = vld [vmem:[#allocation2 + $0x72] sm:$0xff]
      %v2254 = vld [vmem:[#allocation2 + $0x7a] sm:$0xff]
      %v2255 = vld [vmem:[#allocation2 + $0x82] sm:$0xff]
      %v2256 = vld [vmem:[#allocation2 + $0x8a] sm:$0xff]
      %v2257 = vld [vmem:[#allocation2 + $0x92] sm:$0xff]
      %v2258 = vld [vmem:[#allocation2 + $0x9a] sm:$0xff]
      %v2259 = vld [vmem:[#allocation2 + $0xa2] sm:$0xff]
      %v2260 = vld [vmem:[#allocation2 + $0xaa] sm:$0xff]
      %v2261 = vld [vmem:[#allocation2 + $0xb2] sm:$0xff]
      %v2262 = vld [vmem:[#allocation2 + $0xba] sm:$0xff]
      %v2263 = vld [vmem:[#allocation2 + $0xc2] sm:$0xff]
      %v2264 = vld [vmem:[#allocation2 + $0xca] sm:$0xff]
      %v2265 = vld [vmem:[#allocation2 + $0xd2] sm:$0xff]
      %v2266 = vld [vmem:[#allocation2 + $0xda] sm:$0xff]
      %v2267 = vld [vmem:[#allocation2 + $0xe2] sm:$0xff]
      %v2268 = vld [vmem:[#allocation2 + $0xea] sm:$0xff]
      %v2269 = vld [vmem:[#allocation2 + $0xf2] sm:$0xff]
      %v2270 = vld [vmem:[#allocation2 + $0xfa] sm:$0xff]
      %v2271 = vld [vmem:[#allocation2 + $0x102] sm:$0xff]
      %v2272 = vld [vmem:[#allocation2 + $0x10a] sm:$0xff]
      %v2273 = vmul.f32 %v2241, %v1331
      %v2274 = vmul.f32 %v2242, %v1333
      %v2275 = vmul.f32 %v2243, %v1335
      %v2276 = vmul.f32 %v2244, %v1337
      %v2277 = vmul.f32 %v2245, %v1339
      %v2278 = vmul.f32 %v2246, %v1341
      %v2279 = vmul.f32 %v2247, %v1343
      %v2280 = vmul.f32 %v2248, %v1345
      %v2281 = vmul.f32 %v2249, %v1347
      %v2282 = vmul.f32 %v2250, %v1349
      %v2283 = vmul.f32 %v2251, %v1351
      %v2284 = vmul.f32 %v2252, %v1353
      %v2285 = vmul.f32 %v2253, %v1355
      %v2286 = vmul.f32 %v2254, %v1357
      %v2287 = vmul.f32 %v2255, %v1359
      %v2288 = vmul.f32 %v2256, %v1361
      %v2289 = vmul.f32 %v2257, %v1363
      %v2290 = vmul.f32 %v2258, %v1365
      %v2291 = vmul.f32 %v2259, %v1367
      %v2292 = vmul.f32 %v2260, %v1369
      %v2293 = vmul.f32 %v2261, %v1371
      %v2294 = vmul.f32 %v2262, %v1373
      %v2295 = vmul.f32 %v2263, %v1375
      %v2296 = vmul.f32 %v2264, %v1377
      %v2297 = vmul.f32 %v2265, %v1379
      %v2298 = vmul.f32 %v2266, %v1381
      %v2299 = vmul.f32 %v2267, %v1383
      %v2300 = vmul.f32 %v2268, %v1385
      %v2301 = vmul.f32 %v2269, %v1387
      %v2302 = vmul.f32 %v2270, %v1389
      %v2303 = vmul.f32 %v2271, %v1391
      %v2304 = vmul.f32 %v2272, %v1393
      %v2305 = vld [vmem:[%s4 + $0x5] sm:$0x1]
      %2307 = vset.pattern.permute.xlu0 0
      %2308 = vperm.xlu0 %2307, %v2273
      %v2309 = vpop.permute.xlu0 %2308
      %2312 = vset.pattern.permute.xlu0 0
      %2313 = vperm.xlu0 %2312, %v2274
      %v2314 = vpop.permute.xlu0 %2313
      %2317 = vset.pattern.permute.xlu0 0
      %2318 = vperm.xlu0 %2317, %v2275
      %v2319 = vpop.permute.xlu0 %2318
      %2322 = vset.pattern.permute.xlu0 0
      %2323 = vperm.xlu0 %2322, %v2276
      %v2324 = vpop.permute.xlu0 %2323
      %2327 = vset.pattern.permute.xlu0 0
      %2328 = vperm.xlu0 %2327, %v2277
      %v2329 = vpop.permute.xlu0 %2328
      %2332 = vset.pattern.permute.xlu0 0
      %2333 = vperm.xlu0 %2332, %v2278
      %v2334 = vpop.permute.xlu0 %2333
      %2337 = vset.pattern.permute.xlu0 0
      %2338 = vperm.xlu0 %2337, %v2279
      %v2339 = vpop.permute.xlu0 %2338
      %2342 = vset.pattern.permute.xlu0 0
      %2343 = vperm.xlu0 %2342, %v2280
      %v2344 = vpop.permute.xlu0 %2343
      %2347 = vset.pattern.permute.xlu0 0
      %2348 = vperm.xlu0 %2347, %v2281
      %v2349 = vpop.permute.xlu0 %2348
      %2352 = vset.pattern.permute.xlu0 0
      %2353 = vperm.xlu0 %2352, %v2282
      %v2354 = vpop.permute.xlu0 %2353
      %2357 = vset.pattern.permute.xlu0 0
      %2358 = vperm.xlu0 %2357, %v2283
      %v2359 = vpop.permute.xlu0 %2358
      %2362 = vset.pattern.permute.xlu0 0
      %2363 = vperm.xlu0 %2362, %v2284
      %v2364 = vpop.permute.xlu0 %2363
      %2367 = vset.pattern.permute.xlu0 0
      %2368 = vperm.xlu0 %2367, %v2285
      %v2369 = vpop.permute.xlu0 %2368
      %2372 = vset.pattern.permute.xlu0 0
      %2373 = vperm.xlu0 %2372, %v2286
      %v2374 = vpop.permute.xlu0 %2373
      %2377 = vset.pattern.permute.xlu0 0
      %2378 = vperm.xlu0 %2377, %v2287
      %v2379 = vpop.permute.xlu0 %2378
      %2382 = vset.pattern.permute.xlu0 0
      %2383 = vperm.xlu0 %2382, %v2288
      %v2384 = vpop.permute.xlu0 %2383
      %2387 = vset.pattern.permute.xlu0 0
      %2388 = vperm.xlu0 %2387, %v2289
      %v2389 = vpop.permute.xlu0 %2388
      %2392 = vset.pattern.permute.xlu0 0
      %2393 = vperm.xlu0 %2392, %v2290
      %v2394 = vpop.permute.xlu0 %2393
      %2397 = vset.pattern.permute.xlu0 0
      %2398 = vperm.xlu0 %2397, %v2291
      %v2399 = vpop.permute.xlu0 %2398
      %2402 = vset.pattern.permute.xlu0 0
      %2403 = vperm.xlu0 %2402, %v2292
      %v2404 = vpop.permute.xlu0 %2403
      %2407 = vset.pattern.permute.xlu0 0
      %2408 = vperm.xlu0 %2407, %v2293
      %v2409 = vpop.permute.xlu0 %2408
      %2412 = vset.pattern.permute.xlu0 0
      %2413 = vperm.xlu0 %2412, %v2294
      %v2414 = vpop.permute.xlu0 %2413
      %2417 = vset.pattern.permute.xlu0 0
      %2418 = vperm.xlu0 %2417, %v2295
      %v2419 = vpop.permute.xlu0 %2418
      %2422 = vset.pattern.permute.xlu0 0
      %2423 = vperm.xlu0 %2422, %v2296
      %v2424 = vpop.permute.xlu0 %2423
      %2427 = vset.pattern.permute.xlu0 0
      %2428 = vperm.xlu0 %2427, %v2297
      %v2429 = vpop.permute.xlu0 %2428
      %2432 = vset.pattern.permute.xlu0 0
      %2433 = vperm.xlu0 %2432, %v2298
      %v2434 = vpop.permute.xlu0 %2433
      %2437 = vset.pattern.permute.xlu0 0
      %2438 = vperm.xlu0 %2437, %v2299
      %v2439 = vpop.permute.xlu0 %2438
      %2442 = vset.pattern.permute.xlu0 0
      %2443 = vperm.xlu0 %2442, %v2300
      %v2444 = vpop.permute.xlu0 %2443
      %2447 = vset.pattern.permute.xlu0 0
      %2448 = vperm.xlu0 %2447, %v2301
      %v2449 = vpop.permute.xlu0 %2448
      %2452 = vset.pattern.permute.xlu0 0
      %2453 = vperm.xlu0 %2452, %v2302
      %v2454 = vpop.permute.xlu0 %2453
      %2457 = vset.pattern.permute.xlu0 0
      %2458 = vperm.xlu0 %2457, %v2303
      %v2459 = vpop.permute.xlu0 %2458
      %2462 = vset.pattern.permute.xlu0 0
      %2463 = vperm.xlu0 %2462, %v2304
      %v2464 = vpop.permute.xlu0 %2463
      %v2466 = vlaneseq
      %v2467 = vshrl.u32 %v2466, 7
      %v2468 = vsub.s32 0, %v2467
      %v2469 = vrot.slane %v2305, %v2468
      %v2470 = vmul.f32 %v2309, %v2469
      %v2471 = vmul.f32 %v2314, %v2469
      %v2472 = vmul.f32 %v2319, %v2469
      %v2473 = vmul.f32 %v2324, %v2469
      %v2474 = vmul.f32 %v2329, %v2469
      %v2475 = vmul.f32 %v2334, %v2469
      %v2476 = vmul.f32 %v2339, %v2469
      %v2477 = vmul.f32 %v2344, %v2469
      %v2478 = vmul.f32 %v2349, %v2469
      %v2479 = vmul.f32 %v2354, %v2469
      %v2480 = vmul.f32 %v2359, %v2469
      %v2481 = vmul.f32 %v2364, %v2469
      %v2482 = vmul.f32 %v2369, %v2469
      %v2483 = vmul.f32 %v2374, %v2469
      %v2484 = vmul.f32 %v2379, %v2469
      %v2485 = vmul.f32 %v2384, %v2469
      %v2486 = vmul.f32 %v2389, %v2469
      %v2487 = vmul.f32 %v2394, %v2469
      %v2488 = vmul.f32 %v2399, %v2469
      %v2489 = vmul.f32 %v2404, %v2469
      %v2490 = vmul.f32 %v2409, %v2469
      %v2491 = vmul.f32 %v2414, %v2469
      %v2492 = vmul.f32 %v2419, %v2469
      %v2493 = vmul.f32 %v2424, %v2469
      %v2494 = vmul.f32 %v2429, %v2469
      %v2495 = vmul.f32 %v2434, %v2469
      %v2496 = vmul.f32 %v2439, %v2469
      %v2497 = vmul.f32 %v2444, %v2469
      %v2498 = vmul.f32 %v2449, %v2469
      %v2499 = vmul.f32 %v2454, %v2469
      %v2500 = vmul.f32 %v2459, %v2469
      %v2501 = vmul.f32 %v2464, %v2469
      %v2502 = vadd.f32 %v2209, %v2470
      %v2503 = vadd.f32 %v2210, %v2471
      %v2504 = vadd.f32 %v2211, %v2472
      %v2505 = vadd.f32 %v2212, %v2473
      %v2506 = vadd.f32 %v2213, %v2474
      %v2507 = vadd.f32 %v2214, %v2475
      %v2508 = vadd.f32 %v2215, %v2476
      %v2509 = vadd.f32 %v2216, %v2477
      %v2510 = vadd.f32 %v2217, %v2478
      %v2511 = vadd.f32 %v2218, %v2479
      %v2512 = vadd.f32 %v2219, %v2480
      %v2513 = vadd.f32 %v2220, %v2481
      %v2514 = vadd.f32 %v2221, %v2482
      %v2515 = vadd.f32 %v2222, %v2483
      %v2516 = vadd.f32 %v2223, %v2484
      %v2517 = vadd.f32 %v2224, %v2485
      %v2518 = vadd.f32 %v2225, %v2486
      %v2519 = vadd.f32 %v2226, %v2487
      %v2520 = vadd.f32 %v2227, %v2488
      %v2521 = vadd.f32 %v2228, %v2489
      %v2522 = vadd.f32 %v2229, %v2490
      %v2523 = vadd.f32 %v2230, %v2491
      %v2524 = vadd.f32 %v2231, %v2492
      %v2525 = vadd.f32 %v2232, %v2493
      %v2526 = vadd.f32 %v2233, %v2494
      %v2527 = vadd.f32 %v2234, %v2495
      %v2528 = vadd.f32 %v2235, %v2496
      %v2529 = vadd.f32 %v2236, %v2497
      %v2530 = vadd.f32 %v2237, %v2498
      %v2531 = vadd.f32 %v2238, %v2499
      %v2532 = vadd.f32 %v2239, %v2500
      %v2533 = vadd.f32 %v2240, %v2501
      %v2534 = vld [vmem:[#allocation2 + $0x20] sm:$0xff]
      %v2535 = vld [vmem:[#allocation2 + $0x28] sm:$0xff]
      %v2536 = vld [vmem:[#allocation2 + $0x30] sm:$0xff]
      %v2537 = vld [vmem:[#allocation2 + $0x38] sm:$0xff]
      %v2538 = vld [vmem:[#allocation2 + $0x40] sm:$0xff]
      %v2539 = vld [vmem:[#allocation2 + $0x48] sm:$0xff]
      %v2540 = vld [vmem:[#allocation2 + $0x50] sm:$0xff]
      %v2541 = vld [vmem:[#allocation2 + $0x58] sm:$0xff]
      %v2542 = vld [vmem:[#allocation2 + $0x60] sm:$0xff]
      %v2543 = vld [vmem:[#allocation2 + $0x68] sm:$0xff]
      %v2544 = vld [vmem:[#allocation2 + $0x70] sm:$0xff]
      %v2545 = vld [vmem:[#allocation2 + $0x78] sm:$0xff]
      %v2546 = vld [vmem:[#allocation2 + $0x80] sm:$0xff]
      %v2547 = vld [vmem:[#allocation2 + $0x88] sm:$0xff]
      %v2548 = vld [vmem:[#allocation2 + $0x90] sm:$0xff]
      %v2549 = vld [vmem:[#allocation2 + $0x98] sm:$0xff]
      %v2550 = vld [vmem:[#allocation2 + $0xa0] sm:$0xff]
      %v2551 = vld [vmem:[#allocation2 + $0xa8] sm:$0xff]
      %v2552 = vld [vmem:[#allocation2 + $0xb0] sm:$0xff]
      %v2553 = vld [vmem:[#allocation2 + $0xb8] sm:$0xff]
      %v2554 = vld [vmem:[#allocation2 + $0xc0] sm:$0xff]
      %v2555 = vld [vmem:[#allocation2 + $0xc8] sm:$0xff]
      %v2556 = vld [vmem:[#allocation2 + $0xd0] sm:$0xff]
      %v2557 = vld [vmem:[#allocation2 + $0xd8] sm:$0xff]
      %v2558 = vld [vmem:[#allocation2 + $0xe0] sm:$0xff]
      %v2559 = vld [vmem:[#allocation2 + $0xe8] sm:$0xff]
      %v2560 = vld [vmem:[#allocation2 + $0xf0] sm:$0xff]
      %v2561 = vld [vmem:[#allocation2 + $0xf8] sm:$0xff]
      %v2562 = vld [vmem:[#allocation2 + $0x100] sm:$0xff]
      %v2563 = vld [vmem:[#allocation2 + $0x108] sm:$0xff]
      %v2564 = vld [vmem:[#allocation2 + $0x110] sm:$0xff]
      %v2565 = vld [vmem:[#allocation2 + $0x118] sm:$0xff]
      %v2566 = vmul.f32 %v2534, %v680
      %v2567 = vmul.f32 %v2535, %v681
      %v2568 = vmul.f32 %v2536, %v682
      %v2569 = vmul.f32 %v2537, %v683
      %v2570 = vmul.f32 %v2538, %v684
      %v2571 = vmul.f32 %v2539, %v685
      %v2572 = vmul.f32 %v2540, %v686
      %v2573 = vmul.f32 %v2541, %v687
      %v2574 = vmul.f32 %v2542, %v688
      %v2575 = vmul.f32 %v2543, %v689
      %v2576 = vmul.f32 %v2544, %v690
      %v2577 = vmul.f32 %v2545, %v691
      %v2578 = vmul.f32 %v2546, %v692
      %v2579 = vmul.f32 %v2547, %v693
      %v2580 = vmul.f32 %v2548, %v694
      %v2581 = vmul.f32 %v2549, %v695
      %v2582 = vmul.f32 %v2550, %v696
      %v2583 = vmul.f32 %v2551, %v697
      %v2584 = vmul.f32 %v2552, %v698
      %v2585 = vmul.f32 %v2553, %v699
      %v2586 = vmul.f32 %v2554, %v700
      %v2587 = vmul.f32 %v2555, %v701
      %v2588 = vmul.f32 %v2556, %v702
      %v2589 = vmul.f32 %v2557, %v703
      %v2590 = vmul.f32 %v2558, %v704
      %v2591 = vmul.f32 %v2559, %v705
      %v2592 = vmul.f32 %v2560, %v706
      %v2593 = vmul.f32 %v2561, %v707
      %v2594 = vmul.f32 %v2562, %v708
      %v2595 = vmul.f32 %v2563, %v709
      %v2596 = vmul.f32 %v2564, %v710
      %v2597 = vmul.f32 %v2565, %v711
      %v2598 = vld [vmem:[%s4 + $0x6] sm:$0x1]
      %2600 = vset.pattern.permute.xlu0 0
      %2601 = vperm.xlu0 %2600, %v2566
      %v2602 = vpop.permute.xlu0 %2601
      %2605 = vset.pattern.permute.xlu0 0
      %2606 = vperm.xlu0 %2605, %v2567
      %v2607 = vpop.permute.xlu0 %2606
      %2610 = vset.pattern.permute.xlu0 0
      %2611 = vperm.xlu0 %2610, %v2568
      %v2612 = vpop.permute.xlu0 %2611
      %2615 = vset.pattern.permute.xlu0 0
      %2616 = vperm.xlu0 %2615, %v2569
      %v2617 = vpop.permute.xlu0 %2616
      %2620 = vset.pattern.permute.xlu0 0
      %2621 = vperm.xlu0 %2620, %v2570
      %v2622 = vpop.permute.xlu0 %2621
      %2625 = vset.pattern.permute.xlu0 0
      %2626 = vperm.xlu0 %2625, %v2571
      %v2627 = vpop.permute.xlu0 %2626
      %2630 = vset.pattern.permute.xlu0 0
      %2631 = vperm.xlu0 %2630, %v2572
      %v2632 = vpop.permute.xlu0 %2631
      %2635 = vset.pattern.permute.xlu0 0
      %2636 = vperm.xlu0 %2635, %v2573
      %v2637 = vpop.permute.xlu0 %2636
      %2640 = vset.pattern.permute.xlu0 0
      %2641 = vperm.xlu0 %2640, %v2574
      %v2642 = vpop.permute.xlu0 %2641
      %2645 = vset.pattern.permute.xlu0 0
      %2646 = vperm.xlu0 %2645, %v2575
      %v2647 = vpop.permute.xlu0 %2646
      %2650 = vset.pattern.permute.xlu0 0
      %2651 = vperm.xlu0 %2650, %v2576
      %v2652 = vpop.permute.xlu0 %2651
      %2655 = vset.pattern.permute.xlu0 0
      %2656 = vperm.xlu0 %2655, %v2577
      %v2657 = vpop.permute.xlu0 %2656
      %2660 = vset.pattern.permute.xlu0 0
      %2661 = vperm.xlu0 %2660, %v2578
      %v2662 = vpop.permute.xlu0 %2661
      %2665 = vset.pattern.permute.xlu0 0
      %2666 = vperm.xlu0 %2665, %v2579
      %v2667 = vpop.permute.xlu0 %2666
      %2670 = vset.pattern.permute.xlu0 0
      %2671 = vperm.xlu0 %2670, %v2580
      %v2672 = vpop.permute.xlu0 %2671
      %2675 = vset.pattern.permute.xlu0 0
      %2676 = vperm.xlu0 %2675, %v2581
      %v2677 = vpop.permute.xlu0 %2676
      %2680 = vset.pattern.permute.xlu0 0
      %2681 = vperm.xlu0 %2680, %v2582
      %v2682 = vpop.permute.xlu0 %2681
      %2685 = vset.pattern.permute.xlu0 0
      %2686 = vperm.xlu0 %2685, %v2583
      %v2687 = vpop.permute.xlu0 %2686
      %2690 = vset.pattern.permute.xlu0 0
      %2691 = vperm.xlu0 %2690, %v2584
      %v2692 = vpop.permute.xlu0 %2691
      %2695 = vset.pattern.permute.xlu0 0
      %2696 = vperm.xlu0 %2695, %v2585
      %v2697 = vpop.permute.xlu0 %2696
      %2700 = vset.pattern.permute.xlu0 0
      %2701 = vperm.xlu0 %2700, %v2586
      %v2702 = vpop.permute.xlu0 %2701
      %2705 = vset.pattern.permute.xlu0 0
      %2706 = vperm.xlu0 %2705, %v2587
      %v2707 = vpop.permute.xlu0 %2706
      %2710 = vset.pattern.permute.xlu0 0
      %2711 = vperm.xlu0 %2710, %v2588
      %v2712 = vpop.permute.xlu0 %2711
      %2715 = vset.pattern.permute.xlu0 0
      %2716 = vperm.xlu0 %2715, %v2589
      %v2717 = vpop.permute.xlu0 %2716
      %2720 = vset.pattern.permute.xlu0 0
      %2721 = vperm.xlu0 %2720, %v2590
      %v2722 = vpop.permute.xlu0 %2721
      %2725 = vset.pattern.permute.xlu0 0
      %2726 = vperm.xlu0 %2725, %v2591
      %v2727 = vpop.permute.xlu0 %2726
      %2730 = vset.pattern.permute.xlu0 0
      %2731 = vperm.xlu0 %2730, %v2592
      %v2732 = vpop.permute.xlu0 %2731
      %2735 = vset.pattern.permute.xlu0 0
      %2736 = vperm.xlu0 %2735, %v2593
      %v2737 = vpop.permute.xlu0 %2736
      %2740 = vset.pattern.permute.xlu0 0
      %2741 = vperm.xlu0 %2740, %v2594
      %v2742 = vpop.permute.xlu0 %2741
      %2745 = vset.pattern.permute.xlu0 0
      %2746 = vperm.xlu0 %2745, %v2595
      %v2747 = vpop.permute.xlu0 %2746
      %2750 = vset.pattern.permute.xlu0 0
      %2751 = vperm.xlu0 %2750, %v2596
      %v2752 = vpop.permute.xlu0 %2751
      %2755 = vset.pattern.permute.xlu0 0
      %2756 = vperm.xlu0 %2755, %v2597
      %v2757 = vpop.permute.xlu0 %2756
      %v2759 = vlaneseq
      %v2760 = vshrl.u32 %v2759, 7
      %v2761 = vsub.s32 0, %v2760
      %v2762 = vrot.slane %v2598, %v2761
      %v2763 = vmul.f32 %v2602, %v2762
      %v2764 = vmul.f32 %v2607, %v2762
      %v2765 = vmul.f32 %v2612, %v2762
      %v2766 = vmul.f32 %v2617, %v2762
      %v2767 = vmul.f32 %v2622, %v2762
      %v2768 = vmul.f32 %v2627, %v2762
      %v2769 = vmul.f32 %v2632, %v2762
      %v2770 = vmul.f32 %v2637, %v2762
      %v2771 = vmul.f32 %v2642, %v2762
      %v2772 = vmul.f32 %v2647, %v2762
      %v2773 = vmul.f32 %v2652, %v2762
      %v2774 = vmul.f32 %v2657, %v2762
      %v2775 = vmul.f32 %v2662, %v2762
      %v2776 = vmul.f32 %v2667, %v2762
      %v2777 = vmul.f32 %v2672, %v2762
      %v2778 = vmul.f32 %v2677, %v2762
      %v2779 = vmul.f32 %v2682, %v2762
      %v2780 = vmul.f32 %v2687, %v2762
      %v2781 = vmul.f32 %v2692, %v2762
      %v2782 = vmul.f32 %v2697, %v2762
      %v2783 = vmul.f32 %v2702, %v2762
      %v2784 = vmul.f32 %v2707, %v2762
      %v2785 = vmul.f32 %v2712, %v2762
      %v2786 = vmul.f32 %v2717, %v2762
      %v2787 = vmul.f32 %v2722, %v2762
      %v2788 = vmul.f32 %v2727, %v2762
      %v2789 = vmul.f32 %v2732, %v2762
      %v2790 = vmul.f32 %v2737, %v2762
      %v2791 = vmul.f32 %v2742, %v2762
      %v2792 = vmul.f32 %v2747, %v2762
      %v2793 = vmul.f32 %v2752, %v2762
      %v2794 = vmul.f32 %v2757, %v2762
      %v2795 = vadd.f32 %v2502, %v2763
      %v2796 = vadd.f32 %v2503, %v2764
      %v2797 = vadd.f32 %v2504, %v2765
      %v2798 = vadd.f32 %v2505, %v2766
      %v2799 = vadd.f32 %v2506, %v2767
      %v2800 = vadd.f32 %v2507, %v2768
      %v2801 = vadd.f32 %v2508, %v2769
      %v2802 = vadd.f32 %v2509, %v2770
      %v2803 = vadd.f32 %v2510, %v2771
      %v2804 = vadd.f32 %v2511, %v2772
      %v2805 = vadd.f32 %v2512, %v2773
      %v2806 = vadd.f32 %v2513, %v2774
      %v2807 = vadd.f32 %v2514, %v2775
      %v2808 = vadd.f32 %v2515, %v2776
      %v2809 = vadd.f32 %v2516, %v2777
      %v2810 = vadd.f32 %v2517, %v2778
      %v2811 = vadd.f32 %v2518, %v2779
      %v2812 = vadd.f32 %v2519, %v2780
      %v2813 = vadd.f32 %v2520, %v2781
      %v2814 = vadd.f32 %v2521, %v2782
      %v2815 = vadd.f32 %v2522, %v2783
      %v2816 = vadd.f32 %v2523, %v2784
      %v2817 = vadd.f32 %v2524, %v2785
      %v2818 = vadd.f32 %v2525, %v2786
      %v2819 = vadd.f32 %v2526, %v2787
      %v2820 = vadd.f32 %v2527, %v2788
      %v2821 = vadd.f32 %v2528, %v2789
      %v2822 = vadd.f32 %v2529, %v2790
      %v2823 = vadd.f32 %v2530, %v2791
      %v2824 = vadd.f32 %v2531, %v2792
      %v2825 = vadd.f32 %v2532, %v2793
      %v2826 = vadd.f32 %v2533, %v2794
      %v2827 = vld [vmem:[#allocation2 + $0x21] sm:$0xff]
      %v2828 = vld [vmem:[#allocation2 + $0x29] sm:$0xff]
      %v2829 = vld [vmem:[#allocation2 + $0x31] sm:$0xff]
      %v2830 = vld [vmem:[#allocation2 + $0x39] sm:$0xff]
      %v2831 = vld [vmem:[#allocation2 + $0x41] sm:$0xff]
      %v2832 = vld [vmem:[#allocation2 + $0x49] sm:$0xff]
      %v2833 = vld [vmem:[#allocation2 + $0x51] sm:$0xff]
      %v2834 = vld [vmem:[#allocation2 + $0x59] sm:$0xff]
      %v2835 = vld [vmem:[#allocation2 + $0x61] sm:$0xff]
      %v2836 = vld [vmem:[#allocation2 + $0x69] sm:$0xff]
      %v2837 = vld [vmem:[#allocation2 + $0x71] sm:$0xff]
      %v2838 = vld [vmem:[#allocation2 + $0x79] sm:$0xff]
      %v2839 = vld [vmem:[#allocation2 + $0x81] sm:$0xff]
      %v2840 = vld [vmem:[#allocation2 + $0x89] sm:$0xff]
      %v2841 = vld [vmem:[#allocation2 + $0x91] sm:$0xff]
      %v2842 = vld [vmem:[#allocation2 + $0x99] sm:$0xff]
      %v2843 = vld [vmem:[#allocation2 + $0xa1] sm:$0xff]
      %v2844 = vld [vmem:[#allocation2 + $0xa9] sm:$0xff]
      %v2845 = vld [vmem:[#allocation2 + $0xb1] sm:$0xff]
      %v2846 = vld [vmem:[#allocation2 + $0xb9] sm:$0xff]
      %v2847 = vld [vmem:[#allocation2 + $0xc1] sm:$0xff]
      %v2848 = vld [vmem:[#allocation2 + $0xc9] sm:$0xff]
      %v2849 = vld [vmem:[#allocation2 + $0xd1] sm:$0xff]
      %v2850 = vld [vmem:[#allocation2 + $0xd9] sm:$0xff]
      %v2851 = vld [vmem:[#allocation2 + $0xe1] sm:$0xff]
      %v2852 = vld [vmem:[#allocation2 + $0xe9] sm:$0xff]
      %v2853 = vld [vmem:[#allocation2 + $0xf1] sm:$0xff]
      %v2854 = vld [vmem:[#allocation2 + $0xf9] sm:$0xff]
      %v2855 = vld [vmem:[#allocation2 + $0x101] sm:$0xff]
      %v2856 = vld [vmem:[#allocation2 + $0x109] sm:$0xff]
      %v2857 = vld [vmem:[#allocation2 + $0x111] sm:$0xff]
      %v2858 = vld [vmem:[#allocation2 + $0x119] sm:$0xff]
      %v2859 = vld [vmem:[%s4 + $0x7] sm:$0x1]
      %2861 = vset.pattern.permute.xlu0 0
      %2862 = vperm.xlu0 %2861, %v2827
      %v2863 = vpop.permute.xlu0 %2862
      %2866 = vset.pattern.permute.xlu0 0
      %2867 = vperm.xlu0 %2866, %v2828
      %v2868 = vpop.permute.xlu0 %2867
      %2871 = vset.pattern.permute.xlu0 0
      %2872 = vperm.xlu0 %2871, %v2829
      %v2873 = vpop.permute.xlu0 %2872
      %2876 = vset.pattern.permute.xlu0 0
      %2877 = vperm.xlu0 %2876, %v2830
      %v2878 = vpop.permute.xlu0 %2877
      %2881 = vset.pattern.permute.xlu0 0
      %2882 = vperm.xlu0 %2881, %v2831
      %v2883 = vpop.permute.xlu0 %2882
      %2886 = vset.pattern.permute.xlu0 0
      %2887 = vperm.xlu0 %2886, %v2832
      %v2888 = vpop.permute.xlu0 %2887
      %2891 = vset.pattern.permute.xlu0 0
      %2892 = vperm.xlu0 %2891, %v2833
      %v2893 = vpop.permute.xlu0 %2892
      %2896 = vset.pattern.permute.xlu0 0
      %2897 = vperm.xlu0 %2896, %v2834
      %v2898 = vpop.permute.xlu0 %2897
      %2901 = vset.pattern.permute.xlu0 0
      %2902 = vperm.xlu0 %2901, %v2835
      %v2903 = vpop.permute.xlu0 %2902
      %2906 = vset.pattern.permute.xlu0 0
      %2907 = vperm.xlu0 %2906, %v2836
      %v2908 = vpop.permute.xlu0 %2907
      %2911 = vset.pattern.permute.xlu0 0
      %2912 = vperm.xlu0 %2911, %v2837
      %v2913 = vpop.permute.xlu0 %2912
      %2916 = vset.pattern.permute.xlu0 0
      %2917 = vperm.xlu0 %2916, %v2838
      %v2918 = vpop.permute.xlu0 %2917
      %2921 = vset.pattern.permute.xlu0 0
      %2922 = vperm.xlu0 %2921, %v2839
      %v2923 = vpop.permute.xlu0 %2922
      %2926 = vset.pattern.permute.xlu0 0
      %2927 = vperm.xlu0 %2926, %v2840
      %v2928 = vpop.permute.xlu0 %2927
      %2931 = vset.pattern.permute.xlu0 0
      %2932 = vperm.xlu0 %2931, %v2841
      %v2933 = vpop.permute.xlu0 %2932
      %2936 = vset.pattern.permute.xlu0 0
      %2937 = vperm.xlu0 %2936, %v2842
      %v2938 = vpop.permute.xlu0 %2937
      %2941 = vset.pattern.permute.xlu0 0
      %2942 = vperm.xlu0 %2941, %v2843
      %v2943 = vpop.permute.xlu0 %2942
      %2946 = vset.pattern.permute.xlu0 0
      %2947 = vperm.xlu0 %2946, %v2844
      %v2948 = vpop.permute.xlu0 %2947
      %2951 = vset.pattern.permute.xlu0 0
      %2952 = vperm.xlu0 %2951, %v2845
      %v2953 = vpop.permute.xlu0 %2952
      %2956 = vset.pattern.permute.xlu0 0
      %2957 = vperm.xlu0 %2956, %v2846
      %v2958 = vpop.permute.xlu0 %2957
      %2961 = vset.pattern.permute.xlu0 0
      %2962 = vperm.xlu0 %2961, %v2847
      %v2963 = vpop.permute.xlu0 %2962
      %2966 = vset.pattern.permute.xlu0 0
      %2967 = vperm.xlu0 %2966, %v2848
      %v2968 = vpop.permute.xlu0 %2967
      %2971 = vset.pattern.permute.xlu0 0
      %2972 = vperm.xlu0 %2971, %v2849
      %v2973 = vpop.permute.xlu0 %2972
      %2976 = vset.pattern.permute.xlu0 0
      %2977 = vperm.xlu0 %2976, %v2850
      %v2978 = vpop.permute.xlu0 %2977
      %2981 = vset.pattern.permute.xlu0 0
      %2982 = vperm.xlu0 %2981, %v2851
      %v2983 = vpop.permute.xlu0 %2982
      %2986 = vset.pattern.permute.xlu0 0
      %2987 = vperm.xlu0 %2986, %v2852
      %v2988 = vpop.permute.xlu0 %2987
      %2991 = vset.pattern.permute.xlu0 0
      %2992 = vperm.xlu0 %2991, %v2853
      %v2993 = vpop.permute.xlu0 %2992
      %2996 = vset.pattern.permute.xlu0 0
      %2997 = vperm.xlu0 %2996, %v2854
      %v2998 = vpop.permute.xlu0 %2997
      %3001 = vset.pattern.permute.xlu0 0
      %3002 = vperm.xlu0 %3001, %v2855
      %v3003 = vpop.permute.xlu0 %3002
      %3006 = vset.pattern.permute.xlu0 0
      %3007 = vperm.xlu0 %3006, %v2856
      %v3008 = vpop.permute.xlu0 %3007
      %3011 = vset.pattern.permute.xlu0 0
      %3012 = vperm.xlu0 %3011, %v2857
      %v3013 = vpop.permute.xlu0 %3012
      %3016 = vset.pattern.permute.xlu0 0
      %3017 = vperm.xlu0 %3016, %v2858
      %v3018 = vpop.permute.xlu0 %3017
      %v3020 = vlaneseq
      %v3021 = vshrl.u32 %v3020, 7
      %v3022 = vsub.s32 0, %v3021
      %v3023 = vrot.slane %v2859, %v3022
      %v3024 = vmul.f32 %v2863, %v3023
      %v3025 = vmul.f32 %v2868, %v3023
      %v3026 = vmul.f32 %v2873, %v3023
      %v3027 = vmul.f32 %v2878, %v3023
      %v3028 = vmul.f32 %v2883, %v3023
      %v3029 = vmul.f32 %v2888, %v3023
      %v3030 = vmul.f32 %v2893, %v3023
      %v3031 = vmul.f32 %v2898, %v3023
      %v3032 = vmul.f32 %v2903, %v3023
      %v3033 = vmul.f32 %v2908, %v3023
      %v3034 = vmul.f32 %v2913, %v3023
      %v3035 = vmul.f32 %v2918, %v3023
      %v3036 = vmul.f32 %v2923, %v3023
      %v3037 = vmul.f32 %v2928, %v3023
      %v3038 = vmul.f32 %v2933, %v3023
      %v3039 = vmul.f32 %v2938, %v3023
      %v3040 = vmul.f32 %v2943, %v3023
      %v3041 = vmul.f32 %v2948, %v3023
      %v3042 = vmul.f32 %v2953, %v3023
      %v3043 = vmul.f32 %v2958, %v3023
      %v3044 = vmul.f32 %v2963, %v3023
      %v3045 = vmul.f32 %v2968, %v3023
      %v3046 = vmul.f32 %v2973, %v3023
      %v3047 = vmul.f32 %v2978, %v3023
      %v3048 = vmul.f32 %v2983, %v3023
      %v3049 = vmul.f32 %v2988, %v3023
      %v3050 = vmul.f32 %v2993, %v3023
      %v3051 = vmul.f32 %v2998, %v3023
      %v3052 = vmul.f32 %v3003, %v3023
      %v3053 = vmul.f32 %v3008, %v3023
      %v3054 = vmul.f32 %v3013, %v3023
      %v3055 = vmul.f32 %v3018, %v3023
      %v3056 = vadd.f32 %v2795, %v3024
      %v3057 = vadd.f32 %v2796, %v3025
      %v3058 = vadd.f32 %v2797, %v3026
      %v3059 = vadd.f32 %v2798, %v3027
      %v3060 = vadd.f32 %v2799, %v3028
      %v3061 = vadd.f32 %v2800, %v3029
      %v3062 = vadd.f32 %v2801, %v3030
      %v3063 = vadd.f32 %v2802, %v3031
      %v3064 = vadd.f32 %v2803, %v3032
      %v3065 = vadd.f32 %v2804, %v3033
      %v3066 = vadd.f32 %v2805, %v3034
      %v3067 = vadd.f32 %v2806, %v3035
      %v3068 = vadd.f32 %v2807, %v3036
      %v3069 = vadd.f32 %v2808, %v3037
      %v3070 = vadd.f32 %v2809, %v3038
      %v3071 = vadd.f32 %v2810, %v3039
      %v3072 = vadd.f32 %v2811, %v3040
      %v3073 = vadd.f32 %v2812, %v3041
      %v3074 = vadd.f32 %v2813, %v3042
      %v3075 = vadd.f32 %v2814, %v3043
      %v3076 = vadd.f32 %v2815, %v3044
      %v3077 = vadd.f32 %v2816, %v3045
      %v3078 = vadd.f32 %v2817, %v3046
      %v3079 = vadd.f32 %v2818, %v3047
      %v3080 = vadd.f32 %v2819, %v3048
      %v3081 = vadd.f32 %v2820, %v3049
      %v3082 = vadd.f32 %v2821, %v3050
      %v3083 = vadd.f32 %v2822, %v3051
      %v3084 = vadd.f32 %v2823, %v3052
      %v3085 = vadd.f32 %v2824, %v3053
      %v3086 = vadd.f32 %v2825, %v3054
      %v3087 = vadd.f32 %v2826, %v3055
      %v3088 = vld [vmem:[#allocation2 + $0x22] sm:$0xff]
      %v3089 = vld [vmem:[#allocation2 + $0x2a] sm:$0xff]
      %v3090 = vld [vmem:[#allocation2 + $0x32] sm:$0xff]
      %v3091 = vld [vmem:[#allocation2 + $0x3a] sm:$0xff]
      %v3092 = vld [vmem:[#allocation2 + $0x42] sm:$0xff]
      %v3093 = vld [vmem:[#allocation2 + $0x4a] sm:$0xff]
      %v3094 = vld [vmem:[#allocation2 + $0x52] sm:$0xff]
      %v3095 = vld [vmem:[#allocation2 + $0x5a] sm:$0xff]
      %v3096 = vld [vmem:[#allocation2 + $0x62] sm:$0xff]
      %v3097 = vld [vmem:[#allocation2 + $0x6a] sm:$0xff]
      %v3098 = vld [vmem:[#allocation2 + $0x72] sm:$0xff]
      %v3099 = vld [vmem:[#allocation2 + $0x7a] sm:$0xff]
      %v3100 = vld [vmem:[#allocation2 + $0x82] sm:$0xff]
      %v3101 = vld [vmem:[#allocation2 + $0x8a] sm:$0xff]
      %v3102 = vld [vmem:[#allocation2 + $0x92] sm:$0xff]
      %v3103 = vld [vmem:[#allocation2 + $0x9a] sm:$0xff]
      %v3104 = vld [vmem:[#allocation2 + $0xa2] sm:$0xff]
      %v3105 = vld [vmem:[#allocation2 + $0xaa] sm:$0xff]
      %v3106 = vld [vmem:[#allocation2 + $0xb2] sm:$0xff]
      %v3107 = vld [vmem:[#allocation2 + $0xba] sm:$0xff]
      %v3108 = vld [vmem:[#allocation2 + $0xc2] sm:$0xff]
      %v3109 = vld [vmem:[#allocation2 + $0xca] sm:$0xff]
      %v3110 = vld [vmem:[#allocation2 + $0xd2] sm:$0xff]
      %v3111 = vld [vmem:[#allocation2 + $0xda] sm:$0xff]
      %v3112 = vld [vmem:[#allocation2 + $0xe2] sm:$0xff]
      %v3113 = vld [vmem:[#allocation2 + $0xea] sm:$0xff]
      %v3114 = vld [vmem:[#allocation2 + $0xf2] sm:$0xff]
      %v3115 = vld [vmem:[#allocation2 + $0xfa] sm:$0xff]
      %v3116 = vld [vmem:[#allocation2 + $0x102] sm:$0xff]
      %v3117 = vld [vmem:[#allocation2 + $0x10a] sm:$0xff]
      %v3118 = vld [vmem:[#allocation2 + $0x112] sm:$0xff]
      %v3119 = vld [vmem:[#allocation2 + $0x11a] sm:$0xff]
      %v3120 = vmul.f32 %v3088, %v1331
      %v3121 = vmul.f32 %v3089, %v1333
      %v3122 = vmul.f32 %v3090, %v1335
      %v3123 = vmul.f32 %v3091, %v1337
      %v3124 = vmul.f32 %v3092, %v1339
      %v3125 = vmul.f32 %v3093, %v1341
      %v3126 = vmul.f32 %v3094, %v1343
      %v3127 = vmul.f32 %v3095, %v1345
      %v3128 = vmul.f32 %v3096, %v1347
      %v3129 = vmul.f32 %v3097, %v1349
      %v3130 = vmul.f32 %v3098, %v1351
      %v3131 = vmul.f32 %v3099, %v1353
      %v3132 = vmul.f32 %v3100, %v1355
      %v3133 = vmul.f32 %v3101, %v1357
      %v3134 = vmul.f32 %v3102, %v1359
      %v3135 = vmul.f32 %v3103, %v1361
      %v3136 = vmul.f32 %v3104, %v1363
      %v3137 = vmul.f32 %v3105, %v1365
      %v3138 = vmul.f32 %v3106, %v1367
      %v3139 = vmul.f32 %v3107, %v1369
      %v3140 = vmul.f32 %v3108, %v1371
      %v3141 = vmul.f32 %v3109, %v1373
      %v3142 = vmul.f32 %v3110, %v1375
      %v3143 = vmul.f32 %v3111, %v1377
      %v3144 = vmul.f32 %v3112, %v1379
      %v3145 = vmul.f32 %v3113, %v1381
      %v3146 = vmul.f32 %v3114, %v1383
      %v3147 = vmul.f32 %v3115, %v1385
      %v3148 = vmul.f32 %v3116, %v1387
      %v3149 = vmul.f32 %v3117, %v1389
      %v3150 = vmul.f32 %v3118, %v1391
      %v3151 = vmul.f32 %v3119, %v1393
      %v3152 = vld [vmem:[%s4 + $0x8] sm:$0x1]
      %3154 = vset.pattern.permute.xlu0 0
      %3155 = vperm.xlu0 %3154, %v3120
      %v3156 = vpop.permute.xlu0 %3155
      %3159 = vset.pattern.permute.xlu0 0
      %3160 = vperm.xlu0 %3159, %v3121
      %v3161 = vpop.permute.xlu0 %3160
      %3164 = vset.pattern.permute.xlu0 0
      %3165 = vperm.xlu0 %3164, %v3122
      %v3166 = vpop.permute.xlu0 %3165
      %3169 = vset.pattern.permute.xlu0 0
      %3170 = vperm.xlu0 %3169, %v3123
      %v3171 = vpop.permute.xlu0 %3170
      %3174 = vset.pattern.permute.xlu0 0
      %3175 = vperm.xlu0 %3174, %v3124
      %v3176 = vpop.permute.xlu0 %3175
      %3179 = vset.pattern.permute.xlu0 0
      %3180 = vperm.xlu0 %3179, %v3125
      %v3181 = vpop.permute.xlu0 %3180
      %3184 = vset.pattern.permute.xlu0 0
      %3185 = vperm.xlu0 %3184, %v3126
      %v3186 = vpop.permute.xlu0 %3185
      %3189 = vset.pattern.permute.xlu0 0
      %3190 = vperm.xlu0 %3189, %v3127
      %v3191 = vpop.permute.xlu0 %3190
      %3194 = vset.pattern.permute.xlu0 0
      %3195 = vperm.xlu0 %3194, %v3128
      %v3196 = vpop.permute.xlu0 %3195
      %3199 = vset.pattern.permute.xlu0 0
      %3200 = vperm.xlu0 %3199, %v3129
      %v3201 = vpop.permute.xlu0 %3200
      %3204 = vset.pattern.permute.xlu0 0
      %3205 = vperm.xlu0 %3204, %v3130
      %v3206 = vpop.permute.xlu0 %3205
      %3209 = vset.pattern.permute.xlu0 0
      %3210 = vperm.xlu0 %3209, %v3131
      %v3211 = vpop.permute.xlu0 %3210
      %3214 = vset.pattern.permute.xlu0 0
      %3215 = vperm.xlu0 %3214, %v3132
      %v3216 = vpop.permute.xlu0 %3215
      %3219 = vset.pattern.permute.xlu0 0
      %3220 = vperm.xlu0 %3219, %v3133
      %v3221 = vpop.permute.xlu0 %3220
      %3224 = vset.pattern.permute.xlu0 0
      %3225 = vperm.xlu0 %3224, %v3134
      %v3226 = vpop.permute.xlu0 %3225
      %3229 = vset.pattern.permute.xlu0 0
      %3230 = vperm.xlu0 %3229, %v3135
      %v3231 = vpop.permute.xlu0 %3230
      %3234 = vset.pattern.permute.xlu0 0
      %3235 = vperm.xlu0 %3234, %v3136
      %v3236 = vpop.permute.xlu0 %3235
      %3239 = vset.pattern.permute.xlu0 0
      %3240 = vperm.xlu0 %3239, %v3137
      %v3241 = vpop.permute.xlu0 %3240
      %3244 = vset.pattern.permute.xlu0 0
      %3245 = vperm.xlu0 %3244, %v3138
      %v3246 = vpop.permute.xlu0 %3245
      %3249 = vset.pattern.permute.xlu0 0
      %3250 = vperm.xlu0 %3249, %v3139
      %v3251 = vpop.permute.xlu0 %3250
      %3254 = vset.pattern.permute.xlu0 0
      %3255 = vperm.xlu0 %3254, %v3140
      %v3256 = vpop.permute.xlu0 %3255
      %3259 = vset.pattern.permute.xlu0 0
      %3260 = vperm.xlu0 %3259, %v3141
      %v3261 = vpop.permute.xlu0 %3260
      %3264 = vset.pattern.permute.xlu0 0
      %3265 = vperm.xlu0 %3264, %v3142
      %v3266 = vpop.permute.xlu0 %3265
      %3269 = vset.pattern.permute.xlu0 0
      %3270 = vperm.xlu0 %3269, %v3143
      %v3271 = vpop.permute.xlu0 %3270
      %3274 = vset.pattern.permute.xlu0 0
      %3275 = vperm.xlu0 %3274, %v3144
      %v3276 = vpop.permute.xlu0 %3275
      %3279 = vset.pattern.permute.xlu0 0
      %3280 = vperm.xlu0 %3279, %v3145
      %v3281 = vpop.permute.xlu0 %3280
      %3284 = vset.pattern.permute.xlu0 0
      %3285 = vperm.xlu0 %3284, %v3146
      %v3286 = vpop.permute.xlu0 %3285
      %3289 = vset.pattern.permute.xlu0 0
      %3290 = vperm.xlu0 %3289, %v3147
      %v3291 = vpop.permute.xlu0 %3290
      %3294 = vset.pattern.permute.xlu0 0
      %3295 = vperm.xlu0 %3294, %v3148
      %v3296 = vpop.permute.xlu0 %3295
      %3299 = vset.pattern.permute.xlu0 0
      %3300 = vperm.xlu0 %3299, %v3149
      %v3301 = vpop.permute.xlu0 %3300
      %3304 = vset.pattern.permute.xlu0 0
      %3305 = vperm.xlu0 %3304, %v3150
      %v3306 = vpop.permute.xlu0 %3305
      %3309 = vset.pattern.permute.xlu0 0
      %3310 = vperm.xlu0 %3309, %v3151
      %v3311 = vpop.permute.xlu0 %3310
      %v3313 = vlaneseq
      %v3314 = vshrl.u32 %v3313, 7
      %v3315 = vsub.s32 0, %v3314
      %v3316 = vrot.slane %v3152, %v3315
      %v3317 = vmul.f32 %v3156, %v3316
      %v3318 = vmul.f32 %v3161, %v3316
      %v3319 = vmul.f32 %v3166, %v3316
      %v3320 = vmul.f32 %v3171, %v3316
      %v3321 = vmul.f32 %v3176, %v3316
      %v3322 = vmul.f32 %v3181, %v3316
      %v3323 = vmul.f32 %v3186, %v3316
      %v3324 = vmul.f32 %v3191, %v3316
      %v3325 = vmul.f32 %v3196, %v3316
      %v3326 = vmul.f32 %v3201, %v3316
      %v3327 = vmul.f32 %v3206, %v3316
      %v3328 = vmul.f32 %v3211, %v3316
      %v3329 = vmul.f32 %v3216, %v3316
      %v3330 = vmul.f32 %v3221, %v3316
      %v3331 = vmul.f32 %v3226, %v3316
      %v3332 = vmul.f32 %v3231, %v3316
      %v3333 = vmul.f32 %v3236, %v3316
      %v3334 = vmul.f32 %v3241, %v3316
      %v3335 = vmul.f32 %v3246, %v3316
      %v3336 = vmul.f32 %v3251, %v3316
      %v3337 = vmul.f32 %v3256, %v3316
      %v3338 = vmul.f32 %v3261, %v3316
      %v3339 = vmul.f32 %v3266, %v3316
      %v3340 = vmul.f32 %v3271, %v3316
      %v3341 = vmul.f32 %v3276, %v3316
      %v3342 = vmul.f32 %v3281, %v3316
      %v3343 = vmul.f32 %v3286, %v3316
      %v3344 = vmul.f32 %v3291, %v3316
      %v3345 = vmul.f32 %v3296, %v3316
      %v3346 = vmul.f32 %v3301, %v3316
      %v3347 = vmul.f32 %v3306, %v3316
      %v3348 = vmul.f32 %v3311, %v3316
      %v3349 = vadd.f32 %v3056, %v3317
      %v3350 = vadd.f32 %v3057, %v3318
      %v3351 = vadd.f32 %v3058, %v3319
      %v3352 = vadd.f32 %v3059, %v3320
      %v3353 = vadd.f32 %v3060, %v3321
      %v3354 = vadd.f32 %v3061, %v3322
      %v3355 = vadd.f32 %v3062, %v3323
      %v3356 = vadd.f32 %v3063, %v3324
      %v3357 = vadd.f32 %v3064, %v3325
      %v3358 = vadd.f32 %v3065, %v3326
      %v3359 = vadd.f32 %v3066, %v3327
      %v3360 = vadd.f32 %v3067, %v3328
      %v3361 = vadd.f32 %v3068, %v3329
      %v3362 = vadd.f32 %v3069, %v3330
      %v3363 = vadd.f32 %v3070, %v3331
      %v3364 = vadd.f32 %v3071, %v3332
      %v3365 = vadd.f32 %v3072, %v3333
      %v3366 = vadd.f32 %v3073, %v3334
      %v3367 = vadd.f32 %v3074, %v3335
      %v3368 = vadd.f32 %v3075, %v3336
      %v3369 = vadd.f32 %v3076, %v3337
      %v3370 = vadd.f32 %v3077, %v3338
      %v3371 = vadd.f32 %v3078, %v3339
      %v3372 = vadd.f32 %v3079, %v3340
      %v3373 = vadd.f32 %v3080, %v3341
      %v3374 = vadd.f32 %v3081, %v3342
      %v3375 = vadd.f32 %v3082, %v3343
      %v3376 = vadd.f32 %v3083, %v3344
      %v3377 = vadd.f32 %v3084, %v3345
      %v3378 = vadd.f32 %v3085, %v3346
      %v3379 = vadd.f32 %v3086, %v3347
      %v3380 = vadd.f32 %v3087, %v3348
      %v3381 = vld [vmem:[%s5] sm:$0x1]
      %v3383 = vlaneseq
      %v3384 = vshrl.u32 %v3383, 7
      %v3385 = vsub.s32 0, %v3384
      %v3386 = vrot.slane %v3381, %v3385
      %v3388 = vadd.f32 %v3349, %v3386
      %v3389 = vadd.f32 %v3350, %v3386
      %v3390 = vadd.f32 %v3351, %v3386
      %v3391 = vadd.f32 %v3352, %v3386
      %v3392 = vadd.f32 %v3353, %v3386
      %v3393 = vadd.f32 %v3354, %v3386
      %v3394 = vadd.f32 %v3355, %v3386
      %v3395 = vadd.f32 %v3356, %v3386
      %v3396 = vadd.f32 %v3357, %v3386
      %v3397 = vadd.f32 %v3358, %v3386
      %v3398 = vadd.f32 %v3359, %v3386
      %v3399 = vadd.f32 %v3360, %v3386
      %v3400 = vadd.f32 %v3361, %v3386
      %v3401 = vadd.f32 %v3362, %v3386
      %v3402 = vadd.f32 %v3363, %v3386
      %v3403 = vadd.f32 %v3364, %v3386
      %v3404 = vadd.f32 %v3365, %v3386
      %v3405 = vadd.f32 %v3366, %v3386
      %v3406 = vadd.f32 %v3367, %v3386
      %v3407 = vadd.f32 %v3368, %v3386
      %v3408 = vadd.f32 %v3369, %v3386
      %v3409 = vadd.f32 %v3370, %v3386
      %v3410 = vadd.f32 %v3371, %v3386
      %v3411 = vadd.f32 %v3372, %v3386
      %v3412 = vadd.f32 %v3373, %v3386
      %v3413 = vadd.f32 %v3374, %v3386
      %v3414 = vadd.f32 %v3375, %v3386
      %v3415 = vadd.f32 %v3376, %v3386
      %v3416 = vadd.f32 %v3377, %v3386
      %v3417 = vadd.f32 %v3378, %v3386
      %v3418 = vadd.f32 %v3379, %v3386
      %v3419 = vadd.f32 %v3380, %v3386
      %v3420 = vmax.f32 %v3388, 0.0
      %v3421 = vmax.f32 %v3389, 0.0
      %v3422 = vmax.f32 %v3390, 0.0
      %v3423 = vmax.f32 %v3391, 0.0
      %v3424 = vmax.f32 %v3392, 0.0
      %v3425 = vmax.f32 %v3393, 0.0
      %v3426 = vmax.f32 %v3394, 0.0
      %v3427 = vmax.f32 %v3395, 0.0
      %v3428 = vmax.f32 %v3396, 0.0
      %v3429 = vmax.f32 %v3397, 0.0
      %v3430 = vmax.f32 %v3398, 0.0
      %v3431 = vmax.f32 %v3399, 0.0
      %v3432 = vmax.f32 %v3400, 0.0
      %v3433 = vmax.f32 %v3401, 0.0
      %v3434 = vmax.f32 %v3402, 0.0
      %v3435 = vmax.f32 %v3403, 0.0
      %v3436 = vmax.f32 %v3404, 0.0
      %v3437 = vmax.f32 %v3405, 0.0
      %v3438 = vmax.f32 %v3406, 0.0
      %v3439 = vmax.f32 %v3407, 0.0
      %v3440 = vmax.f32 %v3408, 0.0
      %v3441 = vmax.f32 %v3409, 0.0
      %v3442 = vmax.f32 %v3410, 0.0
      %v3443 = vmax.f32 %v3411, 0.0
      %v3444 = vmax.f32 %v3412, 0.0
      %v3445 = vmax.f32 %v3413, 0.0
      %v3446 = vmax.f32 %v3414, 0.0
      %v3447 = vmax.f32 %v3415, 0.0
      %v3448 = vmax.f32 %v3416, 0.0
      %v3449 = vmax.f32 %v3417, 0.0
      %v3450 = vmax.f32 %v3418, 0.0
      %v3451 = vmax.f32 %v3419, 0.0
      %vm3482 = vcmask 1046528
      %v3483 = vrot.slane %v3420, 1
      %v3484 = vrot.slane %v3421, 1
      %v3485 = vsel %vm3482, %v3483, %v3484
      %v3486 = vrot.slane %v3422, 1
      %v3487 = vsel %vm3482, %v3484, %v3486
      %v3488 = vrot.slane %v3423, 1
      %v3489 = vsel %vm3482, %v3486, %v3488
      %v3490 = vrot.slane %v3424, 1
      %v3491 = vsel %vm3482, %v3488, %v3490
      %v3492 = vrot.slane %v3425, 1
      %v3493 = vsel %vm3482, %v3490, %v3492
      %v3494 = vrot.slane %v3426, 1
      %v3495 = vsel %vm3482, %v3492, %v3494
      %v3496 = vrot.slane %v3427, 1
      %v3497 = vsel %vm3482, %v3494, %v3496
      %v3498 = vrot.slane %v3428, 1
      %v3499 = vsel %vm3482, %v3496, %v3498
      %v3500 = vrot.slane %v3429, 1
      %v3501 = vsel %vm3482, %v3498, %v3500
      %v3502 = vrot.slane %v3430, 1
      %v3503 = vsel %vm3482, %v3500, %v3502
      %v3504 = vrot.slane %v3431, 1
      %v3505 = vsel %vm3482, %v3502, %v3504
      %v3506 = vrot.slane %v3432, 1
      %v3507 = vsel %vm3482, %v3504, %v3506
      %v3508 = vrot.slane %v3433, 1
      %v3509 = vsel %vm3482, %v3506, %v3508
      %v3510 = vrot.slane %v3434, 1
      %v3511 = vsel %vm3482, %v3508, %v3510
      %v3512 = vrot.slane %v3435, 1
      %v3513 = vsel %vm3482, %v3510, %v3512
      %v3514 = vrot.slane %v3436, 1
      %v3515 = vsel %vm3482, %v3512, %v3514
      %v3516 = vrot.slane %v3437, 1
      %v3517 = vsel %vm3482, %v3514, %v3516
      %v3518 = vrot.slane %v3438, 1
      %v3519 = vsel %vm3482, %v3516, %v3518
      %v3520 = vrot.slane %v3439, 1
      %v3521 = vsel %vm3482, %v3518, %v3520
      %v3522 = vrot.slane %v3440, 1
      %v3523 = vsel %vm3482, %v3520, %v3522
      %v3524 = vrot.slane %v3441, 1
      %v3525 = vsel %vm3482, %v3522, %v3524
      %v3526 = vrot.slane %v3442, 1
      %v3527 = vsel %vm3482, %v3524, %v3526
      %v3528 = vrot.slane %v3443, 1
      %v3529 = vsel %vm3482, %v3526, %v3528
      %v3530 = vrot.slane %v3444, 1
      %v3531 = vsel %vm3482, %v3528, %v3530
      %v3532 = vrot.slane %v3445, 1
      %v3533 = vsel %vm3482, %v3530, %v3532
      %v3534 = vrot.slane %v3446, 1
      %v3535 = vsel %vm3482, %v3532, %v3534
      %v3536 = vrot.slane %v3447, 1
      %v3537 = vsel %vm3482, %v3534, %v3536
      %v3538 = vrot.slane %v3448, 1
      %v3539 = vsel %vm3482, %v3536, %v3538
      %v3540 = vrot.slane %v3449, 1
      %v3541 = vsel %vm3482, %v3538, %v3540
      %v3572 = vmax.f32 %v3420, %v3485
      %v3573 = vmax.f32 %v3421, %v3487
      %v3574 = vmax.f32 %v3422, %v3489
      %v3575 = vmax.f32 %v3423, %v3491
      %v3576 = vmax.f32 %v3424, %v3493
      %v3577 = vmax.f32 %v3425, %v3495
      %v3578 = vmax.f32 %v3426, %v3497
      %v3579 = vmax.f32 %v3427, %v3499
      %v3580 = vmax.f32 %v3428, %v3501
      %v3581 = vmax.f32 %v3429, %v3503
      %v3582 = vmax.f32 %v3430, %v3505
      %v3583 = vmax.f32 %v3431, %v3507
      %v3584 = vmax.f32 %v3432, %v3509
      %v3585 = vmax.f32 %v3433, %v3511
      %v3586 = vmax.f32 %v3434, %v3513
      %v3587 = vmax.f32 %v3435, %v3515
      %v3588 = vmax.f32 %v3436, %v3517
      %v3589 = vmax.f32 %v3437, %v3519
      %v3590 = vmax.f32 %v3438, %v3521
      %v3591 = vmax.f32 %v3439, %v3523
      %v3592 = vmax.f32 %v3440, %v3525
      %v3593 = vmax.f32 %v3441, %v3527
      %v3594 = vmax.f32 %v3442, %v3529
      %v3595 = vmax.f32 %v3443, %v3531
      %v3596 = vmax.f32 %v3444, %v3533
      %v3597 = vmax.f32 %v3445, %v3535
      %v3598 = vmax.f32 %v3446, %v3537
      %v3599 = vmax.f32 %v3447, %v3539
      %v3600 = vmax.f32 %v3448, %v3541
      %v3601 = vmax.f32 %v3449, %v3540
      %v3604 = vrot.slane %v3450, 1
      %v3605 = vsel %vm3482, %v3540, %v3604
      %v3606 = vrot.slane %v3451, 1
      %v3607 = vsel %vm3482, %v3604, %v3606
      %v3611 = vmax.f32 %v3449, %v3605
      %v3612 = vmax.f32 %v3450, %v3607
      %v3613 = vmax.f32 %v3451, %v3606
      %v3614 = vmax.f32 %v3572, %v3574
      %v3615 = vmax.f32 %v3573, %v3575
      %v3616 = vmax.f32 %v3574, %v3576
      %v3617 = vmax.f32 %v3575, %v3577
      %v3618 = vmax.f32 %v3576, %v3578
      %v3619 = vmax.f32 %v3577, %v3579
      %v3620 = vmax.f32 %v3578, %v3580
      %v3621 = vmax.f32 %v3579, %v3581
      %v3622 = vmax.f32 %v3580, %v3582
      %v3623 = vmax.f32 %v3581, %v3583
      %v3624 = vmax.f32 %v3582, %v3584
      %v3625 = vmax.f32 %v3583, %v3585
      %v3626 = vmax.f32 %v3584, %v3586
      %v3627 = vmax.f32 %v3585, %v3587
      %v3628 = vmax.f32 %v3586, %v3588
      %v3629 = vmax.f32 %v3587, %v3589
      %v3630 = vmax.f32 %v3588, %v3590
      %v3631 = vmax.f32 %v3589, %v3591
      %v3632 = vmax.f32 %v3590, %v3592
      %v3633 = vmax.f32 %v3591, %v3593
      %v3634 = vmax.f32 %v3592, %v3594
      %v3635 = vmax.f32 %v3593, %v3595
      %v3636 = vmax.f32 %v3594, %v3596
      %v3637 = vmax.f32 %v3595, %v3597
      %v3638 = vmax.f32 %v3596, %v3598
      %v3639 = vmax.f32 %v3597, %v3599
      %v3640 = vmax.f32 %v3598, %v3600
      %v3641 = vmax.f32 %v3599, %v3611
      %v3642 = vmax.f32 %v3600, %v3612
      %v3643 = vmax.f32 %v3601, %v3613
      %v3644 = vld [vmem:[%s12] sm:$0xff]
      %v3645 = vld [vmem:[%s12 + $0x8] sm:$0xff]
      %v3646 = vld [vmem:[%s12 + $0x10] sm:$0xff]
      %v3647 = vld [vmem:[%s12 + $0x18] sm:$0xff]
      %v3648 = vld [vmem:[%s12 + $0x20] sm:$0xff]
      %v3649 = vld [vmem:[%s12 + $0x28] sm:$0xff]
      %v3650 = vld [vmem:[%s12 + $0x30] sm:$0xff]
      %v3651 = vld [vmem:[%s12 + $0x38] sm:$0xff]
      %v3652 = vpack.c.bf16 %v3615, %v3614
      %v3653 = vpack.c.bf16 %v3617, %v3616
      %v3654 = vpack.c.bf16 %v3619, %v3618
      %v3655 = vpack.c.bf16 %v3621, %v3620
      %v3656 = vpack.c.bf16 %v3623, %v3622
      %v3657 = vpack.c.bf16 %v3625, %v3624
      %v3658 = vpack.c.bf16 %v3627, %v3626
      %v3659 = vpack.c.bf16 %v3629, %v3628
      %v3660 = vpack.c.bf16 %v3631, %v3630
      %v3661 = vpack.c.bf16 %v3633, %v3632
      %v3662 = vpack.c.bf16 %v3635, %v3634
      %v3663 = vpack.c.bf16 %v3637, %v3636
      %v3664 = vpack.c.bf16 %v3639, %v3638
      %v3665 = vpack.c.bf16 %v3641, %v3640
      %v3666 = vpack.c.bf16 %v3643, %v3642
      %v3675 = vunpack.c.l.b16 %v3644
      %v3676 = vunpack.c.h.b16 %v3644
      %v3677 = vunpack.c.l.b16 %v3645
      %v3678 = vunpack.c.h.b16 %v3645
      %v3679 = vunpack.c.l.b16 %v3646
      %v3680 = vunpack.c.h.b16 %v3646
      %v3681 = vunpack.c.l.b16 %v3647
      %v3682 = vunpack.c.h.b16 %v3647
      %v3683 = vunpack.c.l.b16 %v3648
      %v3684 = vunpack.c.h.b16 %v3648
      %v3685 = vunpack.c.l.b16 %v3649
      %v3686 = vunpack.c.h.b16 %v3649
      %v3687 = vunpack.c.l.b16 %v3650
      %v3688 = vunpack.c.h.b16 %v3650
      %v3689 = vunpack.c.l.b16 %v3651
      %v3690 = vunpack.c.h.b16 %v3651
      %v3691 = vpack.c.b16 %v3677, %v3675
      %v3692 = vpack.c.b16 %v3678, %v3676
      %v3693 = vpack.c.b16 %v3681, %v3679
      %v3694 = vpack.c.b16 %v3682, %v3680
      %v3695 = vpack.c.b16 %v3685, %v3683
      %v3696 = vpack.c.b16 %v3686, %v3684
      %v3697 = vpack.c.b16 %v3689, %v3687
      %v3698 = vpack.c.b16 %v3690, %v3688
      %vm3703 = vcmask 908288
      %v3705 = vsel %vm3703, %v3692, 0
      %v3708 = vsel %vm3703, %v3694, 0
      %v3711 = vsel %vm3703, %v3696, 0
      %v3714 = vsel %vm3703, %v3698, 0
      %vm3716 = vcmask 1047552
      %v3717 = vsel %vm3482, 4294967295, 65535
      %v3718 = vsel %vm3716, %v3717, 0
      %v3720 = vand.u32 %v3666, %v3718
      %3722 = vmatprep.subr.bf16.mxu0 0
      %3723 = vmatpush1.bf16.msra.mxu0 %v3652
      %3724 = vmatprep.subr.bf16.mxu0 0
      %3725 = vmatpush1.bf16.msra.mxu0 %v3653
      %3726 = vmatprep.subr.bf16.mxu0 0
      %3727 = vmatpush1.bf16.msra.mxu0 %v3654
      %3728 = vmatprep.subr.bf16.mxu0 0
      %3729 = vmatpush1.bf16.msra.mxu0 %v3655
      %3730 = vmatprep.subr.bf16.mxu0 0
      %3731 = vmatpush1.bf16.msra.mxu0 %v3656
      %3732 = vmatprep.subr.bf16.mxu0 0
      %3733 = vmatpush1.bf16.msra.mxu0 %v3657
      %3734 = vmatprep.subr.bf16.mxu0 0
      %3735 = vmatpush1.bf16.msra.mxu0 %v3658
      %3736 = vmatprep.subr.bf16.mxu0 0
      %3737 = vmatpush1.bf16.msra.mxu0 %v3659
      %3738 = vmatprep.subr.bf16.mxu0 0
      %3739 = vmatpush1.bf16.msra.mxu0 %v3660
      %3740 = vmatprep.subr.bf16.mxu0 0
      %3741 = vmatpush1.bf16.msra.mxu0 %v3661
      %3742 = vmatprep.subr.bf16.mxu0 0
      %3743 = vmatpush1.bf16.msra.mxu0 %v3662
      %3744 = vmatprep.subr.bf16.mxu0 0
      %3745 = vmatpush1.bf16.msra.mxu0 %v3663
      %3746 = vmatprep.subr.bf16.mxu0 0
      %3747 = vmatpush1.bf16.msra.mxu0 %v3664
      %3748 = vmatprep.subr.bf16.mxu0 0
      %3749 = vmatpush1.bf16.msra.mxu0 %v3665
      %3750 = vmatprep.subr.bf16.mxu0 0
      %3751 = vmatpush1.bf16.msra.mxu0 %v3720
      %3752 = vmatprep.subr.bf16.mxu0 0
      %3753 = vmatpush1.bf16.msra.mxu0 0
      %3754 = vmatprep.mubr.bf16.mxu0 %v3705
      %3755 = vmatmul.mubr.bf16.gmra.mrb[0].mxu0 %v3691
      %v3756 = vpop.f32.mrb[0].mxu0
      %v3757 = vadd.f32 0.0, %v3756
      %v3758 = vpop.f32.mrb[0].mxu0
      %v3759 = vpop.f32.mrb[0].mxu0
      %v3760 = vadd.f32 0.0, %v3759
      %v3761 = vpop.f32.mrb[0].mxu0
      %3762 = vmatprep.mubr.bf16.mxu0 %v3708
      %3763 = vmatmul.mubr.bf16.gmra.mrb[0].mxu0 %v3693
      %v3764 = vpop.f32.mrb[0].mxu0
      %v3765 = vadd.f32 0.0, %v3764
      %v3766 = vpop.f32.mrb[0].mxu0
      %v3767 = vpop.f32.mrb[0].mxu0
      %v3768 = vadd.f32 0.0, %v3767
      %v3769 = vpop.f32.mrb[0].mxu0
      %3770 = vmatprep.mubr.bf16.mxu0 %v3711
      %3771 = vmatmul.mubr.bf16.gmra.mrb[0].mxu0 %v3695
      %v3772 = vpop.f32.mrb[0].mxu0
      %v3773 = vadd.f32 0.0, %v3772
      %v3774 = vpop.f32.mrb[0].mxu0
      %v3775 = vpop.f32.mrb[0].mxu0
      %v3776 = vadd.f32 0.0, %v3775
      %v3777 = vpop.f32.mrb[0].mxu0
      %3778 = vmatprep.mubr.bf16.mxu0 %v3714
      %3779 = vmatmul.mubr.bf16.gmra.mrb[0].mxu0 %v3697
      %v3780 = vpop.f32.mrb[0].mxu0
      %v3781 = vadd.f32 0.0, %v3780
      %v3782 = vpop.f32.mrb[0].mxu0
      %v3783 = vpop.f32.mrb[0].mxu0
      %v3784 = vadd.f32 0.0, %v3783
      %v3785 = vpop.f32.mrb[0].mxu0
      %3786 = vdwg.mxu0
      %vm3787 = vcmask 261120
      %3788 = vst.msk [vmem:[#allocation3] sm:$0xff] %vm3787, 0.0
      %3789 = vst.msk [vmem:[#allocation3 + $0x8] sm:$0xff] %vm3787, 0.0
      %3790 = vst.msk [vmem:[#allocation3 + $0x10] sm:$0xff] %vm3787, 0.0
      %3791 = vst.msk [vmem:[#allocation3 + $0x18] sm:$0xff] %vm3787, 0.0
      %3792 = vst.msk [vmem:[#allocation3 + $0x20] sm:$0xff] %vm3787, 0.0
      %3793 = vst.msk [vmem:[#allocation3 + $0x28] sm:$0xff] %vm3787, 0.0
      %3794 = vst.msk [vmem:[#allocation3 + $0x30] sm:$0xff] %vm3787, 0.0
      %3795 = vst.msk [vmem:[#allocation3 + $0x38] sm:$0xff] %vm3787, 0.0
      %3796 = vst.msk [vmem:[#allocation3 + $0x40] sm:$0xff] %vm3787, 0.0
      %3797 = vst.msk [vmem:[#allocation3 + $0x48] sm:$0xff] %vm3787, 0.0
      %vm3798 = vcmask 254976
      %3799 = vst.msk [vmem:[#allocation3 + $0x50] sm:$0x3] %vm3798, 0.0
      %3800 = vst.msk [vmem:[#allocation3 + $0x9] sm:$0xff] %vm3787, %v3757
      %3801 = vst.msk [vmem:[#allocation3 + $0x11] sm:$0xff] %vm3787, %v3760
      %3802 = vst.msk [vmem:[#allocation3 + $0x19] sm:$0xff] %vm3787, %v3765
      %3803 = vst.msk [vmem:[#allocation3 + $0x21] sm:$0xff] %vm3787, %v3768
      %3804 = vst.msk [vmem:[#allocation3 + $0x29] sm:$0xff] %vm3787, %v3773
      %3805 = vst.msk [vmem:[#allocation3 + $0x31] sm:$0xff] %vm3787, %v3776
      %3806 = vst.msk [vmem:[#allocation3 + $0x39] sm:$0xff] %vm3787, %v3781
      %3807 = vst.msk [vmem:[#allocation3 + $0x41] sm:$0xff] %vm3787, %v3784
      %v3808 = vld [vmem:[%s2] sm:$0xff]
      %v3809 = vld [vmem:[%s2 + $0x8] sm:$0xff]
      %v3810 = vld [vmem:[%s2 + $0x10] sm:$0xff]
      %v3811 = vld [vmem:[%s2 + $0x18] sm:$0xff]
      %v3812 = vld [vmem:[%s2 + $0x20] sm:$0xff]
      %v3813 = vld [vmem:[%s2 + $0x28] sm:$0xff]
      %v3814 = vld [vmem:[%s2 + $0x30] sm:$0xff]
      %v3815 = vld [vmem:[%s2 + $0x38] sm:$0xff]
      %v3816 = vld [vmem:[#allocation3] sm:$0xff]
      %v3817 = vld [vmem:[#allocation3 + $0x8] sm:$0xff]
      %v3818 = vld [vmem:[#allocation3 + $0x10] sm:$0xff]
      %v3819 = vld [vmem:[#allocation3 + $0x18] sm:$0xff]
      %v3820 = vld [vmem:[#allocation3 + $0x20] sm:$0xff]
      %v3821 = vld [vmem:[#allocation3 + $0x28] sm:$0xff]
      %v3822 = vld [vmem:[#allocation3 + $0x30] sm:$0xff]
      %v3823 = vld [vmem:[#allocation3 + $0x38] sm:$0xff]
      %3825 = vset.pattern.permute.xlu0 0
      %3826 = vperm.xlu0 %3825, %v3808
      %v3827 = vpop.permute.xlu0 %3826
      %3830 = vset.pattern.permute.xlu0 0
      %3831 = vperm.xlu0 %3830, %v3809
      %v3832 = vpop.permute.xlu0 %3831
      %3835 = vset.pattern.permute.xlu0 0
      %3836 = vperm.xlu0 %3835, %v3810
      %v3837 = vpop.permute.xlu0 %3836
      %3840 = vset.pattern.permute.xlu0 0
      %3841 = vperm.xlu0 %3840, %v3811
      %v3842 = vpop.permute.xlu0 %3841
      %3845 = vset.pattern.permute.xlu0 0
      %3846 = vperm.xlu0 %3845, %v3812
      %v3847 = vpop.permute.xlu0 %3846
      %3850 = vset.pattern.permute.xlu0 0
      %3851 = vperm.xlu0 %3850, %v3813
      %v3852 = vpop.permute.xlu0 %3851
      %3855 = vset.pattern.permute.xlu0 0
      %3856 = vperm.xlu0 %3855, %v3814
      %v3857 = vpop.permute.xlu0 %3856
      %3860 = vset.pattern.permute.xlu0 0
      %3861 = vperm.xlu0 %3860, %v3815
      %v3862 = vpop.permute.xlu0 %3861
      %v3864 = vmul.f32 %v3816, %v3827
      %v3865 = vmul.f32 %v3817, %v3832
      %v3866 = vmul.f32 %v3818, %v3837
      %v3867 = vmul.f32 %v3819, %v3842
      %v3868 = vmul.f32 %v3820, %v3847
      %v3869 = vmul.f32 %v3821, %v3852
      %v3870 = vmul.f32 %v3822, %v3857
      %v3871 = vmul.f32 %v3823, %v3862
      %v3872 = vpack.c.bf16 %v3865, %v3864
      %v3873 = vpack.c.bf16 %v3867, %v3866
      %v3874 = vpack.c.bf16 %v3869, %v3868
      %v3875 = vpack.c.bf16 %v3871, %v3870
      %v3876 = vld [vmem:[%s6] sm:$0xf]
      %v3877 = vld [vmem:[%s6 + $0x4] sm:$0xf]
      %v3878 = vld [vmem:[%s6 + $0x8] sm:$0xf]
      %v3879 = vld [vmem:[%s6 + $0xc] sm:$0xf]
      %v3880 = vld [vmem:[#allocation3 + $0x1] sm:$0xff]
      %v3881 = vld [vmem:[#allocation3 + $0x9] sm:$0xff]
      %v3882 = vld [vmem:[#allocation3 + $0x11] sm:$0xff]
      %v3883 = vld [vmem:[#allocation3 + $0x19] sm:$0xff]
      %v3884 = vld [vmem:[#allocation3 + $0x21] sm:$0xff]
      %v3885 = vld [vmem:[#allocation3 + $0x29] sm:$0xff]
      %v3886 = vld [vmem:[#allocation3 + $0x31] sm:$0xff]
      %v3887 = vld [vmem:[#allocation3 + $0x39] sm:$0xff]
      %v3888 = vpack.c.bf16 %v3881, %v3880
      %v3889 = vpack.c.bf16 %v3883, %v3882
      %v3890 = vpack.c.bf16 %v3885, %v3884
      %v3891 = vpack.c.bf16 %v3887, %v3886
      %v3892 = vld [vmem:[%s6 + $0x10] sm:$0xf]
      %v3893 = vld [vmem:[%s6 + $0x14] sm:$0xf]
      %v3894 = vld [vmem:[%s6 + $0x18] sm:$0xf]
      %v3895 = vld [vmem:[%s6 + $0x1c] sm:$0xf]
      %v3900 = vunpack.c.l.b16 %v3892
      %v3901 = vunpack.c.l.b16 %v3893
      %v3902 = vunpack.c.l.b16 %v3894
      %v3903 = vunpack.c.l.b16 %v3895
      %v3904 = vpack.c.b16 %v3901, %v3900
      %v3905 = vpack.c.b16 %v3903, %v3902
      %v3909 = vsel %vm3787, %v3888, 0
      %v3912 = vsel %vm3787, %v3889, 0
      %v3915 = vsel %vm3787, %v3890, 0
      %v3918 = vsel %vm3787, %v3891, 0
      %3920 = vmatprep.subr.bf16.mxu0 0
      %3921 = vmatpush1.bf16.msra.mxu0 %v3904
      %3922 = vmatprep.subr.bf16.mxu0 0
      %3923 = vmatpush1.bf16.msra.mxu0 %v3905
      %3924 = vmatprep.subr.bf16.mxu0 0
      %3925 = vmatpush1.bf16.msra.mxu0 0
      %3926 = vmatprep.subr.bf16.mxu0 0
      %3927 = vmatpush1.bf16.msra.mxu0 0
      %3928 = vmatprep.subr.bf16.mxu0 0
      %3929 = vmatpush1.bf16.msra.mxu0 0
      %3930 = vmatprep.subr.bf16.mxu0 0
      %3931 = vmatpush1.bf16.msra.mxu0 0
      %3932 = vmatprep.subr.bf16.mxu0 0
      %3933 = vmatpush1.bf16.msra.mxu0 0
      %3934 = vmatprep.subr.bf16.mxu0 0
      %3935 = vmatpush1.bf16.msra.mxu0 0
      %3936 = vmatprep.subr.bf16.mxu0 0
      %3937 = vmatpush1.bf16.msra.mxu0 0
      %3938 = vmatprep.subr.bf16.mxu0 0
      %3939 = vmatpush1.bf16.msra.mxu0 0
      %3940 = vmatprep.subr.bf16.mxu0 0
      %3941 = vmatpush1.bf16.msra.mxu0 0
      %3942 = vmatprep.subr.bf16.mxu0 0
      %3943 = vmatpush1.bf16.msra.mxu0 0
      %3944 = vmatprep.subr.bf16.mxu0 0
      %3945 = vmatpush1.bf16.msra.mxu0 0
      %3946 = vmatprep.subr.bf16.mxu0 0
      %3947 = vmatpush1.bf16.msra.mxu0 0
      %3948 = vmatprep.subr.bf16.mxu0 0
      %3949 = vmatpush1.bf16.msra.mxu0 0
      %3950 = vmatprep.subr.bf16.mxu0 0
      %3951 = vmatpush1.bf16.msra.mxu0 0
      %3952 = vmatprep.mubr.bf16.mxu0 0
      %3953 = vmatmul.mubr.bf16.gmra.mrb[0].mxu0 %v3909
      %v3954 = vpop.f32.mrb[0].mxu0
      %v3955 = vadd.f32 0.0, %v3954
      %v3956 = vpop.f32.mrb[0].mxu0
      %v3957 = vpop.f32.mrb[0].mxu0
      %v3958 = vadd.f32 0.0, %v3957
      %v3959 = vpop.f32.mrb[0].mxu0
      %3960 = vmatprep.mubr.bf16.mxu0 0
      %3961 = vmatmul.mubr.bf16.gmra.mrb[0].mxu0 %v3912
      %v3962 = vpop.f32.mrb[0].mxu0
      %v3963 = vadd.f32 0.0, %v3962
      %v3964 = vpop.f32.mrb[0].mxu0
      %v3965 = vpop.f32.mrb[0].mxu0
      %v3966 = vadd.f32 0.0, %v3965
      %v3967 = vpop.f32.mrb[0].mxu0
      %3968 = vmatprep.mubr.bf16.mxu0 0
      %3969 = vmatmul.mubr.bf16.gmra.mrb[0].mxu0 %v3915
      %v3970 = vpop.f32.mrb[0].mxu0
      %v3971 = vadd.f32 0.0, %v3970
      %v3972 = vpop.f32.mrb[0].mxu0
      %v3973 = vpop.f32.mrb[0].mxu0
      %v3974 = vadd.f32 0.0, %v3973
      %v3975 = vpop.f32.mrb[0].mxu0
      %3976 = vmatprep.mubr.bf16.mxu0 0
      %3977 = vmatmul.mubr.bf16.gmra.mrb[0].mxu0 %v3918
      %v3978 = vpop.f32.mrb[0].mxu0
      %v3979 = vadd.f32 0.0, %v3978
      %v3980 = vpop.f32.mrb[0].mxu0
      %v3981 = vpop.f32.mrb[0].mxu0
      %v3982 = vadd.f32 0.0, %v3981
      %v3983 = vpop.f32.mrb[0].mxu0
      %3984 = vdwg.mxu0
      %v3989 = vunpack.c.l.b16 %v3876
      %v3990 = vunpack.c.l.b16 %v3877
      %v3991 = vunpack.c.l.b16 %v3878
      %v3992 = vunpack.c.l.b16 %v3879
      %v3993 = vpack.c.b16 %v3990, %v3989
      %v3994 = vpack.c.b16 %v3992, %v3991
      %v3998 = vsel %vm3787, %v3872, 0
      %v4001 = vsel %vm3787, %v3873, 0
      %v4004 = vsel %vm3787, %v3874, 0
      %v4007 = vsel %vm3787, %v3875, 0
      %4009 = vmatprep.subr.bf16.mxu0 0
      %4010 = vmatpush1.bf16.msra.mxu0 %v3993
      %4011 = vmatprep.subr.bf16.mxu0 0
      %4012 = vmatpush1.bf16.msra.mxu0 %v3994
      %4013 = vmatprep.subr.bf16.mxu0 0
      %4014 = vmatpush1.bf16.msra.mxu0 0
      %4015 = vmatprep.subr.bf16.mxu0 0
      %4016 = vmatpush1.bf16.msra.mxu0 0
      %4017 = vmatprep.subr.bf16.mxu0 0
      %4018 = vmatpush1.bf16.msra.mxu0 0
      %4019 = vmatprep.subr.bf16.mxu0 0
      %4020 = vmatpush1.bf16.msra.mxu0 0
      %4021 = vmatprep.subr.bf16.mxu0 0
      %4022 = vmatpush1.bf16.msra.mxu0 0
      %4023 = vmatprep.subr.bf16.mxu0 0
      %4024 = vmatpush1.bf16.msra.mxu0 0
      %4025 = vmatprep.subr.bf16.mxu0 0
      %4026 = vmatpush1.bf16.msra.mxu0 0
      %4027 = vmatprep.subr.bf16.mxu0 0
      %4028 = vmatpush1.bf16.msra.mxu0 0
      %4029 = vmatprep.subr.bf16.mxu0 0
      %4030 = vmatpush1.bf16.msra.mxu0 0
      %4031 = vmatprep.subr.bf16.mxu0 0
      %4032 = vmatpush1.bf16.msra.mxu0 0
      %4033 = vmatprep.subr.bf16.mxu0 0
      %4034 = vmatpush1.bf16.msra.mxu0 0
      %4035 = vmatprep.subr.bf16.mxu0 0
      %4036 = vmatpush1.bf16.msra.mxu0 0
      %4037 = vmatprep.subr.bf16.mxu0 0
      %4038 = vmatpush1.bf16.msra.mxu0 0
      %4039 = vmatprep.subr.bf16.mxu0 0
      %4040 = vmatpush1.bf16.msra.mxu0 0
      %4041 = vmatprep.mubr.bf16.mxu0 0
      %4042 = vmatmul.mubr.bf16.gmra.mrb[0].mxu0 %v3998
      %v4043 = vpop.f32.mrb[0].mxu0
      %v4044 = vadd.f32 %v3955, %v4043
      %v4045 = vpop.f32.mrb[0].mxu0
      %v4046 = vpop.f32.mrb[0].mxu0
      %v4047 = vadd.f32 %v3958, %v4046
      %v4048 = vpop.f32.mrb[0].mxu0
      %4049 = vmatprep.mubr.bf16.mxu0 0
      %4050 = vmatmul.mubr.bf16.gmra.mrb[0].mxu0 %v4001
      %v4051 = vpop.f32.mrb[0].mxu0
      %v4052 = vadd.f32 %v3963, %v4051
      %v4053 = vpop.f32.mrb[0].mxu0
      %v4054 = vpop.f32.mrb[0].mxu0
      %v4055 = vadd.f32 %v3966, %v4054
      %v4056 = vpop.f32.mrb[0].mxu0
      %4057 = vmatprep.mubr.bf16.mxu0 0
      %4058 = vmatmul.mubr.bf16.gmra.mrb[0].mxu0 %v4004
      %v4059 = vpop.f32.mrb[0].mxu0
      %v4060 = vadd.f32 %v3971, %v4059
      %v4061 = vpop.f32.mrb[0].mxu0
      %v4062 = vpop.f32.mrb[0].mxu0
      %v4063 = vadd.f32 %v3974, %v4062
      %v4064 = vpop.f32.mrb[0].mxu0
      %4065 = vmatprep.mubr.bf16.mxu0 0
      %4066 = vmatmul.mubr.bf16.gmra.mrb[0].mxu0 %v4007
      %v4067 = vpop.f32.mrb[0].mxu0
      %v4068 = vadd.f32 %v3979, %v4067
      %v4069 = vpop.f32.mrb[0].mxu0
      %v4070 = vpop.f32.mrb[0].mxu0
      %v4071 = vadd.f32 %v3982, %v4070
      %v4072 = vpop.f32.mrb[0].mxu0
      %4073 = vdwg.mxu0
      %v4074 = vld [vmem:[#allocation3 + $0x2] sm:$0xff]
      %v4075 = vld [vmem:[#allocation3 + $0xa] sm:$0xff]
      %v4076 = vld [vmem:[#allocation3 + $0x12] sm:$0xff]
      %v4077 = vld [vmem:[#allocation3 + $0x1a] sm:$0xff]
      %v4078 = vld [vmem:[#allocation3 + $0x22] sm:$0xff]
      %v4079 = vld [vmem:[#allocation3 + $0x2a] sm:$0xff]
      %v4080 = vld [vmem:[#allocation3 + $0x32] sm:$0xff]
      %v4081 = vld [vmem:[#allocation3 + $0x3a] sm:$0xff]
      %4082 = vset.pattern.permute.xlu0 1
      %4083 = vperm.xlu0 %4082, %v3808
      %v4084 = vpop.permute.xlu0 %4083
      %4086 = vset.pattern.permute.xlu0 1
      %4087 = vperm.xlu0 %4086, %v3809
      %v4088 = vpop.permute.xlu0 %4087
      %4090 = vset.pattern.permute.xlu0 1
      %4091 = vperm.xlu0 %4090, %v3810
      %v4092 = vpop.permute.xlu0 %4091
      %4094 = vset.pattern.permute.xlu0 1
      %4095 = vperm.xlu0 %4094, %v3811
      %v4096 = vpop.permute.xlu0 %4095
      %4098 = vset.pattern.permute.xlu0 1
      %4099 = vperm.xlu0 %4098, %v3812
      %v4100 = vpop.permute.xlu0 %4099
      %4102 = vset.pattern.permute.xlu0 1
      %4103 = vperm.xlu0 %4102, %v3813
      %v4104 = vpop.permute.xlu0 %4103
      %4106 = vset.pattern.permute.xlu0 1
      %4107 = vperm.xlu0 %4106, %v3814
      %v4108 = vpop.permute.xlu0 %4107
      %4110 = vset.pattern.permute.xlu0 1
      %4111 = vperm.xlu0 %4110, %v3815
      %v4112 = vpop.permute.xlu0 %4111
      %v4114 = vmul.f32 %v4074, %v4084
      %v4115 = vmul.f32 %v4075, %v4088
      %v4116 = vmul.f32 %v4076, %v4092
      %v4117 = vmul.f32 %v4077, %v4096
      %v4118 = vmul.f32 %v4078, %v4100
      %v4119 = vmul.f32 %v4079, %v4104
      %v4120 = vmul.f32 %v4080, %v4108
      %v4121 = vmul.f32 %v4081, %v4112
      %v4122 = vpack.c.bf16 %v4115, %v4114
      %v4123 = vpack.c.bf16 %v4117, %v4116
      %v4124 = vpack.c.bf16 %v4119, %v4118
      %v4125 = vpack.c.bf16 %v4121, %v4120
      %v4126 = vld [vmem:[%s6 + $0x20] sm:$0xf]
      %v4127 = vld [vmem:[%s6 + $0x24] sm:$0xf]
      %v4128 = vld [vmem:[%s6 + $0x28] sm:$0xf]
      %v4129 = vld [vmem:[%s6 + $0x2c] sm:$0xf]
      %v4134 = vunpack.c.l.b16 %v4126
      %v4135 = vunpack.c.l.b16 %v4127
      %v4136 = vunpack.c.l.b16 %v4128
      %v4137 = vunpack.c.l.b16 %v4129
      %v4138 = vpack.c.b16 %v4135, %v4134
      %v4139 = vpack.c.b16 %v4137, %v4136
      %v4143 = vsel %vm3787, %v4122, 0
      %v4146 = vsel %vm3787, %v4123, 0
      %v4149 = vsel %vm3787, %v4124, 0
      %v4152 = vsel %vm3787, %v4125, 0
      %4154 = vmatprep.subr.bf16.mxu0 0
      %4155 = vmatpush1.bf16.msra.mxu0 %v4138
      %4156 = vmatprep.subr.bf16.mxu0 0
      %4157 = vmatpush1.bf16.msra.mxu0 %v4139
      %4158 = vmatprep.subr.bf16.mxu0 0
      %4159 = vmatpush1.bf16.msra.mxu0 0
      %4160 = vmatprep.subr.bf16.mxu0 0
      %4161 = vmatpush1.bf16.msra.mxu0 0
      %4162 = vmatprep.subr.bf16.mxu0 0
      %4163 = vmatpush1.bf16.msra.mxu0 0
      %4164 = vmatprep.subr.bf16.mxu0 0
      %4165 = vmatpush1.bf16.msra.mxu0 0
      %4166 = vmatprep.subr.bf16.mxu0 0
      %4167 = vmatpush1.bf16.msra.mxu0 0
      %4168 = vmatprep.subr.bf16.mxu0 0
      %4169 = vmatpush1.bf16.msra.mxu0 0
      %4170 = vmatprep.subr.bf16.mxu0 0
      %4171 = vmatpush1.bf16.msra.mxu0 0
      %4172 = vmatprep.subr.bf16.mxu0 0
      %4173 = vmatpush1.bf16.msra.mxu0 0
      %4174 = vmatprep.subr.bf16.mxu0 0
      %4175 = vmatpush1.bf16.msra.mxu0 0
      %4176 = vmatprep.subr.bf16.mxu0 0
      %4177 = vmatpush1.bf16.msra.mxu0 0
      %4178 = vmatprep.subr.bf16.mxu0 0
      %4179 = vmatpush1.bf16.msra.mxu0 0
      %4180 = vmatprep.subr.bf16.mxu0 0
      %4181 = vmatpush1.bf16.msra.mxu0 0
      %4182 = vmatprep.subr.bf16.mxu0 0
      %4183 = vmatpush1.bf16.msra.mxu0 0
      %4184 = vmatprep.subr.bf16.mxu0 0
      %4185 = vmatpush1.bf16.msra.mxu0 0
      %4186 = vmatprep.mubr.bf16.mxu0 0
      %4187 = vmatmul.mubr.bf16.gmra.mrb[0].mxu0 %v4143
      %v4188 = vpop.f32.mrb[0].mxu0
      %v4189 = vadd.f32 0.0, %v4188
      %v4190 = vpop.f32.mrb[0].mxu0
      %v4191 = vpop.f32.mrb[0].mxu0
      %v4192 = vadd.f32 0.0, %v4191
      %v4193 = vpop.f32.mrb[0].mxu0
      %4194 = vmatprep.mubr.bf16.mxu0 0
      %4195 = vmatmul.mubr.bf16.gmra.mrb[0].mxu0 %v4146
      %v4196 = vpop.f32.mrb[0].mxu0
      %v4197 = vadd.f32 0.0, %v4196
      %v4198 = vpop.f32.mrb[0].mxu0
      %v4199 = vpop.f32.mrb[0].mxu0
      %v4200 = vadd.f32 0.0, %v4199
      %v4201 = vpop.f32.mrb[0].mxu0
      %4202 = vmatprep.mubr.bf16.mxu0 0
      %4203 = vmatmul.mubr.bf16.gmra.mrb[0].mxu0 %v4149
      %v4204 = vpop.f32.mrb[0].mxu0
      %v4205 = vadd.f32 0.0, %v4204
      %v4206 = vpop.f32.mrb[0].mxu0
      %v4207 = vpop.f32.mrb[0].mxu0
      %v4208 = vadd.f32 0.0, %v4207
      %v4209 = vpop.f32.mrb[0].mxu0
      %4210 = vmatprep.mubr.bf16.mxu0 0
      %4211 = vmatmul.mubr.bf16.gmra.mrb[0].mxu0 %v4152
      %v4212 = vpop.f32.mrb[0].mxu0
      %v4213 = vadd.f32 0.0, %v4212
      %v4214 = vpop.f32.mrb[0].mxu0
      %v4215 = vpop.f32.mrb[0].mxu0
      %v4216 = vadd.f32 0.0, %v4215
      %v4217 = vpop.f32.mrb[0].mxu0
      %4218 = vdwg.mxu0
      %v4219 = vadd.f32 %v4044, %v4189
      %v4220 = vadd.f32 %v4047, %v4192
      %v4221 = vadd.f32 %v4052, %v4197
      %v4222 = vadd.f32 %v4055, %v4200
      %v4223 = vadd.f32 %v4060, %v4205
      %v4224 = vadd.f32 %v4063, %v4208
      %v4225 = vadd.f32 %v4068, %v4213
      %v4226 = vadd.f32 %v4071, %v4216
      %v4227 = vld [vmem:[#allocation3 + $0x8] sm:$0xff]
      %v4228 = vld [vmem:[#allocation3 + $0x10] sm:$0xff]
      %v4229 = vld [vmem:[#allocation3 + $0x18] sm:$0xff]
      %v4230 = vld [vmem:[#allocation3 + $0x20] sm:$0xff]
      %v4231 = vld [vmem:[#allocation3 + $0x28] sm:$0xff]
      %v4232 = vld [vmem:[#allocation3 + $0x30] sm:$0xff]
      %v4233 = vld [vmem:[#allocation3 + $0x38] sm:$0xff]
      %v4234 = vld [vmem:[#allocation3 + $0x40] sm:$0xff]
      %v4235 = vmul.f32 %v4227, %v3827
      %v4236 = vmul.f32 %v4228, %v3832
      %v4237 = vmul.f32 %v4229, %v3837
      %v4238 = vmul.f32 %v4230, %v3842
      %v4239 = vmul.f32 %v4231, %v3847
      %v4240 = vmul.f32 %v4232, %v3852
      %v4241 = vmul.f32 %v4233, %v3857
      %v4242 = vmul.f32 %v4234, %v3862
      %v4243 = vpack.c.bf16 %v4236, %v4235
      %v4244 = vpack.c.bf16 %v4238, %v4237
      %v4245 = vpack.c.bf16 %v4240, %v4239
      %v4246 = vpack.c.bf16 %v4242, %v4241
      %v4247 = vld [vmem:[%s6 + $0x30] sm:$0xf]
      %v4248 = vld [vmem:[%s6 + $0x34] sm:$0xf]
      %v4249 = vld [vmem:[%s6 + $0x38] sm:$0xf]
      %v4250 = vld [vmem:[%s6 + $0x3c] sm:$0xf]
      %v4255 = vunpack.c.l.b16 %v4247
      %v4256 = vunpack.c.l.b16 %v4248
      %v4257 = vunpack.c.l.b16 %v4249
      %v4258 = vunpack.c.l.b16 %v4250
      %v4259 = vpack.c.b16 %v4256, %v4255
      %v4260 = vpack.c.b16 %v4258, %v4257
      %v4264 = vsel %vm3787, %v4243, 0
      %v4267 = vsel %vm3787, %v4244, 0
      %v4270 = vsel %vm3787, %v4245, 0
      %v4273 = vsel %vm3787, %v4246, 0
      %4275 = vmatprep.subr.bf16.mxu0 0
      %4276 = vmatpush1.bf16.msra.mxu0 %v4259
      %4277 = vmatprep.subr.bf16.mxu0 0
      %4278 = vmatpush1.bf16.msra.mxu0 %v4260
      %4279 = vmatprep.subr.bf16.mxu0 0
      %4280 = vmatpush1.bf16.msra.mxu0 0
      %4281 = vmatprep.subr.bf16.mxu0 0
      %4282 = vmatpush1.bf16.msra.mxu0 0
      %4283 = vmatprep.subr.bf16.mxu0 0
      %4284 = vmatpush1.bf16.msra.mxu0 0
      %4285 = vmatprep.subr.bf16.mxu0 0
      %4286 = vmatpush1.bf16.msra.mxu0 0
      %4287 = vmatprep.subr.bf16.mxu0 0
      %4288 = vmatpush1.bf16.msra.mxu0 0
      %4289 = vmatprep.subr.bf16.mxu0 0
      %4290 = vmatpush1.bf16.msra.mxu0 0
      %4291 = vmatprep.subr.bf16.mxu0 0
      %4292 = vmatpush1.bf16.msra.mxu0 0
      %4293 = vmatprep.subr.bf16.mxu0 0
      %4294 = vmatpush1.bf16.msra.mxu0 0
      %4295 = vmatprep.subr.bf16.mxu0 0
      %4296 = vmatpush1.bf16.msra.mxu0 0
      %4297 = vmatprep.subr.bf16.mxu0 0
      %4298 = vmatpush1.bf16.msra.mxu0 0
      %4299 = vmatprep.subr.bf16.mxu0 0
      %4300 = vmatpush1.bf16.msra.mxu0 0
      %4301 = vmatprep.subr.bf16.mxu0 0
      %4302 = vmatpush1.bf16.msra.mxu0 0
      %4303 = vmatprep.subr.bf16.mxu0 0
      %4304 = vmatpush1.bf16.msra.mxu0 0
      %4305 = vmatprep.subr.bf16.mxu0 0
      %4306 = vmatpush1.bf16.msra.mxu0 0
      %4307 = vmatprep.mubr.bf16.mxu0 0
      %4308 = vmatmul.mubr.bf16.gmra.mrb[0].mxu0 %v4264
      %v4309 = vpop.f32.mrb[0].mxu0
      %v4310 = vadd.f32 0.0, %v4309
      %v4311 = vpop.f32.mrb[0].mxu0
      %v4312 = vpop.f32.mrb[0].mxu0
      %v4313 = vadd.f32 0.0, %v4312
      %v4314 = vpop.f32.mrb[0].mxu0
      %4315 = vmatprep.mubr.bf16.mxu0 0
      %4316 = vmatmul.mubr.bf16.gmra.mrb[0].mxu0 %v4267
      %v4317 = vpop.f32.mrb[0].mxu0
      %v4318 = vadd.f32 0.0, %v4317
      %v4319 = vpop.f32.mrb[0].mxu0
      %v4320 = vpop.f32.mrb[0].mxu0
      %v4321 = vadd.f32 0.0, %v4320
      %v4322 = vpop.f32.mrb[0].mxu0
      %4323 = vmatprep.mubr.bf16.mxu0 0
      %4324 = vmatmul.mubr.bf16.gmra.mrb[0].mxu0 %v4270
      %v4325 = vpop.f32.mrb[0].mxu0
      %v4326 = vadd.f32 0.0, %v4325
      %v4327 = vpop.f32.mrb[0].mxu0
      %v4328 = vpop.f32.mrb[0].mxu0
      %v4329 = vadd.f32 0.0, %v4328
      %v4330 = vpop.f32.mrb[0].mxu0
      %4331 = vmatprep.mubr.bf16.mxu0 0
      %4332 = vmatmul.mubr.bf16.gmra.mrb[0].mxu0 %v4273
      %v4333 = vpop.f32.mrb[0].mxu0
      %v4334 = vadd.f32 0.0, %v4333
      %v4335 = vpop.f32.mrb[0].mxu0
      %v4336 = vpop.f32.mrb[0].mxu0
      %v4337 = vadd.f32 0.0, %v4336
      %v4338 = vpop.f32.mrb[0].mxu0
      %4339 = vdwg.mxu0
      %v4340 = vadd.f32 %v4219, %v4310
      %v4341 = vadd.f32 %v4220, %v4313
      %v4342 = vadd.f32 %v4221, %v4318
      %v4343 = vadd.f32 %v4222, %v4321
      %v4344 = vadd.f32 %v4223, %v4326
      %v4345 = vadd.f32 %v4224, %v4329
      %v4346 = vadd.f32 %v4225, %v4334
      %v4347 = vadd.f32 %v4226, %v4337
      %v4348 = vld [vmem:[#allocation3 + $0x9] sm:$0xff]
      %v4349 = vld [vmem:[#allocation3 + $0x11] sm:$0xff]
      %v4350 = vld [vmem:[#allocation3 + $0x19] sm:$0xff]
      %v4351 = vld [vmem:[#allocation3 + $0x21] sm:$0xff]
      %v4352 = vld [vmem:[#allocation3 + $0x29] sm:$0xff]
      %v4353 = vld [vmem:[#allocation3 + $0x31] sm:$0xff]
      %v4354 = vld [vmem:[#allocation3 + $0x39] sm:$0xff]
      %v4355 = vld [vmem:[#allocation3 + $0x41] sm:$0xff]
      %v4356 = vpack.c.bf16 %v4349, %v4348
      %v4357 = vpack.c.bf16 %v4351, %v4350
      %v4358 = vpack.c.bf16 %v4353, %v4352
      %v4359 = vpack.c.bf16 %v4355, %v4354
      %v4360 = vld [vmem:[%s6 + $0x40] sm:$0xf]
      %v4361 = vld [vmem:[%s6 + $0x44] sm:$0xf]
      %v4362 = vld [vmem:[%s6 + $0x48] sm:$0xf]
      %v4363 = vld [vmem:[%s6 + $0x4c] sm:$0xf]
      %v4368 = vunpack.c.l.b16 %v4360
      %v4369 = vunpack.c.l.b16 %v4361
      %v4370 = vunpack.c.l.b16 %v4362
      %v4371 = vunpack.c.l.b16 %v4363
      %v4372 = vpack.c.b16 %v4369, %v4368
      %v4373 = vpack.c.b16 %v4371, %v4370
      %v4377 = vsel %vm3787, %v4356, 0
      %v4380 = vsel %vm3787, %v4357, 0
      %v4383 = vsel %vm3787, %v4358, 0
      %v4386 = vsel %vm3787, %v4359, 0
      %4388 = vmatprep.subr.bf16.mxu0 0
      %4389 = vmatpush1.bf16.msra.mxu0 %v4372
      %4390 = vmatprep.subr.bf16.mxu0 0
      %4391 = vmatpush1.bf16.msra.mxu0 %v4373
      %4392 = vmatprep.subr.bf16.mxu0 0
      %4393 = vmatpush1.bf16.msra.mxu0 0
      %4394 = vmatprep.subr.bf16.mxu0 0
      %4395 = vmatpush1.bf16.msra.mxu0 0
      %4396 = vmatprep.subr.bf16.mxu0 0
      %4397 = vmatpush1.bf16.msra.mxu0 0
      %4398 = vmatprep.subr.bf16.mxu0 0
      %4399 = vmatpush1.bf16.msra.mxu0 0
      %4400 = vmatprep.subr.bf16.mxu0 0
      %4401 = vmatpush1.bf16.msra.mxu0 0
      %4402 = vmatprep.subr.bf16.mxu0 0
      %4403 = vmatpush1.bf16.msra.mxu0 0
      %4404 = vmatprep.subr.bf16.mxu0 0
      %4405 = vmatpush1.bf16.msra.mxu0 0
      %4406 = vmatprep.subr.bf16.mxu0 0
      %4407 = vmatpush1.bf16.msra.mxu0 0
      %4408 = vmatprep.subr.bf16.mxu0 0
      %4409 = vmatpush1.bf16.msra.mxu0 0
      %4410 = vmatprep.subr.bf16.mxu0 0
      %4411 = vmatpush1.bf16.msra.mxu0 0
      %4412 = vmatprep.subr.bf16.mxu0 0
      %4413 = vmatpush1.bf16.msra.mxu0 0
      %4414 = vmatprep.subr.bf16.mxu0 0
      %4415 = vmatpush1.bf16.msra.mxu0 0
      %4416 = vmatprep.subr.bf16.mxu0 0
      %4417 = vmatpush1.bf16.msra.mxu0 0
      %4418 = vmatprep.subr.bf16.mxu0 0
      %4419 = vmatpush1.bf16.msra.mxu0 0
      %4420 = vmatprep.mubr.bf16.mxu0 0
      %4421 = vmatmul.mubr.bf16.gmra.mrb[0].mxu0 %v4377
      %v4422 = vpop.f32.mrb[0].mxu0
      %v4423 = vadd.f32 0.0, %v4422
      %v4424 = vpop.f32.mrb[0].mxu0
      %v4425 = vpop.f32.mrb[0].mxu0
      %v4426 = vadd.f32 0.0, %v4425
      %v4427 = vpop.f32.mrb[0].mxu0
      %4428 = vmatprep.mubr.bf16.mxu0 0
      %4429 = vmatmul.mubr.bf16.gmra.mrb[0].mxu0 %v4380
      %v4430 = vpop.f32.mrb[0].mxu0
      %v4431 = vadd.f32 0.0, %v4430
      %v4432 = vpop.f32.mrb[0].mxu0
      %v4433 = vpop.f32.mrb[0].mxu0
      %v4434 = vadd.f32 0.0, %v4433
      %v4435 = vpop.f32.mrb[0].mxu0
      %4436 = vmatprep.mubr.bf16.mxu0 0
      %4437 = vmatmul.mubr.bf16.gmra.mrb[0].mxu0 %v4383
      %v4438 = vpop.f32.mrb[0].mxu0
      %v4439 = vadd.f32 0.0, %v4438
      %v4440 = vpop.f32.mrb[0].mxu0
      %v4441 = vpop.f32.mrb[0].mxu0
      %v4442 = vadd.f32 0.0, %v4441
      %v4443 = vpop.f32.mrb[0].mxu0
      %4444 = vmatprep.mubr.bf16.mxu0 0
      %4445 = vmatmul.mubr.bf16.gmra.mrb[0].mxu0 %v4386
      %v4446 = vpop.f32.mrb[0].mxu0
      %v4447 = vadd.f32 0.0, %v4446
      %v4448 = vpop.f32.mrb[0].mxu0
      %v4449 = vpop.f32.mrb[0].mxu0
      %v4450 = vadd.f32 0.0, %v4449
      %v4451 = vpop.f32.mrb[0].mxu0
      %4452 = vdwg.mxu0
      %v4453 = vadd.f32 %v4340, %v4423
      %v4454 = vadd.f32 %v4341, %v4426
      %v4455 = vadd.f32 %v4342, %v4431
      %v4456 = vadd.f32 %v4343, %v4434
      %v4457 = vadd.f32 %v4344, %v4439
      %v4458 = vadd.f32 %v4345, %v4442
      %v4459 = vadd.f32 %v4346, %v4447
      %v4460 = vadd.f32 %v4347, %v4450
      %v4461 = vld [vmem:[#allocation3 + $0xa] sm:$0xff]
      %v4462 = vld [vmem:[#allocation3 + $0x12] sm:$0xff]
      %v4463 = vld [vmem:[#allocation3 + $0x1a] sm:$0xff]
      %v4464 = vld [vmem:[#allocation3 + $0x22] sm:$0xff]
      %v4465 = vld [vmem:[#allocation3 + $0x2a] sm:$0xff]
      %v4466 = vld [vmem:[#allocation3 + $0x32] sm:$0xff]
      %v4467 = vld [vmem:[#allocation3 + $0x3a] sm:$0xff]
      %v4468 = vld [vmem:[#allocation3 + $0x42] sm:$0xff]
      %v4469 = vmul.f32 %v4461, %v4084
      %v4470 = vmul.f32 %v4462, %v4088
      %v4471 = vmul.f32 %v4463, %v4092
      %v4472 = vmul.f32 %v4464, %v4096
      %v4473 = vmul.f32 %v4465, %v4100
      %v4474 = vmul.f32 %v4466, %v4104
      %v4475 = vmul.f32 %v4467, %v4108
      %v4476 = vmul.f32 %v4468, %v4112
      %v4477 = vpack.c.bf16 %v4470, %v4469
      %v4478 = vpack.c.bf16 %v4472, %v4471
      %v4479 = vpack.c.bf16 %v4474, %v4473
      %v4480 = vpack.c.bf16 %v4476, %v4475
      %v4481 = vld [vmem:[%s6 + $0x50] sm:$0xf]
      %v4482 = vld [vmem:[%s6 + $0x54] sm:$0xf]
      %v4483 = vld [vmem:[%s6 + $0x58] sm:$0xf]
      %v4484 = vld [vmem:[%s6 + $0x5c] sm:$0xf]
      %v4489 = vunpack.c.l.b16 %v4481
      %v4490 = vunpack.c.l.b16 %v4482
      %v4491 = vunpack.c.l.b16 %v4483
      %v4492 = vunpack.c.l.b16 %v4484
      %v4493 = vpack.c.b16 %v4490, %v4489
      %v4494 = vpack.c.b16 %v4492, %v4491
      %v4498 = vsel %vm3787, %v4477, 0
      %v4501 = vsel %vm3787, %v4478, 0
      %v4504 = vsel %vm3787, %v4479, 0
      %v4507 = vsel %vm3787, %v4480, 0
      %4509 = vmatprep.subr.bf16.mxu0 0
      %4510 = vmatpush1.bf16.msra.mxu0 %v4493
      %4511 = vmatprep.subr.bf16.mxu0 0
      %4512 = vmatpush1.bf16.msra.mxu0 %v4494
      %4513 = vmatprep.subr.bf16.mxu0 0
      %4514 = vmatpush1.bf16.msra.mxu0 0
      %4515 = vmatprep.subr.bf16.mxu0 0
      %4516 = vmatpush1.bf16.msra.mxu0 0
      %4517 = vmatprep.subr.bf16.mxu0 0
      %4518 = vmatpush1.bf16.msra.mxu0 0
      %4519 = vmatprep.subr.bf16.mxu0 0
      %4520 = vmatpush1.bf16.msra.mxu0 0
      %4521 = vmatprep.subr.bf16.mxu0 0
      %4522 = vmatpush1.bf16.msra.mxu0 0
      %4523 = vmatprep.subr.bf16.mxu0 0
      %4524 = vmatpush1.bf16.msra.mxu0 0
      %4525 = vmatprep.subr.bf16.mxu0 0
      %4526 = vmatpush1.bf16.msra.mxu0 0
      %4527 = vmatprep.subr.bf16.mxu0 0
      %4528 = vmatpush1.bf16.msra.mxu0 0
      %4529 = vmatprep.subr.bf16.mxu0 0
      %4530 = vmatpush1.bf16.msra.mxu0 0
      %4531 = vmatprep.subr.bf16.mxu0 0
      %4532 = vmatpush1.bf16.msra.mxu0 0
      %4533 = vmatprep.subr.bf16.mxu0 0
      %4534 = vmatpush1.bf16.msra.mxu0 0
      %4535 = vmatprep.subr.bf16.mxu0 0
      %4536 = vmatpush1.bf16.msra.mxu0 0
      %4537 = vmatprep.subr.bf16.mxu0 0
      %4538 = vmatpush1.bf16.msra.mxu0 0
      %4539 = vmatprep.subr.bf16.mxu0 0
      %4540 = vmatpush1.bf16.msra.mxu0 0
      %4541 = vmatprep.mubr.bf16.mxu0 0
      %4542 = vmatmul.mubr.bf16.gmra.mrb[0].mxu0 %v4498
      %v4543 = vpop.f32.mrb[0].mxu0
      %v4544 = vadd.f32 0.0, %v4543
      %v4545 = vpop.f32.mrb[0].mxu0
      %v4546 = vpop.f32.mrb[0].mxu0
      %v4547 = vadd.f32 0.0, %v4546
      %v4548 = vpop.f32.mrb[0].mxu0
      %4549 = vmatprep.mubr.bf16.mxu0 0
      %4550 = vmatmul.mubr.bf16.gmra.mrb[0].mxu0 %v4501
      %v4551 = vpop.f32.mrb[0].mxu0
      %v4552 = vadd.f32 0.0, %v4551
      %v4553 = vpop.f32.mrb[0].mxu0
      %v4554 = vpop.f32.mrb[0].mxu0
      %v4555 = vadd.f32 0.0, %v4554
      %v4556 = vpop.f32.mrb[0].mxu0
      %4557 = vmatprep.mubr.bf16.mxu0 0
      %4558 = vmatmul.mubr.bf16.gmra.mrb[0].mxu0 %v4504
      %v4559 = vpop.f32.mrb[0].mxu0
      %v4560 = vadd.f32 0.0, %v4559
      %v4561 = vpop.f32.mrb[0].mxu0
      %v4562 = vpop.f32.mrb[0].mxu0
      %v4563 = vadd.f32 0.0, %v4562
      %v4564 = vpop.f32.mrb[0].mxu0
      %4565 = vmatprep.mubr.bf16.mxu0 0
      %4566 = vmatmul.mubr.bf16.gmra.mrb[0].mxu0 %v4507
      %v4567 = vpop.f32.mrb[0].mxu0
      %v4568 = vadd.f32 0.0, %v4567
      %v4569 = vpop.f32.mrb[0].mxu0
      %v4570 = vpop.f32.mrb[0].mxu0
      %v4571 = vadd.f32 0.0, %v4570
      %v4572 = vpop.f32.mrb[0].mxu0
      %4573 = vdwg.mxu0
      %v4574 = vadd.f32 %v4453, %v4544
      %v4575 = vadd.f32 %v4454, %v4547
      %v4576 = vadd.f32 %v4455, %v4552
      %v4577 = vadd.f32 %v4456, %v4555
      %v4578 = vadd.f32 %v4457, %v4560
      %v4579 = vadd.f32 %v4458, %v4563
      %v4580 = vadd.f32 %v4459, %v4568
      %v4581 = vadd.f32 %v4460, %v4571
      %v4582 = vld [vmem:[#allocation3 + $0x10] sm:$0xff]
      %v4583 = vld [vmem:[#allocation3 + $0x18] sm:$0xff]
      %v4584 = vld [vmem:[#allocation3 + $0x20] sm:$0xff]
      %v4585 = vld [vmem:[#allocation3 + $0x28] sm:$0xff]
      %v4586 = vld [vmem:[#allocation3 + $0x30] sm:$0xff]
      %v4587 = vld [vmem:[#allocation3 + $0x38] sm:$0xff]
      %v4588 = vld [vmem:[#allocation3 + $0x40] sm:$0xff]
      %v4589 = vld [vmem:[#allocation3 + $0x48] sm:$0xff]
      %v4590 = vmul.f32 %v4582, %v3827
      %v4591 = vmul.f32 %v4583, %v3832
      %v4592 = vmul.f32 %v4584, %v3837
      %v4593 = vmul.f32 %v4585, %v3842
      %v4594 = vmul.f32 %v4586, %v3847
      %v4595 = vmul.f32 %v4587, %v3852
      %v4596 = vmul.f32 %v4588, %v3857
      %v4597 = vmul.f32 %v4589, %v3862
      %v4598 = vpack.c.bf16 %v4591, %v4590
      %v4599 = vpack.c.bf16 %v4593, %v4592
      %v4600 = vpack.c.bf16 %v4595, %v4594
      %v4601 = vpack.c.bf16 %v4597, %v4596
      %v4602 = vld [vmem:[%s6 + $0x60] sm:$0xf]
      %v4603 = vld [vmem:[%s6 + $0x64] sm:$0xf]
      %v4604 = vld [vmem:[%s6 + $0x68] sm:$0xf]
      %v4605 = vld [vmem:[%s6 + $0x6c] sm:$0xf]
      %v4610 = vunpack.c.l.b16 %v4602
      %v4611 = vunpack.c.l.b16 %v4603
      %v4612 = vunpack.c.l.b16 %v4604
      %v4613 = vunpack.c.l.b16 %v4605
      %v4614 = vpack.c.b16 %v4611, %v4610
      %v4615 = vpack.c.b16 %v4613, %v4612
      %v4619 = vsel %vm3787, %v4598, 0
      %v4622 = vsel %vm3787, %v4599, 0
      %v4625 = vsel %vm3787, %v4600, 0
      %v4628 = vsel %vm3787, %v4601, 0
      %4630 = vmatprep.subr.bf16.mxu0 0
      %4631 = vmatpush1.bf16.msra.mxu0 %v4614
      %4632 = vmatprep.subr.bf16.mxu0 0
      %4633 = vmatpush1.bf16.msra.mxu0 %v4615
      %4634 = vmatprep.subr.bf16.mxu0 0
      %4635 = vmatpush1.bf16.msra.mxu0 0
      %4636 = vmatprep.subr.bf16.mxu0 0
      %4637 = vmatpush1.bf16.msra.mxu0 0
      %4638 = vmatprep.subr.bf16.mxu0 0
      %4639 = vmatpush1.bf16.msra.mxu0 0
      %4640 = vmatprep.subr.bf16.mxu0 0
      %4641 = vmatpush1.bf16.msra.mxu0 0
      %4642 = vmatprep.subr.bf16.mxu0 0
      %4643 = vmatpush1.bf16.msra.mxu0 0
      %4644 = vmatprep.subr.bf16.mxu0 0
      %4645 = vmatpush1.bf16.msra.mxu0 0
      %4646 = vmatprep.subr.bf16.mxu0 0
      %4647 = vmatpush1.bf16.msra.mxu0 0
      %4648 = vmatprep.subr.bf16.mxu0 0
      %4649 = vmatpush1.bf16.msra.mxu0 0
      %4650 = vmatprep.subr.bf16.mxu0 0
      %4651 = vmatpush1.bf16.msra.mxu0 0
      %4652 = vmatprep.subr.bf16.mxu0 0
      %4653 = vmatpush1.bf16.msra.mxu0 0
      %4654 = vmatprep.subr.bf16.mxu0 0
      %4655 = vmatpush1.bf16.msra.mxu0 0
      %4656 = vmatprep.subr.bf16.mxu0 0
      %4657 = vmatpush1.bf16.msra.mxu0 0
      %4658 = vmatprep.subr.bf16.mxu0 0
      %4659 = vmatpush1.bf16.msra.mxu0 0
      %4660 = vmatprep.subr.bf16.mxu0 0
      %4661 = vmatpush1.bf16.msra.mxu0 0
      %4662 = vmatprep.mubr.bf16.mxu0 0
      %4663 = vmatmul.mubr.bf16.gmra.mrb[0].mxu0 %v4619
      %v4664 = vpop.f32.mrb[0].mxu0
      %v4665 = vadd.f32 0.0, %v4664
      %v4666 = vpop.f32.mrb[0].mxu0
      %v4667 = vpop.f32.mrb[0].mxu0
      %v4668 = vadd.f32 0.0, %v4667
      %v4669 = vpop.f32.mrb[0].mxu0
      %4670 = vmatprep.mubr.bf16.mxu0 0
      %4671 = vmatmul.mubr.bf16.gmra.mrb[0].mxu0 %v4622
      %v4672 = vpop.f32.mrb[0].mxu0
      %v4673 = vadd.f32 0.0, %v4672
      %v4674 = vpop.f32.mrb[0].mxu0
      %v4675 = vpop.f32.mrb[0].mxu0
      %v4676 = vadd.f32 0.0, %v4675
      %v4677 = vpop.f32.mrb[0].mxu0
      %4678 = vmatprep.mubr.bf16.mxu0 0
      %4679 = vmatmul.mubr.bf16.gmra.mrb[0].mxu0 %v4625
      %v4680 = vpop.f32.mrb[0].mxu0
      %v4681 = vadd.f32 0.0, %v4680
      %v4682 = vpop.f32.mrb[0].mxu0
      %v4683 = vpop.f32.mrb[0].mxu0
      %v4684 = vadd.f32 0.0, %v4683
      %v4685 = vpop.f32.mrb[0].mxu0
      %4686 = vmatprep.mubr.bf16.mxu0 0
      %4687 = vmatmul.mubr.bf16.gmra.mrb[0].mxu0 %v4628
      %v4688 = vpop.f32.mrb[0].mxu0
      %v4689 = vadd.f32 0.0, %v4688
      %v4690 = vpop.f32.mrb[0].mxu0
      %v4691 = vpop.f32.mrb[0].mxu0
      %v4692 = vadd.f32 0.0, %v4691
      %v4693 = vpop.f32.mrb[0].mxu0
      %4694 = vdwg.mxu0
      %v4695 = vadd.f32 %v4574, %v4665
      %v4696 = vadd.f32 %v4575, %v4668
      %v4697 = vadd.f32 %v4576, %v4673
      %v4698 = vadd.f32 %v4577, %v4676
      %v4699 = vadd.f32 %v4578, %v4681
      %v4700 = vadd.f32 %v4579, %v4684
      %v4701 = vadd.f32 %v4580, %v4689
      %v4702 = vadd.f32 %v4581, %v4692
      %v4703 = vld [vmem:[#allocation3 + $0x11] sm:$0xff]
      %v4704 = vld [vmem:[#allocation3 + $0x19] sm:$0xff]
      %v4705 = vld [vmem:[#allocation3 + $0x21] sm:$0xff]
      %v4706 = vld [vmem:[#allocation3 + $0x29] sm:$0xff]
      %v4707 = vld [vmem:[#allocation3 + $0x31] sm:$0xff]
      %v4708 = vld [vmem:[#allocation3 + $0x39] sm:$0xff]
      %v4709 = vld [vmem:[#allocation3 + $0x41] sm:$0xff]
      %v4710 = vld [vmem:[#allocation3 + $0x49] sm:$0xff]
      %v4711 = vpack.c.bf16 %v4704, %v4703
      %v4712 = vpack.c.bf16 %v4706, %v4705
      %v4713 = vpack.c.bf16 %v4708, %v4707
      %v4714 = vpack.c.bf16 %v4710, %v4709
      %v4715 = vld [vmem:[%s6 + $0x70] sm:$0xf]
      %v4716 = vld [vmem:[%s6 + $0x74] sm:$0xf]
      %v4717 = vld [vmem:[%s6 + $0x78] sm:$0xf]
      %v4718 = vld [vmem:[%s6 + $0x7c] sm:$0xf]
      %v4723 = vunpack.c.l.b16 %v4715
      %v4724 = vunpack.c.l.b16 %v4716
      %v4725 = vunpack.c.l.b16 %v4717
      %v4726 = vunpack.c.l.b16 %v4718
      %v4727 = vpack.c.b16 %v4724, %v4723
      %v4728 = vpack.c.b16 %v4726, %v4725
      %v4732 = vsel %vm3787, %v4711, 0
      %v4735 = vsel %vm3787, %v4712, 0
      %v4738 = vsel %vm3787, %v4713, 0
      %v4741 = vsel %vm3787, %v4714, 0
      %4743 = vmatprep.subr.bf16.mxu0 0
      %4744 = vmatpush1.bf16.msra.mxu0 %v4727
      %4745 = vmatprep.subr.bf16.mxu0 0
      %4746 = vmatpush1.bf16.msra.mxu0 %v4728
      %4747 = vmatprep.subr.bf16.mxu0 0
      %4748 = vmatpush1.bf16.msra.mxu0 0
      %4749 = vmatprep.subr.bf16.mxu0 0
      %4750 = vmatpush1.bf16.msra.mxu0 0
      %4751 = vmatprep.subr.bf16.mxu0 0
      %4752 = vmatpush1.bf16.msra.mxu0 0
      %4753 = vmatprep.subr.bf16.mxu0 0
      %4754 = vmatpush1.bf16.msra.mxu0 0
      %4755 = vmatprep.subr.bf16.mxu0 0
      %4756 = vmatpush1.bf16.msra.mxu0 0
      %4757 = vmatprep.subr.bf16.mxu0 0
      %4758 = vmatpush1.bf16.msra.mxu0 0
      %4759 = vmatprep.subr.bf16.mxu0 0
      %4760 = vmatpush1.bf16.msra.mxu0 0
      %4761 = vmatprep.subr.bf16.mxu0 0
      %4762 = vmatpush1.bf16.msra.mxu0 0
      %4763 = vmatprep.subr.bf16.mxu0 0
      %4764 = vmatpush1.bf16.msra.mxu0 0
      %4765 = vmatprep.subr.bf16.mxu0 0
      %4766 = vmatpush1.bf16.msra.mxu0 0
      %4767 = vmatprep.subr.bf16.mxu0 0
      %4768 = vmatpush1.bf16.msra.mxu0 0
      %4769 = vmatprep.subr.bf16.mxu0 0
      %4770 = vmatpush1.bf16.msra.mxu0 0
      %4771 = vmatprep.subr.bf16.mxu0 0
      %4772 = vmatpush1.bf16.msra.mxu0 0
      %4773 = vmatprep.subr.bf16.mxu0 0
      %4774 = vmatpush1.bf16.msra.mxu0 0
      %4775 = vmatprep.mubr.bf16.mxu0 0
      %4776 = vmatmul.mubr.bf16.gmra.mrb[0].mxu0 %v4732
      %v4777 = vpop.f32.mrb[0].mxu0
      %v4778 = vadd.f32 0.0, %v4777
      %v4779 = vpop.f32.mrb[0].mxu0
      %v4780 = vpop.f32.mrb[0].mxu0
      %v4781 = vadd.f32 0.0, %v4780
      %v4782 = vpop.f32.mrb[0].mxu0
      %4783 = vmatprep.mubr.bf16.mxu0 0
      %4784 = vmatmul.mubr.bf16.gmra.mrb[0].mxu0 %v4735
      %v4785 = vpop.f32.mrb[0].mxu0
      %v4786 = vadd.f32 0.0, %v4785
      %v4787 = vpop.f32.mrb[0].mxu0
      %v4788 = vpop.f32.mrb[0].mxu0
      %v4789 = vadd.f32 0.0, %v4788
      %v4790 = vpop.f32.mrb[0].mxu0
      %4791 = vmatprep.mubr.bf16.mxu0 0
      %4792 = vmatmul.mubr.bf16.gmra.mrb[0].mxu0 %v4738
      %v4793 = vpop.f32.mrb[0].mxu0
      %v4794 = vadd.f32 0.0, %v4793
      %v4795 = vpop.f32.mrb[0].mxu0
      %v4796 = vpop.f32.mrb[0].mxu0
      %v4797 = vadd.f32 0.0, %v4796
      %v4798 = vpop.f32.mrb[0].mxu0
      %4799 = vmatprep.mubr.bf16.mxu0 0
      %4800 = vmatmul.mubr.bf16.gmra.mrb[0].mxu0 %v4741
      %v4801 = vpop.f32.mrb[0].mxu0
      %v4802 = vadd.f32 0.0, %v4801
      %v4803 = vpop.f32.mrb[0].mxu0
      %v4804 = vpop.f32.mrb[0].mxu0
      %v4805 = vadd.f32 0.0, %v4804
      %v4806 = vpop.f32.mrb[0].mxu0
      %4807 = vdwg.mxu0
      %v4808 = vadd.f32 %v4695, %v4778
      %v4809 = vadd.f32 %v4696, %v4781
      %v4810 = vadd.f32 %v4697, %v4786
      %v4811 = vadd.f32 %v4698, %v4789
      %v4812 = vadd.f32 %v4699, %v4794
      %v4813 = vadd.f32 %v4700, %v4797
      %v4814 = vadd.f32 %v4701, %v4802
      %v4815 = vadd.f32 %v4702, %v4805
      %v4816 = vld [vmem:[#allocation3 + $0x12] sm:$0xff]
      %v4817 = vld [vmem:[#allocation3 + $0x1a] sm:$0xff]
      %v4818 = vld [vmem:[#allocation3 + $0x22] sm:$0xff]
      %v4819 = vld [vmem:[#allocation3 + $0x2a] sm:$0xff]
      %v4820 = vld [vmem:[#allocation3 + $0x32] sm:$0xff]
      %v4821 = vld [vmem:[#allocation3 + $0x3a] sm:$0xff]
      %v4822 = vld [vmem:[#allocation3 + $0x42] sm:$0xff]
      %v4823 = vld [vmem:[#allocation3 + $0x4a] sm:$0xff]
      %v4824 = vmul.f32 %v4816, %v4084
      %v4825 = vmul.f32 %v4817, %v4088
      %v4826 = vmul.f32 %v4818, %v4092
      %v4827 = vmul.f32 %v4819, %v4096
      %v4828 = vmul.f32 %v4820, %v4100
      %v4829 = vmul.f32 %v4821, %v4104
      %v4830 = vmul.f32 %v4822, %v4108
      %v4831 = vmul.f32 %v4823, %v4112
      %v4832 = vpack.c.bf16 %v4825, %v4824
      %v4833 = vpack.c.bf16 %v4827, %v4826
      %v4834 = vpack.c.bf16 %v4829, %v4828
      %v4835 = vpack.c.bf16 %v4831, %v4830
      %v4836 = vld [vmem:[%s6 + $0x80] sm:$0xf]
      %v4837 = vld [vmem:[%s6 + $0x84] sm:$0xf]
      %v4838 = vld [vmem:[%s6 + $0x88] sm:$0xf]
      %v4839 = vld [vmem:[%s6 + $0x8c] sm:$0xf]
      %v4844 = vunpack.c.l.b16 %v4836
      %v4845 = vunpack.c.l.b16 %v4837
      %v4846 = vunpack.c.l.b16 %v4838
      %v4847 = vunpack.c.l.b16 %v4839
      %v4848 = vpack.c.b16 %v4845, %v4844
      %v4849 = vpack.c.b16 %v4847, %v4846
      %v4853 = vsel %vm3787, %v4832, 0
      %v4856 = vsel %vm3787, %v4833, 0
      %v4859 = vsel %vm3787, %v4834, 0
      %v4862 = vsel %vm3787, %v4835, 0
      %4864 = vmatprep.subr.bf16.mxu0 0
      %4865 = vmatpush1.bf16.msra.mxu0 %v4848
      %4866 = vmatprep.subr.bf16.mxu0 0
      %4867 = vmatpush1.bf16.msra.mxu0 %v4849
      %4868 = vmatprep.subr.bf16.mxu0 0
      %4869 = vmatpush1.bf16.msra.mxu0 0
      %4870 = vmatprep.subr.bf16.mxu0 0
      %4871 = vmatpush1.bf16.msra.mxu0 0
      %4872 = vmatprep.subr.bf16.mxu0 0
      %4873 = vmatpush1.bf16.msra.mxu0 0
      %4874 = vmatprep.subr.bf16.mxu0 0
      %4875 = vmatpush1.bf16.msra.mxu0 0
      %4876 = vmatprep.subr.bf16.mxu0 0
      %4877 = vmatpush1.bf16.msra.mxu0 0
      %4878 = vmatprep.subr.bf16.mxu0 0
      %4879 = vmatpush1.bf16.msra.mxu0 0
      %4880 = vmatprep.subr.bf16.mxu0 0
      %4881 = vmatpush1.bf16.msra.mxu0 0
      %4882 = vmatprep.subr.bf16.mxu0 0
      %4883 = vmatpush1.bf16.msra.mxu0 0
      %4884 = vmatprep.subr.bf16.mxu0 0
      %4885 = vmatpush1.bf16.msra.mxu0 0
      %4886 = vmatprep.subr.bf16.mxu0 0
      %4887 = vmatpush1.bf16.msra.mxu0 0
      %4888 = vmatprep.subr.bf16.mxu0 0
      %4889 = vmatpush1.bf16.msra.mxu0 0
      %4890 = vmatprep.subr.bf16.mxu0 0
      %4891 = vmatpush1.bf16.msra.mxu0 0
      %4892 = vmatprep.subr.bf16.mxu0 0
      %4893 = vmatpush1.bf16.msra.mxu0 0
      %4894 = vmatprep.subr.bf16.mxu0 0
      %4895 = vmatpush1.bf16.msra.mxu0 0
      %4896 = vmatprep.mubr.bf16.mxu0 0
      %4897 = vmatmul.mubr.bf16.gmra.mrb[0].mxu0 %v4853
      %v4898 = vpop.f32.mrb[0].mxu0
      %v4899 = vadd.f32 0.0, %v4898
      %v4900 = vpop.f32.mrb[0].mxu0
      %v4901 = vpop.f32.mrb[0].mxu0
      %v4902 = vadd.f32 0.0, %v4901
      %v4903 = vpop.f32.mrb[0].mxu0
      %4904 = vmatprep.mubr.bf16.mxu0 0
      %4905 = vmatmul.mubr.bf16.gmra.mrb[0].mxu0 %v4856
      %v4906 = vpop.f32.mrb[0].mxu0
      %v4907 = vadd.f32 0.0, %v4906
      %v4908 = vpop.f32.mrb[0].mxu0
      %v4909 = vpop.f32.mrb[0].mxu0
      %v4910 = vadd.f32 0.0, %v4909
      %v4911 = vpop.f32.mrb[0].mxu0
      %4912 = vmatprep.mubr.bf16.mxu0 0
      %4913 = vmatmul.mubr.bf16.gmra.mrb[0].mxu0 %v4859
      %v4914 = vpop.f32.mrb[0].mxu0
      %v4915 = vadd.f32 0.0, %v4914
      %v4916 = vpop.f32.mrb[0].mxu0
      %v4917 = vpop.f32.mrb[0].mxu0
      %v4918 = vadd.f32 0.0, %v4917
      %v4919 = vpop.f32.mrb[0].mxu0
      %4920 = vmatprep.mubr.bf16.mxu0 0
      %4921 = vmatmul.mubr.bf16.gmra.mrb[0].mxu0 %v4862
      %v4922 = vpop.f32.mrb[0].mxu0
      %v4923 = vadd.f32 0.0, %v4922
      %v4924 = vpop.f32.mrb[0].mxu0
      %v4925 = vpop.f32.mrb[0].mxu0
      %v4926 = vadd.f32 0.0, %v4925
      %v4927 = vpop.f32.mrb[0].mxu0
      %4928 = vdwg.mxu0
      %v4929 = vadd.f32 %v4808, %v4899
      %v4930 = vadd.f32 %v4809, %v4902
      %v4931 = vadd.f32 %v4810, %v4907
      %v4932 = vadd.f32 %v4811, %v4910
      %v4933 = vadd.f32 %v4812, %v4915
      %v4934 = vadd.f32 %v4813, %v4918
      %v4935 = vadd.f32 %v4814, %v4923
      %v4936 = vadd.f32 %v4815, %v4926
      %v4937 = vld [vmem:[%s7] sm:$0x1]
      %v4939 = vlaneseq
      %v4940 = vshrl.u32 %v4939, 7
      %v4941 = vsub.s32 0, %v4940
      %v4942 = vrot.slane %v4937, %v4941
      %v4944 = vadd.f32 %v4929, %v4942
      %v4945 = vadd.f32 %v4930, %v4942
      %v4946 = vadd.f32 %v4931, %v4942
      %v4947 = vadd.f32 %v4932, %v4942
      %v4948 = vadd.f32 %v4933, %v4942
      %v4949 = vadd.f32 %v4934, %v4942
      %v4950 = vadd.f32 %v4935, %v4942
      %v4951 = vadd.f32 %v4936, %v4942
      %v4952 = vmax.f32 %v4944, 0.0
      %v4953 = vmax.f32 %v4945, 0.0
      %v4954 = vmax.f32 %v4946, 0.0
      %v4955 = vmax.f32 %v4947, 0.0
      %v4956 = vmax.f32 %v4948, 0.0
      %v4957 = vmax.f32 %v4949, 0.0
      %v4958 = vmax.f32 %v4950, 0.0
      %v4959 = vmax.f32 %v4951, 0.0
      %v4967 = vrot.slane %v4952, 1
      %v4968 = vrot.slane %v4953, 1
      %v4969 = vsel %vm3482, %v4967, %v4968
      %v4970 = vrot.slane %v4954, 1
      %v4971 = vsel %vm3482, %v4968, %v4970
      %v4972 = vrot.slane %v4955, 1
      %v4973 = vsel %vm3482, %v4970, %v4972
      %v4974 = vrot.slane %v4956, 1
      %v4975 = vsel %vm3482, %v4972, %v4974
      %v4976 = vrot.slane %v4957, 1
      %v4977 = vsel %vm3482, %v4974, %v4976
      %v4978 = vrot.slane %v4958, 1
      %v4979 = vsel %vm3482, %v4976, %v4978
      %v4987 = vmax.f32 %v4952, %v4969
      %v4988 = vmax.f32 %v4953, %v4971
      %v4989 = vmax.f32 %v4954, %v4973
      %v4990 = vmax.f32 %v4955, %v4975
      %v4991 = vmax.f32 %v4956, %v4977
      %v4992 = vmax.f32 %v4957, %v4979
      %v4993 = vmax.f32 %v4958, %v4978
      %v4995 = vrot.slane %v4959, 1
      %v4996 = vsel %vm3482, %v4978, %v4995
      %v4999 = vmax.f32 %v4958, %v4996
      %v5000 = vmax.f32 %v4959, %v4995
      %v5001 = vmax.f32 %v4987, %v4988
      %v5002 = vmax.f32 %v4988, %v4989
      %v5003 = vmax.f32 %v4989, %v4990
      %v5004 = vmax.f32 %v4990, %v4991
      %v5005 = vmax.f32 %v4991, %v4992
      %v5006 = vmax.f32 %v4992, %v4999
      %v5007 = vmax.f32 %v4993, %v5000
      %v5008 = vld [vmem:[%s13] sm:$0xf]
      %v5009 = vld [vmem:[%s13 + $0x4] sm:$0xf]
      %v5010 = vpack.c.bf16 %v5002, %v5001
      %v5011 = vpack.c.bf16 %v5004, %v5003
      %v5012 = vpack.c.bf16 %v5006, %v5005
      %v5013 = vpack.c.bf16 %v5007, %v5007
      %v5016 = vunpack.c.l.b16 %v5008
      %v5017 = vunpack.c.l.b16 %v5009
      %v5018 = vpack.c.b16 %v5017, %v5016
      %vm5019 = vcmask 449536
      %v5021 = vsel %vm5019, %v5018, 0
      %vm5023 = vcmask 1042432
      %vm5024 = vcmask 1043456
      %v5025 = vsel %vm5023, 4294967295, 65535
      %v5026 = vsel %vm5024, %v5025, 0
      %v5028 = vand.u32 %v5013, %v5026
      %5030 = vmatprep.subr.bf16.mxu0 0
      %5031 = vmatpush1.bf16.msra.mxu0 %v5010
      %5032 = vmatprep.subr.bf16.mxu0 0
      %5033 = vmatpush1.bf16.msra.mxu0 %v5011
      %5034 = vmatprep.subr.bf16.mxu0 0
      %5035 = vmatpush1.bf16.msra.mxu0 %v5012
      %5036 = vmatprep.subr.bf16.mxu0 0
      %5037 = vmatpush1.bf16.msra.mxu0 %v5028
      %5038 = vmatprep.subr.bf16.mxu0 0
      %5039 = vmatpush1.bf16.msra.mxu0 0
      %5040 = vmatprep.subr.bf16.mxu0 0
      %5041 = vmatpush1.bf16.msra.mxu0 0
      %5042 = vmatprep.subr.bf16.mxu0 0
      %5043 = vmatpush1.bf16.msra.mxu0 0
      %5044 = vmatprep.subr.bf16.mxu0 0
      %5045 = vmatpush1.bf16.msra.mxu0 0
      %5046 = vmatprep.subr.bf16.mxu0 0
      %5047 = vmatpush1.bf16.msra.mxu0 0
      %5048 = vmatprep.subr.bf16.mxu0 0
      %5049 = vmatpush1.bf16.msra.mxu0 0
      %5050 = vmatprep.subr.bf16.mxu0 0
      %5051 = vmatpush1.bf16.msra.mxu0 0
      %5052 = vmatprep.subr.bf16.mxu0 0
      %5053 = vmatpush1.bf16.msra.mxu0 0
      %5054 = vmatprep.subr.bf16.mxu0 0
      %5055 = vmatpush1.bf16.msra.mxu0 0
      %5056 = vmatprep.subr.bf16.mxu0 0
      %5057 = vmatpush1.bf16.msra.mxu0 0
      %5058 = vmatprep.subr.bf16.mxu0 0
      %5059 = vmatpush1.bf16.msra.mxu0 0
      %5060 = vmatprep.subr.bf16.mxu0 0
      %5061 = vmatpush1.bf16.msra.mxu0 0
      %5062 = vmatprep.mubr.bf16.mxu0 0
      %5063 = vmatmul.mubr.bf16.gmra.mrb[0].mxu0 %v5021
      %v5064 = vpop.f32.mrb[0].mxu0
      %v5065 = vadd.f32 0.0, %v5064
      %v5066 = vpop.f32.mrb[0].mxu0
      %v5067 = vpop.f32.mrb[0].mxu0
      %v5068 = vadd.f32 0.0, %v5067
      %v5069 = vpop.f32.mrb[0].mxu0
      %5070 = vdwg.mxu0
      %vm5071 = vcmask 523264
      %5072 = vst.msk [vmem:[#allocation4] sm:$0xff] %vm5071, 0.0
      %5073 = vst.msk [vmem:[#allocation4 + $0x8] sm:$0xff] %vm5071, 0.0
      %5074 = vst.msk [vmem:[#allocation4 + $0x10] sm:$0xff] %vm5071, 0.0
      %vm5075 = vcmask 517120
      %5076 = vst.msk [vmem:[#allocation4 + $0x18] sm:$0x3] %vm5075, 0.0
      %5077 = vst.msk [vmem:[#allocation4 + $0x5] sm:$0xff] %vm5071, %v5065
      %5078 = vst.msk [vmem:[#allocation4 + $0xd] sm:$0xff] %vm5071, %v5068
      %v5079 = vld [vmem:[%s3] sm:$0xff]
      %v5080 = vld [vmem:[%s3 + $0x8] sm:$0xff]
      %v5081 = vld [vmem:[#allocation4] sm:$0xff]
      %v5082 = vld [vmem:[#allocation4 + $0x8] sm:$0xff]
      %5084 = vset.pattern.permute.xlu0 0
      %5085 = vperm.xlu0 %5084, %v5079
      %v5086 = vpop.permute.xlu0 %5085
      %5089 = vset.pattern.permute.xlu0 0
      %5090 = vperm.xlu0 %5089, %v5080
      %v5091 = vpop.permute.xlu0 %5090
      %v5093 = vmul.f32 %v5081, %v5086
      %v5094 = vmul.f32 %v5082, %v5091
      %v5095 = vpack.c.bf16 %v5094, %v5093
      %v5096 = vld [vmem:[%s8] sm:$0xf]
      %v5097 = vld [vmem:[%s8 + $0x4] sm:$0xf]
      %v5098 = vld [vmem:[%s8 + $0x8] sm:$0xf]
      %v5099 = vld [vmem:[%s8 + $0xc] sm:$0xf]
      %v5100 = vld [vmem:[%s8 + $0x10] sm:$0xf]
      %v5101 = vld [vmem:[%s8 + $0x14] sm:$0xf]
      %v5102 = vld [vmem:[%s8 + $0x18] sm:$0xf]
      %v5103 = vld [vmem:[%s8 + $0x1c] sm:$0xf]
      %v5104 = vld [vmem:[#allocation4 + $0x1] sm:$0xff]
      %v5105 = vld [vmem:[#allocation4 + $0x9] sm:$0xff]
      %v5106 = vpack.c.bf16 %v5105, %v5104
      %v5107 = vld [vmem:[%s8 + $0x20] sm:$0xf]
      %v5108 = vld [vmem:[%s8 + $0x24] sm:$0xf]
      %v5109 = vld [vmem:[%s8 + $0x28] sm:$0xf]
      %v5110 = vld [vmem:[%s8 + $0x2c] sm:$0xf]
      %v5111 = vld [vmem:[%s8 + $0x30] sm:$0xf]
      %v5112 = vld [vmem:[%s8 + $0x34] sm:$0xf]
      %v5113 = vld [vmem:[%s8 + $0x38] sm:$0xf]
      %v5114 = vld [vmem:[%s8 + $0x3c] sm:$0xf]
      %v5123 = vunpack.c.l.b16 %v5107
      %v5124 = vunpack.c.l.b16 %v5108
      %v5125 = vunpack.c.l.b16 %v5109
      %v5126 = vunpack.c.l.b16 %v5110
      %v5127 = vunpack.c.l.b16 %v5111
      %v5128 = vunpack.c.l.b16 %v5112
      %v5129 = vunpack.c.l.b16 %v5113
      %v5130 = vunpack.c.l.b16 %v5114
      %v5131 = vpack.c.b16 %v5124, %v5123
      %v5132 = vpack.c.b16 %v5126, %v5125
      %v5133 = vpack.c.b16 %v5128, %v5127
      %v5134 = vpack.c.b16 %v5130, %v5129
      %v5140 = vsel %vm5071, %v5106, 0
      %5142 = vmatprep.subr.bf16.mxu0 0
      %5143 = vmatpush1.bf16.msra.mxu0 %v5131
      %5144 = vmatprep.subr.bf16.mxu0 0
      %5145 = vmatpush1.bf16.msra.mxu0 %v5132
      %5146 = vmatprep.subr.bf16.mxu0 0
      %5147 = vmatpush1.bf16.msra.mxu0 %v5133
      %5148 = vmatprep.subr.bf16.mxu0 0
      %5149 = vmatpush1.bf16.msra.mxu0 %v5134
      %5150 = vmatprep.subr.bf16.mxu0 0
      %5151 = vmatpush1.bf16.msra.mxu0 0
      %5152 = vmatprep.subr.bf16.mxu0 0
      %5153 = vmatpush1.bf16.msra.mxu0 0
      %5154 = vmatprep.subr.bf16.mxu0 0
      %5155 = vmatpush1.bf16.msra.mxu0 0
      %5156 = vmatprep.subr.bf16.mxu0 0
      %5157 = vmatpush1.bf16.msra.mxu0 0
      %5158 = vmatprep.subr.bf16.mxu0 0
      %5159 = vmatpush1.bf16.msra.mxu0 0
      %5160 = vmatprep.subr.bf16.mxu0 0
      %5161 = vmatpush1.bf16.msra.mxu0 0
      %5162 = vmatprep.subr.bf16.mxu0 0
      %5163 = vmatpush1.bf16.msra.mxu0 0
      %5164 = vmatprep.subr.bf16.mxu0 0
      %5165 = vmatpush1.bf16.msra.mxu0 0
      %5166 = vmatprep.subr.bf16.mxu0 0
      %5167 = vmatpush1.bf16.msra.mxu0 0
      %5168 = vmatprep.subr.bf16.mxu0 0
      %5169 = vmatpush1.bf16.msra.mxu0 0
      %5170 = vmatprep.subr.bf16.mxu0 0
      %5171 = vmatpush1.bf16.msra.mxu0 0
      %5172 = vmatprep.subr.bf16.mxu0 0
      %5173 = vmatpush1.bf16.msra.mxu0 0
      %5174 = vmatprep.mubr.bf16.mxu0 0
      %5175 = vmatmul.mubr.bf16.gmra.mrb[0].mxu0 %v5140
      %v5176 = vpop.f32.mrb[0].mxu0
      %v5177 = vadd.f32 0.0, %v5176
      %v5178 = vpop.f32.mrb[0].mxu0
      %v5179 = vpop.f32.mrb[0].mxu0
      %v5180 = vadd.f32 0.0, %v5179
      %v5181 = vpop.f32.mrb[0].mxu0
      %5182 = vdwg.mxu0
      %v5191 = vunpack.c.l.b16 %v5096
      %v5192 = vunpack.c.l.b16 %v5097
      %v5193 = vunpack.c.l.b16 %v5098
      %v5194 = vunpack.c.l.b16 %v5099
      %v5195 = vunpack.c.l.b16 %v5100
      %v5196 = vunpack.c.l.b16 %v5101
      %v5197 = vunpack.c.l.b16 %v5102
      %v5198 = vunpack.c.l.b16 %v5103
      %v5199 = vpack.c.b16 %v5192, %v5191
      %v5200 = vpack.c.b16 %v5194, %v5193
      %v5201 = vpack.c.b16 %v5196, %v5195
      %v5202 = vpack.c.b16 %v5198, %v5197
      %v5208 = vsel %vm5071, %v5095, 0
      %5210 = vmatprep.subr.bf16.mxu0 0
      %5211 = vmatpush1.bf16.msra.mxu0 %v5199
      %5212 = vmatprep.subr.bf16.mxu0 0
      %5213 = vmatpush1.bf16.msra.mxu0 %v5200
      %5214 = vmatprep.subr.bf16.mxu0 0
      %5215 = vmatpush1.bf16.msra.mxu0 %v5201
      %5216 = vmatprep.subr.bf16.mxu0 0
      %5217 = vmatpush1.bf16.msra.mxu0 %v5202
      %5218 = vmatprep.subr.bf16.mxu0 0
      %5219 = vmatpush1.bf16.msra.mxu0 0
      %5220 = vmatprep.subr.bf16.mxu0 0
      %5221 = vmatpush1.bf16.msra.mxu0 0
      %5222 = vmatprep.subr.bf16.mxu0 0
      %5223 = vmatpush1.bf16.msra.mxu0 0
      %5224 = vmatprep.subr.bf16.mxu0 0
      %5225 = vmatpush1.bf16.msra.mxu0 0
      %5226 = vmatprep.subr.bf16.mxu0 0
      %5227 = vmatpush1.bf16.msra.mxu0 0
      %5228 = vmatprep.subr.bf16.mxu0 0
      %5229 = vmatpush1.bf16.msra.mxu0 0
      %5230 = vmatprep.subr.bf16.mxu0 0
      %5231 = vmatpush1.bf16.msra.mxu0 0
      %5232 = vmatprep.subr.bf16.mxu0 0
      %5233 = vmatpush1.bf16.msra.mxu0 0
      %5234 = vmatprep.subr.bf16.mxu0 0
      %5235 = vmatpush1.bf16.msra.mxu0 0
      %5236 = vmatprep.subr.bf16.mxu0 0
      %5237 = vmatpush1.bf16.msra.mxu0 0
      %5238 = vmatprep.subr.bf16.mxu0 0
      %5239 = vmatpush1.bf16.msra.mxu0 0
      %5240 = vmatprep.subr.bf16.mxu0 0
      %5241 = vmatpush1.bf16.msra.mxu0 0
      %5242 = vmatprep.mubr.bf16.mxu0 0
      %5243 = vmatmul.mubr.bf16.gmra.mrb[0].mxu0 %v5208
      %v5244 = vpop.f32.mrb[0].mxu0
      %v5245 = vadd.f32 %v5177, %v5244
      %v5246 = vpop.f32.mrb[0].mxu0
      %v5247 = vpop.f32.mrb[0].mxu0
      %v5248 = vadd.f32 %v5180, %v5247
      %v5249 = vpop.f32.mrb[0].mxu0
      %5250 = vdwg.mxu0
      %v5251 = vld [vmem:[#allocation4 + $0x2] sm:$0xff]
      %v5252 = vld [vmem:[#allocation4 + $0xa] sm:$0xff]
      %5253 = vset.pattern.permute.xlu0 1
      %5254 = vperm.xlu0 %5253, %v5079
      %v5255 = vpop.permute.xlu0 %5254
      %5257 = vset.pattern.permute.xlu0 1
      %5258 = vperm.xlu0 %5257, %v5080
      %v5259 = vpop.permute.xlu0 %5258
      %v5261 = vmul.f32 %v5251, %v5255
      %v5262 = vmul.f32 %v5252, %v5259
      %v5263 = vpack.c.bf16 %v5262, %v5261
      %v5264 = vld [vmem:[%s8 + $0x40] sm:$0xf]
      %v5265 = vld [vmem:[%s8 + $0x44] sm:$0xf]
      %v5266 = vld [vmem:[%s8 + $0x48] sm:$0xf]
      %v5267 = vld [vmem:[%s8 + $0x4c] sm:$0xf]
      %v5268 = vld [vmem:[%s8 + $0x50] sm:$0xf]
      %v5269 = vld [vmem:[%s8 + $0x54] sm:$0xf]
      %v5270 = vld [vmem:[%s8 + $0x58] sm:$0xf]
      %v5271 = vld [vmem:[%s8 + $0x5c] sm:$0xf]
      %v5280 = vunpack.c.l.b16 %v5264
      %v5281 = vunpack.c.l.b16 %v5265
      %v5282 = vunpack.c.l.b16 %v5266
      %v5283 = vunpack.c.l.b16 %v5267
      %v5284 = vunpack.c.l.b16 %v5268
      %v5285 = vunpack.c.l.b16 %v5269
      %v5286 = vunpack.c.l.b16 %v5270
      %v5287 = vunpack.c.l.b16 %v5271
      %v5288 = vpack.c.b16 %v5281, %v5280
      %v5289 = vpack.c.b16 %v5283, %v5282
      %v5290 = vpack.c.b16 %v5285, %v5284
      %v5291 = vpack.c.b16 %v5287, %v5286
      %v5297 = vsel %vm5071, %v5263, 0
      %5299 = vmatprep.subr.bf16.mxu0 0
      %5300 = vmatpush1.bf16.msra.mxu0 %v5288
      %5301 = vmatprep.subr.bf16.mxu0 0
      %5302 = vmatpush1.bf16.msra.mxu0 %v5289
      %5303 = vmatprep.subr.bf16.mxu0 0
      %5304 = vmatpush1.bf16.msra.mxu0 %v5290
      %5305 = vmatprep.subr.bf16.mxu0 0
      %5306 = vmatpush1.bf16.msra.mxu0 %v5291
      %5307 = vmatprep.subr.bf16.mxu0 0
      %5308 = vmatpush1.bf16.msra.mxu0 0
      %5309 = vmatprep.subr.bf16.mxu0 0
      %5310 = vmatpush1.bf16.msra.mxu0 0
      %5311 = vmatprep.subr.bf16.mxu0 0
      %5312 = vmatpush1.bf16.msra.mxu0 0
      %5313 = vmatprep.subr.bf16.mxu0 0
      %5314 = vmatpush1.bf16.msra.mxu0 0
      %5315 = vmatprep.subr.bf16.mxu0 0
      %5316 = vmatpush1.bf16.msra.mxu0 0
      %5317 = vmatprep.subr.bf16.mxu0 0
      %5318 = vmatpush1.bf16.msra.mxu0 0
      %5319 = vmatprep.subr.bf16.mxu0 0
      %5320 = vmatpush1.bf16.msra.mxu0 0
      %5321 = vmatprep.subr.bf16.mxu0 0
      %5322 = vmatpush1.bf16.msra.mxu0 0
      %5323 = vmatprep.subr.bf16.mxu0 0
      %5324 = vmatpush1.bf16.msra.mxu0 0
      %5325 = vmatprep.subr.bf16.mxu0 0
      %5326 = vmatpush1.bf16.msra.mxu0 0
      %5327 = vmatprep.subr.bf16.mxu0 0
      %5328 = vmatpush1.bf16.msra.mxu0 0
      %5329 = vmatprep.subr.bf16.mxu0 0
      %5330 = vmatpush1.bf16.msra.mxu0 0
      %5331 = vmatprep.mubr.bf16.mxu0 0
      %5332 = vmatmul.mubr.bf16.gmra.mrb[0].mxu0 %v5297
      %v5333 = vpop.f32.mrb[0].mxu0
      %v5334 = vadd.f32 0.0, %v5333
      %v5335 = vpop.f32.mrb[0].mxu0
      %v5336 = vpop.f32.mrb[0].mxu0
      %v5337 = vadd.f32 0.0, %v5336
      %v5338 = vpop.f32.mrb[0].mxu0
      %5339 = vdwg.mxu0
      %v5340 = vadd.f32 %v5245, %v5334
      %v5341 = vadd.f32 %v5248, %v5337
      %v5342 = vld [vmem:[#allocation4 + $0x4] sm:$0xff]
      %v5343 = vld [vmem:[#allocation4 + $0xc] sm:$0xff]
      %v5344 = vmul.f32 %v5342, %v5086
      %v5345 = vmul.f32 %v5343, %v5091
      %v5346 = vpack.c.bf16 %v5345, %v5344
      %v5347 = vld [vmem:[%s8 + $0x60] sm:$0xf]
      %v5348 = vld [vmem:[%s8 + $0x64] sm:$0xf]
      %v5349 = vld [vmem:[%s8 + $0x68] sm:$0xf]
      %v5350 = vld [vmem:[%s8 + $0x6c] sm:$0xf]
      %v5351 = vld [vmem:[%s8 + $0x70] sm:$0xf]
      %v5352 = vld [vmem:[%s8 + $0x74] sm:$0xf]
      %v5353 = vld [vmem:[%s8 + $0x78] sm:$0xf]
      %v5354 = vld [vmem:[%s8 + $0x7c] sm:$0xf]
      %v5363 = vunpack.c.l.b16 %v5347
      %v5364 = vunpack.c.l.b16 %v5348
      %v5365 = vunpack.c.l.b16 %v5349
      %v5366 = vunpack.c.l.b16 %v5350
      %v5367 = vunpack.c.l.b16 %v5351
      %v5368 = vunpack.c.l.b16 %v5352
      %v5369 = vunpack.c.l.b16 %v5353
      %v5370 = vunpack.c.l.b16 %v5354
      %v5371 = vpack.c.b16 %v5364, %v5363
      %v5372 = vpack.c.b16 %v5366, %v5365
      %v5373 = vpack.c.b16 %v5368, %v5367
      %v5374 = vpack.c.b16 %v5370, %v5369
      %v5380 = vsel %vm5071, %v5346, 0
      %5382 = vmatprep.subr.bf16.mxu0 0
      %5383 = vmatpush1.bf16.msra.mxu0 %v5371
      %5384 = vmatprep.subr.bf16.mxu0 0
      %5385 = vmatpush1.bf16.msra.mxu0 %v5372
      %5386 = vmatprep.subr.bf16.mxu0 0
      %5387 = vmatpush1.bf16.msra.mxu0 %v5373
      %5388 = vmatprep.subr.bf16.mxu0 0
      %5389 = vmatpush1.bf16.msra.mxu0 %v5374
      %5390 = vmatprep.subr.bf16.mxu0 0
      %5391 = vmatpush1.bf16.msra.mxu0 0
      %5392 = vmatprep.subr.bf16.mxu0 0
      %5393 = vmatpush1.bf16.msra.mxu0 0
      %5394 = vmatprep.subr.bf16.mxu0 0
      %5395 = vmatpush1.bf16.msra.mxu0 0
      %5396 = vmatprep.subr.bf16.mxu0 0
      %5397 = vmatpush1.bf16.msra.mxu0 0
      %5398 = vmatprep.subr.bf16.mxu0 0
      %5399 = vmatpush1.bf16.msra.mxu0 0
      %5400 = vmatprep.subr.bf16.mxu0 0
      %5401 = vmatpush1.bf16.msra.mxu0 0
      %5402 = vmatprep.subr.bf16.mxu0 0
      %5403 = vmatpush1.bf16.msra.mxu0 0
      %5404 = vmatprep.subr.bf16.mxu0 0
      %5405 = vmatpush1.bf16.msra.mxu0 0
      %5406 = vmatprep.subr.bf16.mxu0 0
      %5407 = vmatpush1.bf16.msra.mxu0 0
      %5408 = vmatprep.subr.bf16.mxu0 0
      %5409 = vmatpush1.bf16.msra.mxu0 0
      %5410 = vmatprep.subr.bf16.mxu0 0
      %5411 = vmatpush1.bf16.msra.mxu0 0
      %5412 = vmatprep.subr.bf16.mxu0 0
      %5413 = vmatpush1.bf16.msra.mxu0 0
      %5414 = vmatprep.mubr.bf16.mxu0 0
      %5415 = vmatmul.mubr.bf16.gmra.mrb[0].mxu0 %v5380
      %v5416 = vpop.f32.mrb[0].mxu0
      %v5417 = vadd.f32 0.0, %v5416
      %v5418 = vpop.f32.mrb[0].mxu0
      %v5419 = vpop.f32.mrb[0].mxu0
      %v5420 = vadd.f32 0.0, %v5419
      %v5421 = vpop.f32.mrb[0].mxu0
      %5422 = vdwg.mxu0
      %v5423 = vadd.f32 %v5340, %v5417
      %v5424 = vadd.f32 %v5341, %v5420
      %v5425 = vld [vmem:[#allocation4 + $0x5] sm:$0xff]
      %v5426 = vld [vmem:[#allocation4 + $0xd] sm:$0xff]
      %v5427 = vpack.c.bf16 %v5426, %v5425
      %v5428 = vld [vmem:[%s8 + $0x80] sm:$0xf]
      %v5429 = vld [vmem:[%s8 + $0x84] sm:$0xf]
      %v5430 = vld [vmem:[%s8 + $0x88] sm:$0xf]
      %v5431 = vld [vmem:[%s8 + $0x8c] sm:$0xf]
      %v5432 = vld [vmem:[%s8 + $0x90] sm:$0xf]
      %v5433 = vld [vmem:[%s8 + $0x94] sm:$0xf]
      %v5434 = vld [vmem:[%s8 + $0x98] sm:$0xf]
      %v5435 = vld [vmem:[%s8 + $0x9c] sm:$0xf]
      %v5444 = vunpack.c.l.b16 %v5428
      %v5445 = vunpack.c.l.b16 %v5429
      %v5446 = vunpack.c.l.b16 %v5430
      %v5447 = vunpack.c.l.b16 %v5431
      %v5448 = vunpack.c.l.b16 %v5432
      %v5449 = vunpack.c.l.b16 %v5433
      %v5450 = vunpack.c.l.b16 %v5434
      %v5451 = vunpack.c.l.b16 %v5435
      %v5452 = vpack.c.b16 %v5445, %v5444
      %v5453 = vpack.c.b16 %v5447, %v5446
      %v5454 = vpack.c.b16 %v5449, %v5448
      %v5455 = vpack.c.b16 %v5451, %v5450
      %v5461 = vsel %vm5071, %v5427, 0
      %5463 = vmatprep.subr.bf16.mxu0 0
      %5464 = vmatpush1.bf16.msra.mxu0 %v5452
      %5465 = vmatprep.subr.bf16.mxu0 0
      %5466 = vmatpush1.bf16.msra.mxu0 %v5453
      %5467 = vmatprep.subr.bf16.mxu0 0
      %5468 = vmatpush1.bf16.msra.mxu0 %v5454
      %5469 = vmatprep.subr.bf16.mxu0 0
      %5470 = vmatpush1.bf16.msra.mxu0 %v5455
      %5471 = vmatprep.subr.bf16.mxu0 0
      %5472 = vmatpush1.bf16.msra.mxu0 0
      %5473 = vmatprep.subr.bf16.mxu0 0
      %5474 = vmatpush1.bf16.msra.mxu0 0
      %5475 = vmatprep.subr.bf16.mxu0 0
      %5476 = vmatpush1.bf16.msra.mxu0 0
      %5477 = vmatprep.subr.bf16.mxu0 0
      %5478 = vmatpush1.bf16.msra.mxu0 0
      %5479 = vmatprep.subr.bf16.mxu0 0
      %5480 = vmatpush1.bf16.msra.mxu0 0
      %5481 = vmatprep.subr.bf16.mxu0 0
      %5482 = vmatpush1.bf16.msra.mxu0 0
      %5483 = vmatprep.subr.bf16.mxu0 0
      %5484 = vmatpush1.bf16.msra.mxu0 0
      %5485 = vmatprep.subr.bf16.mxu0 0
      %5486 = vmatpush1.bf16.msra.mxu0 0
      %5487 = vmatprep.subr.bf16.mxu0 0
      %5488 = vmatpush1.bf16.msra.mxu0 0
      %5489 = vmatprep.subr.bf16.mxu0 0
      %5490 = vmatpush1.bf16.msra.mxu0 0
      %5491 = vmatprep.subr.bf16.mxu0 0
      %5492 = vmatpush1.bf16.msra.mxu0 0
      %5493 = vmatprep.subr.bf16.mxu0 0
      %5494 = vmatpush1.bf16.msra.mxu0 0
      %5495 = vmatprep.mubr.bf16.mxu0 0
      %5496 = vmatmul.mubr.bf16.gmra.mrb[0].mxu0 %v5461
      %v5497 = vpop.f32.mrb[0].mxu0
      %v5498 = vadd.f32 0.0, %v5497
      %v5499 = vpop.f32.mrb[0].mxu0
      %v5500 = vpop.f32.mrb[0].mxu0
      %v5501 = vadd.f32 0.0, %v5500
      %v5502 = vpop.f32.mrb[0].mxu0
      %5503 = vdwg.mxu0
      %v5504 = vadd.f32 %v5423, %v5498
      %v5505 = vadd.f32 %v5424, %v5501
      %v5506 = vld [vmem:[#allocation4 + $0x6] sm:$0xff]
      %v5507 = vld [vmem:[#allocation4 + $0xe] sm:$0xff]
      %v5508 = vmul.f32 %v5506, %v5255
      %v5509 = vmul.f32 %v5507, %v5259
      %v5510 = vpack.c.bf16 %v5509, %v5508
      %v5511 = vld [vmem:[%s8 + $0xa0] sm:$0xf]
      %v5512 = vld [vmem:[%s8 + $0xa4] sm:$0xf]
      %v5513 = vld [vmem:[%s8 + $0xa8] sm:$0xf]
      %v5514 = vld [vmem:[%s8 + $0xac] sm:$0xf]
      %v5515 = vld [vmem:[%s8 + $0xb0] sm:$0xf]
      %v5516 = vld [vmem:[%s8 + $0xb4] sm:$0xf]
      %v5517 = vld [vmem:[%s8 + $0xb8] sm:$0xf]
      %v5518 = vld [vmem:[%s8 + $0xbc] sm:$0xf]
      %v5527 = vunpack.c.l.b16 %v5511
      %v5528 = vunpack.c.l.b16 %v5512
      %v5529 = vunpack.c.l.b16 %v5513
      %v5530 = vunpack.c.l.b16 %v5514
      %v5531 = vunpack.c.l.b16 %v5515
      %v5532 = vunpack.c.l.b16 %v5516
      %v5533 = vunpack.c.l.b16 %v5517
      %v5534 = vunpack.c.l.b16 %v5518
      %v5535 = vpack.c.b16 %v5528, %v5527
      %v5536 = vpack.c.b16 %v5530, %v5529
      %v5537 = vpack.c.b16 %v5532, %v5531
      %v5538 = vpack.c.b16 %v5534, %v5533
      %v5544 = vsel %vm5071, %v5510, 0
      %5546 = vmatprep.subr.bf16.mxu0 0
      %5547 = vmatpush1.bf16.msra.mxu0 %v5535
      %5548 = vmatprep.subr.bf16.mxu0 0
      %5549 = vmatpush1.bf16.msra.mxu0 %v5536
      %5550 = vmatprep.subr.bf16.mxu0 0
      %5551 = vmatpush1.bf16.msra.mxu0 %v5537
      %5552 = vmatprep.subr.bf16.mxu0 0
      %5553 = vmatpush1.bf16.msra.mxu0 %v5538
      %5554 = vmatprep.subr.bf16.mxu0 0
      %5555 = vmatpush1.bf16.msra.mxu0 0
      %5556 = vmatprep.subr.bf16.mxu0 0
      %5557 = vmatpush1.bf16.msra.mxu0 0
      %5558 = vmatprep.subr.bf16.mxu0 0
      %5559 = vmatpush1.bf16.msra.mxu0 0
      %5560 = vmatprep.subr.bf16.mxu0 0
      %5561 = vmatpush1.bf16.msra.mxu0 0
      %5562 = vmatprep.subr.bf16.mxu0 0
      %5563 = vmatpush1.bf16.msra.mxu0 0
      %5564 = vmatprep.subr.bf16.mxu0 0
      %5565 = vmatpush1.bf16.msra.mxu0 0
      %5566 = vmatprep.subr.bf16.mxu0 0
      %5567 = vmatpush1.bf16.msra.mxu0 0
      %5568 = vmatprep.subr.bf16.mxu0 0
      %5569 = vmatpush1.bf16.msra.mxu0 0
      %5570 = vmatprep.subr.bf16.mxu0 0
      %5571 = vmatpush1.bf16.msra.mxu0 0
      %5572 = vmatprep.subr.bf16.mxu0 0
      %5573 = vmatpush1.bf16.msra.mxu0 0
      %5574 = vmatprep.subr.bf16.mxu0 0
      %5575 = vmatpush1.bf16.msra.mxu0 0
      %5576 = vmatprep.subr.bf16.mxu0 0
      %5577 = vmatpush1.bf16.msra.mxu0 0
      %5578 = vmatprep.mubr.bf16.mxu0 0
      %5579 = vmatmul.mubr.bf16.gmra.mrb[0].mxu0 %v5544
      %v5580 = vpop.f32.mrb[0].mxu0
      %v5581 = vadd.f32 0.0, %v5580
      %v5582 = vpop.f32.mrb[0].mxu0
      %v5583 = vpop.f32.mrb[0].mxu0
      %v5584 = vadd.f32 0.0, %v5583
      %v5585 = vpop.f32.mrb[0].mxu0
      %5586 = vdwg.mxu0
      %v5587 = vadd.f32 %v5504, %v5581
      %v5588 = vadd.f32 %v5505, %v5584
      %v5589 = vld [vmem:[#allocation4 + $0x8] sm:$0xff]
      %v5590 = vld [vmem:[#allocation4 + $0x10] sm:$0xff]
      %v5591 = vmul.f32 %v5589, %v5086
      %v5592 = vmul.f32 %v5590, %v5091
      %v5593 = vpack.c.bf16 %v5592, %v5591
      %v5594 = vld [vmem:[%s8 + $0xc0] sm:$0xf]
      %v5595 = vld [vmem:[%s8 + $0xc4] sm:$0xf]
      %v5596 = vld [vmem:[%s8 + $0xc8] sm:$0xf]
      %v5597 = vld [vmem:[%s8 + $0xcc] sm:$0xf]
      %v5598 = vld [vmem:[%s8 + $0xd0] sm:$0xf]
      %v5599 = vld [vmem:[%s8 + $0xd4] sm:$0xf]
      %v5600 = vld [vmem:[%s8 + $0xd8] sm:$0xf]
      %v5601 = vld [vmem:[%s8 + $0xdc] sm:$0xf]
      %v5610 = vunpack.c.l.b16 %v5594
      %v5611 = vunpack.c.l.b16 %v5595
      %v5612 = vunpack.c.l.b16 %v5596
      %v5613 = vunpack.c.l.b16 %v5597
      %v5614 = vunpack.c.l.b16 %v5598
      %v5615 = vunpack.c.l.b16 %v5599
      %v5616 = vunpack.c.l.b16 %v5600
      %v5617 = vunpack.c.l.b16 %v5601
      %v5618 = vpack.c.b16 %v5611, %v5610
      %v5619 = vpack.c.b16 %v5613, %v5612
      %v5620 = vpack.c.b16 %v5615, %v5614
      %v5621 = vpack.c.b16 %v5617, %v5616
      %v5627 = vsel %vm5071, %v5593, 0
      %5629 = vmatprep.subr.bf16.mxu0 0
      %5630 = vmatpush1.bf16.msra.mxu0 %v5618
      %5631 = vmatprep.subr.bf16.mxu0 0
      %5632 = vmatpush1.bf16.msra.mxu0 %v5619
      %5633 = vmatprep.subr.bf16.mxu0 0
      %5634 = vmatpush1.bf16.msra.mxu0 %v5620
      %5635 = vmatprep.subr.bf16.mxu0 0
      %5636 = vmatpush1.bf16.msra.mxu0 %v5621
      %5637 = vmatprep.subr.bf16.mxu0 0
      %5638 = vmatpush1.bf16.msra.mxu0 0
      %5639 = vmatprep.subr.bf16.mxu0 0
      %5640 = vmatpush1.bf16.msra.mxu0 0
      %5641 = vmatprep.subr.bf16.mxu0 0
      %5642 = vmatpush1.bf16.msra.mxu0 0
      %5643 = vmatprep.subr.bf16.mxu0 0
      %5644 = vmatpush1.bf16.msra.mxu0 0
      %5645 = vmatprep.subr.bf16.mxu0 0
      %5646 = vmatpush1.bf16.msra.mxu0 0
      %5647 = vmatprep.subr.bf16.mxu0 0
      %5648 = vmatpush1.bf16.msra.mxu0 0
      %5649 = vmatprep.subr.bf16.mxu0 0
      %5650 = vmatpush1.bf16.msra.mxu0 0
      %5651 = vmatprep.subr.bf16.mxu0 0
      %5652 = vmatpush1.bf16.msra.mxu0 0
      %5653 = vmatprep.subr.bf16.mxu0 0
      %5654 = vmatpush1.bf16.msra.mxu0 0
      %5655 = vmatprep.subr.bf16.mxu0 0
      %5656 = vmatpush1.bf16.msra.mxu0 0
      %5657 = vmatprep.subr.bf16.mxu0 0
      %5658 = vmatpush1.bf16.msra.mxu0 0
      %5659 = vmatprep.subr.bf16.mxu0 0
      %5660 = vmatpush1.bf16.msra.mxu0 0
      %5661 = vmatprep.mubr.bf16.mxu0 0
      %5662 = vmatmul.mubr.bf16.gmra.mrb[0].mxu0 %v5627
      %v5663 = vpop.f32.mrb[0].mxu0
      %v5664 = vadd.f32 0.0, %v5663
      %v5665 = vpop.f32.mrb[0].mxu0
      %v5666 = vpop.f32.mrb[0].mxu0
      %v5667 = vadd.f32 0.0, %v5666
      %v5668 = vpop.f32.mrb[0].mxu0
      %5669 = vdwg.mxu0
      %v5670 = vadd.f32 %v5587, %v5664
      %v5671 = vadd.f32 %v5588, %v5667
      %v5672 = vld [vmem:[#allocation4 + $0x9] sm:$0xff]
      %v5673 = vld [vmem:[#allocation4 + $0x11] sm:$0xff]
      %v5674 = vpack.c.bf16 %v5673, %v5672
      %v5675 = vld [vmem:[%s8 + $0xe0] sm:$0xf]
      %v5676 = vld [vmem:[%s8 + $0xe4] sm:$0xf]
      %v5677 = vld [vmem:[%s8 + $0xe8] sm:$0xf]
      %v5678 = vld [vmem:[%s8 + $0xec] sm:$0xf]
      %v5679 = vld [vmem:[%s8 + $0xf0] sm:$0xf]
      %v5680 = vld [vmem:[%s8 + $0xf4] sm:$0xf]
      %v5681 = vld [vmem:[%s8 + $0xf8] sm:$0xf]
      %v5682 = vld [vmem:[%s8 + $0xfc] sm:$0xf]
      %v5691 = vunpack.c.l.b16 %v5675
      %v5692 = vunpack.c.l.b16 %v5676
      %v5693 = vunpack.c.l.b16 %v5677
      %v5694 = vunpack.c.l.b16 %v5678
      %v5695 = vunpack.c.l.b16 %v5679
      %v5696 = vunpack.c.l.b16 %v5680
      %v5697 = vunpack.c.l.b16 %v5681
      %v5698 = vunpack.c.l.b16 %v5682
      %v5699 = vpack.c.b16 %v5692, %v5691
      %v5700 = vpack.c.b16 %v5694, %v5693
      %v5701 = vpack.c.b16 %v5696, %v5695
      %v5702 = vpack.c.b16 %v5698, %v5697
      %v5708 = vsel %vm5071, %v5674, 0
      %5710 = vmatprep.subr.bf16.mxu0 0
      %5711 = vmatpush1.bf16.msra.mxu0 %v5699
      %5712 = vmatprep.subr.bf16.mxu0 0
      %5713 = vmatpush1.bf16.msra.mxu0 %v5700
      %5714 = vmatprep.subr.bf16.mxu0 0
      %5715 = vmatpush1.bf16.msra.mxu0 %v5701
      %5716 = vmatprep.subr.bf16.mxu0 0
      %5717 = vmatpush1.bf16.msra.mxu0 %v5702
      %5718 = vmatprep.subr.bf16.mxu0 0
      %5719 = vmatpush1.bf16.msra.mxu0 0
      %5720 = vmatprep.subr.bf16.mxu0 0
      %5721 = vmatpush1.bf16.msra.mxu0 0
      %5722 = vmatprep.subr.bf16.mxu0 0
      %5723 = vmatpush1.bf16.msra.mxu0 0
      %5724 = vmatprep.subr.bf16.mxu0 0
      %5725 = vmatpush1.bf16.msra.mxu0 0
      %5726 = vmatprep.subr.bf16.mxu0 0
      %5727 = vmatpush1.bf16.msra.mxu0 0
      %5728 = vmatprep.subr.bf16.mxu0 0
      %5729 = vmatpush1.bf16.msra.mxu0 0
      %5730 = vmatprep.subr.bf16.mxu0 0
      %5731 = vmatpush1.bf16.msra.mxu0 0
      %5732 = vmatprep.subr.bf16.mxu0 0
      %5733 = vmatpush1.bf16.msra.mxu0 0
      %5734 = vmatprep.subr.bf16.mxu0 0
      %5735 = vmatpush1.bf16.msra.mxu0 0
      %5736 = vmatprep.subr.bf16.mxu0 0
      %5737 = vmatpush1.bf16.msra.mxu0 0
      %5738 = vmatprep.subr.bf16.mxu0 0
      %5739 = vmatpush1.bf16.msra.mxu0 0
      %5740 = vmatprep.subr.bf16.mxu0 0
      %5741 = vmatpush1.bf16.msra.mxu0 0
      %5742 = vmatprep.mubr.bf16.mxu0 0
      %5743 = vmatmul.mubr.bf16.gmra.mrb[0].mxu0 %v5708
      %v5744 = vpop.f32.mrb[0].mxu0
      %v5745 = vadd.f32 0.0, %v5744
      %v5746 = vpop.f32.mrb[0].mxu0
      %v5747 = vpop.f32.mrb[0].mxu0
      %v5748 = vadd.f32 0.0, %v5747
      %v5749 = vpop.f32.mrb[0].mxu0
      %5750 = vdwg.mxu0
      %v5751 = vadd.f32 %v5670, %v5745
      %v5752 = vadd.f32 %v5671, %v5748
      %v5753 = vld [vmem:[#allocation4 + $0xa] sm:$0xff]
      %v5754 = vld [vmem:[#allocation4 + $0x12] sm:$0xff]
      %v5755 = vmul.f32 %v5753, %v5255
      %v5756 = vmul.f32 %v5754, %v5259
      %v5757 = vpack.c.bf16 %v5756, %v5755
      %v5758 = vld [vmem:[%s8 + $0x100] sm:$0xf]
      %v5759 = vld [vmem:[%s8 + $0x104] sm:$0xf]
      %v5760 = vld [vmem:[%s8 + $0x108] sm:$0xf]
      %v5761 = vld [vmem:[%s8 + $0x10c] sm:$0xf]
      %v5762 = vld [vmem:[%s8 + $0x110] sm:$0xf]
      %v5763 = vld [vmem:[%s8 + $0x114] sm:$0xf]
      %v5764 = vld [vmem:[%s8 + $0x118] sm:$0xf]
      %v5765 = vld [vmem:[%s8 + $0x11c] sm:$0xf]
      %v5774 = vunpack.c.l.b16 %v5758
      %v5775 = vunpack.c.l.b16 %v5759
      %v5776 = vunpack.c.l.b16 %v5760
      %v5777 = vunpack.c.l.b16 %v5761
      %v5778 = vunpack.c.l.b16 %v5762
      %v5779 = vunpack.c.l.b16 %v5763
      %v5780 = vunpack.c.l.b16 %v5764
      %v5781 = vunpack.c.l.b16 %v5765
      %v5782 = vpack.c.b16 %v5775, %v5774
      %v5783 = vpack.c.b16 %v5777, %v5776
      %v5784 = vpack.c.b16 %v5779, %v5778
      %v5785 = vpack.c.b16 %v5781, %v5780
      %v5791 = vsel %vm5071, %v5757, 0
      %5793 = vmatprep.subr.bf16.mxu0 0
      %5794 = vmatpush1.bf16.msra.mxu0 %v5782
      %5795 = vmatprep.subr.bf16.mxu0 0
      %5796 = vmatpush1.bf16.msra.mxu0 %v5783
      %5797 = vmatprep.subr.bf16.mxu0 0
      %5798 = vmatpush1.bf16.msra.mxu0 %v5784
      %5799 = vmatprep.subr.bf16.mxu0 0
      %5800 = vmatpush1.bf16.msra.mxu0 %v5785
      %5801 = vmatprep.subr.bf16.mxu0 0
      %5802 = vmatpush1.bf16.msra.mxu0 0
      %5803 = vmatprep.subr.bf16.mxu0 0
      %5804 = vmatpush1.bf16.msra.mxu0 0
      %5805 = vmatprep.subr.bf16.mxu0 0
      %5806 = vmatpush1.bf16.msra.mxu0 0
      %5807 = vmatprep.subr.bf16.mxu0 0
      %5808 = vmatpush1.bf16.msra.mxu0 0
      %5809 = vmatprep.subr.bf16.mxu0 0
      %5810 = vmatpush1.bf16.msra.mxu0 0
      %5811 = vmatprep.subr.bf16.mxu0 0
      %5812 = vmatpush1.bf16.msra.mxu0 0
      %5813 = vmatprep.subr.bf16.mxu0 0
      %5814 = vmatpush1.bf16.msra.mxu0 0
      %5815 = vmatprep.subr.bf16.mxu0 0
      %5816 = vmatpush1.bf16.msra.mxu0 0
      %5817 = vmatprep.subr.bf16.mxu0 0
      %5818 = vmatpush1.bf16.msra.mxu0 0
      %5819 = vmatprep.subr.bf16.mxu0 0
      %5820 = vmatpush1.bf16.msra.mxu0 0
      %5821 = vmatprep.subr.bf16.mxu0 0
      %5822 = vmatpush1.bf16.msra.mxu0 0
      %5823 = vmatprep.subr.bf16.mxu0 0
      %5824 = vmatpush1.bf16.msra.mxu0 0
      %5825 = vmatprep.mubr.bf16.mxu0 0
      %5826 = vmatmul.mubr.bf16.gmra.mrb[0].mxu0 %v5791
      %v5827 = vpop.f32.mrb[0].mxu0
      %v5828 = vadd.f32 0.0, %v5827
      %v5829 = vpop.f32.mrb[0].mxu0
      %v5830 = vpop.f32.mrb[0].mxu0
      %v5831 = vadd.f32 0.0, %v5830
      %v5832 = vpop.f32.mrb[0].mxu0
      %5833 = vdwg.mxu0
      %v5834 = vadd.f32 %v5751, %v5828
      %v5835 = vadd.f32 %v5752, %v5831
      %v5836 = vld [vmem:[%s9] sm:$0x1]
      %v5838 = vlaneseq
      %v5839 = vshrl.u32 %v5838, 7
      %v5840 = vsub.s32 0, %v5839
      %v5841 = vrot.slane %v5836, %v5840
      %v5843 = vadd.f32 %v5834, %v5841
      %v5844 = vadd.f32 %v5835, %v5841
      %v5845 = vmax.f32 %v5843, 0.0
      %v5846 = vmax.f32 %v5844, 0.0
      %5847 = vst [vmem:[#allocation5] sm:$0xff] 0.0
      %5848 = vst [vmem:[#allocation5 + $0x8] sm:$0xff] 0.0
      %5849 = vst [vmem:[#allocation5 + $0x10] sm:$0xff] 0.0
      %5850 = vst [vmem:[#allocation5 + $0x18] sm:$0x3] 0.0
      %5851 = vst [vmem:[#allocation5 + $0x5] sm:$0xff] %v5845
      %5852 = vst [vmem:[#allocation5 + $0xd] sm:$0xff] %v5846
      %v5853 = vld [vmem:[%s3] sm:$0xff]
      %v5854 = vld [vmem:[%s3 + $0x8] sm:$0xff]
      %v5855 = vld [vmem:[#allocation5] sm:$0xff]
      %v5856 = vld [vmem:[#allocation5 + $0x8] sm:$0xff]
      %5858 = vset.pattern.permute.xlu0 0
      %5859 = vperm.xlu0 %5858, %v5853
      %v5860 = vpop.permute.xlu0 %5859
      %5863 = vset.pattern.permute.xlu0 0
      %5864 = vperm.xlu0 %5863, %v5854
      %v5865 = vpop.permute.xlu0 %5864
      %v5867 = vmul.f32 %v5855, %v5860
      %v5868 = vmul.f32 %v5856, %v5865
      %v5869 = vpack.c.bf16 %v5868, %v5867
      %v5870 = vld [vmem:[%s10] sm:$0xf]
      %v5871 = vld [vmem:[%s10 + $0x4] sm:$0xf]
      %v5872 = vld [vmem:[%s10 + $0x8] sm:$0xf]
      %v5873 = vld [vmem:[%s10 + $0xc] sm:$0xf]
      %v5874 = vld [vmem:[%s10 + $0x10] sm:$0xf]
      %v5875 = vld [vmem:[%s10 + $0x14] sm:$0xf]
      %v5876 = vld [vmem:[%s10 + $0x18] sm:$0xf]
      %v5877 = vld [vmem:[%s10 + $0x1c] sm:$0xf]
      %v5878 = vld [vmem:[%s10 + $0x20] sm:$0xf]
      %v5879 = vld [vmem:[%s10 + $0x24] sm:$0xf]
      %v5880 = vld [vmem:[%s10 + $0x28] sm:$0xf]
      %v5881 = vld [vmem:[%s10 + $0x2c] sm:$0xf]
      %v5882 = vld [vmem:[%s10 + $0x30] sm:$0xf]
      %v5883 = vld [vmem:[%s10 + $0x34] sm:$0xf]
      %v5884 = vld [vmem:[%s10 + $0x38] sm:$0xf]
      %v5885 = vld [vmem:[%s10 + $0x3c] sm:$0xf]
      %v5886 = vld [vmem:[#allocation5 + $0x1] sm:$0xff]
      %v5887 = vld [vmem:[#allocation5 + $0x9] sm:$0xff]
      %v5888 = vpack.c.bf16 %v5887, %v5886
      %v5889 = vld [vmem:[%s10 + $0x40] sm:$0xf]
      %v5890 = vld [vmem:[%s10 + $0x44] sm:$0xf]
      %v5891 = vld [vmem:[%s10 + $0x48] sm:$0xf]
      %v5892 = vld [vmem:[%s10 + $0x4c] sm:$0xf]
      %v5893 = vld [vmem:[%s10 + $0x50] sm:$0xf]
      %v5894 = vld [vmem:[%s10 + $0x54] sm:$0xf]
      %v5895 = vld [vmem:[%s10 + $0x58] sm:$0xf]
      %v5896 = vld [vmem:[%s10 + $0x5c] sm:$0xf]
      %v5897 = vld [vmem:[%s10 + $0x60] sm:$0xf]
      %v5898 = vld [vmem:[%s10 + $0x64] sm:$0xf]
      %v5899 = vld [vmem:[%s10 + $0x68] sm:$0xf]
      %v5900 = vld [vmem:[%s10 + $0x6c] sm:$0xf]
      %v5901 = vld [vmem:[%s10 + $0x70] sm:$0xf]
      %v5902 = vld [vmem:[%s10 + $0x74] sm:$0xf]
      %v5903 = vld [vmem:[%s10 + $0x78] sm:$0xf]
      %v5904 = vld [vmem:[%s10 + $0x7c] sm:$0xf]
      %v5921 = vunpack.c.l.b16 %v5889
      %v5922 = vunpack.c.l.b16 %v5890
      %v5923 = vunpack.c.l.b16 %v5891
      %v5924 = vunpack.c.l.b16 %v5892
      %v5925 = vunpack.c.l.b16 %v5893
      %v5926 = vunpack.c.l.b16 %v5894
      %v5927 = vunpack.c.l.b16 %v5895
      %v5928 = vunpack.c.l.b16 %v5896
      %v5929 = vunpack.c.l.b16 %v5897
      %v5930 = vunpack.c.l.b16 %v5898
      %v5931 = vunpack.c.l.b16 %v5899
      %v5932 = vunpack.c.l.b16 %v5900
      %v5933 = vunpack.c.l.b16 %v5901
      %v5934 = vunpack.c.l.b16 %v5902
      %v5935 = vunpack.c.l.b16 %v5903
      %v5936 = vunpack.c.l.b16 %v5904
      %v5937 = vpack.c.b16 %v5922, %v5921
      %v5938 = vpack.c.b16 %v5924, %v5923
      %v5939 = vpack.c.b16 %v5926, %v5925
      %v5940 = vpack.c.b16 %v5928, %v5927
      %v5941 = vpack.c.b16 %v5930, %v5929
      %v5942 = vpack.c.b16 %v5932, %v5931
      %v5943 = vpack.c.b16 %v5934, %v5933
      %v5944 = vpack.c.b16 %v5936, %v5935
      %5953 = vmatprep.subr.bf16.mxu0 0
      %5954 = vmatpush1.bf16.msra.mxu0 %v5937
      %5955 = vmatprep.subr.bf16.mxu0 0
      %5956 = vmatpush1.bf16.msra.mxu0 %v5938
      %5957 = vmatprep.subr.bf16.mxu0 0
      %5958 = vmatpush1.bf16.msra.mxu0 %v5939
      %5959 = vmatprep.subr.bf16.mxu0 0
      %5960 = vmatpush1.bf16.msra.mxu0 %v5940
      %5961 = vmatprep.subr.bf16.mxu0 0
      %5962 = vmatpush1.bf16.msra.mxu0 %v5941
      %5963 = vmatprep.subr.bf16.mxu0 0
      %5964 = vmatpush1.bf16.msra.mxu0 %v5942
      %5965 = vmatprep.subr.bf16.mxu0 0
      %5966 = vmatpush1.bf16.msra.mxu0 %v5943
      %5967 = vmatprep.subr.bf16.mxu0 0
      %5968 = vmatpush1.bf16.msra.mxu0 %v5944
      %5969 = vmatprep.subr.bf16.mxu0 0
      %5970 = vmatpush1.bf16.msra.mxu0 0
      %5971 = vmatprep.subr.bf16.mxu0 0
      %5972 = vmatpush1.bf16.msra.mxu0 0
      %5973 = vmatprep.subr.bf16.mxu0 0
      %5974 = vmatpush1.bf16.msra.mxu0 0
      %5975 = vmatprep.subr.bf16.mxu0 0
      %5976 = vmatpush1.bf16.msra.mxu0 0
      %5977 = vmatprep.subr.bf16.mxu0 0
      %5978 = vmatpush1.bf16.msra.mxu0 0
      %5979 = vmatprep.subr.bf16.mxu0 0
      %5980 = vmatpush1.bf16.msra.mxu0 0
      %5981 = vmatprep.subr.bf16.mxu0 0
      %5982 = vmatpush1.bf16.msra.mxu0 0
      %5983 = vmatprep.subr.bf16.mxu0 0
      %5984 = vmatpush1.bf16.msra.mxu0 0
      %5985 = vmatprep.mubr.bf16.mxu0 0
      %5986 = vmatmul.mubr.bf16.gmra.mrb[0].mxu0 %v5888
      %v5987 = vpop.f32.mrb[0].mxu0
      %v5988 = vadd.f32 0.0, %v5987
      %v5989 = vpop.f32.mrb[0].mxu0
      %v5990 = vpop.f32.mrb[0].mxu0
      %v5991 = vadd.f32 0.0, %v5990
      %v5992 = vpop.f32.mrb[0].mxu0
      %5993 = vdwg.mxu0
      %v6010 = vunpack.c.l.b16 %v5870
      %v6011 = vunpack.c.l.b16 %v5871
      %v6012 = vunpack.c.l.b16 %v5872
      %v6013 = vunpack.c.l.b16 %v5873
      %v6014 = vunpack.c.l.b16 %v5874
      %v6015 = vunpack.c.l.b16 %v5875
      %v6016 = vunpack.c.l.b16 %v5876
      %v6017 = vunpack.c.l.b16 %v5877
      %v6018 = vunpack.c.l.b16 %v5878
      %v6019 = vunpack.c.l.b16 %v5879
      %v6020 = vunpack.c.l.b16 %v5880
      %v6021 = vunpack.c.l.b16 %v5881
      %v6022 = vunpack.c.l.b16 %v5882
      %v6023 = vunpack.c.l.b16 %v5883
      %v6024 = vunpack.c.l.b16 %v5884
      %v6025 = vunpack.c.l.b16 %v5885
      %v6026 = vpack.c.b16 %v6011, %v6010
      %v6027 = vpack.c.b16 %v6013, %v6012
      %v6028 = vpack.c.b16 %v6015, %v6014
      %v6029 = vpack.c.b16 %v6017, %v6016
      %v6030 = vpack.c.b16 %v6019, %v6018
      %v6031 = vpack.c.b16 %v6021, %v6020
      %v6032 = vpack.c.b16 %v6023, %v6022
      %v6033 = vpack.c.b16 %v6025, %v6024
      %6042 = vmatprep.subr.bf16.mxu0 0
      %6043 = vmatpush1.bf16.msra.mxu0 %v6026
      %6044 = vmatprep.subr.bf16.mxu0 0
      %6045 = vmatpush1.bf16.msra.mxu0 %v6027
      %6046 = vmatprep.subr.bf16.mxu0 0
      %6047 = vmatpush1.bf16.msra.mxu0 %v6028
      %6048 = vmatprep.subr.bf16.mxu0 0
      %6049 = vmatpush1.bf16.msra.mxu0 %v6029
      %6050 = vmatprep.subr.bf16.mxu0 0
      %6051 = vmatpush1.bf16.msra.mxu0 %v6030
      %6052 = vmatprep.subr.bf16.mxu0 0
      %6053 = vmatpush1.bf16.msra.mxu0 %v6031
      %6054 = vmatprep.subr.bf16.mxu0 0
      %6055 = vmatpush1.bf16.msra.mxu0 %v6032
      %6056 = vmatprep.subr.bf16.mxu0 0
      %6057 = vmatpush1.bf16.msra.mxu0 %v6033
      %6058 = vmatprep.subr.bf16.mxu0 0
      %6059 = vmatpush1.bf16.msra.mxu0 0
      %6060 = vmatprep.subr.bf16.mxu0 0
      %6061 = vmatpush1.bf16.msra.mxu0 0
      %6062 = vmatprep.subr.bf16.mxu0 0
      %6063 = vmatpush1.bf16.msra.mxu0 0
      %6064 = vmatprep.subr.bf16.mxu0 0
      %6065 = vmatpush1.bf16.msra.mxu0 0
      %6066 = vmatprep.subr.bf16.mxu0 0
      %6067 = vmatpush1.bf16.msra.mxu0 0
      %6068 = vmatprep.subr.bf16.mxu0 0
      %6069 = vmatpush1.bf16.msra.mxu0 0
      %6070 = vmatprep.subr.bf16.mxu0 0
      %6071 = vmatpush1.bf16.msra.mxu0 0
      %6072 = vmatprep.subr.bf16.mxu0 0
      %6073 = vmatpush1.bf16.msra.mxu0 0
      %6074 = vmatprep.mubr.bf16.mxu0 0
      %6075 = vmatmul.mubr.bf16.gmra.mrb[0].mxu0 %v5869
      %v6076 = vpop.f32.mrb[0].mxu0
      %v6077 = vadd.f32 %v5988, %v6076
      %v6078 = vpop.f32.mrb[0].mxu0
      %v6079 = vpop.f32.mrb[0].mxu0
      %v6080 = vadd.f32 %v5991, %v6079
      %v6081 = vpop.f32.mrb[0].mxu0
      %6082 = vdwg.mxu0
      %v6083 = vld [vmem:[#allocation5 + $0x2] sm:$0xff]
      %v6084 = vld [vmem:[#allocation5 + $0xa] sm:$0xff]
      %6085 = vset.pattern.permute.xlu0 1
      %6086 = vperm.xlu0 %6085, %v5853
      %v6087 = vpop.permute.xlu0 %6086
      %6089 = vset.pattern.permute.xlu0 1
      %6090 = vperm.xlu0 %6089, %v5854
      %v6091 = vpop.permute.xlu0 %6090
      %v6093 = vmul.f32 %v6083, %v6087
      %v6094 = vmul.f32 %v6084, %v6091
      %v6095 = vpack.c.bf16 %v6094, %v6093
      %v6096 = vld [vmem:[%s10 + $0x80] sm:$0xf]
      %v6097 = vld [vmem:[%s10 + $0x84] sm:$0xf]
      %v6098 = vld [vmem:[%s10 + $0x88] sm:$0xf]
      %v6099 = vld [vmem:[%s10 + $0x8c] sm:$0xf]
      %v6100 = vld [vmem:[%s10 + $0x90] sm:$0xf]
      %v6101 = vld [vmem:[%s10 + $0x94] sm:$0xf]
      %v6102 = vld [vmem:[%s10 + $0x98] sm:$0xf]
      %v6103 = vld [vmem:[%s10 + $0x9c] sm:$0xf]
      %v6104 = vld [vmem:[%s10 + $0xa0] sm:$0xf]
      %v6105 = vld [vmem:[%s10 + $0xa4] sm:$0xf]
      %v6106 = vld [vmem:[%s10 + $0xa8] sm:$0xf]
      %v6107 = vld [vmem:[%s10 + $0xac] sm:$0xf]
      %v6108 = vld [vmem:[%s10 + $0xb0] sm:$0xf]
      %v6109 = vld [vmem:[%s10 + $0xb4] sm:$0xf]
      %v6110 = vld [vmem:[%s10 + $0xb8] sm:$0xf]
      %v6111 = vld [vmem:[%s10 + $0xbc] sm:$0xf]
      %v6128 = vunpack.c.l.b16 %v6096
      %v6129 = vunpack.c.l.b16 %v6097
      %v6130 = vunpack.c.l.b16 %v6098
      %v6131 = vunpack.c.l.b16 %v6099
      %v6132 = vunpack.c.l.b16 %v6100
      %v6133 = vunpack.c.l.b16 %v6101
      %v6134 = vunpack.c.l.b16 %v6102
      %v6135 = vunpack.c.l.b16 %v6103
      %v6136 = vunpack.c.l.b16 %v6104
      %v6137 = vunpack.c.l.b16 %v6105
      %v6138 = vunpack.c.l.b16 %v6106
      %v6139 = vunpack.c.l.b16 %v6107
      %v6140 = vunpack.c.l.b16 %v6108
      %v6141 = vunpack.c.l.b16 %v6109
      %v6142 = vunpack.c.l.b16 %v6110
      %v6143 = vunpack.c.l.b16 %v6111
      %v6144 = vpack.c.b16 %v6129, %v6128
      %v6145 = vpack.c.b16 %v6131, %v6130
      %v6146 = vpack.c.b16 %v6133, %v6132
      %v6147 = vpack.c.b16 %v6135, %v6134
      %v6148 = vpack.c.b16 %v6137, %v6136
      %v6149 = vpack.c.b16 %v6139, %v6138
      %v6150 = vpack.c.b16 %v6141, %v6140
      %v6151 = vpack.c.b16 %v6143, %v6142
      %6160 = vmatprep.subr.bf16.mxu0 0
      %6161 = vmatpush1.bf16.msra.mxu0 %v6144
      %6162 = vmatprep.subr.bf16.mxu0 0
      %6163 = vmatpush1.bf16.msra.mxu0 %v6145
      %6164 = vmatprep.subr.bf16.mxu0 0
      %6165 = vmatpush1.bf16.msra.mxu0 %v6146
      %6166 = vmatprep.subr.bf16.mxu0 0
      %6167 = vmatpush1.bf16.msra.mxu0 %v6147
      %6168 = vmatprep.subr.bf16.mxu0 0
      %6169 = vmatpush1.bf16.msra.mxu0 %v6148
      %6170 = vmatprep.subr.bf16.mxu0 0
      %6171 = vmatpush1.bf16.msra.mxu0 %v6149
      %6172 = vmatprep.subr.bf16.mxu0 0
      %6173 = vmatpush1.bf16.msra.mxu0 %v6150
      %6174 = vmatprep.subr.bf16.mxu0 0
      %6175 = vmatpush1.bf16.msra.mxu0 %v6151
      %6176 = vmatprep.subr.bf16.mxu0 0
      %6177 = vmatpush1.bf16.msra.mxu0 0
      %6178 = vmatprep.subr.bf16.mxu0 0
      %6179 = vmatpush1.bf16.msra.mxu0 0
      %6180 = vmatprep.subr.bf16.mxu0 0
      %6181 = vmatpush1.bf16.msra.mxu0 0
      %6182 = vmatprep.subr.bf16.mxu0 0
      %6183 = vmatpush1.bf16.msra.mxu0 0
      %6184 = vmatprep.subr.bf16.mxu0 0
      %6185 = vmatpush1.bf16.msra.mxu0 0
      %6186 = vmatprep.subr.bf16.mxu0 0
      %6187 = vmatpush1.bf16.msra.mxu0 0
      %6188 = vmatprep.subr.bf16.mxu0 0
      %6189 = vmatpush1.bf16.msra.mxu0 0
      %6190 = vmatprep.subr.bf16.mxu0 0
      %6191 = vmatpush1.bf16.msra.mxu0 0
      %6192 = vmatprep.mubr.bf16.mxu0 0
      %6193 = vmatmul.mubr.bf16.gmra.mrb[0].mxu0 %v6095
      %v6194 = vpop.f32.mrb[0].mxu0
      %v6195 = vadd.f32 0.0, %v6194
      %v6196 = vpop.f32.mrb[0].mxu0
      %v6197 = vpop.f32.mrb[0].mxu0
      %v6198 = vadd.f32 0.0, %v6197
      %v6199 = vpop.f32.mrb[0].mxu0
      %6200 = vdwg.mxu0
      %v6201 = vadd.f32 %v6077, %v6195
      %v6202 = vadd.f32 %v6080, %v6198
      %v6203 = vld [vmem:[#allocation5 + $0x4] sm:$0xff]
      %v6204 = vld [vmem:[#allocation5 + $0xc] sm:$0xff]
      %v6205 = vmul.f32 %v6203, %v5860
      %v6206 = vmul.f32 %v6204, %v5865
      %v6207 = vpack.c.bf16 %v6206, %v6205
      %v6208 = vld [vmem:[%s10 + $0xc0] sm:$0xf]
      %v6209 = vld [vmem:[%s10 + $0xc4] sm:$0xf]
      %v6210 = vld [vmem:[%s10 + $0xc8] sm:$0xf]
      %v6211 = vld [vmem:[%s10 + $0xcc] sm:$0xf]
      %v6212 = vld [vmem:[%s10 + $0xd0] sm:$0xf]
      %v6213 = vld [vmem:[%s10 + $0xd4] sm:$0xf]
      %v6214 = vld [vmem:[%s10 + $0xd8] sm:$0xf]
      %v6215 = vld [vmem:[%s10 + $0xdc] sm:$0xf]
      %v6216 = vld [vmem:[%s10 + $0xe0] sm:$0xf]
      %v6217 = vld [vmem:[%s10 + $0xe4] sm:$0xf]
      %v6218 = vld [vmem:[%s10 + $0xe8] sm:$0xf]
      %v6219 = vld [vmem:[%s10 + $0xec] sm:$0xf]
      %v6220 = vld [vmem:[%s10 + $0xf0] sm:$0xf]
      %v6221 = vld [vmem:[%s10 + $0xf4] sm:$0xf]
      %v6222 = vld [vmem:[%s10 + $0xf8] sm:$0xf]
      %v6223 = vld [vmem:[%s10 + $0xfc] sm:$0xf]
      %v6240 = vunpack.c.l.b16 %v6208
      %v6241 = vunpack.c.l.b16 %v6209
      %v6242 = vunpack.c.l.b16 %v6210
      %v6243 = vunpack.c.l.b16 %v6211
      %v6244 = vunpack.c.l.b16 %v6212
      %v6245 = vunpack.c.l.b16 %v6213
      %v6246 = vunpack.c.l.b16 %v6214
      %v6247 = vunpack.c.l.b16 %v6215
      %v6248 = vunpack.c.l.b16 %v6216
      %v6249 = vunpack.c.l.b16 %v6217
      %v6250 = vunpack.c.l.b16 %v6218
      %v6251 = vunpack.c.l.b16 %v6219
      %v6252 = vunpack.c.l.b16 %v6220
      %v6253 = vunpack.c.l.b16 %v6221
      %v6254 = vunpack.c.l.b16 %v6222
      %v6255 = vunpack.c.l.b16 %v6223
      %v6256 = vpack.c.b16 %v6241, %v6240
      %v6257 = vpack.c.b16 %v6243, %v6242
      %v6258 = vpack.c.b16 %v6245, %v6244
      %v6259 = vpack.c.b16 %v6247, %v6246
      %v6260 = vpack.c.b16 %v6249, %v6248
      %v6261 = vpack.c.b16 %v6251, %v6250
      %v6262 = vpack.c.b16 %v6253, %v6252
      %v6263 = vpack.c.b16 %v6255, %v6254
      %6272 = vmatprep.subr.bf16.mxu0 0
      %6273 = vmatpush1.bf16.msra.mxu0 %v6256
      %6274 = vmatprep.subr.bf16.mxu0 0
      %6275 = vmatpush1.bf16.msra.mxu0 %v6257
      %6276 = vmatprep.subr.bf16.mxu0 0
      %6277 = vmatpush1.bf16.msra.mxu0 %v6258
      %6278 = vmatprep.subr.bf16.mxu0 0
      %6279 = vmatpush1.bf16.msra.mxu0 %v6259
      %6280 = vmatprep.subr.bf16.mxu0 0
      %6281 = vmatpush1.bf16.msra.mxu0 %v6260
      %6282 = vmatprep.subr.bf16.mxu0 0
      %6283 = vmatpush1.bf16.msra.mxu0 %v6261
      %6284 = vmatprep.subr.bf16.mxu0 0
      %6285 = vmatpush1.bf16.msra.mxu0 %v6262
      %6286 = vmatprep.subr.bf16.mxu0 0
      %6287 = vmatpush1.bf16.msra.mxu0 %v6263
      %6288 = vmatprep.subr.bf16.mxu0 0
      %6289 = vmatpush1.bf16.msra.mxu0 0
      %6290 = vmatprep.subr.bf16.mxu0 0
      %6291 = vmatpush1.bf16.msra.mxu0 0
      %6292 = vmatprep.subr.bf16.mxu0 0
      %6293 = vmatpush1.bf16.msra.mxu0 0
      %6294 = vmatprep.subr.bf16.mxu0 0
      %6295 = vmatpush1.bf16.msra.mxu0 0
      %6296 = vmatprep.subr.bf16.mxu0 0
      %6297 = vmatpush1.bf16.msra.mxu0 0
      %6298 = vmatprep.subr.bf16.mxu0 0
      %6299 = vmatpush1.bf16.msra.mxu0 0
      %6300 = vmatprep.subr.bf16.mxu0 0
      %6301 = vmatpush1.bf16.msra.mxu0 0
      %6302 = vmatprep.subr.bf16.mxu0 0
      %6303 = vmatpush1.bf16.msra.mxu0 0
      %6304 = vmatprep.mubr.bf16.mxu0 0
      %6305 = vmatmul.mubr.bf16.gmra.mrb[0].mxu0 %v6207
      %v6306 = vpop.f32.mrb[0].mxu0
      %v6307 = vadd.f32 0.0, %v6306
      %v6308 = vpop.f32.mrb[0].mxu0
      %v6309 = vpop.f32.mrb[0].mxu0
      %v6310 = vadd.f32 0.0, %v6309
      %v6311 = vpop.f32.mrb[0].mxu0
      %6312 = vdwg.mxu0
      %v6313 = vadd.f32 %v6201, %v6307
      %v6314 = vadd.f32 %v6202, %v6310
      %v6315 = vld [vmem:[#allocation5 + $0x5] sm:$0xff]
      %v6316 = vld [vmem:[#allocation5 + $0xd] sm:$0xff]
      %v6317 = vpack.c.bf16 %v6316, %v6315
      %v6318 = vld [vmem:[%s10 + $0x100] sm:$0xf]
      %v6319 = vld [vmem:[%s10 + $0x104] sm:$0xf]
      %v6320 = vld [vmem:[%s10 + $0x108] sm:$0xf]
      %v6321 = vld [vmem:[%s10 + $0x10c] sm:$0xf]
      %v6322 = vld [vmem:[%s10 + $0x110] sm:$0xf]
      %v6323 = vld [vmem:[%s10 + $0x114] sm:$0xf]
      %v6324 = vld [vmem:[%s10 + $0x118] sm:$0xf]
      %v6325 = vld [vmem:[%s10 + $0x11c] sm:$0xf]
      %v6326 = vld [vmem:[%s10 + $0x120] sm:$0xf]
      %v6327 = vld [vmem:[%s10 + $0x124] sm:$0xf]
      %v6328 = vld [vmem:[%s10 + $0x128] sm:$0xf]
      %v6329 = vld [vmem:[%s10 + $0x12c] sm:$0xf]
      %v6330 = vld [vmem:[%s10 + $0x130] sm:$0xf]
      %v6331 = vld [vmem:[%s10 + $0x134] sm:$0xf]
      %v6332 = vld [vmem:[%s10 + $0x138] sm:$0xf]
      %v6333 = vld [vmem:[%s10 + $0x13c] sm:$0xf]
      %v6350 = vunpack.c.l.b16 %v6318
      %v6351 = vunpack.c.l.b16 %v6319
      %v6352 = vunpack.c.l.b16 %v6320
      %v6353 = vunpack.c.l.b16 %v6321
      %v6354 = vunpack.c.l.b16 %v6322
      %v6355 = vunpack.c.l.b16 %v6323
      %v6356 = vunpack.c.l.b16 %v6324
      %v6357 = vunpack.c.l.b16 %v6325
      %v6358 = vunpack.c.l.b16 %v6326
      %v6359 = vunpack.c.l.b16 %v6327
      %v6360 = vunpack.c.l.b16 %v6328
      %v6361 = vunpack.c.l.b16 %v6329
      %v6362 = vunpack.c.l.b16 %v6330
      %v6363 = vunpack.c.l.b16 %v6331
      %v6364 = vunpack.c.l.b16 %v6332
      %v6365 = vunpack.c.l.b16 %v6333
      %v6366 = vpack.c.b16 %v6351, %v6350
      %v6367 = vpack.c.b16 %v6353, %v6352
      %v6368 = vpack.c.b16 %v6355, %v6354
      %v6369 = vpack.c.b16 %v6357, %v6356
      %v6370 = vpack.c.b16 %v6359, %v6358
      %v6371 = vpack.c.b16 %v6361, %v6360
      %v6372 = vpack.c.b16 %v6363, %v6362
      %v6373 = vpack.c.b16 %v6365, %v6364
      %6382 = vmatprep.subr.bf16.mxu0 0
      %6383 = vmatpush1.bf16.msra.mxu0 %v6366
      %6384 = vmatprep.subr.bf16.mxu0 0
      %6385 = vmatpush1.bf16.msra.mxu0 %v6367
      %6386 = vmatprep.subr.bf16.mxu0 0
      %6387 = vmatpush1.bf16.msra.mxu0 %v6368
      %6388 = vmatprep.subr.bf16.mxu0 0
      %6389 = vmatpush1.bf16.msra.mxu0 %v6369
      %6390 = vmatprep.subr.bf16.mxu0 0
      %6391 = vmatpush1.bf16.msra.mxu0 %v6370
      %6392 = vmatprep.subr.bf16.mxu0 0
      %6393 = vmatpush1.bf16.msra.mxu0 %v6371
      %6394 = vmatprep.subr.bf16.mxu0 0
      %6395 = vmatpush1.bf16.msra.mxu0 %v6372
      %6396 = vmatprep.subr.bf16.mxu0 0
      %6397 = vmatpush1.bf16.msra.mxu0 %v6373
      %6398 = vmatprep.subr.bf16.mxu0 0
      %6399 = vmatpush1.bf16.msra.mxu0 0
      %6400 = vmatprep.subr.bf16.mxu0 0
      %6401 = vmatpush1.bf16.msra.mxu0 0
      %6402 = vmatprep.subr.bf16.mxu0 0
      %6403 = vmatpush1.bf16.msra.mxu0 0
      %6404 = vmatprep.subr.bf16.mxu0 0
      %6405 = vmatpush1.bf16.msra.mxu0 0
      %6406 = vmatprep.subr.bf16.mxu0 0
      %6407 = vmatpush1.bf16.msra.mxu0 0
      %6408 = vmatprep.subr.bf16.mxu0 0
      %6409 = vmatpush1.bf16.msra.mxu0 0
      %6410 = vmatprep.subr.bf16.mxu0 0
      %6411 = vmatpush1.bf16.msra.mxu0 0
      %6412 = vmatprep.subr.bf16.mxu0 0
      %6413 = vmatpush1.bf16.msra.mxu0 0
      %6414 = vmatprep.mubr.bf16.mxu0 0
      %6415 = vmatmul.mubr.bf16.gmra.mrb[0].mxu0 %v6317
      %v6416 = vpop.f32.mrb[0].mxu0
      %v6417 = vadd.f32 0.0, %v6416
      %v6418 = vpop.f32.mrb[0].mxu0
      %v6419 = vpop.f32.mrb[0].mxu0
      %v6420 = vadd.f32 0.0, %v6419
      %v6421 = vpop.f32.mrb[0].mxu0
      %6422 = vdwg.mxu0
      %v6423 = vadd.f32 %v6313, %v6417
      %v6424 = vadd.f32 %v6314, %v6420
      %v6425 = vld [vmem:[#allocation5 + $0x6] sm:$0xff]
      %v6426 = vld [vmem:[#allocation5 + $0xe] sm:$0xff]
      %v6427 = vmul.f32 %v6425, %v6087
      %v6428 = vmul.f32 %v6426, %v6091
      %v6429 = vpack.c.bf16 %v6428, %v6427
      %v6430 = vld [vmem:[%s10 + $0x140] sm:$0xf]
      %v6431 = vld [vmem:[%s10 + $0x144] sm:$0xf]
      %v6432 = vld [vmem:[%s10 + $0x148] sm:$0xf]
      %v6433 = vld [vmem:[%s10 + $0x14c] sm:$0xf]
      %v6434 = vld [vmem:[%s10 + $0x150] sm:$0xf]
      %v6435 = vld [vmem:[%s10 + $0x154] sm:$0xf]
      %v6436 = vld [vmem:[%s10 + $0x158] sm:$0xf]
      %v6437 = vld [vmem:[%s10 + $0x15c] sm:$0xf]
      %v6438 = vld [vmem:[%s10 + $0x160] sm:$0xf]
      %v6439 = vld [vmem:[%s10 + $0x164] sm:$0xf]
      %v6440 = vld [vmem:[%s10 + $0x168] sm:$0xf]
      %v6441 = vld [vmem:[%s10 + $0x16c] sm:$0xf]
      %v6442 = vld [vmem:[%s10 + $0x170] sm:$0xf]
      %v6443 = vld [vmem:[%s10 + $0x174] sm:$0xf]
      %v6444 = vld [vmem:[%s10 + $0x178] sm:$0xf]
      %v6445 = vld [vmem:[%s10 + $0x17c] sm:$0xf]
      %v6462 = vunpack.c.l.b16 %v6430
      %v6463 = vunpack.c.l.b16 %v6431
      %v6464 = vunpack.c.l.b16 %v6432
      %v6465 = vunpack.c.l.b16 %v6433
      %v6466 = vunpack.c.l.b16 %v6434
      %v6467 = vunpack.c.l.b16 %v6435
      %v6468 = vunpack.c.l.b16 %v6436
      %v6469 = vunpack.c.l.b16 %v6437
      %v6470 = vunpack.c.l.b16 %v6438
      %v6471 = vunpack.c.l.b16 %v6439
      %v6472 = vunpack.c.l.b16 %v6440
      %v6473 = vunpack.c.l.b16 %v6441
      %v6474 = vunpack.c.l.b16 %v6442
      %v6475 = vunpack.c.l.b16 %v6443
      %v6476 = vunpack.c.l.b16 %v6444
      %v6477 = vunpack.c.l.b16 %v6445
      %v6478 = vpack.c.b16 %v6463, %v6462
      %v6479 = vpack.c.b16 %v6465, %v6464
      %v6480 = vpack.c.b16 %v6467, %v6466
      %v6481 = vpack.c.b16 %v6469, %v6468
      %v6482 = vpack.c.b16 %v6471, %v6470
      %v6483 = vpack.c.b16 %v6473, %v6472
      %v6484 = vpack.c.b16 %v6475, %v6474
      %v6485 = vpack.c.b16 %v6477, %v6476
      %6494 = vmatprep.subr.bf16.mxu0 0
      %6495 = vmatpush1.bf16.msra.mxu0 %v6478
      %6496 = vmatprep.subr.bf16.mxu0 0
      %6497 = vmatpush1.bf16.msra.mxu0 %v6479
      %6498 = vmatprep.subr.bf16.mxu0 0
      %6499 = vmatpush1.bf16.msra.mxu0 %v6480
      %6500 = vmatprep.subr.bf16.mxu0 0
      %6501 = vmatpush1.bf16.msra.mxu0 %v6481
      %6502 = vmatprep.subr.bf16.mxu0 0
      %6503 = vmatpush1.bf16.msra.mxu0 %v6482
      %6504 = vmatprep.subr.bf16.mxu0 0
      %6505 = vmatpush1.bf16.msra.mxu0 %v6483
      %6506 = vmatprep.subr.bf16.mxu0 0
      %6507 = vmatpush1.bf16.msra.mxu0 %v6484
      %6508 = vmatprep.subr.bf16.mxu0 0
      %6509 = vmatpush1.bf16.msra.mxu0 %v6485
      %6510 = vmatprep.subr.bf16.mxu0 0
      %6511 = vmatpush1.bf16.msra.mxu0 0
      %6512 = vmatprep.subr.bf16.mxu0 0
      %6513 = vmatpush1.bf16.msra.mxu0 0
      %6514 = vmatprep.subr.bf16.mxu0 0
      %6515 = vmatpush1.bf16.msra.mxu0 0
      %6516 = vmatprep.subr.bf16.mxu0 0
      %6517 = vmatpush1.bf16.msra.mxu0 0
      %6518 = vmatprep.subr.bf16.mxu0 0
      %6519 = vmatpush1.bf16.msra.mxu0 0
      %6520 = vmatprep.subr.bf16.mxu0 0
      %6521 = vmatpush1.bf16.msra.mxu0 0
      %6522 = vmatprep.subr.bf16.mxu0 0
      %6523 = vmatpush1.bf16.msra.mxu0 0
      %6524 = vmatprep.subr.bf16.mxu0 0
      %6525 = vmatpush1.bf16.msra.mxu0 0
      %6526 = vmatprep.mubr.bf16.mxu0 0
      %6527 = vmatmul.mubr.bf16.gmra.mrb[0].mxu0 %v6429
      %v6528 = vpop.f32.mrb[0].mxu0
      %v6529 = vadd.f32 0.0, %v6528
      %v6530 = vpop.f32.mrb[0].mxu0
      %v6531 = vpop.f32.mrb[0].mxu0
      %v6532 = vadd.f32 0.0, %v6531
      %v6533 = vpop.f32.mrb[0].mxu0
      %6534 = vdwg.mxu0
      %v6535 = vadd.f32 %v6423, %v6529
      %v6536 = vadd.f32 %v6424, %v6532
      %v6537 = vld [vmem:[#allocation5 + $0x8] sm:$0xff]
      %v6538 = vld [vmem:[#allocation5 + $0x10] sm:$0xff]
      %v6539 = vmul.f32 %v6537, %v5860
      %v6540 = vmul.f32 %v6538, %v5865
      %v6541 = vpack.c.bf16 %v6540, %v6539
      %v6542 = vld [vmem:[%s10 + $0x180] sm:$0xf]
      %v6543 = vld [vmem:[%s10 + $0x184] sm:$0xf]
      %v6544 = vld [vmem:[%s10 + $0x188] sm:$0xf]
      %v6545 = vld [vmem:[%s10 + $0x18c] sm:$0xf]
      %v6546 = vld [vmem:[%s10 + $0x190] sm:$0xf]
      %v6547 = vld [vmem:[%s10 + $0x194] sm:$0xf]
      %v6548 = vld [vmem:[%s10 + $0x198] sm:$0xf]
      %v6549 = vld [vmem:[%s10 + $0x19c] sm:$0xf]
      %v6550 = vld [vmem:[%s10 + $0x1a0] sm:$0xf]
      %v6551 = vld [vmem:[%s10 + $0x1a4] sm:$0xf]
      %v6552 = vld [vmem:[%s10 + $0x1a8] sm:$0xf]
      %v6553 = vld [vmem:[%s10 + $0x1ac] sm:$0xf]
      %v6554 = vld [vmem:[%s10 + $0x1b0] sm:$0xf]
      %v6555 = vld [vmem:[%s10 + $0x1b4] sm:$0xf]
      %v6556 = vld [vmem:[%s10 + $0x1b8] sm:$0xf]
      %v6557 = vld [vmem:[%s10 + $0x1bc] sm:$0xf]
      %v6574 = vunpack.c.l.b16 %v6542
      %v6575 = vunpack.c.l.b16 %v6543
      %v6576 = vunpack.c.l.b16 %v6544
      %v6577 = vunpack.c.l.b16 %v6545
      %v6578 = vunpack.c.l.b16 %v6546
      %v6579 = vunpack.c.l.b16 %v6547
      %v6580 = vunpack.c.l.b16 %v6548
      %v6581 = vunpack.c.l.b16 %v6549
      %v6582 = vunpack.c.l.b16 %v6550
      %v6583 = vunpack.c.l.b16 %v6551
      %v6584 = vunpack.c.l.b16 %v6552
      %v6585 = vunpack.c.l.b16 %v6553
      %v6586 = vunpack.c.l.b16 %v6554
      %v6587 = vunpack.c.l.b16 %v6555
      %v6588 = vunpack.c.l.b16 %v6556
      %v6589 = vunpack.c.l.b16 %v6557
      %v6590 = vpack.c.b16 %v6575, %v6574
      %v6591 = vpack.c.b16 %v6577, %v6576
      %v6592 = vpack.c.b16 %v6579, %v6578
      %v6593 = vpack.c.b16 %v6581, %v6580
      %v6594 = vpack.c.b16 %v6583, %v6582
      %v6595 = vpack.c.b16 %v6585, %v6584
      %v6596 = vpack.c.b16 %v6587, %v6586
      %v6597 = vpack.c.b16 %v6589, %v6588
      %6606 = vmatprep.subr.bf16.mxu0 0
      %6607 = vmatpush1.bf16.msra.mxu0 %v6590
      %6608 = vmatprep.subr.bf16.mxu0 0
      %6609 = vmatpush1.bf16.msra.mxu0 %v6591
      %6610 = vmatprep.subr.bf16.mxu0 0
      %6611 = vmatpush1.bf16.msra.mxu0 %v6592
      %6612 = vmatprep.subr.bf16.mxu0 0
      %6613 = vmatpush1.bf16.msra.mxu0 %v6593
      %6614 = vmatprep.subr.bf16.mxu0 0
      %6615 = vmatpush1.bf16.msra.mxu0 %v6594
      %6616 = vmatprep.subr.bf16.mxu0 0
      %6617 = vmatpush1.bf16.msra.mxu0 %v6595
      %6618 = vmatprep.subr.bf16.mxu0 0
      %6619 = vmatpush1.bf16.msra.mxu0 %v6596
      %6620 = vmatprep.subr.bf16.mxu0 0
      %6621 = vmatpush1.bf16.msra.mxu0 %v6597
      %6622 = vmatprep.subr.bf16.mxu0 0
      %6623 = vmatpush1.bf16.msra.mxu0 0
      %6624 = vmatprep.subr.bf16.mxu0 0
      %6625 = vmatpush1.bf16.msra.mxu0 0
      %6626 = vmatprep.subr.bf16.mxu0 0
      %6627 = vmatpush1.bf16.msra.mxu0 0
      %6628 = vmatprep.subr.bf16.mxu0 0
      %6629 = vmatpush1.bf16.msra.mxu0 0
      %6630 = vmatprep.subr.bf16.mxu0 0
      %6631 = vmatpush1.bf16.msra.mxu0 0
      %6632 = vmatprep.subr.bf16.mxu0 0
      %6633 = vmatpush1.bf16.msra.mxu0 0
      %6634 = vmatprep.subr.bf16.mxu0 0
      %6635 = vmatpush1.bf16.msra.mxu0 0
      %6636 = vmatprep.subr.bf16.mxu0 0
      %6637 = vmatpush1.bf16.msra.mxu0 0
      %6638 = vmatprep.mubr.bf16.mxu0 0
      %6639 = vmatmul.mubr.bf16.gmra.mrb[0].mxu0 %v6541
      %v6640 = vpop.f32.mrb[0].mxu0
      %v6641 = vadd.f32 0.0, %v6640
      %v6642 = vpop.f32.mrb[0].mxu0
      %v6643 = vpop.f32.mrb[0].mxu0
      %v6644 = vadd.f32 0.0, %v6643
      %v6645 = vpop.f32.mrb[0].mxu0
      %6646 = vdwg.mxu0
      %v6647 = vadd.f32 %v6535, %v6641
      %v6648 = vadd.f32 %v6536, %v6644
      %v6649 = vld [vmem:[#allocation5 + $0x9] sm:$0xff]
      %v6650 = vld [vmem:[#allocation5 + $0x11] sm:$0xff]
      %v6651 = vpack.c.bf16 %v6650, %v6649
      %v6652 = vld [vmem:[%s10 + $0x1c0] sm:$0xf]
      %v6653 = vld [vmem:[%s10 + $0x1c4] sm:$0xf]
      %v6654 = vld [vmem:[%s10 + $0x1c8] sm:$0xf]
      %v6655 = vld [vmem:[%s10 + $0x1cc] sm:$0xf]
      %v6656 = vld [vmem:[%s10 + $0x1d0] sm:$0xf]
      %v6657 = vld [vmem:[%s10 + $0x1d4] sm:$0xf]
      %v6658 = vld [vmem:[%s10 + $0x1d8] sm:$0xf]
      %v6659 = vld [vmem:[%s10 + $0x1dc] sm:$0xf]
      %v6660 = vld [vmem:[%s10 + $0x1e0] sm:$0xf]
      %v6661 = vld [vmem:[%s10 + $0x1e4] sm:$0xf]
      %v6662 = vld [vmem:[%s10 + $0x1e8] sm:$0xf]
      %v6663 = vld [vmem:[%s10 + $0x1ec] sm:$0xf]
      %v6664 = vld [vmem:[%s10 + $0x1f0] sm:$0xf]
      %v6665 = vld [vmem:[%s10 + $0x1f4] sm:$0xf]
      %v6666 = vld [vmem:[%s10 + $0x1f8] sm:$0xf]
      %v6667 = vld [vmem:[%s10 + $0x1fc] sm:$0xf]
      %v6684 = vunpack.c.l.b16 %v6652
      %v6685 = vunpack.c.l.b16 %v6653
      %v6686 = vunpack.c.l.b16 %v6654
      %v6687 = vunpack.c.l.b16 %v6655
      %v6688 = vunpack.c.l.b16 %v6656
      %v6689 = vunpack.c.l.b16 %v6657
      %v6690 = vunpack.c.l.b16 %v6658
      %v6691 = vunpack.c.l.b16 %v6659
      %v6692 = vunpack.c.l.b16 %v6660
      %v6693 = vunpack.c.l.b16 %v6661
      %v6694 = vunpack.c.l.b16 %v6662
      %v6695 = vunpack.c.l.b16 %v6663
      %v6696 = vunpack.c.l.b16 %v6664
      %v6697 = vunpack.c.l.b16 %v6665
      %v6698 = vunpack.c.l.b16 %v6666
      %v6699 = vunpack.c.l.b16 %v6667
      %v6700 = vpack.c.b16 %v6685, %v6684
      %v6701 = vpack.c.b16 %v6687, %v6686
      %v6702 = vpack.c.b16 %v6689, %v6688
      %v6703 = vpack.c.b16 %v6691, %v6690
      %v6704 = vpack.c.b16 %v6693, %v6692
      %v6705 = vpack.c.b16 %v6695, %v6694
      %v6706 = vpack.c.b16 %v6697, %v6696
      %v6707 = vpack.c.b16 %v6699, %v6698
      %6716 = vmatprep.subr.bf16.mxu0 0
      %6717 = vmatpush1.bf16.msra.mxu0 %v6700
      %6718 = vmatprep.subr.bf16.mxu0 0
      %6719 = vmatpush1.bf16.msra.mxu0 %v6701
      %6720 = vmatprep.subr.bf16.mxu0 0
      %6721 = vmatpush1.bf16.msra.mxu0 %v6702
      %6722 = vmatprep.subr.bf16.mxu0 0
      %6723 = vmatpush1.bf16.msra.mxu0 %v6703
      %6724 = vmatprep.subr.bf16.mxu0 0
      %6725 = vmatpush1.bf16.msra.mxu0 %v6704
      %6726 = vmatprep.subr.bf16.mxu0 0
      %6727 = vmatpush1.bf16.msra.mxu0 %v6705
      %6728 = vmatprep.subr.bf16.mxu0 0
      %6729 = vmatpush1.bf16.msra.mxu0 %v6706
      %6730 = vmatprep.subr.bf16.mxu0 0
      %6731 = vmatpush1.bf16.msra.mxu0 %v6707
      %6732 = vmatprep.subr.bf16.mxu0 0
      %6733 = vmatpush1.bf16.msra.mxu0 0
      %6734 = vmatprep.subr.bf16.mxu0 0
      %6735 = vmatpush1.bf16.msra.mxu0 0
      %6736 = vmatprep.subr.bf16.mxu0 0
      %6737 = vmatpush1.bf16.msra.mxu0 0
      %6738 = vmatprep.subr.bf16.mxu0 0
      %6739 = vmatpush1.bf16.msra.mxu0 0
      %6740 = vmatprep.subr.bf16.mxu0 0
      %6741 = vmatpush1.bf16.msra.mxu0 0
      %6742 = vmatprep.subr.bf16.mxu0 0
      %6743 = vmatpush1.bf16.msra.mxu0 0
      %6744 = vmatprep.subr.bf16.mxu0 0
      %6745 = vmatpush1.bf16.msra.mxu0 0
      %6746 = vmatprep.subr.bf16.mxu0 0
      %6747 = vmatpush1.bf16.msra.mxu0 0
      %6748 = vmatprep.mubr.bf16.mxu0 0
      %6749 = vmatmul.mubr.bf16.gmra.mrb[0].mxu0 %v6651
      %v6750 = vpop.f32.mrb[0].mxu0
      %v6751 = vadd.f32 0.0, %v6750
      %v6752 = vpop.f32.mrb[0].mxu0
      %v6753 = vpop.f32.mrb[0].mxu0
      %v6754 = vadd.f32 0.0, %v6753
      %v6755 = vpop.f32.mrb[0].mxu0
      %6756 = vdwg.mxu0
      %v6757 = vadd.f32 %v6647, %v6751
      %v6758 = vadd.f32 %v6648, %v6754
      %v6759 = vld [vmem:[#allocation5 + $0xa] sm:$0xff]
      %v6760 = vld [vmem:[#allocation5 + $0x12] sm:$0xff]
      %v6761 = vmul.f32 %v6759, %v6087
      %v6762 = vmul.f32 %v6760, %v6091
      %v6763 = vpack.c.bf16 %v6762, %v6761
      %v6764 = vld [vmem:[%s10 + $0x200] sm:$0xf]
      %v6765 = vld [vmem:[%s10 + $0x204] sm:$0xf]
      %v6766 = vld [vmem:[%s10 + $0x208] sm:$0xf]
      %v6767 = vld [vmem:[%s10 + $0x20c] sm:$0xf]
      %v6768 = vld [vmem:[%s10 + $0x210] sm:$0xf]
      %v6769 = vld [vmem:[%s10 + $0x214] sm:$0xf]
      %v6770 = vld [vmem:[%s10 + $0x218] sm:$0xf]
      %v6771 = vld [vmem:[%s10 + $0x21c] sm:$0xf]
      %v6772 = vld [vmem:[%s10 + $0x220] sm:$0xf]
      %v6773 = vld [vmem:[%s10 + $0x224] sm:$0xf]
      %v6774 = vld [vmem:[%s10 + $0x228] sm:$0xf]
      %v6775 = vld [vmem:[%s10 + $0x22c] sm:$0xf]
      %v6776 = vld [vmem:[%s10 + $0x230] sm:$0xf]
      %v6777 = vld [vmem:[%s10 + $0x234] sm:$0xf]
      %v6778 = vld [vmem:[%s10 + $0x238] sm:$0xf]
      %v6779 = vld [vmem:[%s10 + $0x23c] sm:$0xf]
      %v6796 = vunpack.c.l.b16 %v6764
      %v6797 = vunpack.c.l.b16 %v6765
      %v6798 = vunpack.c.l.b16 %v6766
      %v6799 = vunpack.c.l.b16 %v6767
      %v6800 = vunpack.c.l.b16 %v6768
      %v6801 = vunpack.c.l.b16 %v6769
      %v6802 = vunpack.c.l.b16 %v6770
      %v6803 = vunpack.c.l.b16 %v6771
      %v6804 = vunpack.c.l.b16 %v6772
      %v6805 = vunpack.c.l.b16 %v6773
      %v6806 = vunpack.c.l.b16 %v6774
      %v6807 = vunpack.c.l.b16 %v6775
      %v6808 = vunpack.c.l.b16 %v6776
      %v6809 = vunpack.c.l.b16 %v6777
      %v6810 = vunpack.c.l.b16 %v6778
      %v6811 = vunpack.c.l.b16 %v6779
      %v6812 = vpack.c.b16 %v6797, %v6796
      %v6813 = vpack.c.b16 %v6799, %v6798
      %v6814 = vpack.c.b16 %v6801, %v6800
      %v6815 = vpack.c.b16 %v6803, %v6802
      %v6816 = vpack.c.b16 %v6805, %v6804
      %v6817 = vpack.c.b16 %v6807, %v6806
      %v6818 = vpack.c.b16 %v6809, %v6808
      %v6819 = vpack.c.b16 %v6811, %v6810
      %6828 = vmatprep.subr.bf16.mxu0 0
      %6829 = vmatpush1.bf16.msra.mxu0 %v6812
      %6830 = vmatprep.subr.bf16.mxu0 0
      %6831 = vmatpush1.bf16.msra.mxu0 %v6813
      %6832 = vmatprep.subr.bf16.mxu0 0
      %6833 = vmatpush1.bf16.msra.mxu0 %v6814
      %6834 = vmatprep.subr.bf16.mxu0 0
      %6835 = vmatpush1.bf16.msra.mxu0 %v6815
      %6836 = vmatprep.subr.bf16.mxu0 0
      %6837 = vmatpush1.bf16.msra.mxu0 %v6816
      %6838 = vmatprep.subr.bf16.mxu0 0
      %6839 = vmatpush1.bf16.msra.mxu0 %v6817
      %6840 = vmatprep.subr.bf16.mxu0 0
      %6841 = vmatpush1.bf16.msra.mxu0 %v6818
      %6842 = vmatprep.subr.bf16.mxu0 0
      %6843 = vmatpush1.bf16.msra.mxu0 %v6819
      %6844 = vmatprep.subr.bf16.mxu0 0
      %6845 = vmatpush1.bf16.msra.mxu0 0
      %6846 = vmatprep.subr.bf16.mxu0 0
      %6847 = vmatpush1.bf16.msra.mxu0 0
      %6848 = vmatprep.subr.bf16.mxu0 0
      %6849 = vmatpush1.bf16.msra.mxu0 0
      %6850 = vmatprep.subr.bf16.mxu0 0
      %6851 = vmatpush1.bf16.msra.mxu0 0
      %6852 = vmatprep.subr.bf16.mxu0 0
      %6853 = vmatpush1.bf16.msra.mxu0 0
      %6854 = vmatprep.subr.bf16.mxu0 0
      %6855 = vmatpush1.bf16.msra.mxu0 0
      %6856 = vmatprep.subr.bf16.mxu0 0
      %6857 = vmatpush1.bf16.msra.mxu0 0
      %6858 = vmatprep.subr.bf16.mxu0 0
      %6859 = vmatpush1.bf16.msra.mxu0 0
      %6860 = vmatprep.mubr.bf16.mxu0 0
      %6861 = vmatmul.mubr.bf16.gmra.mrb[0].mxu0 %v6763
      %v6862 = vpop.f32.mrb[0].mxu0
      %v6863 = vadd.f32 0.0, %v6862
      %v6864 = vpop.f32.mrb[0].mxu0
      %v6865 = vpop.f32.mrb[0].mxu0
      %v6866 = vadd.f32 0.0, %v6865
      %v6867 = vpop.f32.mrb[0].mxu0
      %6868 = vdwg.mxu0
      %v6869 = vadd.f32 %v6757, %v6863
      %v6870 = vadd.f32 %v6758, %v6866
      %v6871 = vld [vmem:[%s11] sm:$0x1]
      %v6873 = vlaneseq
      %v6874 = vshrl.u32 %v6873, 7
      %v6875 = vsub.s32 0, %v6874
      %v6876 = vrot.slane %v6871, %v6875
      %v6878 = vadd.f32 %v6869, %v6876
      %v6879 = vadd.f32 %v6870, %v6876
      %v6880 = vmax.f32 %v6878, 0.0
      %v6881 = vmax.f32 %v6879, 0.0
      %v6882 = vpack.c.bf16 %v6881, %v6880
      %v6883 = vld [vmem:[%s14] sm:$0xf]
      %v6884 = vld [vmem:[%s14 + $0x4] sm:$0xf]
      %v6885 = vld [vmem:[%s14 + $0x8] sm:$0xf]
      %v6886 = vld [vmem:[%s14 + $0xc] sm:$0xf]
      %v6887 = vld [vmem:[%s14 + $0x10] sm:$0xf]
      %v6888 = vld [vmem:[%s14 + $0x14] sm:$0xf]
      %v6889 = vld [vmem:[%s14 + $0x18] sm:$0xf]
      %v6890 = vld [vmem:[%s14 + $0x1c] sm:$0xf]
      %v6891 = vld [vmem:[%s15] sm:$0x1]
      %v6893 = vlaneseq
      %v6894 = vshrl.u32 %v6893, 7
      %v6895 = vsub.s32 0, %v6894
      %v6896 = vrot.slane %v6891, %v6895
      %v6906 = vunpack.c.l.b16 %v6883
      %v6907 = vunpack.c.l.b16 %v6884
      %v6908 = vunpack.c.l.b16 %v6885
      %v6909 = vunpack.c.l.b16 %v6886
      %v6910 = vunpack.c.l.b16 %v6887
      %v6911 = vunpack.c.l.b16 %v6888
      %v6912 = vunpack.c.l.b16 %v6889
      %v6913 = vunpack.c.l.b16 %v6890
      %v6914 = vpack.c.b16 %v6907, %v6906
      %v6915 = vpack.c.b16 %v6909, %v6908
      %v6916 = vpack.c.b16 %v6911, %v6910
      %v6917 = vpack.c.b16 %v6913, %v6912
      %v6923 = vsel %vm5071, %v6882, 0
      %6925 = vmatprep.subr.bf16.mxu0 0
      %6926 = vmatpush1.bf16.msra.mxu0 %v6914
      %6927 = vmatprep.subr.bf16.mxu0 0
      %6928 = vmatpush1.bf16.msra.mxu0 %v6915
      %6929 = vmatprep.subr.bf16.mxu0 0
      %6930 = vmatpush1.bf16.msra.mxu0 %v6916
      %6931 = vmatprep.subr.bf16.mxu0 0
      %6932 = vmatpush1.bf16.msra.mxu0 %v6917
      %6933 = vmatprep.subr.bf16.mxu0 0
      %6934 = vmatpush1.bf16.msra.mxu0 0
      %6935 = vmatprep.subr.bf16.mxu0 0
      %6936 = vmatpush1.bf16.msra.mxu0 0
      %6937 = vmatprep.subr.bf16.mxu0 0
      %6938 = vmatpush1.bf16.msra.mxu0 0
      %6939 = vmatprep.subr.bf16.mxu0 0
      %6940 = vmatpush1.bf16.msra.mxu0 0
      %6941 = vmatprep.subr.bf16.mxu0 0
      %6942 = vmatpush1.bf16.msra.mxu0 0
      %6943 = vmatprep.subr.bf16.mxu0 0
      %6944 = vmatpush1.bf16.msra.mxu0 0
      %6945 = vmatprep.subr.bf16.mxu0 0
      %6946 = vmatpush1.bf16.msra.mxu0 0
      %6947 = vmatprep.subr.bf16.mxu0 0
      %6948 = vmatpush1.bf16.msra.mxu0 0
      %6949 = vmatprep.subr.bf16.mxu0 0
      %6950 = vmatpush1.bf16.msra.mxu0 0
      %6951 = vmatprep.subr.bf16.mxu0 0
      %6952 = vmatpush1.bf16.msra.mxu0 0
      %6953 = vmatprep.subr.bf16.mxu0 0
      %6954 = vmatpush1.bf16.msra.mxu0 0
      %6955 = vmatprep.subr.bf16.mxu0 0
      %6956 = vmatpush1.bf16.msra.mxu0 0
      %6957 = vmatprep.mubr.bf16.mxu0 0
      %6958 = vmatmul.mubr.bf16.gmra.mrb[0].mxu0 %v6923
      %v6959 = vpop.f32.mrb[0].mxu0
      %v6960 = vadd.f32 %v6896, %v6959
      %v6961 = vpop.f32.mrb[0].mxu0
      %v6962 = vpop.f32.mrb[0].mxu0
      %v6963 = vadd.f32 %v6896, %v6962
      %v6964 = vpop.f32.mrb[0].mxu0
      %6965 = vdwg.mxu0
      %v6966 = vmax.f32 %v6960, 0.0
      %v6967 = vmax.f32 %v6963, 0.0
      %v6968 = vpack.c.bf16 %v6967, %v6966
      %v6969 = vld [vmem:[%s16] sm:$0xf]
      %v6970 = vld [vmem:[%s16 + $0x4] sm:$0xf]
      %v6971 = vld [vmem:[%s16 + $0x8] sm:$0xf]
      %v6972 = vld [vmem:[%s16 + $0xc] sm:$0xf]
      %v6973 = vld [vmem:[%s16 + $0x10] sm:$0xf]
      %v6974 = vld [vmem:[%s16 + $0x14] sm:$0xf]
      %v6975 = vld [vmem:[%s16 + $0x18] sm:$0xf]
      %v6976 = vld [vmem:[%s16 + $0x1c] sm:$0xf]
      %v6977 = vld [vmem:[%s16 + $0x20] sm:$0xf]
      %v6978 = vld [vmem:[%s16 + $0x24] sm:$0xf]
      %v6979 = vld [vmem:[%s16 + $0x28] sm:$0xf]
      %v6980 = vld [vmem:[%s16 + $0x2c] sm:$0xf]
      %v6981 = vld [vmem:[%s16 + $0x30] sm:$0xf]
      %v6982 = vld [vmem:[%s16 + $0x34] sm:$0xf]
      %v6983 = vld [vmem:[%s16 + $0x38] sm:$0xf]
      %v6984 = vld [vmem:[%s16 + $0x3c] sm:$0xf]
      %v6985 = vld [vmem:[%s17] sm:$0x1]
      %v6987 = vlaneseq
      %v6988 = vshrl.u32 %v6987, 7
      %v6989 = vsub.s32 0, %v6988
      %v6990 = vrot.slane %v6985, %v6989
      %v7008 = vunpack.c.l.b16 %v6969
      %v7009 = vunpack.c.l.b16 %v6970
      %v7010 = vunpack.c.l.b16 %v6971
      %v7011 = vunpack.c.l.b16 %v6972
      %v7012 = vunpack.c.l.b16 %v6973
      %v7013 = vunpack.c.l.b16 %v6974
      %v7014 = vunpack.c.l.b16 %v6975
      %v7015 = vunpack.c.l.b16 %v6976
      %v7016 = vunpack.c.l.b16 %v6977
      %v7017 = vunpack.c.l.b16 %v6978
      %v7018 = vunpack.c.l.b16 %v6979
      %v7019 = vunpack.c.l.b16 %v6980
      %v7020 = vunpack.c.l.b16 %v6981
      %v7021 = vunpack.c.l.b16 %v6982
      %v7022 = vunpack.c.l.b16 %v6983
      %v7023 = vunpack.c.l.b16 %v6984
      %v7024 = vpack.c.b16 %v7009, %v7008
      %v7025 = vpack.c.b16 %v7011, %v7010
      %v7026 = vpack.c.b16 %v7013, %v7012
      %v7027 = vpack.c.b16 %v7015, %v7014
      %v7028 = vpack.c.b16 %v7017, %v7016
      %v7029 = vpack.c.b16 %v7019, %v7018
      %v7030 = vpack.c.b16 %v7021, %v7020
      %v7031 = vpack.c.b16 %v7023, %v7022
      %7040 = vmatprep.subr.bf16.mxu0 0
      %7041 = vmatpush1.bf16.msra.mxu0 %v7024
      %7042 = vmatprep.subr.bf16.mxu0 0
      %7043 = vmatpush1.bf16.msra.mxu0 %v7025
      %7044 = vmatprep.subr.bf16.mxu0 0
      %7045 = vmatpush1.bf16.msra.mxu0 %v7026
      %7046 = vmatprep.subr.bf16.mxu0 0
      %7047 = vmatpush1.bf16.msra.mxu0 %v7027
      %7048 = vmatprep.subr.bf16.mxu0 0
      %7049 = vmatpush1.bf16.msra.mxu0 %v7028
      %7050 = vmatprep.subr.bf16.mxu0 0
      %7051 = vmatpush1.bf16.msra.mxu0 %v7029
      %7052 = vmatprep.subr.bf16.mxu0 0
      %7053 = vmatpush1.bf16.msra.mxu0 %v7030
      %7054 = vmatprep.subr.bf16.mxu0 0
      %7055 = vmatpush1.bf16.msra.mxu0 %v7031
      %7056 = vmatprep.subr.bf16.mxu0 0
      %7057 = vmatpush1.bf16.msra.mxu0 0
      %7058 = vmatprep.subr.bf16.mxu0 0
      %7059 = vmatpush1.bf16.msra.mxu0 0
      %7060 = vmatprep.subr.bf16.mxu0 0
      %7061 = vmatpush1.bf16.msra.mxu0 0
      %7062 = vmatprep.subr.bf16.mxu0 0
      %7063 = vmatpush1.bf16.msra.mxu0 0
      %7064 = vmatprep.subr.bf16.mxu0 0
      %7065 = vmatpush1.bf16.msra.mxu0 0
      %7066 = vmatprep.subr.bf16.mxu0 0
      %7067 = vmatpush1.bf16.msra.mxu0 0
      %7068 = vmatprep.subr.bf16.mxu0 0
      %7069 = vmatpush1.bf16.msra.mxu0 0
      %7070 = vmatprep.subr.bf16.mxu0 0
      %7071 = vmatpush1.bf16.msra.mxu0 0
      %7072 = vmatprep.mubr.bf16.mxu0 0
      %7073 = vmatmul.mubr.bf16.gmra.mrb[0].mxu0 %v6968
      %v7074 = vpop.f32.mrb[0].mxu0
      %v7075 = vadd.f32 %v6990, %v7074
      %v7076 = vpop.f32.mrb[0].mxu0
      %v7077 = vpop.f32.mrb[0].mxu0
      %v7078 = vadd.f32 %v6990, %v7077
      %v7079 = vpop.f32.mrb[0].mxu0
      %7080 = vdwg.mxu0
      %v7081 = vsub.f32 0.0, %v7075
      %v7082 = vsub.f32 0.0, %v7078
      %v7083 = vmul.f32 %v7081, 1.442695
      %v7084 = vpow.pop %v7083
      %v7085 = vmul.f32 %v7082, 1.442695
      %v7086 = vpow.pop %v7085
      %v7087 = vadd.f32 %v7084, 1.0
      %v7088 = vadd.f32 %v7086, 1.0
      %v7089 = vrcp.pop %v7087
      %v7090 = vrcp.pop %v7088
      %vm7091 = vcmask 130048
      %7092 = vst.msk [vmem:[%s575] sm:$0xff] %vm7091, %v7089
      %7093 = vst.msk [vmem:[%s575 + $0x8] sm:$0xff] %vm7091, %v7090
      %p7094 = scmp.lt.s32.totalorder %s29, 1
      %s7095 = scalar_select %p7094, %s29, 1
      %s7096 = smul.addr %s7095, 2
      %s7097 = smul.addr %s7096, 8
      %s7098 = scalar_lea.vmem %s18, %s7097
      // Predicated region
      $region93: #{edge_segmentation_cnn_forward.1} parent=91 // pred_check
        %p7099 = pneg %p430
      $region94: #{edge_segmentation_cnn_forward.1} parent=91 // pred_check_branch
        %7101 = sbr.rel (%p7099) target = $region96
      $region95: #{edge_segmentation_cnn_forward.1} parent=91 // pred_region
        _
      $region96: #{edge_segmentation_cnn_forward.1} parent=91 // pred_fallthru
        _
    $region92: #{edge_segmentation_cnn_forward.1} parent=5 // pred_fallthru
      _
    %p7102 = scmp.le.s32.totalorder 2, %s24
    // Predicated region
    $region97: #{edge_segmentation_cnn_forward.1} parent=5 // pred_check
      %p7103 = pneg %p7102
    $region98: #{edge_segmentation_cnn_forward.1} parent=5 // pred_check_branch
      %7105 = sbr.rel (%p7103) target = $region100
    $region99: #{edge_segmentation_cnn_forward.1} parent=5 // pred_region
      %s7106 = ssub.s32 %s24, 2
      // Predicated region
      $region101: #{edge_segmentation_cnn_forward.1} parent=99 // pred_check
        %p7107 = pneg %p436
      $region102: #{edge_segmentation_cnn_forward.1} parent=99 // pred_check_branch
        %7109 = sbr.rel (%p7107) target = $region104
      $region103: #{edge_segmentation_cnn_forward.1} parent=99 // pred_region
        %p7110 = scmp.lt.s32.totalorder %s30, 1
        %s7111 = scalar_select %p7110, %s30, 1
        %s7112 = smul.addr %s7111, 2
        %s7113 = smul.addr %s7112, 8
        %s7114 = scalar_lea.vmem %s18, %s7113
      $region104: #{edge_segmentation_cnn_forward.1} parent=99 // pred_fallthru
        _
    $region100: #{edge_segmentation_cnn_forward.1} parent=5 // pred_fallthru
      _
  $region6: #{edge_segmentation_cnn_forward.1} parent=0 // loop_footer
    %s28 = sadd.s32 1, %s24
  $region7: #{edge_segmentation_cnn_forward.1} parent=0 // loop_footer_branch
    %23 = sbr.rel target = $region3
  $region8: #{edge_segmentation_cnn_forward.1} parent=0 // loop_exit
    _

</llo_original>
